<compile_context>
chip_gen: v6e
topology: v6e:2x2x1
jax: 0.10.0
libtpu: 0.0.40
codegen_flags: <defaults>
</compile_context>

<pallas_src>
import jax
import jax.numpy as jnp
from jax.experimental import pallas as pl
from jax.experimental.pallas import tpu as pltpu

# ------------------------- model configuration (small) ----------------------
B = 2
IMG_C, IMG_H, IMG_W = 3, 16, 16
HW = IMG_H * IMG_W
V_SUB = 128          # sub-sampled mesh vertices (stand-in for 1723)
V_FULL = 256         # full mesh vertices      (stand-in for 6890)
ENC_C = 16           # encoder conv channels
FEAT = 64            # image feature dim       (stand-in for ResNet50's 2048)
NUM_LAYERS = 2
NUM_CHANNELS = 32
N_JOINTS = 24
N_BETAS = 10
HID = 256            # SMPLParamRegressor hidden (stand-in for 1024)
OUT_DIM = N_JOINTS * 9 + N_BETAS

SMPL_PARENTS = [-1, 0, 0, 0, 1, 2, 3, 4, 5, 6, 7, 8,
                9, 9, 9, 12, 13, 14, 16, 17, 18, 19, 20, 21]


# ==================== kernel 1: fused GraphCNN (per batch) ===================
# Everything is computed in transposed orientation (channels on sublanes,
# vertices/pixels on the 128-wide lane axis), so all intermediates and the two
# big outputs are lane-dense and no in-kernel transpose is ever needed.
def _graph_cnn_kernel(img_ref, ecw_ref, ecb_ref, efw_ref, efb_ref,
                      refT_ref, wlr_ref, wlf_ref, bl_ref,
                      adjT_ref, gw_ref, gb_ref,
                      shw_ref, shb_ref, cw_ref, cb_ref, up_ref,
                      subT_ref, fullT_ref, cam_ref):
    f32 = jnp.float32
    bf16 = jnp.bfloat16
    # --- image encoder: 1x1 conv + ReLU + mean-pool + FC + ReLU (lanes = H*W) ---
    # TODO(synk): ResNet50 backbone replaced by a small 1x1-conv + pool encoder.
    h = jnp.dot(ecw_ref[...], img_ref[...], preferred_element_type=f32) + ecb_ref[...]
    h = jnp.maximum(h, 0.0)                                           # (ENC_C, HW)
    pooled = jnp.sum(h, axis=1, keepdims=True) * (1.0 / HW)           # (ENC_C, 1)
    feat = jnp.dot(efw_ref[...], pooled, preferred_element_type=f32) + efb_ref[...]
    feat = jnp.maximum(feat, 0.0)                                     # (FEAT, 1)
    # --- g_lin: relu(Wref @ ref^T + Wfeat @ feat + b); feat column lane-broadcasts
    #     (replaces the [ref | img_feat] concat of the reference model) ---
    x = jnp.dot(wlr_ref[...], refT_ref[...], preferred_element_type=f32)
    x = x + jnp.dot(wlf_ref[...], feat, preferred_element_type=f32)
    x = jnp.maximum(x + bl_ref[...], 0.0)                             # (C, V_SUB)
    # --- graph conv layers: x <- relu(W^T @ x @ A^T + b), bf16 MXU / f32 acc ---
    adjT_f32 = adjT_ref[...]
    adjT_bf = adjT_f32.astype(bf16)
    for l in range(NUM_LAYERS):
        s = jnp.dot(gw_ref[l].astype(bf16), x.astype(bf16),
                    preferred_element_type=f32)                       # (C, V_SUB)
        x = jnp.dot(s.astype(bf16), adjT_bf, preferred_element_type=f32)
        x = jnp.maximum(x + gb_ref[l], 0.0)
    # --- shape branch (kept f32: feeds the SVD-based regressor downstream) ---
    s = jnp.dot(shw_ref[...], x, preferred_element_type=f32)          # (3, V_SUB)
    subT = jnp.dot(s, adjT_f32, preferred_element_type=f32) + shb_ref[...]
    subT_ref[...] = subT                                               # lane-dense
    # --- mesh upsample fused in: (3, V_SUB) @ (V_SUB, V_FULL) ---
    fullT_ref[...] = jnp.dot(subT, up_ref[...], preferred_element_type=f32)
    # --- camera branch: mean over vertices then (3, C) @ (C, 1) ---
    xm = jnp.sum(x, axis=1, keepdims=True) * (1.0 / V_SUB)            # (C, 1)
    cam_ref[...] = jnp.dot(cw_ref[...], xm, preferred_element_type=f32) + cb_ref[...]


def graph_cnn_fused(p, img_flat):
    bb = img_flat.shape[0]
    C = NUM_CHANNELS

    def full(shape):
        return pl.BlockSpec(shape, lambda b, _s=len(shape): (0,) * _s)

    in_specs = [
        pl.BlockSpec((None, IMG_C, HW), lambda b: (b, 0, 0)),   # per-batch image slab
        full((ENC_C, IMG_C)), full((ENC_C, 1)),
        full((FEAT, ENC_C)), full((FEAT, 1)),
        full((3, V_SUB)),
        full((C, 3)), full((C, FEAT)), full((C, 1)),
        full((V_SUB, V_SUB)),
        full((NUM_LAYERS, C, C)), full((NUM_LAYERS, C, 1)),
        full((3, C)), full((3, 1)),
        full((3, C)), full((3, 1)),
        full((V_SUB, V_FULL)),
    ]
    out_specs = [
        pl.BlockSpec((None, 3, V_SUB), lambda b: (b, 0, 0)),
        pl.BlockSpec((None, 3, V_FULL), lambda b: (b, 0, 0)),
        pl.BlockSpec((None, 3, 1), lambda b: (b, 0, 0)),
    ]
    out_shape = (jax.ShapeDtypeStruct((bb, 3, V_SUB), jnp.float32),
                 jax.ShapeDtypeStruct((bb, 3, V_FULL), jnp.float32),
                 jax.ShapeDtypeStruct((bb, 3, 1), jnp.float32))
    return pl.pallas_call(
        _graph_cnn_kernel,
        out_shape=out_shape,
        grid=(bb,),
        in_specs=in_specs,
        out_specs=out_specs,
        compiler_params=pltpu.CompilerParams(dimension_semantics=("parallel",)),
    )(img_flat,
      p["enc_conv_wT"], p["enc_conv_b"], p["enc_fc_wT"], p["enc_fc_b"],
      p["ref_vertices_T"], p["g_lin_wT_ref"], p["g_lin_wT_feat"], p["g_lin_b"],
      p["adjmat_T"], p["g_conv_wT"], p["g_conv_b"],
      p["shape_wT"], p["shape_b"], p["cam_wT"], p["cam_b"], p["upsample_T"])


# ============ kernel 2: fused 3-layer SMPLParamRegressor MLP ================
def _regressor_kernel(x_ref, w1_ref, b1_ref, w2_ref, b2_ref, w3_ref, b3_ref, o_ref):
    f32 = jnp.float32
    bf16 = jnp.bfloat16
    h = jnp.dot(x_ref[...].astype(bf16), w1_ref[...], preferred_element_type=f32)
    h = jnp.maximum(h + b1_ref[...], 0.0)
    h = jnp.dot(h.astype(bf16), w2_ref[...], preferred_element_type=f32)
    h = jnp.maximum(h + b2_ref[...], 0.0)
    o_ref[...] = jnp.dot(h, w3_ref[...], preferred_element_type=f32) + b3_ref[...]


def _det3(m):
    return (m[..., 0, 0] * (m[..., 1, 1] * m[..., 2, 2] - m[..., 1, 2] * m[..., 2, 1])
            - m[..., 0, 1] * (m[..., 1, 0] * m[..., 2, 2] - m[..., 1, 2] * m[..., 2, 0])
            + m[..., 0, 2] * (m[..., 1, 0] * m[..., 2, 1] - m[..., 1, 1] * m[..., 2, 0]))


def smpl_param_regressor(p, x_flat):
    bb = x_flat.shape[0]
    out = pl.pallas_call(
        _regressor_kernel,
        out_shape=jax.ShapeDtypeStruct((bb, OUT_DIM), jnp.float32),
    )(x_flat.astype(jnp.float32),
      p["r_w1a"], p["r_b1_eff"], p["r_w2"], p["r_b2"], p["r_w3"], p["r_b3"])
    rot_raw = out[:, :N_JOINTS * 9].reshape(bb * N_JOINTS, 3, 3)
    betas = out[:, N_JOINTS * 9:]
    # TODO(synk): batched 3x3 SVD has no Pallas equivalent; done with jnp.linalg.svd (tiny).
    Um, _, Vh = jnp.linalg.svd(rot_raw)
    sign = jnp.where(_det3(jnp.matmul(Um, Vh)) < 0.0, -1.0, 1.0)       # proper rotations
    Um = Um.at[:, :, 2].multiply(sign[:, None])
    rotmat = jnp.matmul(Um, Vh).reshape(bb, N_JOINTS, 3, 3)
    return rotmat, betas


# ============== kernel 3: SMPL blend-shapes + joint regression ==============
# Joint regression is folded at init into J = J_template + betas @ J_dirs (exact).
def _smpl_blend_kernel(betas_ref, pose_ref, sdirs_ref, pdirs_ref, vtmpl_ref,
                       jtmpl_ref, jdirs_ref, vposed_ref, joints_ref):
    f32 = jnp.float32
    betas = betas_ref[...]
    v = vtmpl_ref[...] + jnp.dot(betas, sdirs_ref[...], preferred_element_type=f32)
    v = v + jnp.dot(pose_ref[...], pdirs_ref[...], preferred_element_type=f32)
    vposed_ref[...] = v                                                # (B, 3*V_FULL)
    joints_ref[...] = jtmpl_ref[...] + jnp.dot(betas, jdirs_ref[...],
                                               preferred_element_type=f32)


# ================= kernel 4: LBS skinning + 4x4 apply (per batch) ===========
def _lbs_kernel(a_ref, vp_ref, wT_ref, out_ref):
    # T16[i*4+j, v] = sum_k A[k,i,j] * W[v,k]   (lane-dense over V_FULL)
    T16 = jnp.dot(a_ref[...], wT_ref[...], preferred_element_type=jnp.float32)  # (16, V)
    vp = vp_ref[...]                                                             # (3, V)
    vx, vy, vz = vp[0:1, :], vp[1:2, :], vp[2:3, :]
    rows = []
    for i in range(3):
        rows.append(T16[4 * i + 0:4 * i + 1, :] * vx
                    + T16[4 * i + 1:4 * i + 2, :] * vy
                    + T16[4 * i + 2:4 * i + 3, :] * vz
                    + T16[4 * i + 3:4 * i + 4, :])
    out_ref[...] = jnp.concatenate(rows, axis=0)                                 # (3, V)


# ----------------------------- parameter init -------------------------------
def init_params(key):
    keys = jax.random.split(key, 48)
    kit = iter(keys)

    def nrm(shape, scale=0.05):
        return (scale * jax.random.normal(next(kit), shape)).astype(jnp.float32)

    p = {}
    # ---- mesh: template vertices, adjacency, upsampling (stored transposed) ----
    ref_vertices = nrm((V_SUB, 3), 0.5)
    p["ref_vertices_T"] = ref_vertices.T                               # (3, V_SUB)
    eye = jnp.eye(V_SUB, dtype=jnp.float32)
    ring = jnp.roll(eye, 1, axis=1) + jnp.roll(eye, -1, axis=1) + eye
    adj = ring / ring.sum(axis=1, keepdims=True)
    p["adjmat_T"] = adj.T
    rows = jnp.arange(V_FULL)
    U = jnp.zeros((V_FULL, V_SUB), jnp.float32)
    U = U.at[rows, rows % V_SUB].add(0.5)
    U = U.at[rows, (rows + 1) % V_SUB].add(0.5)
    p["upsample_T"] = U.T                                              # (V_SUB, V_FULL)
    # ---- GraphCNN image encoder (weights stored transposed, biases as columns) ----
    p["enc_conv_wT"] = nrm((ENC_C, IMG_C))
    p["enc_conv_b"] = jnp.zeros((ENC_C, 1), jnp.float32)
    p["enc_fc_wT"] = nrm((FEAT, ENC_C))
    p["enc_fc_b"] = jnp.zeros((FEAT, 1), jnp.float32)
    # ---- GraphCNN graph layers (g_lin split into ref / image-feature row blocks) ----
    p["g_lin_wT_ref"] = nrm((NUM_CHANNELS, 3))
    p["g_lin_wT_feat"] = nrm((NUM_CHANNELS, FEAT))
    p["g_lin_b"] = jnp.zeros((NUM_CHANNELS, 1), jnp.float32)
    p["g_conv_wT"] = jnp.stack(
        [nrm((NUM_CHANNELS, NUM_CHANNELS)) for _ in range(NUM_LAYERS)])
    p["g_conv_b"] = jnp.zeros((NUM_LAYERS, NUM_CHANNELS, 1), jnp.float32)
    p["shape_wT"] = nrm((3, NUM_CHANNELS))
    p["shape_b"] = jnp.zeros((3, 1), jnp.float32)
    p["cam_wT"] = nrm((3, NUM_CHANNELS))
    p["cam_b"] = jnp.zeros((3, 1), jnp.float32)
    # ---- SMPLParamRegressor: layer-1 weight split into [sub-vertex | ref-vertex]
    #      row blocks; the (constant) ref-vertex half is folded into the bias.
    #      NOTE: rows are in (coord, vertex) order to match the lane-dense (B,3,V)
    #      GraphCNN output; real checkpoints would need a row permutation.
    w1a = nrm((3 * V_SUB, HID))
    w1b = nrm((3 * V_SUB, HID))
    b1 = jnp.zeros((1, HID), jnp.float32)
    ref_flat = p["ref_vertices_T"].reshape(1, 3 * V_SUB)
    p["r_w1a"] = w1a.astype(jnp.bfloat16)
    p["r_b1_eff"] = (b1 + ref_flat @ w1b).astype(jnp.float32)
    p["r_w2"] = nrm((HID, HID)).astype(jnp.bfloat16)
    p["r_b2"] = jnp.zeros((1, HID), jnp.float32)
    p["r_w3"] = nrm((HID, OUT_DIM))
    p["r_b3"] = jnp.zeros((1, OUT_DIM), jnp.float32)
    # ---- SMPL body model (blendshapes stored coord-major: index = c*V_FULL + v) ----
    v_template = nrm((V_FULL, 3), 0.5)
    p["v_template_cm"] = v_template.T.reshape(1, 3 * V_FULL)
    p["shapedirs_CT"] = nrm((N_BETAS, 3 * V_FULL), 0.01)
    p["posedirs_CT"] = nrm(((N_JOINTS - 1) * 9, 3 * V_FULL), 0.01)
    J_regressor = jax.nn.softmax(nrm((N_JOINTS, V_FULL), 1.0), axis=-1)
    p["lbs_weights_T"] = jax.nn.softmax(nrm((V_FULL, N_JOINTS), 1.0), axis=-1).T
    # exact linear rewrite of the joint regressor: J = J_template + betas @ J_dirs
    p["J_template_flat"] = (J_regressor @ v_template).reshape(1, N_JOINTS * 3)
    sd = p["shapedirs_CT"].reshape(N_BETAS, 3, V_FULL)
    p["J_dirs"] = jnp.einsum("kcv,jv->kjc", sd, J_regressor).reshape(
        N_BETAS, N_JOINTS * 3)
    return p


# ---------------------------- SMPL (kernels 3 + 4) ---------------------------
def rigid_transforms(rotmat, J):
    # TODO(synk): 24-joint sequential 4x4 kinematic chain kept in plain JAX (tiny).
    bb = rotmat.shape[0]
    bottom = jnp.broadcast_to(jnp.array([0.0, 0.0, 0.0, 1.0], jnp.float32),
                              (bb, 1, 4))

    def make_T(R, t):
        return jnp.concatenate(
            [jnp.concatenate([R, t[:, :, None]], axis=2), bottom], axis=1)

    G = [make_T(rotmat[:, 0], J[:, 0])]
    for i in range(1, N_JOINTS):
        par = SMPL_PARENTS[i]
        T_local = make_T(rotmat[:, i], J[:, i] - J[:, par])
        G.append(jnp.einsum("bij,bjk->bik", G[par], T_local))
    G = jnp.stack(G, axis=1)                                       # (B, 24, 4, 4)
    J_homo = jnp.concatenate([J, jnp.zeros((bb, N_JOINTS, 1), jnp.float32)], -1)
    init_bone = jnp.einsum("bkij,bkj->bki", G, J_homo)             # (B, 24, 4)
    A = G - jnp.concatenate(
        [jnp.zeros((bb, N_JOINTS, 4, 3), jnp.float32), init_bone[..., None]], -1)
    return A


def smpl(p, rotmat, betas):
    bb = rotmat.shape[0]
    ident = jnp.eye(3, dtype=jnp.float32)
    pose_feat = (rotmat[:, 1:] - ident).reshape(bb, (N_JOINTS - 1) * 9)
    # --- blendshapes + joints, lane-dense (B, 3*V_FULL) / (B, 72) outputs ---
    v_posed_cm, j_flat = pl.pallas_call(
        _smpl_blend_kernel,
        out_shape=(jax.ShapeDtypeStruct((bb, 3 * V_FULL), jnp.float32),
                   jax.ShapeDtypeStruct((bb, N_JOINTS * 3), jnp.float32)),
    )(betas.astype(jnp.float32), pose_feat.astype(jnp.float32),
      p["shapedirs_CT"], p["posedirs_CT"], p["v_template_cm"],
      p["J_template_flat"], p["J_dirs"])
    J = j_flat.reshape(bb, N_JOINTS, 3)
    # --- kinematic chain (plain JAX) ---
    A = rigid_transforms(rotmat, J)                                 # (B, 24, 4, 4)
    A_perm = A.transpose(0, 2, 3, 1).reshape(bb, 16, N_JOINTS)      # tiny permute
    v_posed_3 = v_posed_cm.reshape(bb, 3, V_FULL)
    # --- LBS + 4x4 apply, fused, lane-dense (B, 3, V_FULL) output ---
    verts_T = pl.pallas_call(
        _lbs_kernel,
        out_shape=jax.ShapeDtypeStruct((bb, 3, V_FULL), jnp.float32),
        grid=(bb,),
        in_specs=[pl.BlockSpec((None, 16, N_JOINTS), lambda b: (b, 0, 0)),
                  pl.BlockSpec((None, 3, V_FULL), lambda b: (b, 0, 0)),
                  pl.BlockSpec((N_JOINTS, V_FULL), lambda b: (0, 0))],
        out_specs=pl.BlockSpec((None, 3, V_FULL), lambda b: (b, 0, 0)),
        compiler_params=pltpu.CompilerParams(dimension_semantics=("parallel",)),
    )(A_perm, v_posed_3, p["lbs_weights_T"])
    return verts_T.transpose(0, 2, 1)                               # (B, V_FULL, 3)


# ------------------------------- CMR forward --------------------------------
def cmr_forward(p, image):
    bb = image.shape[0]
    img_flat = image.astype(jnp.float32).reshape(bb, IMG_C, HW)     # free reshape
    sub_T, full_T, cam_col = graph_cnn_fused(p, img_flat)
    camera = cam_col[:, :, 0]                                       # (B, 3)
    pred_vertices = full_T.transpose(0, 2, 1)                       # (B, V_FULL, 3)
    # detach -> stop_gradient; ref-vertex concat is folded into the regressor bias
    x_flat = jax.lax.stop_gradient(sub_T).reshape(bb, 3 * V_SUB)
    pred_rotmat, pred_betas = smpl_param_regressor(p, x_flat)
    pred_vertices_smpl = smpl(p, pred_rotmat, pred_betas)
    return pred_vertices, pred_vertices_smpl, camera, pred_rotmat, pred_betas


cmr_forward_jit = jax.jit(cmr_forward)


if __name__ == "__main__":
    key = jax.random.PRNGKey(0)
    pkey, ikey = jax.random.split(key)
    params = init_params(pkey)
    image = jax.random.normal(ikey, (B, IMG_C, IMG_H, IMG_W), jnp.float32)

    outs = cmr_forward_jit(params, image)
    outs = jax.block_until_ready(outs)
    pred_vertices, pred_vertices_smpl, camera, pred_rotmat, pred_betas = outs

    assert pred_vertices.shape == (B, V_FULL, 3)
    assert pred_vertices_smpl.shape == (B, V_FULL, 3)
    assert camera.shape == (B, 3)
    assert pred_rotmat.shape == (B, N_JOINTS, 3, 3)
    assert pred_betas.shape == (B, N_BETAS)
    assert all(bool(jnp.all(jnp.isfinite(o))) for o in outs)
    # rotations should be proper (det = +1) after the sign fix
    dets = _det3(pred_rotmat.reshape(-1, 3, 3))
    assert bool(jnp.all(jnp.abs(dets - 1.0) < 1e-2))
    print("KERNEL_OK")
</pallas_src>

<mosaic_0001>
module attributes {stable_mosaic.version = 11 : i64} {
  func.func @_graph_cnn_kernel(%arg0: i32, %arg1: memref<1x3x256xf32, #tpu.memory_space<vmem>>, %arg2: memref<16x3xf32, #tpu.memory_space<vmem>>, %arg3: memref<16x1xf32, #tpu.memory_space<vmem>>, %arg4: memref<64x16xf32, #tpu.memory_space<vmem>>, %arg5: memref<64x1xf32, #tpu.memory_space<vmem>>, %arg6: memref<3x128xf32, #tpu.memory_space<vmem>>, %arg7: memref<32x3xf32, #tpu.memory_space<vmem>>, %arg8: memref<32x64xf32, #tpu.memory_space<vmem>>, %arg9: memref<32x1xf32, #tpu.memory_space<vmem>>, %arg10: memref<128x128xf32, #tpu.memory_space<vmem>>, %arg11: memref<2x32x32xf32, #tpu.memory_space<vmem>>, %arg12: memref<2x32x1xf32, #tpu.memory_space<vmem>>, %arg13: memref<3x32xf32, #tpu.memory_space<vmem>>, %arg14: memref<3x1xf32, #tpu.memory_space<vmem>>, %arg15: memref<3x32xf32, #tpu.memory_space<vmem>>, %arg16: memref<3x1xf32, #tpu.memory_space<vmem>>, %arg17: memref<128x256xf32, #tpu.memory_space<vmem>>, %arg18: memref<1x3x128xf32, #tpu.memory_space<vmem>>, %arg19: memref<1x3x256xf32, #tpu.memory_space<vmem>>, %arg20: memref<1x3x1xf32, #tpu.memory_space<vmem>>) attributes {dimension_semantics = [#tpu.dimension_semantics<parallel>], iteration_bounds = array<i64: 2>, scalar_prefetch = 0 : i64, scratch_operands = 0 : i64, tpu.core_type = #tpu.core_type<tc>, window_params = [{transform_indices = @transform_0, window_bounds = array<i64: 1, 3, 256>}, {pipeline_mode = #tpu.pipeline_mode<synchronous>, transform_indices = @transform_1, window_bounds = array<i64: 16, 3>}, {pipeline_mode = #tpu.pipeline_mode<synchronous>, transform_indices = @transform_2, window_bounds = array<i64: 16, 1>}, {pipeline_mode = #tpu.pipeline_mode<synchronous>, transform_indices = @transform_3, window_bounds = array<i64: 64, 16>}, {pipeline_mode = #tpu.pipeline_mode<synchronous>, transform_indices = @transform_4, window_bounds = array<i64: 64, 1>}, {pipeline_mode = #tpu.pipeline_mode<synchronous>, transform_indices = @transform_5, window_bounds = array<i64: 3, 128>}, {pipeline_mode = #tpu.pipeline_mode<synchronous>, transform_indices = @transform_6, window_bounds = array<i64: 32, 3>}, {pipeline_mode = #tpu.pipeline_mode<synchronous>, transform_indices = @transform_7, window_bounds = array<i64: 32, 64>}, {pipeline_mode = #tpu.pipeline_mode<synchronous>, transform_indices = @transform_8, window_bounds = array<i64: 32, 1>}, {pipeline_mode = #tpu.pipeline_mode<synchronous>, transform_indices = @transform_9, window_bounds = array<i64: 128, 128>}, {pipeline_mode = #tpu.pipeline_mode<synchronous>, transform_indices = @transform_10, window_bounds = array<i64: 2, 32, 32>}, {pipeline_mode = #tpu.pipeline_mode<synchronous>, transform_indices = @transform_11, window_bounds = array<i64: 2, 32, 1>}, {pipeline_mode = #tpu.pipeline_mode<synchronous>, transform_indices = @transform_12, window_bounds = array<i64: 3, 32>}, {pipeline_mode = #tpu.pipeline_mode<synchronous>, transform_indices = @transform_13, window_bounds = array<i64: 3, 1>}, {pipeline_mode = #tpu.pipeline_mode<synchronous>, transform_indices = @transform_14, window_bounds = array<i64: 3, 32>}, {pipeline_mode = #tpu.pipeline_mode<synchronous>, transform_indices = @transform_15, window_bounds = array<i64: 3, 1>}, {pipeline_mode = #tpu.pipeline_mode<synchronous>, transform_indices = @transform_16, window_bounds = array<i64: 128, 256>}, {transform_indices = @transform_17, window_bounds = array<i64: 1, 3, 128>}, {transform_indices = @transform_18, window_bounds = array<i64: 1, 3, 256>}, {transform_indices = @transform_19, window_bounds = array<i64: 1, 3, 1>}]} {
    %c0 = arith.constant 0 : index
    %c0_0 = arith.constant 0 : index
    %0 = vector.load %arg2[%c0, %c0_0] : memref<16x3xf32, #tpu.memory_space<vmem>>, vector<16x3xf32>
    %c0_1 = arith.constant 0 : index
    %c0_2 = arith.constant 0 : index
    %c0_3 = arith.constant 0 : index
    %1 = vector.load %arg1[%c0_1, %c0_2, %c0_3] : memref<1x3x256xf32, #tpu.memory_space<vmem>>, vector<1x3x256xf32>
    %2 = vector.shape_cast %1 : vector<1x3x256xf32> to vector<3x256xf32>
    %cst = arith.constant dense<0.000000e+00> : vector<16x256xf32>
    %3 = tpu.matmul %0, %2, %cst {dimension_numbers = #tpu.dot_dimension_numbers<[1], [0], [0], [1], [0, 0, 1, 1], [], []>} : vector<16x3xf32>, vector<3x256xf32>, vector<16x256xf32> -> vector<16x256xf32>
    %c0_4 = arith.constant 0 : index
    %c0_5 = arith.constant 0 : index
    %4 = vector.load %arg3[%c0_4, %c0_5] : memref<16x1xf32, #tpu.memory_space<vmem>>, vector<16x1xf32>
    %5 = vector.broadcast %4 : vector<16x1xf32> to vector<16x256xf32>
    %6 = arith.addf %3, %5 : vector<16x256xf32>
    %cst_6 = arith.constant 0.000000e+00 : f32
    %7 = vector.broadcast %cst_6 : f32 to vector<16x256xf32>
    %8 = arith.maximumf %6, %7 : vector<16x256xf32>
    %cst_7 = arith.constant dense<0.000000e+00> : vector<16xf32>
    %9 = vector.multi_reduction <add>, %8, %cst_7 [1] : vector<16x256xf32> to vector<16xf32>
    %10 = vector.shape_cast %9 : vector<16xf32> to vector<16x1xf32>
    %cst_8 = arith.constant 3.906250e-03 : f32
    %11 = vector.broadcast %cst_8 : f32 to vector<16x1xf32>
    %12 = arith.mulf %10, %11 : vector<16x1xf32>
    %c0_9 = arith.constant 0 : index
    %c0_10 = arith.constant 0 : index
    %13 = vector.load %arg4[%c0_9, %c0_10] : memref<64x16xf32, #tpu.memory_space<vmem>>, vector<64x16xf32>
    %cst_11 = arith.constant dense<0.000000e+00> : vector<64x1xf32>
    %14 = tpu.matmul %13, %12, %cst_11 {dimension_numbers = #tpu.dot_dimension_numbers<[1], [0], [0], [1], [0, 0, 1, 1], [], []>} : vector<64x16xf32>, vector<16x1xf32>, vector<64x1xf32> -> vector<64x1xf32>
    %c0_12 = arith.constant 0 : index
    %c0_13 = arith.constant 0 : index
    %15 = vector.load %arg5[%c0_12, %c0_13] : memref<64x1xf32, #tpu.memory_space<vmem>>, vector<64x1xf32>
    %16 = arith.addf %14, %15 : vector<64x1xf32>
    %cst_14 = arith.constant 0.000000e+00 : f32
    %17 = vector.broadcast %cst_14 : f32 to vector<64x1xf32>
    %18 = arith.maximumf %16, %17 : vector<64x1xf32>
    %c0_15 = arith.constant 0 : index
    %c0_16 = arith.constant 0 : index
    %19 = vector.load %arg7[%c0_15, %c0_16] : memref<32x3xf32, #tpu.memory_space<vmem>>, vector<32x3xf32>
    %c0_17 = arith.constant 0 : index
    %c0_18 = arith.constant 0 : index
    %20 = vector.load %arg6[%c0_17, %c0_18] : memref<3x128xf32, #tpu.memory_space<vmem>>, vector<3x128xf32>
    %cst_19 = arith.constant dense<0.000000e+00> : vector<32x128xf32>
    %21 = tpu.matmul %19, %20, %cst_19 {dimension_numbers = #tpu.dot_dimension_numbers<[1], [0], [0], [1], [0, 0, 1, 1], [], []>} : vector<32x3xf32>, vector<3x128xf32>, vector<32x128xf32> -> vector<32x128xf32>
    %c0_20 = arith.constant 0 : index
    %c0_21 = arith.constant 0 : index
    %22 = vector.load %arg8[%c0_20, %c0_21] : memref<32x64xf32, #tpu.memory_space<vmem>>, vector<32x64xf32>
    %cst_22 = arith.constant dense<0.000000e+00> : vector<32x1xf32>
    %23 = tpu.matmul %22, %18, %cst_22 {dimension_numbers = #tpu.dot_dimension_numbers<[1], [0], [0], [1], [0, 0, 1, 1], [], []>} : vector<32x64xf32>, vector<64x1xf32>, vector<32x1xf32> -> vector<32x1xf32>
    %24 = vector.broadcast %23 : vector<32x1xf32> to vector<32x128xf32>
    %25 = arith.addf %21, %24 : vector<32x128xf32>
    %c0_23 = arith.constant 0 : index
    %c0_24 = arith.constant 0 : index
    %26 = vector.load %arg9[%c0_23, %c0_24] : memref<32x1xf32, #tpu.memory_space<vmem>>, vector<32x1xf32>
    %27 = vector.broadcast %26 : vector<32x1xf32> to vector<32x128xf32>
    %28 = arith.addf %25, %27 : vector<32x128xf32>
    %cst_25 = arith.constant 0.000000e+00 : f32
    %29 = vector.broadcast %cst_25 : f32 to vector<32x128xf32>
    %30 = arith.maximumf %28, %29 : vector<32x128xf32>
    %c0_26 = arith.constant 0 : index
    %c0_27 = arith.constant 0 : index
    %31 = vector.load %arg10[%c0_26, %c0_27] : memref<128x128xf32, #tpu.memory_space<vmem>>, vector<128x128xf32>
    %32 = arith.truncf %31 : vector<128x128xf32> to vector<128x128xbf16>
    %c0_28 = arith.constant 0 : index
    %c0_29 = arith.constant 0 : index
    %c0_30 = arith.constant 0 : index
    %33 = vector.load %arg11[%c0_28, %c0_29, %c0_30] : memref<2x32x32xf32, #tpu.memory_space<vmem>>, vector<1x32x32xf32>
    %34 = vector.shape_cast %33 : vector<1x32x32xf32> to vector<32x32xf32>
    %35 = arith.truncf %34 : vector<32x32xf32> to vector<32x32xbf16>
    %36 = arith.truncf %30 : vector<32x128xf32> to vector<32x128xbf16>
    %cst_31 = arith.constant dense<0.000000e+00> : vector<32x128xf32>
    %37 = tpu.matmul %35, %36, %cst_31 {dimension_numbers = #tpu.dot_dimension_numbers<[1], [0], [0], [1], [0, 0, 1, 1], [], []>} : vector<32x32xbf16>, vector<32x128xbf16>, vector<32x128xf32> -> vector<32x128xf32>
    %38 = arith.truncf %37 : vector<32x128xf32> to vector<32x128xbf16>
    %cst_32 = arith.constant dense<0.000000e+00> : vector<32x128xf32>
    %39 = tpu.matmul %38, %32, %cst_32 {dimension_numbers = #tpu.dot_dimension_numbers<[1], [0], [0], [1], [0, 0, 1, 1], [], []>} : vector<32x128xbf16>, vector<128x128xbf16>, vector<32x128xf32> -> vector<32x128xf32>
    %c0_33 = arith.constant 0 : index
    %c0_34 = arith.constant 0 : index
    %c0_35 = arith.constant 0 : index
    %40 = vector.load %arg12[%c0_33, %c0_34, %c0_35] : memref<2x32x1xf32, #tpu.memory_space<vmem>>, vector<1x32x1xf32>
    %41 = vector.shape_cast %40 : vector<1x32x1xf32> to vector<32x1xf32>
    %42 = vector.broadcast %41 : vector<32x1xf32> to vector<32x128xf32>
    %43 = arith.addf %39, %42 : vector<32x128xf32>
    %cst_36 = arith.constant 0.000000e+00 : f32
    %44 = vector.broadcast %cst_36 : f32 to vector<32x128xf32>
    %45 = arith.maximumf %43, %44 : vector<32x128xf32>
    %c1 = arith.constant 1 : index
    %c0_37 = arith.constant 0 : index
    %c0_38 = arith.constant 0 : index
    %46 = vector.load %arg11[%c1, %c0_37, %c0_38] : memref<2x32x32xf32, #tpu.memory_space<vmem>>, vector<1x32x32xf32>
    %47 = vector.shape_cast %46 : vector<1x32x32xf32> to vector<32x32xf32>
    %48 = arith.truncf %47 : vector<32x32xf32> to vector<32x32xbf16>
    %49 = arith.truncf %45 : vector<32x128xf32> to vector<32x128xbf16>
    %cst_39 = arith.constant dense<0.000000e+00> : vector<32x128xf32>
    %50 = tpu.matmul %48, %49, %cst_39 {dimension_numbers = #tpu.dot_dimension_numbers<[1], [0], [0], [1], [0, 0, 1, 1], [], []>} : vector<32x32xbf16>, vector<32x128xbf16>, vector<32x128xf32> -> vector<32x128xf32>
    %51 = arith.truncf %50 : vector<32x128xf32> to vector<32x128xbf16>
    %cst_40 = arith.constant dense<0.000000e+00> : vector<32x128xf32>
    %52 = tpu.matmul %51, %32, %cst_40 {dimension_numbers = #tpu.dot_dimension_numbers<[1], [0], [0], [1], [0, 0, 1, 1], [], []>} : vector<32x128xbf16>, vector<128x128xbf16>, vector<32x128xf32> -> vector<32x128xf32>
    %c1_41 = arith.constant 1 : index
    %c0_42 = arith.constant 0 : index
    %c0_43 = arith.constant 0 : index
    %53 = vector.load %arg12[%c1_41, %c0_42, %c0_43] : memref<2x32x1xf32, #tpu.memory_space<vmem>>, vector<1x32x1xf32>
    %54 = vector.shape_cast %53 : vector<1x32x1xf32> to vector<32x1xf32>
    %55 = vector.broadcast %54 : vector<32x1xf32> to vector<32x128xf32>
    %56 = arith.addf %52, %55 : vector<32x128xf32>
    %cst_44 = arith.constant 0.000000e+00 : f32
    %57 = vector.broadcast %cst_44 : f32 to vector<32x128xf32>
    %58 = arith.maximumf %56, %57 : vector<32x128xf32>
    %c0_45 = arith.constant 0 : index
    %c0_46 = arith.constant 0 : index
    %59 = vector.load %arg13[%c0_45, %c0_46] : memref<3x32xf32, #tpu.memory_space<vmem>>, vector<3x32xf32>
    %cst_47 = arith.constant dense<0.000000e+00> : vector<3x128xf32>
    %60 = tpu.matmul %59, %58, %cst_47 {dimension_numbers = #tpu.dot_dimension_numbers<[1], [0], [0], [1], [0, 0, 1, 1], [], []>} : vector<3x32xf32>, vector<32x128xf32>, vector<3x128xf32> -> vector<3x128xf32>
    %cst_48 = arith.constant dense<0.000000e+00> : vector<3x128xf32>
    %61 = tpu.matmul %60, %31, %cst_48 {dimension_numbers = #tpu.dot_dimension_numbers<[1], [0], [0], [1], [0, 0, 1, 1], [], []>} : vector<3x128xf32>, vector<128x128xf32>, vector<3x128xf32> -> vector<3x128xf32>
    %c0_49 = arith.constant 0 : index
    %c0_50 = arith.constant 0 : index
    %62 = vector.load %arg14[%c0_49, %c0_50] : memref<3x1xf32, #tpu.memory_space<vmem>>, vector<3x1xf32>
    %63 = vector.broadcast %62 : vector<3x1xf32> to vector<3x128xf32>
    %64 = arith.addf %61, %63 : vector<3x128xf32>
    %c0_51 = arith.constant 0 : index
    %c0_52 = arith.constant 0 : index
    %c0_53 = arith.constant 0 : index
    %65 = vector.load %arg18[%c0_51, %c0_52, %c0_53] : memref<1x3x128xf32, #tpu.memory_space<vmem>>, vector<1x3x128xf32>
    %66 = vector.shape_cast %65 : vector<1x3x128xf32> to vector<3x128xf32>
    %67 = vector.shape_cast %64 : vector<3x128xf32> to vector<1x3x128xf32>
    tpu.vector_store %arg18[%c0_51, %c0_52, %c0_53], %67 {strides = array<i32>} : memref<1x3x128xf32, #tpu.memory_space<vmem>>, vector<1x3x128xf32>,
    %c0_54 = arith.constant 0 : index
    %c0_55 = arith.constant 0 : index
    %68 = vector.load %arg17[%c0_54, %c0_55] : memref<128x256xf32, #tpu.memory_space<vmem>>, vector<128x256xf32>
    %cst_56 = arith.constant dense<0.000000e+00> : vector<3x256xf32>
    %69 = tpu.matmul %64, %68, %cst_56 {dimension_numbers = #tpu.dot_dimension_numbers<[1], [0], [0], [1], [0, 0, 1, 1], [], []>} : vector<3x128xf32>, vector<128x256xf32>, vector<3x256xf32> -> vector<3x256xf32>
    %c0_57 = arith.constant 0 : index
    %c0_58 = arith.constant 0 : index
    %c0_59 = arith.constant 0 : index
    %70 = vector.load %arg19[%c0_57, %c0_58, %c0_59] : memref<1x3x256xf32, #tpu.memory_space<vmem>>, vector<1x3x256xf32>
    %71 = vector.shape_cast %70 : vector<1x3x256xf32> to vector<3x256xf32>
    %72 = vector.shape_cast %69 : vector<3x256xf32> to vector<1x3x256xf32>
    tpu.vector_store %arg19[%c0_57, %c0_58, %c0_59], %72 {strides = array<i32>} : memref<1x3x256xf32, #tpu.memory_space<vmem>>, vector<1x3x256xf32>,
    %cst_60 = arith.constant dense<0.000000e+00> : vector<32xf32>
    %73 = vector.multi_reduction <add>, %58, %cst_60 [1] : vector<32x128xf32> to vector<32xf32>
    %74 = vector.shape_cast %73 : vector<32xf32> to vector<32x1xf32>
    %cst_61 = arith.constant 7.812500e-03 : f32
    %75 = vector.broadcast %cst_61 : f32 to vector<32x1xf32>
    %76 = arith.mulf %74, %75 : vector<32x1xf32>
    %c0_62 = arith.constant 0 : index
    %c0_63 = arith.constant 0 : index
    %77 = vector.load %arg15[%c0_62, %c0_63] : memref<3x32xf32, #tpu.memory_space<vmem>>, vector<3x32xf32>
    %cst_64 = arith.constant dense<0.000000e+00> : vector<3x1xf32>
    %78 = tpu.matmul %77, %76, %cst_64 {dimension_numbers = #tpu.dot_dimension_numbers<[1], [0], [0], [1], [0, 0, 1, 1], [], []>} : vector<3x32xf32>, vector<32x1xf32>, vector<3x1xf32> -> vector<3x1xf32>
    %c0_65 = arith.constant 0 : index
    %c0_66 = arith.constant 0 : index
    %79 = vector.load %arg16[%c0_65, %c0_66] : memref<3x1xf32, #tpu.memory_space<vmem>>, vector<3x1xf32>
    %80 = arith.addf %78, %79 : vector<3x1xf32>
    %c0_67 = arith.constant 0 : index
    %c0_68 = arith.constant 0 : index
    %c0_69 = arith.constant 0 : index
    %81 = vector.load %arg20[%c0_67, %c0_68, %c0_69] : memref<1x3x1xf32, #tpu.memory_space<vmem>>, vector<1x3x1xf32>
    %82 = vector.shape_cast %81 : vector<1x3x1xf32> to vector<3x1xf32>
    %83 = vector.shape_cast %80 : vector<3x1xf32> to vector<1x3x1xf32>
    tpu.vector_store %arg20[%c0_67, %c0_68, %c0_69], %83 {strides = array<i32>} : memref<1x3x1xf32, #tpu.memory_space<vmem>>, vector<1x3x1xf32>,
    return
  }
  func.func @transform_0(%arg0: i32) -> (i32, i32, i32) {
    %c0_i32 = arith.constant 0 : i32
    %c0_i32_0 = arith.constant 0 : i32
    %c0_i32_1 = arith.constant 0 : i32
    return %arg0, %c0_i32, %c0_i32_0 : i32, i32, i32
  }
  func.func @transform_1(%arg0: i32) -> (i32, i32) {
    %c0_i32 = arith.constant 0 : i32
    %c0_i32_0 = arith.constant 0 : i32
    %c0_i32_1 = arith.constant 0 : i32
    return %c0_i32, %c0_i32_0 : i32, i32
  }
  func.func @transform_2(%arg0: i32) -> (i32, i32) {
    %c0_i32 = arith.constant 0 : i32
    %c0_i32_0 = arith.constant 0 : i32
    %c0_i32_1 = arith.constant 0 : i32
    return %c0_i32, %c0_i32_0 : i32, i32
  }
  func.func @transform_3(%arg0: i32) -> (i32, i32) {
    %c0_i32 = arith.constant 0 : i32
    %c0_i32_0 = arith.constant 0 : i32
    %c0_i32_1 = arith.constant 0 : i32
    return %c0_i32, %c0_i32_0 : i32, i32
  }
  func.func @transform_4(%arg0: i32) -> (i32, i32) {
    %c0_i32 = arith.constant 0 : i32
    %c0_i32_0 = arith.constant 0 : i32
    %c0_i32_1 = arith.constant 0 : i32
    return %c0_i32, %c0_i32_0 : i32, i32
  }
  func.func @transform_5(%arg0: i32) -> (i32, i32) {
    %c0_i32 = arith.constant 0 : i32
    %c0_i32_0 = arith.constant 0 : i32
    %c0_i32_1 = arith.constant 0 : i32
    return %c0_i32, %c0_i32_0 : i32, i32
  }
  func.func @transform_6(%arg0: i32) -> (i32, i32) {
    %c0_i32 = arith.constant 0 : i32
    %c0_i32_0 = arith.constant 0 : i32
    %c0_i32_1 = arith.constant 0 : i32
    return %c0_i32, %c0_i32_0 : i32, i32
  }
  func.func @transform_7(%arg0: i32) -> (i32, i32) {
    %c0_i32 = arith.constant 0 : i32
    %c0_i32_0 = arith.constant 0 : i32
    %c0_i32_1 = arith.constant 0 : i32
    return %c0_i32, %c0_i32_0 : i32, i32
  }
  func.func @transform_8(%arg0: i32) -> (i32, i32) {
    %c0_i32 = arith.constant 0 : i32
    %c0_i32_0 = arith.constant 0 : i32
    %c0_i32_1 = arith.constant 0 : i32
    return %c0_i32, %c0_i32_0 : i32, i32
  }
  func.func @transform_9(%arg0: i32) -> (i32, i32) {
    %c0_i32 = arith.constant 0 : i32
    %c0_i32_0 = arith.constant 0 : i32
    %c0_i32_1 = arith.constant 0 : i32
    return %c0_i32, %c0_i32_0 : i32, i32
  }
  func.func @transform_10(%arg0: i32) -> (i32, i32, i32) {
    %c0_i32 = arith.constant 0 : i32
    %c0_i32_0 = arith.constant 0 : i32
    %c0_i32_1 = arith.constant 0 : i32
    %c0_i32_2 = arith.constant 0 : i32
    return %c0_i32, %c0_i32_0, %c0_i32_1 : i32, i32, i32
  }
  func.func @transform_11(%arg0: i32) -> (i32, i32, i32) {
    %c0_i32 = arith.constant 0 : i32
    %c0_i32_0 = arith.constant 0 : i32
    %c0_i32_1 = arith.constant 0 : i32
    %c0_i32_2 = arith.constant 0 : i32
    return %c0_i32, %c0_i32_0, %c0_i32_1 : i32, i32, i32
  }
  func.func @transform_12(%arg0: i32) -> (i32, i32) {
    %c0_i32 = arith.constant 0 : i32
    %c0_i32_0 = arith.constant 0 : i32
    %c0_i32_1 = arith.constant 0 : i32
    return %c0_i32, %c0_i32_0 : i32, i32
  }
  func.func @transform_13(%arg0: i32) -> (i32, i32) {
    %c0_i32 = arith.constant 0 : i32
    %c0_i32_0 = arith.constant 0 : i32
    %c0_i32_1 = arith.constant 0 : i32
    return %c0_i32, %c0_i32_0 : i32, i32
  }
  func.func @transform_14(%arg0: i32) -> (i32, i32) {
    %c0_i32 = arith.constant 0 : i32
    %c0_i32_0 = arith.constant 0 : i32
    %c0_i32_1 = arith.constant 0 : i32
    return %c0_i32, %c0_i32_0 : i32, i32
  }
  func.func @transform_15(%arg0: i32) -> (i32, i32) {
    %c0_i32 = arith.constant 0 : i32
    %c0_i32_0 = arith.constant 0 : i32
    %c0_i32_1 = arith.constant 0 : i32
    return %c0_i32, %c0_i32_0 : i32, i32
  }
  func.func @transform_16(%arg0: i32) -> (i32, i32) {
    %c0_i32 = arith.constant 0 : i32
    %c0_i32_0 = arith.constant 0 : i32
    %c0_i32_1 = arith.constant 0 : i32
    return %c0_i32, %c0_i32_0 : i32, i32
  }
  func.func @transform_17(%arg0: i32) -> (i32, i32, i32) {
    %c0_i32 = arith.constant 0 : i32
    %c0_i32_0 = arith.constant 0 : i32
    %c0_i32_1 = arith.constant 0 : i32
    return %arg0, %c0_i32, %c0_i32_0 : i32, i32, i32
  }
  func.func @transform_18(%arg0: i32) -> (i32, i32, i32) {
    %c0_i32 = arith.constant 0 : i32
    %c0_i32_0 = arith.constant 0 : i32
    %c0_i32_1 = arith.constant 0 : i32
    return %arg0, %c0_i32, %c0_i32_0 : i32, i32, i32
  }
  func.func @transform_19(%arg0: i32) -> (i32, i32, i32) {
    %c0_i32 = arith.constant 0 : i32
    %c0_i32_0 = arith.constant 0 : i32
    %c0_i32_1 = arith.constant 0 : i32
    return %arg0, %c0_i32, %c0_i32_0 : i32, i32, i32
  }
}

module attributes {stable_mosaic.version = 11 : i64} {
  func.func @_regressor_kernel(%arg0: memref<2x384xf32, #tpu.memory_space<vmem>>, %arg1: memref<384x256xbf16, #tpu.memory_space<vmem>>, %arg2: memref<1x256xf32, #tpu.memory_space<vmem>>, %arg3: memref<256x256xbf16, #tpu.memory_space<vmem>>, %arg4: memref<1x256xf32, #tpu.memory_space<vmem>>, %arg5: memref<256x226xf32, #tpu.memory_space<vmem>>, %arg6: memref<1x226xf32, #tpu.memory_space<vmem>>, %arg7: memref<2x226xf32, #tpu.memory_space<vmem>>) attributes {dimension_semantics = [], scalar_prefetch = 0 : i64, scratch_operands = 0 : i64, tpu.core_type = #tpu.core_type<tc>} {
    %c0 = arith.constant 0 : index
    %c0_0 = arith.constant 0 : index
    %0 = vector.load %arg0[%c0, %c0_0] : memref<2x384xf32, #tpu.memory_space<vmem>>, vector<2x384xf32>
    %1 = arith.truncf %0 : vector<2x384xf32> to vector<2x384xbf16>
    %c0_1 = arith.constant 0 : index
    %c0_2 = arith.constant 0 : index
    %2 = vector.load %arg1[%c0_1, %c0_2] : memref<384x256xbf16, #tpu.memory_space<vmem>>, vector<384x256xbf16>
    %cst = arith.constant dense<0.000000e+00> : vector<2x256xf32>
    %3 = tpu.matmul %1, %2, %cst {dimension_numbers = #tpu.dot_dimension_numbers<[1], [0], [0], [1], [0, 0, 1, 1], [], []>} : vector<2x384xbf16>, vector<384x256xbf16>, vector<2x256xf32> -> vector<2x256xf32>
    %c0_3 = arith.constant 0 : index
    %c0_4 = arith.constant 0 : index
    %4 = vector.load %arg2[%c0_3, %c0_4] : memref<1x256xf32, #tpu.memory_space<vmem>>, vector<1x256xf32>
    %5 = vector.broadcast %4 : vector<1x256xf32> to vector<2x256xf32>
    %6 = arith.addf %3, %5 : vector<2x256xf32>
    %cst_5 = arith.constant 0.000000e+00 : f32
    %7 = vector.broadcast %cst_5 : f32 to vector<2x256xf32>
    %8 = arith.maximumf %6, %7 : vector<2x256xf32>
    %9 = arith.truncf %8 : vector<2x256xf32> to vector<2x256xbf16>
    %c0_6 = arith.constant 0 : index
    %c0_7 = arith.constant 0 : index
    %10 = vector.load %arg3[%c0_6, %c0_7] : memref<256x256xbf16, #tpu.memory_space<vmem>>, vector<256x256xbf16>
    %cst_8 = arith.constant dense<0.000000e+00> : vector<2x256xf32>
    %11 = tpu.matmul %9, %10, %cst_8 {dimension_numbers = #tpu.dot_dimension_numbers<[1], [0], [0], [1], [0, 0, 1, 1], [], []>} : vector<2x256xbf16>, vector<256x256xbf16>, vector<2x256xf32> -> vector<2x256xf32>
    %c0_9 = arith.constant 0 : index
    %c0_10 = arith.constant 0 : index
    %12 = vector.load %arg4[%c0_9, %c0_10] : memref<1x256xf32, #tpu.memory_space<vmem>>, vector<1x256xf32>
    %13 = vector.broadcast %12 : vector<1x256xf32> to vector<2x256xf32>
    %14 = arith.addf %11, %13 : vector<2x256xf32>
    %cst_11 = arith.constant 0.000000e+00 : f32
    %15 = vector.broadcast %cst_11 : f32 to vector<2x256xf32>
    %16 = arith.maximumf %14, %15 : vector<2x256xf32>
    %c0_12 = arith.constant 0 : index
    %c0_13 = arith.constant 0 : index
    %17 = vector.load %arg5[%c0_12, %c0_13] : memref<256x226xf32, #tpu.memory_space<vmem>>, vector<256x226xf32>
    %cst_14 = arith.constant dense<0.000000e+00> : vector<2x226xf32>
    %18 = tpu.matmul %16, %17, %cst_14 {dimension_numbers = #tpu.dot_dimension_numbers<[1], [0], [0], [1], [0, 0, 1, 1], [], []>} : vector<2x256xf32>, vector<256x226xf32>, vector<2x226xf32> -> vector<2x226xf32>
    %c0_15 = arith.constant 0 : index
    %c0_16 = arith.constant 0 : index
    %19 = vector.load %arg6[%c0_15, %c0_16] : memref<1x226xf32, #tpu.memory_space<vmem>>, vector<1x226xf32>
    %20 = vector.broadcast %19 : vector<1x226xf32> to vector<2x226xf32>
    %21 = arith.addf %18, %20 : vector<2x226xf32>
    %c0_17 = arith.constant 0 : index
    %c0_18 = arith.constant 0 : index
    %22 = vector.load %arg7[%c0_17, %c0_18] : memref<2x226xf32, #tpu.memory_space<vmem>>, vector<2x226xf32>
    tpu.vector_store %arg7[%c0_17, %c0_18], %21 {strides = array<i32>} : memref<2x226xf32, #tpu.memory_space<vmem>>, vector<2x226xf32>,
    return
  }
}

module attributes {stable_mosaic.version = 11 : i64} {
  func.func @_smpl_blend_kernel(%arg0: memref<2x10xf32, #tpu.memory_space<vmem>>, %arg1: memref<2x207xf32, #tpu.memory_space<vmem>>, %arg2: memref<10x768xf32, #tpu.memory_space<vmem>>, %arg3: memref<207x768xf32, #tpu.memory_space<vmem>>, %arg4: memref<1x768xf32, #tpu.memory_space<vmem>>, %arg5: memref<1x72xf32, #tpu.memory_space<vmem>>, %arg6: memref<10x72xf32, #tpu.memory_space<vmem>>, %arg7: memref<2x768xf32, #tpu.memory_space<vmem>>, %arg8: memref<2x72xf32, #tpu.memory_space<vmem>>) attributes {dimension_semantics = [], scalar_prefetch = 0 : i64, scratch_operands = 0 : i64, tpu.core_type = #tpu.core_type<tc>} {
    %c0 = arith.constant 0 : index
    %c0_0 = arith.constant 0 : index
    %0 = vector.load %arg0[%c0, %c0_0] : memref<2x10xf32, #tpu.memory_space<vmem>>, vector<2x10xf32>
    %c0_1 = arith.constant 0 : index
    %c0_2 = arith.constant 0 : index
    %1 = vector.load %arg4[%c0_1, %c0_2] : memref<1x768xf32, #tpu.memory_space<vmem>>, vector<1x768xf32>
    %c0_3 = arith.constant 0 : index
    %c0_4 = arith.constant 0 : index
    %2 = vector.load %arg2[%c0_3, %c0_4] : memref<10x768xf32, #tpu.memory_space<vmem>>, vector<10x768xf32>
    %cst = arith.constant dense<0.000000e+00> : vector<2x768xf32>
    %3 = tpu.matmul %0, %2, %cst {dimension_numbers = #tpu.dot_dimension_numbers<[1], [0], [0], [1], [0, 0, 1, 1], [], []>} : vector<2x10xf32>, vector<10x768xf32>, vector<2x768xf32> -> vector<2x768xf32>
    %4 = vector.broadcast %1 : vector<1x768xf32> to vector<2x768xf32>
    %5 = arith.addf %4, %3 : vector<2x768xf32>
    %c0_5 = arith.constant 0 : index
    %c0_6 = arith.constant 0 : index
    %6 = vector.load %arg1[%c0_5, %c0_6] : memref<2x207xf32, #tpu.memory_space<vmem>>, vector<2x207xf32>
    %c0_7 = arith.constant 0 : index
    %c0_8 = arith.constant 0 : index
    %7 = vector.load %arg3[%c0_7, %c0_8] : memref<207x768xf32, #tpu.memory_space<vmem>>, vector<207x768xf32>
    %cst_9 = arith.constant dense<0.000000e+00> : vector<2x768xf32>
    %8 = tpu.matmul %6, %7, %cst_9 {dimension_numbers = #tpu.dot_dimension_numbers<[1], [0], [0], [1], [0, 0, 1, 1], [], []>} : vector<2x207xf32>, vector<207x768xf32>, vector<2x768xf32> -> vector<2x768xf32>
    %9 = arith.addf %5, %8 : vector<2x768xf32>
    %c0_10 = arith.constant 0 : index
    %c0_11 = arith.constant 0 : index
    %10 = vector.load %arg7[%c0_10, %c0_11] : memref<2x768xf32, #tpu.memory_space<vmem>>, vector<2x768xf32>
    tpu.vector_store %arg7[%c0_10, %c0_11], %9 {strides = array<i32>} : memref<2x768xf32, #tpu.memory_space<vmem>>, vector<2x768xf32>,
    %c0_12 = arith.constant 0 : index
    %c0_13 = arith.constant 0 : index
    %11 = vector.load %arg5[%c0_12, %c0_13] : memref<1x72xf32, #tpu.memory_space<vmem>>, vector<1x72xf32>
    %c0_14 = arith.constant 0 : index
    %c0_15 = arith.constant 0 : index
    %12 = vector.load %arg6[%c0_14, %c0_15] : memref<10x72xf32, #tpu.memory_space<vmem>>, vector<10x72xf32>
    %cst_16 = arith.constant dense<0.000000e+00> : vector<2x72xf32>
    %13 = tpu.matmul %0, %12, %cst_16 {dimension_numbers = #tpu.dot_dimension_numbers<[1], [0], [0], [1], [0, 0, 1, 1], [], []>} : vector<2x10xf32>, vector<10x72xf32>, vector<2x72xf32> -> vector<2x72xf32>
    %14 = vector.broadcast %11 : vector<1x72xf32> to vector<2x72xf32>
    %15 = arith.addf %14, %13 : vector<2x72xf32>
    %c0_17 = arith.constant 0 : index
    %c0_18 = arith.constant 0 : index
    %16 = vector.load %arg8[%c0_17, %c0_18] : memref<2x72xf32, #tpu.memory_space<vmem>>, vector<2x72xf32>
    tpu.vector_store %arg8[%c0_17, %c0_18], %15 {strides = array<i32>} : memref<2x72xf32, #tpu.memory_space<vmem>>, vector<2x72xf32>,
    return
  }
}

module attributes {stable_mosaic.version = 11 : i64} {
  func.func @_lbs_kernel(%arg0: i32, %arg1: memref<1x16x24xf32, #tpu.memory_space<vmem>>, %arg2: memref<1x3x256xf32, #tpu.memory_space<vmem>>, %arg3: memref<24x256xf32, #tpu.memory_space<vmem>>, %arg4: memref<1x3x256xf32, #tpu.memory_space<vmem>>) attributes {dimension_semantics = [#tpu.dimension_semantics<parallel>], iteration_bounds = array<i64: 2>, scalar_prefetch = 0 : i64, scratch_operands = 0 : i64, tpu.core_type = #tpu.core_type<tc>, window_params = [{transform_indices = @transform_0, window_bounds = array<i64: 1, 16, 24>}, {transform_indices = @transform_1, window_bounds = array<i64: 1, 3, 256>}, {pipeline_mode = #tpu.pipeline_mode<synchronous>, transform_indices = @transform_2, window_bounds = array<i64: 24, 256>}, {transform_indices = @transform_3, window_bounds = array<i64: 1, 3, 256>}]} {
    %c0 = arith.constant 0 : index
    %c0_0 = arith.constant 0 : index
    %c0_1 = arith.constant 0 : index
    %0 = vector.load %arg1[%c0, %c0_0, %c0_1] : memref<1x16x24xf32, #tpu.memory_space<vmem>>, vector<1x16x24xf32>
    %1 = vector.shape_cast %0 : vector<1x16x24xf32> to vector<16x24xf32>
    %c0_2 = arith.constant 0 : index
    %c0_3 = arith.constant 0 : index
    %2 = vector.load %arg3[%c0_2, %c0_3] : memref<24x256xf32, #tpu.memory_space<vmem>>, vector<24x256xf32>
    %cst = arith.constant dense<0.000000e+00> : vector<16x256xf32>
    %3 = tpu.matmul %1, %2, %cst {dimension_numbers = #tpu.dot_dimension_numbers<[1], [0], [0], [1], [0, 0, 1, 1], [], []>} : vector<16x24xf32>, vector<24x256xf32>, vector<16x256xf32> -> vector<16x256xf32>
    %c0_4 = arith.constant 0 : index
    %c0_5 = arith.constant 0 : index
    %c0_6 = arith.constant 0 : index
    %4 = vector.load %arg2[%c0_4, %c0_5, %c0_6] : memref<1x3x256xf32, #tpu.memory_space<vmem>>, vector<1x3x256xf32>
    %5 = vector.shape_cast %4 : vector<1x3x256xf32> to vector<3x256xf32>
    %6 = vector.extract_strided_slice %5 {offsets = [0, 0], sizes = [1, 256], strides = [1, 1]} : vector<3x256xf32> to vector<1x256xf32>
    %7 = vector.extract_strided_slice %5 {offsets = [1, 0], sizes = [1, 256], strides = [1, 1]} : vector<3x256xf32> to vector<1x256xf32>
    %8 = vector.extract_strided_slice %5 {offsets = [2, 0], sizes = [1, 256], strides = [1, 1]} : vector<3x256xf32> to vector<1x256xf32>
    %9 = vector.extract_strided_slice %3 {offsets = [0, 0], sizes = [1, 256], strides = [1, 1]} : vector<16x256xf32> to vector<1x256xf32>
    %10 = arith.mulf %9, %6 : vector<1x256xf32>
    %11 = vector.extract_strided_slice %3 {offsets = [1, 0], sizes = [1, 256], strides = [1, 1]} : vector<16x256xf32> to vector<1x256xf32>
    %12 = arith.mulf %11, %7 : vector<1x256xf32>
    %13 = arith.addf %10, %12 : vector<1x256xf32>
    %14 = vector.extract_strided_slice %3 {offsets = [2, 0], sizes = [1, 256], strides = [1, 1]} : vector<16x256xf32> to vector<1x256xf32>
    %15 = arith.mulf %14, %8 : vector<1x256xf32>
    %16 = arith.addf %13, %15 : vector<1x256xf32>
    %17 = vector.extract_strided_slice %3 {offsets = [3, 0], sizes = [1, 256], strides = [1, 1]} : vector<16x256xf32> to vector<1x256xf32>
    %18 = arith.addf %16, %17 : vector<1x256xf32>
    %19 = vector.extract_strided_slice %3 {offsets = [4, 0], sizes = [1, 256], strides = [1, 1]} : vector<16x256xf32> to vector<1x256xf32>
    %20 = arith.mulf %19, %6 : vector<1x256xf32>
    %21 = vector.extract_strided_slice %3 {offsets = [5, 0], sizes = [1, 256], strides = [1, 1]} : vector<16x256xf32> to vector<1x256xf32>
    %22 = arith.mulf %21, %7 : vector<1x256xf32>
    %23 = arith.addf %20, %22 : vector<1x256xf32>
    %24 = vector.extract_strided_slice %3 {offsets = [6, 0], sizes = [1, 256], strides = [1, 1]} : vector<16x256xf32> to vector<1x256xf32>
    %25 = arith.mulf %24, %8 : vector<1x256xf32>
    %26 = arith.addf %23, %25 : vector<1x256xf32>
    %27 = vector.extract_strided_slice %3 {offsets = [7, 0], sizes = [1, 256], strides = [1, 1]} : vector<16x256xf32> to vector<1x256xf32>
    %28 = arith.addf %26, %27 : vector<1x256xf32>
    %29 = vector.extract_strided_slice %3 {offsets = [8, 0], sizes = [1, 256], strides = [1, 1]} : vector<16x256xf32> to vector<1x256xf32>
    %30 = arith.mulf %29, %6 : vector<1x256xf32>
    %31 = vector.extract_strided_slice %3 {offsets = [9, 0], sizes = [1, 256], strides = [1, 1]} : vector<16x256xf32> to vector<1x256xf32>
    %32 = arith.mulf %31, %7 : vector<1x256xf32>
    %33 = arith.addf %30, %32 : vector<1x256xf32>
    %34 = vector.extract_strided_slice %3 {offsets = [10, 0], sizes = [1, 256], strides = [1, 1]} : vector<16x256xf32> to vector<1x256xf32>
    %35 = arith.mulf %34, %8 : vector<1x256xf32>
    %36 = arith.addf %33, %35 : vector<1x256xf32>
    %37 = vector.extract_strided_slice %3 {offsets = [11, 0], sizes = [1, 256], strides = [1, 1]} : vector<16x256xf32> to vector<1x256xf32>
    %38 = arith.addf %36, %37 : vector<1x256xf32>
    %39 = tpu.concatenate %18, %28, %38 in 0 : vector<1x256xf32>, vector<1x256xf32>, vector<1x256xf32> -> vector<3x256xf32>
    %c0_7 = arith.constant 0 : index
    %c0_8 = arith.constant 0 : index
    %c0_9 = arith.constant 0 : index
    %40 = vector.load %arg4[%c0_7, %c0_8, %c0_9] : memref<1x3x256xf32, #tpu.memory_space<vmem>>, vector<1x3x256xf32>
    %41 = vector.shape_cast %40 : vector<1x3x256xf32> to vector<3x256xf32>
    %42 = vector.shape_cast %39 : vector<3x256xf32> to vector<1x3x256xf32>
    tpu.vector_store %arg4[%c0_7, %c0_8, %c0_9], %42 {strides = array<i32>} : memref<1x3x256xf32, #tpu.memory_space<vmem>>, vector<1x3x256xf32>,
    return
  }
  func.func @transform_0(%arg0: i32) -> (i32, i32, i32) {
    %c0_i32 = arith.constant 0 : i32
    %c0_i32_0 = arith.constant 0 : i32
    %c0_i32_1 = arith.constant 0 : i32
    return %arg0, %c0_i32, %c0_i32_0 : i32, i32, i32
  }
  func.func @transform_1(%arg0: i32) -> (i32, i32, i32) {
    %c0_i32 = arith.constant 0 : i32
    %c0_i32_0 = arith.constant 0 : i32
    %c0_i32_1 = arith.constant 0 : i32
    return %arg0, %c0_i32, %c0_i32_0 : i32, i32, i32
  }
  func.func @transform_2(%arg0: i32) -> (i32, i32) {
    %c0_i32 = arith.constant 0 : i32
    %c0_i32_0 = arith.constant 0 : i32
    %c0_i32_1 = arith.constant 0 : i32
    return %c0_i32, %c0_i32_0 : i32, i32
  }
  func.func @transform_3(%arg0: i32) -> (i32, i32, i32) {
    %c0_i32 = arith.constant 0 : i32
    %c0_i32_0 = arith.constant 0 : i32
    %c0_i32_1 = arith.constant 0 : i32
    return %arg0, %c0_i32, %c0_i32_0 : i32, i32, i32
  }
}

</mosaic_0001>

<llo_original>
// kernel: custom-call.51
$region0: #{custom-call.51}
  %s0 = inlined_call_operand.hbm [shape: pred[48], index: 0, kind: output, shape index: {}]

// kernel: cmr_forward.5
$region0: #{cmr_forward.5}
  #allocation0 [shape = 'u32[]', space=smem, size = 0x4, offset = 0x4, fixed_abs, tag = 'smem constant byte address 0x4 - core index']
  #allocation1 [shape = 'u32[144,128]{1,0:T(1,128)}', space=vmem, size = 0x12000, scoped, tag = 'internal scratch']
  %s0 = inlined_call_operand.vmem [shape: f32[2,384], index: 0, kind: input, shape index: {}]
  %s1 = inlined_call_operand.vmem [shape: bf16[384,256], index: 1, kind: input, shape index: {}]
  %s2 = inlined_call_operand.vmem [shape: f32[1,256], index: 2, kind: input, shape index: {}]
  %s3 = inlined_call_operand.vmem [shape: bf16[256,256], index: 3, kind: input, shape index: {}]
  %s4 = inlined_call_operand.vmem [shape: f32[1,256], index: 4, kind: input, shape index: {}]
  %s5 = inlined_call_operand.vmem [shape: f32[256,226], index: 5, kind: input, shape index: {}]
  %s6 = inlined_call_operand.vmem [shape: f32[1,226], index: 6, kind: input, shape index: {}]
  %s7 = inlined_call_operand.vmem [shape: f32[2,226], index: 7, kind: output, shape index: {}]
  %s8 = sld [smem:[#allocation0]]
  $region38: #{cmr_forward.5} parent=0
    _
  %s10 = ssub.s32 1, %s8
  %s11 = scalar_select 0, %s10, %s8
  // Predicated region
  $region2: #{cmr_forward.5} parent=0 // pred_check
    _
  $region3: #{cmr_forward.5} parent=0 // pred_check_branch
    %13 = sbr.rel (0) target = $region5
  $region4: #{cmr_forward.5} parent=0 // pred_region
    _
  $region5: #{cmr_forward.5} parent=0 // pred_fallthru
    _
  // Predicated region
  $region6: #{cmr_forward.5} parent=0 // pred_check
    _
  $region7: #{cmr_forward.5} parent=0 // pred_check_branch
    %15 = sbr.rel (0) target = $region9
  $region8: #{cmr_forward.5} parent=0 // pred_region
    _
  $region9: #{cmr_forward.5} parent=0 // pred_fallthru
    _
  // Predicated region
  $region10: #{cmr_forward.5} parent=0 // pred_check
    _
  $region11: #{cmr_forward.5} parent=0 // pred_check_branch
    %17 = sbr.rel (0) target = $region13
  $region12: #{cmr_forward.5} parent=0 // pred_region
    _
  $region13: #{cmr_forward.5} parent=0 // pred_fallthru
    _
  // Predicated region
  $region14: #{cmr_forward.5} parent=0 // pred_check
    _
  $region15: #{cmr_forward.5} parent=0 // pred_check_branch
    %19 = sbr.rel (0) target = $region17
  $region16: #{cmr_forward.5} parent=0 // pred_region
    _
  $region17: #{cmr_forward.5} parent=0 // pred_fallthru
    _
  // Predicated region
  $region18: #{cmr_forward.5} parent=0 // pred_check
    _
  $region19: #{cmr_forward.5} parent=0 // pred_check_branch
    %21 = sbr.rel (0) target = $region21
  $region20: #{cmr_forward.5} parent=0 // pred_region
    _
  $region21: #{cmr_forward.5} parent=0 // pred_fallthru
    _
  // Predicated region
  $region22: #{cmr_forward.5} parent=0 // pred_check
    _
  $region23: #{cmr_forward.5} parent=0 // pred_check_branch
    %23 = sbr.rel (0) target = $region25
  $region24: #{cmr_forward.5} parent=0 // pred_region
    _
  $region25: #{cmr_forward.5} parent=0 // pred_fallthru
    _
  // Predicated region
  $region26: #{cmr_forward.5} parent=0 // pred_check
    _
  $region27: #{cmr_forward.5} parent=0 // pred_check_branch
    %25 = sbr.rel (0) target = $region29
  $region28: #{cmr_forward.5} parent=0 // pred_region
    _
  $region29: #{cmr_forward.5} parent=0 // pred_fallthru
    _
  %v27 = vld [vmem:[%s0] sm:$0x3f]
  %v29 = vcombine.high %v27, %v27
  %v31 = vunpack.c.l.s4 1983009808
  %v32 = vunpack.c.0.s8 %v31
  %v33 = vlaneseq
  %v34 = vshrl.u32 %v33, 7
  %v35 = vsub.s32 %v32, %v34
  %v36 = vrot.slane %v27, %v35
  %v38 = vunpack.c.l.s4 1983009808
  %v39 = vunpack.c.0.s8 %v38
  %v40 = vlaneseq
  %v41 = vshrl.u32 %v40, 7
  %v42 = vsub.s32 %v39, %v41
  %v43 = vrot.slane %v29, %v42
  %v44 = vcombine.high %v36, %v36
  %v48 = vpack.c.bf16 %v36, %v36
  %v49 = vpack.c.bf16 %v44, %v44
  %v50 = vpack.c.bf16 %v43, %v43
  %v51 = vld [vmem:[%s1] sm:$0xff]
  %v52 = vld [vmem:[%s1 + $0x8] sm:$0xff]
  %v53 = vld [vmem:[%s1 + $0x10] sm:$0xff]
  %v54 = vld [vmem:[%s1 + $0x18] sm:$0xff]
  %v55 = vld [vmem:[%s1 + $0x20] sm:$0xff]
  %v56 = vld [vmem:[%s1 + $0x28] sm:$0xff]
  %v57 = vld [vmem:[%s1 + $0x30] sm:$0xff]
  %v58 = vld [vmem:[%s1 + $0x38] sm:$0xff]
  %v59 = vld [vmem:[%s1 + $0x40] sm:$0xff]
  %v60 = vld [vmem:[%s1 + $0x48] sm:$0xff]
  %v61 = vld [vmem:[%s1 + $0x50] sm:$0xff]
  %v62 = vld [vmem:[%s1 + $0x58] sm:$0xff]
  %v63 = vld [vmem:[%s1 + $0x60] sm:$0xff]
  %v64 = vld [vmem:[%s1 + $0x68] sm:$0xff]
  %v65 = vld [vmem:[%s1 + $0x70] sm:$0xff]
  %v66 = vld [vmem:[%s1 + $0x78] sm:$0xff]
  %v67 = vld [vmem:[%s1 + $0x80] sm:$0xff]
  %v68 = vld [vmem:[%s1 + $0x88] sm:$0xff]
  %v69 = vld [vmem:[%s1 + $0x90] sm:$0xff]
  %v70 = vld [vmem:[%s1 + $0x98] sm:$0xff]
  %v71 = vld [vmem:[%s1 + $0xa0] sm:$0xff]
  %v72 = vld [vmem:[%s1 + $0xa8] sm:$0xff]
  %v73 = vld [vmem:[%s1 + $0xb0] sm:$0xff]
  %v74 = vld [vmem:[%s1 + $0xb8] sm:$0xff]
  %v75 = vld [vmem:[%s1 + $0xc0] sm:$0xff]
  %v76 = vld [vmem:[%s1 + $0xc8] sm:$0xff]
  %v77 = vld [vmem:[%s1 + $0xd0] sm:$0xff]
  %v78 = vld [vmem:[%s1 + $0xd8] sm:$0xff]
  %v79 = vld [vmem:[%s1 + $0xe0] sm:$0xff]
  %v80 = vld [vmem:[%s1 + $0xe8] sm:$0xff]
  %v81 = vld [vmem:[%s1 + $0xf0] sm:$0xff]
  %v82 = vld [vmem:[%s1 + $0xf8] sm:$0xff]
  %v83 = vld [vmem:[%s1 + $0x100] sm:$0xff]
  %v84 = vld [vmem:[%s1 + $0x108] sm:$0xff]
  %v85 = vld [vmem:[%s1 + $0x110] sm:$0xff]
  %v86 = vld [vmem:[%s1 + $0x118] sm:$0xff]
  %v87 = vld [vmem:[%s1 + $0x120] sm:$0xff]
  %v88 = vld [vmem:[%s1 + $0x128] sm:$0xff]
  %v89 = vld [vmem:[%s1 + $0x130] sm:$0xff]
  %v90 = vld [vmem:[%s1 + $0x138] sm:$0xff]
  %v91 = vld [vmem:[%s1 + $0x140] sm:$0xff]
  %v92 = vld [vmem:[%s1 + $0x148] sm:$0xff]
  %v93 = vld [vmem:[%s1 + $0x150] sm:$0xff]
  %v94 = vld [vmem:[%s1 + $0x158] sm:$0xff]
  %v95 = vld [vmem:[%s1 + $0x160] sm:$0xff]
  %v96 = vld [vmem:[%s1 + $0x168] sm:$0xff]
  %v97 = vld [vmem:[%s1 + $0x170] sm:$0xff]
  %v98 = vld [vmem:[%s1 + $0x178] sm:$0xff]
  %v99 = vld [vmem:[%s2] sm:$0x3]
  %v101 = vlaneseq
  %v102 = vshrl.u32 %v101, 7
  %v103 = vsub.s32 0, %v102
  %v104 = vrot.slane %v99, %v103
  %v105 = vlaneseq
  %v106 = vshrl.u32 %v105, 7
  %v107 = vsub.s32 1, %v106
  %v108 = vrot.slane %v99, %v107
  %v159 = vunpack.c.l.b16 %v51
  %v160 = vunpack.c.h.b16 %v51
  %v161 = vunpack.c.l.b16 %v52
  %v162 = vunpack.c.h.b16 %v52
  %v163 = vunpack.c.l.b16 %v53
  %v164 = vunpack.c.h.b16 %v53
  %v165 = vunpack.c.l.b16 %v54
  %v166 = vunpack.c.h.b16 %v54
  %v167 = vunpack.c.l.b16 %v55
  %v168 = vunpack.c.h.b16 %v55
  %v169 = vunpack.c.l.b16 %v56
  %v170 = vunpack.c.h.b16 %v56
  %v171 = vunpack.c.l.b16 %v57
  %v172 = vunpack.c.h.b16 %v57
  %v173 = vunpack.c.l.b16 %v58
  %v174 = vunpack.c.h.b16 %v58
  %v175 = vunpack.c.l.b16 %v59
  %v176 = vunpack.c.h.b16 %v59
  %v177 = vunpack.c.l.b16 %v60
  %v178 = vunpack.c.h.b16 %v60
  %v179 = vunpack.c.l.b16 %v61
  %v180 = vunpack.c.h.b16 %v61
  %v181 = vunpack.c.l.b16 %v62
  %v182 = vunpack.c.h.b16 %v62
  %v183 = vunpack.c.l.b16 %v63
  %v184 = vunpack.c.h.b16 %v63
  %v185 = vunpack.c.l.b16 %v64
  %v186 = vunpack.c.h.b16 %v64
  %v187 = vunpack.c.l.b16 %v65
  %v188 = vunpack.c.h.b16 %v65
  %v189 = vunpack.c.l.b16 %v66
  %v190 = vunpack.c.h.b16 %v66
  %v191 = vunpack.c.l.b16 %v67
  %v192 = vunpack.c.h.b16 %v67
  %v193 = vunpack.c.l.b16 %v68
  %v194 = vunpack.c.h.b16 %v68
  %v195 = vunpack.c.l.b16 %v69
  %v196 = vunpack.c.h.b16 %v69
  %v197 = vunpack.c.l.b16 %v70
  %v198 = vunpack.c.h.b16 %v70
  %v199 = vunpack.c.l.b16 %v71
  %v200 = vunpack.c.h.b16 %v71
  %v201 = vunpack.c.l.b16 %v72
  %v202 = vunpack.c.h.b16 %v72
  %v203 = vunpack.c.l.b16 %v73
  %v204 = vunpack.c.h.b16 %v73
  %v205 = vunpack.c.l.b16 %v74
  %v206 = vunpack.c.h.b16 %v74
  %v207 = vunpack.c.l.b16 %v75
  %v208 = vunpack.c.h.b16 %v75
  %v209 = vunpack.c.l.b16 %v76
  %v210 = vunpack.c.h.b16 %v76
  %v211 = vunpack.c.l.b16 %v77
  %v212 = vunpack.c.h.b16 %v77
  %v213 = vunpack.c.l.b16 %v78
  %v214 = vunpack.c.h.b16 %v78
  %v215 = vunpack.c.l.b16 %v79
  %v216 = vunpack.c.h.b16 %v79
  %v217 = vunpack.c.l.b16 %v80
  %v218 = vunpack.c.h.b16 %v80
  %v219 = vunpack.c.l.b16 %v81
  %v220 = vunpack.c.h.b16 %v81
  %v221 = vunpack.c.l.b16 %v82
  %v222 = vunpack.c.h.b16 %v82
  %v223 = vunpack.c.l.b16 %v83
  %v224 = vunpack.c.h.b16 %v83
  %v225 = vunpack.c.l.b16 %v84
  %v226 = vunpack.c.h.b16 %v84
  %v227 = vunpack.c.l.b16 %v85
  %v228 = vunpack.c.h.b16 %v85
  %v229 = vunpack.c.l.b16 %v86
  %v230 = vunpack.c.h.b16 %v86
  %v231 = vunpack.c.l.b16 %v87
  %v232 = vunpack.c.h.b16 %v87
  %v233 = vunpack.c.l.b16 %v88
  %v234 = vunpack.c.h.b16 %v88
  %v235 = vunpack.c.l.b16 %v89
  %v236 = vunpack.c.h.b16 %v89
  %v237 = vunpack.c.l.b16 %v90
  %v238 = vunpack.c.h.b16 %v90
  %v239 = vunpack.c.l.b16 %v91
  %v240 = vunpack.c.h.b16 %v91
  %v241 = vunpack.c.l.b16 %v92
  %v242 = vunpack.c.h.b16 %v92
  %v243 = vunpack.c.l.b16 %v93
  %v244 = vunpack.c.h.b16 %v93
  %v245 = vunpack.c.l.b16 %v94
  %v246 = vunpack.c.h.b16 %v94
  %v247 = vunpack.c.l.b16 %v95
  %v248 = vunpack.c.h.b16 %v95
  %v249 = vunpack.c.l.b16 %v96
  %v250 = vunpack.c.h.b16 %v96
  %v251 = vunpack.c.l.b16 %v97
  %v252 = vunpack.c.h.b16 %v97
  %v253 = vunpack.c.l.b16 %v98
  %v254 = vunpack.c.h.b16 %v98
  %v255 = vpack.c.b16 %v161, %v159
  %v256 = vpack.c.b16 %v162, %v160
  %v257 = vpack.c.b16 %v165, %v163
  %v258 = vpack.c.b16 %v166, %v164
  %v259 = vpack.c.b16 %v169, %v167
  %v260 = vpack.c.b16 %v170, %v168
  %v261 = vpack.c.b16 %v173, %v171
  %v262 = vpack.c.b16 %v174, %v172
  %v263 = vpack.c.b16 %v177, %v175
  %v264 = vpack.c.b16 %v178, %v176
  %v265 = vpack.c.b16 %v181, %v179
  %v266 = vpack.c.b16 %v182, %v180
  %v267 = vpack.c.b16 %v185, %v183
  %v268 = vpack.c.b16 %v186, %v184
  %v269 = vpack.c.b16 %v189, %v187
  %v270 = vpack.c.b16 %v190, %v188
  %v271 = vpack.c.b16 %v193, %v191
  %v272 = vpack.c.b16 %v194, %v192
  %v273 = vpack.c.b16 %v197, %v195
  %v274 = vpack.c.b16 %v198, %v196
  %v275 = vpack.c.b16 %v201, %v199
  %v276 = vpack.c.b16 %v202, %v200
  %v277 = vpack.c.b16 %v205, %v203
  %v278 = vpack.c.b16 %v206, %v204
  %v279 = vpack.c.b16 %v209, %v207
  %v280 = vpack.c.b16 %v210, %v208
  %v281 = vpack.c.b16 %v213, %v211
  %v282 = vpack.c.b16 %v214, %v212
  %v283 = vpack.c.b16 %v217, %v215
  %v284 = vpack.c.b16 %v218, %v216
  %v285 = vpack.c.b16 %v221, %v219
  %v286 = vpack.c.b16 %v222, %v220
  %v287 = vpack.c.b16 %v225, %v223
  %v288 = vpack.c.b16 %v226, %v224
  %v289 = vpack.c.b16 %v229, %v227
  %v290 = vpack.c.b16 %v230, %v228
  %v291 = vpack.c.b16 %v233, %v231
  %v292 = vpack.c.b16 %v234, %v232
  %v293 = vpack.c.b16 %v237, %v235
  %v294 = vpack.c.b16 %v238, %v236
  %v295 = vpack.c.b16 %v241, %v239
  %v296 = vpack.c.b16 %v242, %v240
  %v297 = vpack.c.b16 %v245, %v243
  %v298 = vpack.c.b16 %v246, %v244
  %v299 = vpack.c.b16 %v249, %v247
  %v300 = vpack.c.b16 %v250, %v248
  %v301 = vpack.c.b16 %v253, %v251
  %v302 = vpack.c.b16 %v254, %v252
  %351 = vmatprep.subr.bf16.mxu0 %v270
  %352 = vmatpush1.bf16.msra.mxu0 %v269
  %353 = vmatprep.subr.bf16.mxu0 %v268
  %354 = vmatpush1.bf16.msra.mxu0 %v267
  %355 = vmatprep.subr.bf16.mxu0 %v266
  %356 = vmatpush1.bf16.msra.mxu0 %v265
  %357 = vmatprep.subr.bf16.mxu0 %v264
  %358 = vmatpush1.bf16.msra.mxu0 %v263
  %359 = vmatprep.subr.bf16.mxu0 %v262
  %360 = vmatpush1.bf16.msra.mxu0 %v261
  %361 = vmatprep.subr.bf16.mxu0 %v260
  %362 = vmatpush1.bf16.msra.mxu0 %v259
  %363 = vmatprep.subr.bf16.mxu0 %v258
  %364 = vmatpush1.bf16.msra.mxu0 %v257
  %365 = vmatprep.subr.bf16.mxu0 %v256
  %366 = vmatpush1.bf16.msra.mxu0 %v255
  %367 = vmatprep.subr.bf16.mxu0 %v286
  %368 = vmatpush2.bf16.msra.mxu0 %v285
  %369 = vmatprep.subr.bf16.mxu0 %v284
  %370 = vmatpush2.bf16.msra.mxu0 %v283
  %371 = vmatprep.subr.bf16.mxu0 %v282
  %372 = vmatpush2.bf16.msra.mxu0 %v281
  %373 = vmatprep.subr.bf16.mxu0 %v280
  %374 = vmatpush2.bf16.msra.mxu0 %v279
  %375 = vmatprep.subr.bf16.mxu0 %v278
  %376 = vmatpush2.bf16.msra.mxu0 %v277
  %377 = vmatprep.subr.bf16.mxu0 %v276
  %378 = vmatpush2.bf16.msra.mxu0 %v275
  %379 = vmatprep.subr.bf16.mxu0 %v274
  %380 = vmatpush2.bf16.msra.mxu0 %v273
  %381 = vmatprep.subr.bf16.mxu0 %v272
  %382 = vmatpush2.bf16.msra.mxu0 %v271
  %383 = vmatprep.mubr.bf16.mxu0 %v49
  %384 = vmatmul.mubr.bf16.gmra.mxu0 %v48
  %v385 = vpop.f32.mrf.mxu0
  %v386 = vadd.f32 %v104, %v385
  %v387 = vpop.f32.mrf.mxu0
  %v388 = vadd.f32 %v108, %v387
  %v389 = vpop.f32.mrf.mxu0
  %v390 = vpop.f32.mrf.mxu0
  %391 = vdwg.mxu0
  %392 = vmatprep.subr.bf16.mxu0 %v302
  %393 = vmatpush1.bf16.msra.mxu0 %v301
  %394 = vmatprep.subr.bf16.mxu0 %v300
  %395 = vmatpush1.bf16.msra.mxu0 %v299
  %396 = vmatprep.subr.bf16.mxu0 %v298
  %397 = vmatpush1.bf16.msra.mxu0 %v297
  %398 = vmatprep.subr.bf16.mxu0 %v296
  %399 = vmatpush1.bf16.msra.mxu0 %v295
  %400 = vmatprep.subr.bf16.mxu0 %v294
  %401 = vmatpush1.bf16.msra.mxu0 %v293
  %402 = vmatprep.subr.bf16.mxu0 %v292
  %403 = vmatpush1.bf16.msra.mxu0 %v291
  %404 = vmatprep.subr.bf16.mxu0 %v290
  %405 = vmatpush1.bf16.msra.mxu0 %v289
  %406 = vmatprep.subr.bf16.mxu0 %v288
  %407 = vmatpush1.bf16.msra.mxu0 %v287
  %408 = vmatprep.subr.bf16.mxu0 0
  %409 = vmatpush2.bf16.msra.mxu0 0
  %410 = vmatprep.subr.bf16.mxu0 0
  %411 = vmatpush2.bf16.msra.mxu0 0
  %412 = vmatprep.subr.bf16.mxu0 0
  %413 = vmatpush2.bf16.msra.mxu0 0
  %414 = vmatprep.subr.bf16.mxu0 0
  %415 = vmatpush2.bf16.msra.mxu0 0
  %416 = vmatprep.subr.bf16.mxu0 0
  %417 = vmatpush2.bf16.msra.mxu0 0
  %418 = vmatprep.subr.bf16.mxu0 0
  %419 = vmatpush2.bf16.msra.mxu0 0
  %420 = vmatprep.subr.bf16.mxu0 0
  %421 = vmatpush2.bf16.msra.mxu0 0
  %422 = vmatprep.subr.bf16.mxu0 0
  %423 = vmatpush2.bf16.msra.mxu0 0
  %424 = vmatprep.mubr.bf16.mxu0 0
  %425 = vmatmul.mubr.bf16.gmra.mxu0 %v50
  %v426 = vpop.f32.mrf.mxu0
  %v427 = vadd.f32 %v386, %v426
  %v428 = vpop.f32.mrf.mxu0
  %v429 = vadd.f32 %v388, %v428
  %v430 = vpop.f32.mrf.mxu0
  %v431 = vpop.f32.mrf.mxu0
  %432 = vdwg.mxu0
  %v433 = vmax.f32 %v427, 0.0
  %v434 = vmax.f32 %v429, 0.0
  %v435 = vpack.c.bf16 %v433, %v433
  %v436 = vpack.c.bf16 %v434, %v434
  %v437 = vld [vmem:[%s3] sm:$0xff]
  %v438 = vld [vmem:[%s3 + $0x8] sm:$0xff]
  %v439 = vld [vmem:[%s3 + $0x10] sm:$0xff]
  %v440 = vld [vmem:[%s3 + $0x18] sm:$0xff]
  %v441 = vld [vmem:[%s3 + $0x20] sm:$0xff]
  %v442 = vld [vmem:[%s3 + $0x28] sm:$0xff]
  %v443 = vld [vmem:[%s3 + $0x30] sm:$0xff]
  %v444 = vld [vmem:[%s3 + $0x38] sm:$0xff]
  %v445 = vld [vmem:[%s3 + $0x40] sm:$0xff]
  %v446 = vld [vmem:[%s3 + $0x48] sm:$0xff]
  %v447 = vld [vmem:[%s3 + $0x50] sm:$0xff]
  %v448 = vld [vmem:[%s3 + $0x58] sm:$0xff]
  %v449 = vld [vmem:[%s3 + $0x60] sm:$0xff]
  %v450 = vld [vmem:[%s3 + $0x68] sm:$0xff]
  %v451 = vld [vmem:[%s3 + $0x70] sm:$0xff]
  %v452 = vld [vmem:[%s3 + $0x78] sm:$0xff]
  %v453 = vld [vmem:[%s3 + $0x80] sm:$0xff]
  %v454 = vld [vmem:[%s3 + $0x88] sm:$0xff]
  %v455 = vld [vmem:[%s3 + $0x90] sm:$0xff]
  %v456 = vld [vmem:[%s3 + $0x98] sm:$0xff]
  %v457 = vld [vmem:[%s3 + $0xa0] sm:$0xff]
  %v458 = vld [vmem:[%s3 + $0xa8] sm:$0xff]
  %v459 = vld [vmem:[%s3 + $0xb0] sm:$0xff]
  %v460 = vld [vmem:[%s3 + $0xb8] sm:$0xff]
  %v461 = vld [vmem:[%s3 + $0xc0] sm:$0xff]
  %v462 = vld [vmem:[%s3 + $0xc8] sm:$0xff]
  %v463 = vld [vmem:[%s3 + $0xd0] sm:$0xff]
  %v464 = vld [vmem:[%s3 + $0xd8] sm:$0xff]
  %v465 = vld [vmem:[%s3 + $0xe0] sm:$0xff]
  %v466 = vld [vmem:[%s3 + $0xe8] sm:$0xff]
  %v467 = vld [vmem:[%s3 + $0xf0] sm:$0xff]
  %v468 = vld [vmem:[%s3 + $0xf8] sm:$0xff]
  %v469 = vld [vmem:[%s4] sm:$0x3]
  %v471 = vlaneseq
  %v472 = vshrl.u32 %v471, 7
  %v473 = vsub.s32 0, %v472
  %v474 = vrot.slane %v469, %v473
  %v475 = vlaneseq
  %v476 = vshrl.u32 %v475, 7
  %v477 = vsub.s32 1, %v476
  %v478 = vrot.slane %v469, %v477
  %v513 = vunpack.c.l.b16 %v437
  %v514 = vunpack.c.h.b16 %v437
  %v515 = vunpack.c.l.b16 %v438
  %v516 = vunpack.c.h.b16 %v438
  %v517 = vunpack.c.l.b16 %v439
  %v518 = vunpack.c.h.b16 %v439
  %v519 = vunpack.c.l.b16 %v440
  %v520 = vunpack.c.h.b16 %v440
  %v521 = vunpack.c.l.b16 %v441
  %v522 = vunpack.c.h.b16 %v441
  %v523 = vunpack.c.l.b16 %v442
  %v524 = vunpack.c.h.b16 %v442
  %v525 = vunpack.c.l.b16 %v443
  %v526 = vunpack.c.h.b16 %v443
  %v527 = vunpack.c.l.b16 %v444
  %v528 = vunpack.c.h.b16 %v444
  %v529 = vunpack.c.l.b16 %v445
  %v530 = vunpack.c.h.b16 %v445
  %v531 = vunpack.c.l.b16 %v446
  %v532 = vunpack.c.h.b16 %v446
  %v533 = vunpack.c.l.b16 %v447
  %v534 = vunpack.c.h.b16 %v447
  %v535 = vunpack.c.l.b16 %v448
  %v536 = vunpack.c.h.b16 %v448
  %v537 = vunpack.c.l.b16 %v449
  %v538 = vunpack.c.h.b16 %v449
  %v539 = vunpack.c.l.b16 %v450
  %v540 = vunpack.c.h.b16 %v450
  %v541 = vunpack.c.l.b16 %v451
  %v542 = vunpack.c.h.b16 %v451
  %v543 = vunpack.c.l.b16 %v452
  %v544 = vunpack.c.h.b16 %v452
  %v545 = vunpack.c.l.b16 %v453
  %v546 = vunpack.c.h.b16 %v453
  %v547 = vunpack.c.l.b16 %v454
  %v548 = vunpack.c.h.b16 %v454
  %v549 = vunpack.c.l.b16 %v455
  %v550 = vunpack.c.h.b16 %v455
  %v551 = vunpack.c.l.b16 %v456
  %v552 = vunpack.c.h.b16 %v456
  %v553 = vunpack.c.l.b16 %v457
  %v554 = vunpack.c.h.b16 %v457
  %v555 = vunpack.c.l.b16 %v458
  %v556 = vunpack.c.h.b16 %v458
  %v557 = vunpack.c.l.b16 %v459
  %v558 = vunpack.c.h.b16 %v459
  %v559 = vunpack.c.l.b16 %v460
  %v560 = vunpack.c.h.b16 %v460
  %v561 = vunpack.c.l.b16 %v461
  %v562 = vunpack.c.h.b16 %v461
  %v563 = vunpack.c.l.b16 %v462
  %v564 = vunpack.c.h.b16 %v462
  %v565 = vunpack.c.l.b16 %v463
  %v566 = vunpack.c.h.b16 %v463
  %v567 = vunpack.c.l.b16 %v464
  %v568 = vunpack.c.h.b16 %v464
  %v569 = vunpack.c.l.b16 %v465
  %v570 = vunpack.c.h.b16 %v465
  %v571 = vunpack.c.l.b16 %v466
  %v572 = vunpack.c.h.b16 %v466
  %v573 = vunpack.c.l.b16 %v467
  %v574 = vunpack.c.h.b16 %v467
  %v575 = vunpack.c.l.b16 %v468
  %v576 = vunpack.c.h.b16 %v468
  %v577 = vpack.c.b16 %v515, %v513
  %v578 = vpack.c.b16 %v516, %v514
  %v579 = vpack.c.b16 %v519, %v517
  %v580 = vpack.c.b16 %v520, %v518
  %v581 = vpack.c.b16 %v523, %v521
  %v582 = vpack.c.b16 %v524, %v522
  %v583 = vpack.c.b16 %v527, %v525
  %v584 = vpack.c.b16 %v528, %v526
  %v585 = vpack.c.b16 %v531, %v529
  %v586 = vpack.c.b16 %v532, %v530
  %v587 = vpack.c.b16 %v535, %v533
  %v588 = vpack.c.b16 %v536, %v534
  %v589 = vpack.c.b16 %v539, %v537
  %v590 = vpack.c.b16 %v540, %v538
  %v591 = vpack.c.b16 %v543, %v541
  %v592 = vpack.c.b16 %v544, %v542
  %v593 = vpack.c.b16 %v547, %v545
  %v594 = vpack.c.b16 %v548, %v546
  %v595 = vpack.c.b16 %v551, %v549
  %v596 = vpack.c.b16 %v552, %v550
  %v597 = vpack.c.b16 %v555, %v553
  %v598 = vpack.c.b16 %v556, %v554
  %v599 = vpack.c.b16 %v559, %v557
  %v600 = vpack.c.b16 %v560, %v558
  %v601 = vpack.c.b16 %v563, %v561
  %v602 = vpack.c.b16 %v564, %v562
  %v603 = vpack.c.b16 %v567, %v565
  %v604 = vpack.c.b16 %v568, %v566
  %v605 = vpack.c.b16 %v571, %v569
  %v606 = vpack.c.b16 %v572, %v570
  %v607 = vpack.c.b16 %v575, %v573
  %v608 = vpack.c.b16 %v576, %v574
  %641 = vmatprep.subr.bf16.mxu0 %v592
  %642 = vmatpush1.bf16.msra.mxu0 %v591
  %643 = vmatprep.subr.bf16.mxu0 %v590
  %644 = vmatpush1.bf16.msra.mxu0 %v589
  %645 = vmatprep.subr.bf16.mxu0 %v588
  %646 = vmatpush1.bf16.msra.mxu0 %v587
  %647 = vmatprep.subr.bf16.mxu0 %v586
  %648 = vmatpush1.bf16.msra.mxu0 %v585
  %649 = vmatprep.subr.bf16.mxu0 %v584
  %650 = vmatpush1.bf16.msra.mxu0 %v583
  %651 = vmatprep.subr.bf16.mxu0 %v582
  %652 = vmatpush1.bf16.msra.mxu0 %v581
  %653 = vmatprep.subr.bf16.mxu0 %v580
  %654 = vmatpush1.bf16.msra.mxu0 %v579
  %655 = vmatprep.subr.bf16.mxu0 %v578
  %656 = vmatpush1.bf16.msra.mxu0 %v577
  %657 = vmatprep.subr.bf16.mxu0 %v608
  %658 = vmatpush2.bf16.msra.mxu0 %v607
  %659 = vmatprep.subr.bf16.mxu0 %v606
  %660 = vmatpush2.bf16.msra.mxu0 %v605
  %661 = vmatprep.subr.bf16.mxu0 %v604
  %662 = vmatpush2.bf16.msra.mxu0 %v603
  %663 = vmatprep.subr.bf16.mxu0 %v602
  %664 = vmatpush2.bf16.msra.mxu0 %v601
  %665 = vmatprep.subr.bf16.mxu0 %v600
  %666 = vmatpush2.bf16.msra.mxu0 %v599
  %667 = vmatprep.subr.bf16.mxu0 %v598
  %668 = vmatpush2.bf16.msra.mxu0 %v597
  %669 = vmatprep.subr.bf16.mxu0 %v596
  %670 = vmatpush2.bf16.msra.mxu0 %v595
  %671 = vmatprep.subr.bf16.mxu0 %v594
  %672 = vmatpush2.bf16.msra.mxu0 %v593
  %673 = vmatprep.mubr.bf16.mxu0 %v436
  %674 = vmatmul.mubr.bf16.gmra.mxu0 %v435
  %v675 = vpop.f32.mrf.mxu0
  %v676 = vadd.f32 %v474, %v675
  %v677 = vpop.f32.mrf.mxu0
  %v678 = vadd.f32 %v478, %v677
  %v679 = vpop.f32.mrf.mxu0
  %v680 = vpop.f32.mrf.mxu0
  %681 = vdwg.mxu0
  %v682 = vmax.f32 %v676, 0.0
  %v683 = vmax.f32 %v678, 0.0
  %v684 = vld [vmem:[%s5] sm:$0xff]
  %v685 = vld [vmem:[%s5 + $0x8] sm:$0xff]
  %v686 = vld [vmem:[%s5 + $0x10] sm:$0xff]
  %v687 = vld [vmem:[%s5 + $0x18] sm:$0xff]
  %v688 = vld [vmem:[%s5 + $0x20] sm:$0xff]
  %v689 = vld [vmem:[%s5 + $0x28] sm:$0xff]
  %v690 = vld [vmem:[%s5 + $0x30] sm:$0xff]
  %v691 = vld [vmem:[%s5 + $0x38] sm:$0xff]
  %v692 = vld [vmem:[%s5 + $0x40] sm:$0xff]
  %v693 = vld [vmem:[%s5 + $0x48] sm:$0xff]
  %v694 = vld [vmem:[%s5 + $0x50] sm:$0xff]
  %v695 = vld [vmem:[%s5 + $0x58] sm:$0xff]
  %v696 = vld [vmem:[%s5 + $0x60] sm:$0xff]
  %v697 = vld [vmem:[%s5 + $0x68] sm:$0xff]
  %v698 = vld [vmem:[%s5 + $0x70] sm:$0xff]
  %v699 = vld [vmem:[%s5 + $0x78] sm:$0xff]
  %v700 = vld [vmem:[%s5 + $0x80] sm:$0xff]
  %v701 = vld [vmem:[%s5 + $0x88] sm:$0xff]
  %v702 = vld [vmem:[%s5 + $0x90] sm:$0xff]
  %v703 = vld [vmem:[%s5 + $0x98] sm:$0xff]
  %v704 = vld [vmem:[%s5 + $0xa0] sm:$0xff]
  %v705 = vld [vmem:[%s5 + $0xa8] sm:$0xff]
  %v706 = vld [vmem:[%s5 + $0xb0] sm:$0xff]
  %v707 = vld [vmem:[%s5 + $0xb8] sm:$0xff]
  %v708 = vld [vmem:[%s5 + $0xc0] sm:$0xff]
  %v709 = vld [vmem:[%s5 + $0xc8] sm:$0xff]
  %v710 = vld [vmem:[%s5 + $0xd0] sm:$0xff]
  %v711 = vld [vmem:[%s5 + $0xd8] sm:$0xff]
  %v712 = vld [vmem:[%s5 + $0xe0] sm:$0xff]
  %v713 = vld [vmem:[%s5 + $0xe8] sm:$0xff]
  %v714 = vld [vmem:[%s5 + $0xf0] sm:$0xff]
  %v715 = vld [vmem:[%s5 + $0xf8] sm:$0xff]
  %v716 = vld [vmem:[%s5 + $0x100] sm:$0xff]
  %v717 = vld [vmem:[%s5 + $0x108] sm:$0xff]
  %v718 = vld [vmem:[%s5 + $0x110] sm:$0xff]
  %v719 = vld [vmem:[%s5 + $0x118] sm:$0xff]
  %v720 = vld [vmem:[%s5 + $0x120] sm:$0xff]
  %v721 = vld [vmem:[%s5 + $0x128] sm:$0xff]
  %v722 = vld [vmem:[%s5 + $0x130] sm:$0xff]
  %v723 = vld [vmem:[%s5 + $0x138] sm:$0xff]
  %v724 = vld [vmem:[%s5 + $0x140] sm:$0xff]
  %v725 = vld [vmem:[%s5 + $0x148] sm:$0xff]
  %v726 = vld [vmem:[%s5 + $0x150] sm:$0xff]
  %v727 = vld [vmem:[%s5 + $0x158] sm:$0xff]
  %v728 = vld [vmem:[%s5 + $0x160] sm:$0xff]
  %v729 = vld [vmem:[%s5 + $0x168] sm:$0xff]
  %v730 = vld [vmem:[%s5 + $0x170] sm:$0xff]
  %v731 = vld [vmem:[%s5 + $0x178] sm:$0xff]
  %v732 = vld [vmem:[%s5 + $0x180] sm:$0xff]
  %v733 = vld [vmem:[%s5 + $0x188] sm:$0xff]
  %v734 = vld [vmem:[%s5 + $0x190] sm:$0xff]
  %v735 = vld [vmem:[%s5 + $0x198] sm:$0xff]
  %v736 = vld [vmem:[%s5 + $0x1a0] sm:$0xff]
  %v737 = vld [vmem:[%s5 + $0x1a8] sm:$0xff]
  %v738 = vld [vmem:[%s5 + $0x1b0] sm:$0xff]
  %v739 = vld [vmem:[%s5 + $0x1b8] sm:$0xff]
  %v740 = vld [vmem:[%s5 + $0x1c0] sm:$0xff]
  %v741 = vld [vmem:[%s5 + $0x1c8] sm:$0xff]
  %v742 = vld [vmem:[%s5 + $0x1d0] sm:$0xff]
  %v743 = vld [vmem:[%s5 + $0x1d8] sm:$0xff]
  %v744 = vld [vmem:[%s5 + $0x1e0] sm:$0xff]
  %v745 = vld [vmem:[%s5 + $0x1e8] sm:$0xff]
  %v746 = vld [vmem:[%s5 + $0x1f0] sm:$0xff]
  %v747 = vld [vmem:[%s5 + $0x1f8] sm:$0xff]
  %v748 = vld [vmem:[%s6] sm:$0x3]
  %v750 = vlaneseq
  %v751 = vshrl.u32 %v750, 7
  %v752 = vsub.s32 0, %v751
  %v753 = vrot.slane %v748, %v752
  %v754 = vlaneseq
  %v755 = vshrl.u32 %v754, 7
  %v756 = vsub.s32 1, %v755
  %v757 = vrot.slane %v748, %v756
  %760 = vmatprep.subr.mxu0 %v715
  %761 = vmatpush1.msra.mxu0 %v714
  %762 = vmatprep.subr.mxu0 %v713
  %763 = vmatpush1.msra.mxu0 %v712
  %764 = vmatprep.subr.mxu0 %v711
  %765 = vmatpush1.msra.mxu0 %v710
  %766 = vmatprep.subr.mxu0 %v709
  %767 = vmatpush1.msra.mxu0 %v708
  %768 = vmatprep.subr.mxu0 %v707
  %769 = vmatpush1.msra.mxu0 %v706
  %770 = vmatprep.subr.mxu0 %v705
  %771 = vmatpush1.msra.mxu0 %v704
  %772 = vmatprep.subr.mxu0 %v703
  %773 = vmatpush1.msra.mxu0 %v702
  %774 = vmatprep.subr.mxu0 %v701
  %775 = vmatpush1.msra.mxu0 %v700
  %776 = vmatprep.subr.mxu0 %v699
  %777 = vmatpush1.msra.mxu0 %v698
  %778 = vmatprep.subr.mxu0 %v697
  %779 = vmatpush1.msra.mxu0 %v696
  %780 = vmatprep.subr.mxu0 %v695
  %781 = vmatpush1.msra.mxu0 %v694
  %782 = vmatprep.subr.mxu0 %v693
  %783 = vmatpush1.msra.mxu0 %v692
  %784 = vmatprep.subr.mxu0 %v691
  %785 = vmatpush1.msra.mxu0 %v690
  %786 = vmatprep.subr.mxu0 %v689
  %787 = vmatpush1.msra.mxu0 %v688
  %788 = vmatprep.subr.mxu0 %v687
  %789 = vmatpush1.msra.mxu0 %v686
  %790 = vmatprep.subr.mxu0 %v685
  %791 = vmatpush1.msra.mxu0 %v684
  %792 = vmatprep.subr.mxu0 %v747
  %793 = vmatpush2.msra.mxu0 %v746
  %794 = vmatprep.subr.mxu0 %v745
  %795 = vmatpush2.msra.mxu0 %v744
  %796 = vmatprep.subr.mxu0 %v743
  %797 = vmatpush2.msra.mxu0 %v742
  %798 = vmatprep.subr.mxu0 %v741
  %799 = vmatpush2.msra.mxu0 %v740
  %800 = vmatprep.subr.mxu0 %v739
  %801 = vmatpush2.msra.mxu0 %v738
  %802 = vmatprep.subr.mxu0 %v737
  %803 = vmatpush2.msra.mxu0 %v736
  %804 = vmatprep.subr.mxu0 %v735
  %805 = vmatpush2.msra.mxu0 %v734
  %806 = vmatprep.subr.mxu0 %v733
  %807 = vmatpush2.msra.mxu0 %v732
  %808 = vmatprep.subr.mxu0 %v731
  %809 = vmatpush2.msra.mxu0 %v730
  %810 = vmatprep.subr.mxu0 %v729
  %811 = vmatpush2.msra.mxu0 %v728
  %812 = vmatprep.subr.mxu0 %v727
  %813 = vmatpush2.msra.mxu0 %v726
  %814 = vmatprep.subr.mxu0 %v725
  %815 = vmatpush2.msra.mxu0 %v724
  %816 = vmatprep.subr.mxu0 %v723
  %817 = vmatpush2.msra.mxu0 %v722
  %818 = vmatprep.subr.mxu0 %v721
  %819 = vmatpush2.msra.mxu0 %v720
  %820 = vmatprep.subr.mxu0 %v719
  %821 = vmatpush2.msra.mxu0 %v718
  %822 = vmatprep.subr.mxu0 %v717
  %823 = vmatpush2.msra.mxu0 %v716
  %824 = vmatprep.mubr.f32.mxu0 %v683
  %825 = vmatmul.mubr.f32.gmra.mxu0 %v682
  %v826 = vpop.f32.mrf.mxu0
  %v827 = vadd.f32 %v753, %v826
  %v828 = vpop.f32.mrf.mxu0
  %v829 = vadd.f32 %v757, %v828
  %830 = vdwg.mxu0
  %v833 = vcombine.low %v827, %v829
  %v835 = vunpack.c.l.s4 1983009808
  %v836 = vunpack.c.0.s8 %v835
  %v837 = vlaneseq
  %v838 = vshrl.u32 %v837, 7
  %v839 = vsub.s32 %v836, %v838
  %v840 = vrot.slane %v833, %v839
  %vm842 = vcmask 1041408
  %vm843 = vcmask 797698
  %vm844 = vmor %vm843, %vm842
  %845 = vst.msk [vmem:[%s7] sm:$0xf] %vm844, %v840
  // Predicated region
  $region30: #{cmr_forward.5} parent=0 // pred_check
    _
  $region31: #{cmr_forward.5} parent=0 // pred_check_branch
    %847 = sbr.rel (0) target = $region33
  $region32: #{cmr_forward.5} parent=0 // pred_region
    _
  $region33: #{cmr_forward.5} parent=0 // pred_fallthru
    _
  // Predicated region
  $region34: #{cmr_forward.5} parent=0 // pred_check
    _
  $region35: #{cmr_forward.5} parent=0 // pred_check_branch
    %849 = sbr.rel (0) target = $region37
  $region36: #{cmr_forward.5} parent=0 // pred_region
    _
  $region37: #{cmr_forward.5} parent=0 // pred_fallthru
    _

// kernel: cmr_forward.4
$region0: #{cmr_forward.4}
  #allocation0 [shape = 'u32[]', space=smem, size = 0x4, offset = 0x4, fixed_abs, tag = 'smem constant byte address 0x4 - core index']
  #allocation1 [shape = 'u32[144,128]{1,0:T(1,128)}', space=vmem, size = 0x12000, scoped, tag = 'internal scratch']
  %s0 = inlined_call_operand.vmem [shape: f32[2,3,256], index: 0, kind: input, shape index: {}]
  %s1 = inlined_call_operand.vmem [shape: f32[16,3], index: 1, kind: input, shape index: {}]
  %s2 = inlined_call_operand.vmem [shape: f32[16,1], index: 2, kind: input, shape index: {}]
  %s3 = inlined_call_operand.vmem [shape: f32[64,16], index: 3, kind: input, shape index: {}]
  %s4 = inlined_call_operand.vmem [shape: f32[64,1], index: 4, kind: input, shape index: {}]
  %s5 = inlined_call_operand.hbm [shape: f32[3,128], index: 5, kind: input, shape index: {}]
  %s6 = inlined_call_operand.vmem [shape: f32[32,3], index: 6, kind: input, shape index: {}]
  %s7 = inlined_call_operand.vmem [shape: f32[32,64], index: 7, kind: input, shape index: {}]
  %s8 = inlined_call_operand.vmem [shape: f32[32,1], index: 8, kind: input, shape index: {}]
  %s9 = inlined_call_operand.vmem [shape: f32[128,128], index: 9, kind: input, shape index: {}]
  %s10 = inlined_call_operand.hbm [shape: f32[2,32,32], index: 10, kind: input, shape index: {}]
  %s11 = inlined_call_operand.vmem [shape: f32[2,32,1], index: 11, kind: input, shape index: {}]
  %s12 = inlined_call_operand.hbm [shape: f32[3,32], index: 12, kind: input, shape index: {}]
  %s13 = inlined_call_operand.vmem [shape: f32[3,1], index: 13, kind: input, shape index: {}]
  %s14 = inlined_call_operand.hbm [shape: f32[3,32], index: 14, kind: input, shape index: {}]
  %s15 = inlined_call_operand.vmem [shape: f32[3,1], index: 15, kind: input, shape index: {}]
  %s16 = inlined_call_operand.vmem [shape: f32[128,256], index: 16, kind: input, shape index: {}]
  %s17 = inlined_call_operand.vmem [shape: f32[2,3,128], index: 17, kind: output, shape index: {0}]
  %s18 = inlined_call_operand.vmem [shape: f32[2,3,256], index: 18, kind: output, shape index: {1}]
  %s19 = inlined_call_operand.vmem [shape: f32[2,3,1], index: 19, kind: output, shape index: {2}]
  %20 = xla_tuple %s17, %s18, %s19
  %s21 = sld [smem:[#allocation0]]
  $region133: #{cmr_forward.4} parent=0
    _
  %s23 = ssub.s32 1, %s21
  %s24 = scalar_select 0, %s23, %s21
  $region1: #{cmr_forward.4} parent=0
    #allocation2 [shape = 'u8[2048]{0}', space=vmem, size = 0x800, scoped, tag = 'input window, operand 5, single buffered']
    #allocation3 [shape = 's32[2]{0}', space=sflag, size = 0x8, scoped, tag = 'scoped memory for cmr_forward.4']
    #allocation4 [shape = 'u8[32768]{0}', space=vmem, size = 0x8000, scoped, tag = 'input window, operand 10, single buffered']
    #allocation5 [shape = 's32[1]{0}', space=sflag, size = 0x4, scoped, tag = 'scoped memory for cmr_forward.4']
    #allocation6 [shape = 'u8[2048]{0}', space=vmem, size = 0x800, scoped, tag = 'input window, operand 12, single buffered']
    #allocation7 [shape = 'u8[2048]{0}', space=vmem, size = 0x800, scoped, tag = 'input window, operand 14, single buffered']
    #allocation8 [shape = 's32[1]{0}', space=sflag, size = 0x4, scoped, tag = 'scoped memory for cmr_forward.4']
    %25 = vsyncpa [#allocation3], 0
    %26 = vsyncpa [#allocation5], 0
    %27 = vsyncpa [#allocation8], 0
    loop: start=0, step=1, limit=4
    $region2: #{cmr_forward.4} parent=1 // loop_pre_header
      _
    $region3: #{cmr_forward.4} parent=1 // loop_header
      %s29 = sphi 0, %s33
      %p30 = scmp.ge.s32.totalorder %s29, 4
      %s39 = sphi 0, %s41
      %s42 = sphi 0, %s39
      %s43 = sphi 0, %s42
      %s59 = sphi 0, %s43
      %s63 = sphi 0, %s63
      %s65 = sphi 0, %s63
      %s66 = sphi 0, %s65
      %s80 = sphi 0, %s66
      %s84 = sphi 0, %s84
      %s86 = sphi 0, %s84
      %s87 = sphi 0, %s86
      %s101 = sphi 0, %s87
      %s105 = sphi 0, %s105
      %s107 = sphi 0, %s105
      %s108 = sphi 0, %s107
      %s122 = sphi 0, %s108
      %s126 = sphi 0, %s126
      %s128 = sphi 0, %s126
      %s129 = sphi 0, %s128
      %s143 = sphi 0, %s129
      %s147 = sphi 0, %s147
      %s149 = sphi 0, %s147
      %s150 = sphi 0, %s149
      %s164 = sphi 0, %s150
      %s168 = sphi 0, %s168
      %s170 = sphi 0, %s168
      %s171 = sphi 0, %s170
      %s185 = sphi 0, %s171
      %s189 = sphi 0, %s189
      %s191 = sphi 0, %s189
      %s192 = sphi 0, %s191
      %s206 = sphi 0, %s192
      %s210 = sphi 0, %s210
      %s212 = sphi 0, %s210
      %s213 = sphi 0, %s212
      %s227 = sphi 0, %s213
      %s231 = sphi 0, %s231
      %s233 = sphi 0, %s231
      %s234 = sphi 0, %s233
      %s248 = sphi 0, %s234
      %s252 = sphi 0, %s252
      %s254 = sphi 0, %s252
      %s255 = sphi 0, %s254
      %s269 = sphi 0, %s255
      %s273 = sphi 0, %s273
      %s275 = sphi 0, %s273
      %s276 = sphi 0, %s275
      %s290 = sphi 0, %s276
      %s294 = sphi 0, %s294
      %s296 = sphi 0, %s294
      %s297 = sphi 0, %s296
      %s311 = sphi 0, %s297
      %s315 = sphi 0, %s315
      %s317 = sphi 0, %s315
      %s318 = sphi 0, %s317
      %s332 = sphi 0, %s318
      %s336 = sphi 0, %s336
      %s338 = sphi 0, %s336
      %s339 = sphi 0, %s338
      %s353 = sphi 0, %s339
      %s357 = sphi 0, %s357
      %s359 = sphi 0, %s357
      %s360 = sphi 0, %s359
      %s374 = sphi 0, %s360
      %s378 = sphi 0, %s378
      %s380 = sphi 0, %s378
      %s381 = sphi 0, %s380
      %s395 = sphi 0, %s381
      %s401 = sphi 0, %s403
      %s404 = sphi 0, %s401
      %s405 = sphi 0, %s404
      %s421 = sphi 0, %s405
      %s427 = sphi 0, %s429
      %s430 = sphi 0, %s427
      %s431 = sphi 0, %s430
      %s447 = sphi 0, %s431
      %s453 = sphi 0, %s455
      %s456 = sphi 0, %s453
      %s457 = sphi 0, %s456
      %s473 = sphi 0, %s457
    $region4: #{cmr_forward.4} parent=1 // loop_header_branch
      %32 = sbr.rel (%p30) target = $region8
    $region5: #{cmr_forward.4} parent=1 // loop_body
      %s34 = ssub.s32 %s29, 1
      %s35 = ssub.s32 %s29, 2
      %s36 = sadd.s32 %s29, 1
      %s37 = ssub.s32 %s29, %s36
      %p38 = scmp.eq.s32.totalorder %s37, 0
      %s40 = sadd.s32 %s39, 1
      %s41 = scalar_select %p38, %s39, %s40
      %p44 = pneg %p38
      %p45 = scmp.eq.s32.totalorder %s29, 1
      %p46 = por %p44, %p45
      %p47 = scmp.ne.s32.totalorder %s39, %s42
      %p48 = scmp.eq.s32.totalorder %s29, 0
      %p49 = por %p47, %p48
      %p50 = scmp.ne.s32.totalorder %s39, %s42
      %p51 = scmp.eq.s32.totalorder %s34, 1
      %p52 = por %p50, %p51
      %p53 = scmp.ne.s32.totalorder %s42, %s43
      %p54 = scmp.eq.s32.totalorder %s34, 0
      %p55 = por %p53, %p54
      %p56 = scmp.ne.s32.totalorder %s42, %s43
      %p57 = scmp.eq.s32.totalorder %s35, 1
      %p58 = por %p56, %p57
      %p60 = scmp.ne.s32.totalorder %s43, %s59
      %p61 = scmp.eq.s32.totalorder %s35, 0
      %p62 = por %p60, %p61
      %s64 = sadd.s32 %s63, 1
      %p67 = scmp.eq.s32.totalorder %s29, 1
      %p68 = scmp.ne.s32.totalorder %s63, %s65
      %p69 = scmp.eq.s32.totalorder %s29, 0
      %p70 = por %p68, %p69
      %p71 = scmp.ne.s32.totalorder %s63, %s65
      %p72 = scmp.eq.s32.totalorder %s34, 1
      %p73 = por %p71, %p72
      %p74 = scmp.ne.s32.totalorder %s65, %s66
      %p75 = scmp.eq.s32.totalorder %s34, 0
      %p76 = por %p74, %p75
      %p77 = scmp.ne.s32.totalorder %s65, %s66
      %p78 = scmp.eq.s32.totalorder %s35, 1
      %p79 = por %p77, %p78
      %p81 = scmp.ne.s32.totalorder %s66, %s80
      %p82 = scmp.eq.s32.totalorder %s35, 0
      %p83 = por %p81, %p82
      %s85 = sadd.s32 %s84, 1
      %p88 = scmp.eq.s32.totalorder %s29, 1
      %p89 = scmp.ne.s32.totalorder %s84, %s86
      %p90 = scmp.eq.s32.totalorder %s29, 0
      %p91 = por %p89, %p90
      %p92 = scmp.ne.s32.totalorder %s84, %s86
      %p93 = scmp.eq.s32.totalorder %s34, 1
      %p94 = por %p92, %p93
      %p95 = scmp.ne.s32.totalorder %s86, %s87
      %p96 = scmp.eq.s32.totalorder %s34, 0
      %p97 = por %p95, %p96
      %p98 = scmp.ne.s32.totalorder %s86, %s87
      %p99 = scmp.eq.s32.totalorder %s35, 1
      %p100 = por %p98, %p99
      %p102 = scmp.ne.s32.totalorder %s87, %s101
      %p103 = scmp.eq.s32.totalorder %s35, 0
      %p104 = por %p102, %p103
      %s106 = sadd.s32 %s105, 1
      %p109 = scmp.eq.s32.totalorder %s29, 1
      %p110 = scmp.ne.s32.totalorder %s105, %s107
      %p111 = scmp.eq.s32.totalorder %s29, 0
      %p112 = por %p110, %p111
      %p113 = scmp.ne.s32.totalorder %s105, %s107
      %p114 = scmp.eq.s32.totalorder %s34, 1
      %p115 = por %p113, %p114
      %p116 = scmp.ne.s32.totalorder %s107, %s108
      %p117 = scmp.eq.s32.totalorder %s34, 0
      %p118 = por %p116, %p117
      %p119 = scmp.ne.s32.totalorder %s107, %s108
      %p120 = scmp.eq.s32.totalorder %s35, 1
      %p121 = por %p119, %p120
      %p123 = scmp.ne.s32.totalorder %s108, %s122
      %p124 = scmp.eq.s32.totalorder %s35, 0
      %p125 = por %p123, %p124
      %s127 = sadd.s32 %s126, 1
      %p130 = scmp.eq.s32.totalorder %s29, 1
      %p131 = scmp.ne.s32.totalorder %s126, %s128
      %p132 = scmp.eq.s32.totalorder %s29, 0
      %p133 = por %p131, %p132
      %p134 = scmp.ne.s32.totalorder %s126, %s128
      %p135 = scmp.eq.s32.totalorder %s34, 1
      %p136 = por %p134, %p135
      %p137 = scmp.ne.s32.totalorder %s128, %s129
      %p138 = scmp.eq.s32.totalorder %s34, 0
      %p139 = por %p137, %p138
      %p140 = scmp.ne.s32.totalorder %s128, %s129
      %p141 = scmp.eq.s32.totalorder %s35, 1
      %p142 = por %p140, %p141
      %p144 = scmp.ne.s32.totalorder %s129, %s143
      %p145 = scmp.eq.s32.totalorder %s35, 0
      %p146 = por %p144, %p145
      %s148 = sadd.s32 %s147, 1
      %p151 = scmp.eq.s32.totalorder %s29, 1
      %p152 = scmp.ne.s32.totalorder %s147, %s149
      %p153 = scmp.eq.s32.totalorder %s29, 0
      %p154 = por %p152, %p153
      %p155 = scmp.ne.s32.totalorder %s147, %s149
      %p156 = scmp.eq.s32.totalorder %s34, 1
      %p157 = por %p155, %p156
      %p158 = scmp.ne.s32.totalorder %s149, %s150
      %p159 = scmp.eq.s32.totalorder %s34, 0
      %p160 = por %p158, %p159
      %p161 = scmp.ne.s32.totalorder %s149, %s150
      %p162 = scmp.eq.s32.totalorder %s35, 1
      %p163 = por %p161, %p162
      %p165 = scmp.ne.s32.totalorder %s150, %s164
      %p166 = scmp.eq.s32.totalorder %s35, 0
      %p167 = por %p165, %p166
      %s169 = sadd.s32 %s168, 1
      %p172 = scmp.eq.s32.totalorder %s29, 1
      %p173 = scmp.ne.s32.totalorder %s168, %s170
      %p174 = scmp.eq.s32.totalorder %s29, 0
      %p175 = por %p173, %p174
      %p176 = scmp.ne.s32.totalorder %s168, %s170
      %p177 = scmp.eq.s32.totalorder %s34, 1
      %p178 = por %p176, %p177
      %p179 = scmp.ne.s32.totalorder %s170, %s171
      %p180 = scmp.eq.s32.totalorder %s34, 0
      %p181 = por %p179, %p180
      %p182 = scmp.ne.s32.totalorder %s170, %s171
      %p183 = scmp.eq.s32.totalorder %s35, 1
      %p184 = por %p182, %p183
      %p186 = scmp.ne.s32.totalorder %s171, %s185
      %p187 = scmp.eq.s32.totalorder %s35, 0
      %p188 = por %p186, %p187
      %s190 = sadd.s32 %s189, 1
      %p193 = scmp.eq.s32.totalorder %s29, 1
      %p194 = scmp.ne.s32.totalorder %s189, %s191
      %p195 = scmp.eq.s32.totalorder %s29, 0
      %p196 = por %p194, %p195
      %p197 = scmp.ne.s32.totalorder %s189, %s191
      %p198 = scmp.eq.s32.totalorder %s34, 1
      %p199 = por %p197, %p198
      %p200 = scmp.ne.s32.totalorder %s191, %s192
      %p201 = scmp.eq.s32.totalorder %s34, 0
      %p202 = por %p200, %p201
      %p203 = scmp.ne.s32.totalorder %s191, %s192
      %p204 = scmp.eq.s32.totalorder %s35, 1
      %p205 = por %p203, %p204
      %p207 = scmp.ne.s32.totalorder %s192, %s206
      %p208 = scmp.eq.s32.totalorder %s35, 0
      %p209 = por %p207, %p208
      %s211 = sadd.s32 %s210, 1
      %p214 = scmp.eq.s32.totalorder %s29, 1
      %p215 = scmp.ne.s32.totalorder %s210, %s212
      %p216 = scmp.eq.s32.totalorder %s29, 0
      %p217 = por %p215, %p216
      %p218 = scmp.ne.s32.totalorder %s210, %s212
      %p219 = scmp.eq.s32.totalorder %s34, 1
      %p220 = por %p218, %p219
      %p221 = scmp.ne.s32.totalorder %s212, %s213
      %p222 = scmp.eq.s32.totalorder %s34, 0
      %p223 = por %p221, %p222
      %p224 = scmp.ne.s32.totalorder %s212, %s213
      %p225 = scmp.eq.s32.totalorder %s35, 1
      %p226 = por %p224, %p225
      %p228 = scmp.ne.s32.totalorder %s213, %s227
      %p229 = scmp.eq.s32.totalorder %s35, 0
      %p230 = por %p228, %p229
      %s232 = sadd.s32 %s231, 1
      %p235 = scmp.eq.s32.totalorder %s29, 1
      %p236 = scmp.ne.s32.totalorder %s231, %s233
      %p237 = scmp.eq.s32.totalorder %s29, 0
      %p238 = por %p236, %p237
      %p239 = scmp.ne.s32.totalorder %s231, %s233
      %p240 = scmp.eq.s32.totalorder %s34, 1
      %p241 = por %p239, %p240
      %p242 = scmp.ne.s32.totalorder %s233, %s234
      %p243 = scmp.eq.s32.totalorder %s34, 0
      %p244 = por %p242, %p243
      %p245 = scmp.ne.s32.totalorder %s233, %s234
      %p246 = scmp.eq.s32.totalorder %s35, 1
      %p247 = por %p245, %p246
      %p249 = scmp.ne.s32.totalorder %s234, %s248
      %p250 = scmp.eq.s32.totalorder %s35, 0
      %p251 = por %p249, %p250
      %s253 = sadd.s32 %s252, 1
      %p256 = scmp.eq.s32.totalorder %s29, 1
      %p257 = scmp.ne.s32.totalorder %s252, %s254
      %p258 = scmp.eq.s32.totalorder %s29, 0
      %p259 = por %p257, %p258
      %p260 = scmp.ne.s32.totalorder %s252, %s254
      %p261 = scmp.eq.s32.totalorder %s34, 1
      %p262 = por %p260, %p261
      %p263 = scmp.ne.s32.totalorder %s254, %s255
      %p264 = scmp.eq.s32.totalorder %s34, 0
      %p265 = por %p263, %p264
      %p266 = scmp.ne.s32.totalorder %s254, %s255
      %p267 = scmp.eq.s32.totalorder %s35, 1
      %p268 = por %p266, %p267
      %p270 = scmp.ne.s32.totalorder %s255, %s269
      %p271 = scmp.eq.s32.totalorder %s35, 0
      %p272 = por %p270, %p271
      %s274 = sadd.s32 %s273, 1
      %p277 = scmp.eq.s32.totalorder %s29, 1
      %p278 = scmp.ne.s32.totalorder %s273, %s275
      %p279 = scmp.eq.s32.totalorder %s29, 0
      %p280 = por %p278, %p279
      %p281 = scmp.ne.s32.totalorder %s273, %s275
      %p282 = scmp.eq.s32.totalorder %s34, 1
      %p283 = por %p281, %p282
      %p284 = scmp.ne.s32.totalorder %s275, %s276
      %p285 = scmp.eq.s32.totalorder %s34, 0
      %p286 = por %p284, %p285
      %p287 = scmp.ne.s32.totalorder %s275, %s276
      %p288 = scmp.eq.s32.totalorder %s35, 1
      %p289 = por %p287, %p288
      %p291 = scmp.ne.s32.totalorder %s276, %s290
      %p292 = scmp.eq.s32.totalorder %s35, 0
      %p293 = por %p291, %p292
      %s295 = sadd.s32 %s294, 1
      %p298 = scmp.eq.s32.totalorder %s29, 1
      %p299 = scmp.ne.s32.totalorder %s294, %s296
      %p300 = scmp.eq.s32.totalorder %s29, 0
      %p301 = por %p299, %p300
      %p302 = scmp.ne.s32.totalorder %s294, %s296
      %p303 = scmp.eq.s32.totalorder %s34, 1
      %p304 = por %p302, %p303
      %p305 = scmp.ne.s32.totalorder %s296, %s297
      %p306 = scmp.eq.s32.totalorder %s34, 0
      %p307 = por %p305, %p306
      %p308 = scmp.ne.s32.totalorder %s296, %s297
      %p309 = scmp.eq.s32.totalorder %s35, 1
      %p310 = por %p308, %p309
      %p312 = scmp.ne.s32.totalorder %s297, %s311
      %p313 = scmp.eq.s32.totalorder %s35, 0
      %p314 = por %p312, %p313
      %s316 = sadd.s32 %s315, 1
      %p319 = scmp.eq.s32.totalorder %s29, 1
      %p320 = scmp.ne.s32.totalorder %s315, %s317
      %p321 = scmp.eq.s32.totalorder %s29, 0
      %p322 = por %p320, %p321
      %p323 = scmp.ne.s32.totalorder %s315, %s317
      %p324 = scmp.eq.s32.totalorder %s34, 1
      %p325 = por %p323, %p324
      %p326 = scmp.ne.s32.totalorder %s317, %s318
      %p327 = scmp.eq.s32.totalorder %s34, 0
      %p328 = por %p326, %p327
      %p329 = scmp.ne.s32.totalorder %s317, %s318
      %p330 = scmp.eq.s32.totalorder %s35, 1
      %p331 = por %p329, %p330
      %p333 = scmp.ne.s32.totalorder %s318, %s332
      %p334 = scmp.eq.s32.totalorder %s35, 0
      %p335 = por %p333, %p334
      %s337 = sadd.s32 %s336, 1
      %p340 = scmp.eq.s32.totalorder %s29, 1
      %p341 = scmp.ne.s32.totalorder %s336, %s338
      %p342 = scmp.eq.s32.totalorder %s29, 0
      %p343 = por %p341, %p342
      %p344 = scmp.ne.s32.totalorder %s336, %s338
      %p345 = scmp.eq.s32.totalorder %s34, 1
      %p346 = por %p344, %p345
      %p347 = scmp.ne.s32.totalorder %s338, %s339
      %p348 = scmp.eq.s32.totalorder %s34, 0
      %p349 = por %p347, %p348
      %p350 = scmp.ne.s32.totalorder %s338, %s339
      %p351 = scmp.eq.s32.totalorder %s35, 1
      %p352 = por %p350, %p351
      %p354 = scmp.ne.s32.totalorder %s339, %s353
      %p355 = scmp.eq.s32.totalorder %s35, 0
      %p356 = por %p354, %p355
      %s358 = sadd.s32 %s357, 1
      %p361 = scmp.eq.s32.totalorder %s29, 1
      %p362 = scmp.ne.s32.totalorder %s357, %s359
      %p363 = scmp.eq.s32.totalorder %s29, 0
      %p364 = por %p362, %p363
      %p365 = scmp.ne.s32.totalorder %s357, %s359
      %p366 = scmp.eq.s32.totalorder %s34, 1
      %p367 = por %p365, %p366
      %p368 = scmp.ne.s32.totalorder %s359, %s360
      %p369 = scmp.eq.s32.totalorder %s34, 0
      %p370 = por %p368, %p369
      %p371 = scmp.ne.s32.totalorder %s359, %s360
      %p372 = scmp.eq.s32.totalorder %s35, 1
      %p373 = por %p371, %p372
      %p375 = scmp.ne.s32.totalorder %s360, %s374
      %p376 = scmp.eq.s32.totalorder %s35, 0
      %p377 = por %p375, %p376
      %s379 = sadd.s32 %s378, 1
      %p382 = scmp.eq.s32.totalorder %s29, 1
      %p383 = scmp.ne.s32.totalorder %s378, %s380
      %p384 = scmp.eq.s32.totalorder %s29, 0
      %p385 = por %p383, %p384
      %p386 = scmp.ne.s32.totalorder %s378, %s380
      %p387 = scmp.eq.s32.totalorder %s34, 1
      %p388 = por %p386, %p387
      %p389 = scmp.ne.s32.totalorder %s380, %s381
      %p390 = scmp.eq.s32.totalorder %s34, 0
      %p391 = por %p389, %p390
      %p392 = scmp.ne.s32.totalorder %s380, %s381
      %p393 = scmp.eq.s32.totalorder %s35, 1
      %p394 = por %p392, %p393
      %p396 = scmp.ne.s32.totalorder %s381, %s395
      %p397 = scmp.eq.s32.totalorder %s35, 0
      %p398 = por %p396, %p397
      %s399 = ssub.s32 %s29, %s36
      %p400 = scmp.eq.s32.totalorder %s399, 0
      %s402 = sadd.s32 %s401, 1
      %s403 = scalar_select %p400, %s401, %s402
      %p406 = pneg %p400
      %p407 = scmp.eq.s32.totalorder %s29, 1
      %p408 = por %p406, %p407
      %p409 = scmp.ne.s32.totalorder %s401, %s404
      %p410 = scmp.eq.s32.totalorder %s29, 0
      %p411 = por %p409, %p410
      %p412 = scmp.ne.s32.totalorder %s401, %s404
      %p413 = scmp.eq.s32.totalorder %s34, 1
      %p414 = por %p412, %p413
      %p415 = scmp.ne.s32.totalorder %s404, %s405
      %p416 = scmp.eq.s32.totalorder %s34, 0
      %p417 = por %p415, %p416
      %p418 = scmp.ne.s32.totalorder %s404, %s405
      %p419 = scmp.eq.s32.totalorder %s35, 1
      %p420 = por %p418, %p419
      %p422 = scmp.ne.s32.totalorder %s405, %s421
      %p423 = scmp.eq.s32.totalorder %s35, 0
      %p424 = por %p422, %p423
      %s425 = ssub.s32 %s29, %s36
      %p426 = scmp.eq.s32.totalorder %s425, 0
      %s428 = sadd.s32 %s427, 1
      %s429 = scalar_select %p426, %s427, %s428
      %p432 = pneg %p426
      %p433 = scmp.eq.s32.totalorder %s29, 1
      %p434 = por %p432, %p433
      %p435 = scmp.ne.s32.totalorder %s427, %s430
      %p436 = scmp.eq.s32.totalorder %s29, 0
      %p437 = por %p435, %p436
      %p438 = scmp.ne.s32.totalorder %s427, %s430
      %p439 = scmp.eq.s32.totalorder %s34, 1
      %p440 = por %p438, %p439
      %p441 = scmp.ne.s32.totalorder %s430, %s431
      %p442 = scmp.eq.s32.totalorder %s34, 0
      %p443 = por %p441, %p442
      %p444 = scmp.ne.s32.totalorder %s430, %s431
      %p445 = scmp.eq.s32.totalorder %s35, 1
      %p446 = por %p444, %p445
      %p448 = scmp.ne.s32.totalorder %s431, %s447
      %p449 = scmp.eq.s32.totalorder %s35, 0
      %p450 = por %p448, %p449
      %s451 = ssub.s32 %s29, %s36
      %p452 = scmp.eq.s32.totalorder %s451, 0
      %s454 = sadd.s32 %s453, 1
      %s455 = scalar_select %p452, %s453, %s454
      %p458 = pneg %p452
      %p459 = scmp.eq.s32.totalorder %s29, 1
      %p460 = por %p458, %p459
      %p461 = scmp.ne.s32.totalorder %s453, %s456
      %p462 = scmp.eq.s32.totalorder %s29, 0
      %p463 = por %p461, %p462
      %p464 = scmp.ne.s32.totalorder %s453, %s456
      %p465 = scmp.eq.s32.totalorder %s34, 1
      %p466 = por %p464, %p465
      %p467 = scmp.ne.s32.totalorder %s456, %s457
      %p468 = scmp.eq.s32.totalorder %s34, 0
      %p469 = por %p467, %p468
      %p470 = scmp.ne.s32.totalorder %s456, %s457
      %p471 = scmp.eq.s32.totalorder %s35, 1
      %p472 = por %p470, %p471
      %p474 = scmp.ne.s32.totalorder %s457, %s473
      %p475 = scmp.eq.s32.totalorder %s35, 0
      %p476 = por %p474, %p475
      %p477 = scmp.le.s32.totalorder 1, %s29
      %p478 = scmp.lt.s32.totalorder %s29, 3
      %p479 = pnand %p477, %p478
      %p480 = pneg %p479
      // Predicated region
      $region9: #{cmr_forward.4} parent=5 // pred_check
        _
      $region10: #{cmr_forward.4} parent=5 // pred_check_branch
        %482 = sbr.rel (%p479) target = $region12
      $region11: #{cmr_forward.4} parent=5 // pred_region
        %s483 = ssub.s32 %s29, 1
        // Predicated region
        $region13: #{cmr_forward.4} parent=11 // pred_check
          %p484 = pneg %p76
        $region14: #{cmr_forward.4} parent=11 // pred_check_branch
          %486 = sbr.rel (%p484) target = $region16
        $region15: #{cmr_forward.4} parent=11 // pred_region
          _
        $region16: #{cmr_forward.4} parent=11 // pred_fallthru
          _
        // Predicated region
        $region17: #{cmr_forward.4} parent=11 // pred_check
          %p487 = pneg %p97
        $region18: #{cmr_forward.4} parent=11 // pred_check_branch
          %489 = sbr.rel (%p487) target = $region20
        $region19: #{cmr_forward.4} parent=11 // pred_region
          _
        $region20: #{cmr_forward.4} parent=11 // pred_fallthru
          _
        // Predicated region
        $region21: #{cmr_forward.4} parent=11 // pred_check
          %p490 = pneg %p118
        $region22: #{cmr_forward.4} parent=11 // pred_check_branch
          %492 = sbr.rel (%p490) target = $region24
        $region23: #{cmr_forward.4} parent=11 // pred_region
          _
        $region24: #{cmr_forward.4} parent=11 // pred_fallthru
          _
        // Predicated region
        $region25: #{cmr_forward.4} parent=11 // pred_check
          %p493 = pneg %p139
        $region26: #{cmr_forward.4} parent=11 // pred_check_branch
          %495 = sbr.rel (%p493) target = $region28
        $region27: #{cmr_forward.4} parent=11 // pred_region
          _
        $region28: #{cmr_forward.4} parent=11 // pred_fallthru
          _
        // Predicated region
        $region29: #{cmr_forward.4} parent=11 // pred_check
          %p496 = pneg %p160
        $region30: #{cmr_forward.4} parent=11 // pred_check_branch
          %498 = sbr.rel (%p496) target = $region32
        $region31: #{cmr_forward.4} parent=11 // pred_region
          %s500 = ssub.s32 64, 64
          %501 = vsyncadd [#allocation3], %s500
          %s503 = sshll.u32 [#allocation2], 4
          %s504 = int_to_ptr.vmem [resolvable:$true] %s503
          %506 = dma.hbm_to_vmem [thread:$0]  %s5, 64, %s504, [#allocation3]
        $region32: #{cmr_forward.4} parent=11 // pred_fallthru
          _
        // Predicated region
        $region33: #{cmr_forward.4} parent=11 // pred_check
          %p507 = pneg %p181
        $region34: #{cmr_forward.4} parent=11 // pred_check_branch
          %509 = sbr.rel (%p507) target = $region36
        $region35: #{cmr_forward.4} parent=11 // pred_region
          _
        $region36: #{cmr_forward.4} parent=11 // pred_fallthru
          _
        // Predicated region
        $region37: #{cmr_forward.4} parent=11 // pred_check
          %p510 = pneg %p202
        $region38: #{cmr_forward.4} parent=11 // pred_check_branch
          %512 = sbr.rel (%p510) target = $region40
        $region39: #{cmr_forward.4} parent=11 // pred_region
          _
        $region40: #{cmr_forward.4} parent=11 // pred_fallthru
          _
        // Predicated region
        $region41: #{cmr_forward.4} parent=11 // pred_check
          %p513 = pneg %p223
        $region42: #{cmr_forward.4} parent=11 // pred_check_branch
          %515 = sbr.rel (%p513) target = $region44
        $region43: #{cmr_forward.4} parent=11 // pred_region
          _
        $region44: #{cmr_forward.4} parent=11 // pred_fallthru
          _
        // Predicated region
        $region45: #{cmr_forward.4} parent=11 // pred_check
          %p516 = pneg %p244
        $region46: #{cmr_forward.4} parent=11 // pred_check_branch
          %518 = sbr.rel (%p516) target = $region48
        $region47: #{cmr_forward.4} parent=11 // pred_region
          _
        $region48: #{cmr_forward.4} parent=11 // pred_fallthru
          _
        // Predicated region
        $region49: #{cmr_forward.4} parent=11 // pred_check
          %p519 = pneg %p265
        $region50: #{cmr_forward.4} parent=11 // pred_check_branch
          %521 = sbr.rel (%p519) target = $region52
        $region51: #{cmr_forward.4} parent=11 // pred_region
          %s523 = ssub.s32 1024, 1024
          %524 = vsyncadd [#allocation5], %s523
          %s525 = sshll.u32 [#allocation4], 4
          %s526 = int_to_ptr.vmem [resolvable:$true] %s525
          %531 = dma.hbm_to_vmem [thread:$0]  %s10, 1024, %s526, [#allocation5], 128, 128, 8
        $region52: #{cmr_forward.4} parent=11 // pred_fallthru
          _
        // Predicated region
        $region53: #{cmr_forward.4} parent=11 // pred_check
          %p532 = pneg %p286
        $region54: #{cmr_forward.4} parent=11 // pred_check_branch
          %534 = sbr.rel (%p532) target = $region56
        $region55: #{cmr_forward.4} parent=11 // pred_region
          _
        $region56: #{cmr_forward.4} parent=11 // pred_fallthru
          _
        // Predicated region
        $region57: #{cmr_forward.4} parent=11 // pred_check
          %p535 = pneg %p307
        $region58: #{cmr_forward.4} parent=11 // pred_check_branch
          %537 = sbr.rel (%p535) target = $region60
        $region59: #{cmr_forward.4} parent=11 // pred_region
          %s539 = ssub.s32 64, 64
          %540 = vsyncadd [#allocation5], %s539
          %s542 = sshll.u32 [#allocation6], 4
          %s543 = int_to_ptr.vmem [resolvable:$true] %s542
          %545 = dma.hbm_to_vmem [thread:$0]  %s12, 64, %s543, [#allocation5]
        $region60: #{cmr_forward.4} parent=11 // pred_fallthru
          _
        // Predicated region
        $region61: #{cmr_forward.4} parent=11 // pred_check
          %p546 = pneg %p328
        $region62: #{cmr_forward.4} parent=11 // pred_check_branch
          %548 = sbr.rel (%p546) target = $region64
        $region63: #{cmr_forward.4} parent=11 // pred_region
          _
        $region64: #{cmr_forward.4} parent=11 // pred_fallthru
          _
        // Predicated region
        $region65: #{cmr_forward.4} parent=11 // pred_check
          %p549 = pneg %p349
        $region66: #{cmr_forward.4} parent=11 // pred_check_branch
          %551 = sbr.rel (%p549) target = $region68
        $region67: #{cmr_forward.4} parent=11 // pred_region
          %s553 = ssub.s32 64, 64
          %554 = vsyncadd [#allocation8], %s553
          %s556 = sshll.u32 [#allocation7], 4
          %s557 = int_to_ptr.vmem [resolvable:$true] %s556
          %559 = dma.hbm_to_vmem [thread:$0]  %s14, 64, %s557, [#allocation8]
        $region68: #{cmr_forward.4} parent=11 // pred_fallthru
          _
        // Predicated region
        $region69: #{cmr_forward.4} parent=11 // pred_check
          %p560 = pneg %p370
        $region70: #{cmr_forward.4} parent=11 // pred_check_branch
          %562 = sbr.rel (%p560) target = $region72
        $region71: #{cmr_forward.4} parent=11 // pred_region
          _
        $region72: #{cmr_forward.4} parent=11 // pred_fallthru
          _
        // Predicated region
        $region73: #{cmr_forward.4} parent=11 // pred_check
          %p563 = pneg %p391
        $region74: #{cmr_forward.4} parent=11 // pred_check_branch
          %565 = sbr.rel (%p563) target = $region76
        $region75: #{cmr_forward.4} parent=11 // pred_region
          _
        $region76: #{cmr_forward.4} parent=11 // pred_fallthru
          _
      $region12: #{cmr_forward.4} parent=5 // pred_fallthru
        _
      %p566 = scmp.lt.s32.totalorder %s29, 2
      // Predicated region
      $region77: #{cmr_forward.4} parent=5 // pred_check
        %p567 = pneg %p566
      $region78: #{cmr_forward.4} parent=5 // pred_check_branch
        %569 = sbr.rel (%p567) target = $region80
      $region79: #{cmr_forward.4} parent=5 // pred_region
        // Predicated region
        $region81: #{cmr_forward.4} parent=79 // pred_check
          %p570 = pneg %p49
        $region82: #{cmr_forward.4} parent=79 // pred_check_branch
          %572 = sbr.rel (%p570) target = $region84
        $region83: #{cmr_forward.4} parent=79 // pred_region
          %p573 = scmp.lt.s32.totalorder %s29, 1
          %s574 = scalar_select %p573, %s29, 1
          %s575 = smul.addr %s574, 2
          %s576 = smul.addr %s575, 4
          %s577 = scalar_lea.vmem %s0, %s576
        $region84: #{cmr_forward.4} parent=79 // pred_fallthru
          _
      $region80: #{cmr_forward.4} parent=5 // pred_fallthru
        _
      %p578 = scmp.le.s32.totalorder 1, %s29
      %p579 = scmp.lt.s32.totalorder %s29, 3
      %p580 = pnand %p578, %p579
      %p581 = pneg %p580
      // Predicated region
      $region85: #{cmr_forward.4} parent=5 // pred_check
        _
      $region86: #{cmr_forward.4} parent=5 // pred_check_branch
        %583 = sbr.rel (%p580) target = $region88
      $region87: #{cmr_forward.4} parent=5 // pred_region
        %s584 = ssub.s32 %s29, 1
        // Predicated region
        $region89: #{cmr_forward.4} parent=87 // pred_check
          %p585 = pneg %p160
        $region90: #{cmr_forward.4} parent=87 // pred_check_branch
          %587 = sbr.rel (%p585) target = $region92
        $region91: #{cmr_forward.4} parent=87 // pred_region
          %588 = dma.done [#allocation3], 64
        $region92: #{cmr_forward.4} parent=87 // pred_fallthru
          _
        // Predicated region
        $region93: #{cmr_forward.4} parent=87 // pred_check
          %p589 = pneg %p265
        $region94: #{cmr_forward.4} parent=87 // pred_check_branch
          %591 = sbr.rel (%p589) target = $region96
        $region95: #{cmr_forward.4} parent=87 // pred_region
          %592 = dma.done [#allocation5], 1024
        $region96: #{cmr_forward.4} parent=87 // pred_fallthru
          _
        // Predicated region
        $region97: #{cmr_forward.4} parent=87 // pred_check
          %p593 = pneg %p307
        $region98: #{cmr_forward.4} parent=87 // pred_check_branch
          %595 = sbr.rel (%p593) target = $region100
        $region99: #{cmr_forward.4} parent=87 // pred_region
          %596 = dma.done [#allocation5], 64
        $region100: #{cmr_forward.4} parent=87 // pred_fallthru
          _
        // Predicated region
        $region101: #{cmr_forward.4} parent=87 // pred_check
          %p597 = pneg %p349
        $region102: #{cmr_forward.4} parent=87 // pred_check_branch
          %599 = sbr.rel (%p597) target = $region104
        $region103: #{cmr_forward.4} parent=87 // pred_region
          %600 = dma.done [#allocation8], 64
        $region104: #{cmr_forward.4} parent=87 // pred_fallthru
          _
        %p601 = scmp.lt.s32.totalorder %s34, 1
        %s602 = scalar_select %p601, %s34, 1
        %s603 = smul.addr %s602, 2
        %s604 = smul.addr %s603, 4
        %s605 = scalar_lea.vmem %s0, %s604
        %p606 = pneg %p55
        %p607 = pneg %p52
        %p608 = pneg %p76
        %p609 = pneg %p73
        %p610 = pneg %p97
        %p611 = pneg %p94
        %p612 = pneg %p118
        %p613 = pneg %p115
        %p614 = pneg %p139
        %p615 = pneg %p136
        %p616 = pneg %p160
        %p617 = pneg %p157
        %p618 = pneg %p181
        %p619 = pneg %p178
        %p620 = pneg %p202
        %p621 = pneg %p199
        %p622 = pneg %p223
        %p623 = pneg %p220
        %p624 = pneg %p244
        %p625 = pneg %p241
        %p626 = pneg %p265
        %p627 = pneg %p262
        %p628 = pneg %p286
        %p629 = pneg %p283
        %p630 = pneg %p307
        %p631 = pneg %p304
        %p632 = pneg %p328
        %p633 = pneg %p325
        %p634 = pneg %p349
        %p635 = pneg %p346
        %p636 = pneg %p370
        %p637 = pneg %p367
        %p638 = pneg %p391
        %p639 = pneg %p388
        %p640 = pneg %p417
        %p641 = pneg %p414
        %p642 = scmp.lt.s32.totalorder %s34, 1
        %s643 = scalar_select %p642, %s34, 1
        %s644 = smul.addr %s643, 4
        %s645 = scalar_lea.vmem %s17, %s644
        %p646 = pneg %p443
        %p647 = pneg %p440
        %p648 = scmp.lt.s32.totalorder %s34, 1
        %s649 = scalar_select %p648, %s34, 1
        %s650 = smul.addr %s649, 2
        %s651 = smul.addr %s650, 4
        %s652 = scalar_lea.vmem %s18, %s651
        %p653 = pneg %p469
        %p654 = pneg %p466
        %p655 = scmp.lt.s32.totalorder %s34, 1
        %s656 = scalar_select %p655, %s34, 1
        %s657 = smul.addr %s656, 4
        %s658 = scalar_lea.vmem %s19, %s657
        %p659 = scmp.lt.s32.totalorder %s34, 1
        %s660 = scalar_select %p659, %s34, 1
        %s661 = smul.addr %s660, 2
        %s662 = smul.addr %s661, 4
        %s663 = scalar_lea.vmem %s0, %s662
        %p664 = scmp.lt.s32.totalorder %s34, 1
        %s665 = scalar_select %p664, %s34, 1
        %s666 = smul.addr %s665, 4
        %s667 = scalar_lea.vmem %s17, %s666
        %p668 = scmp.lt.s32.totalorder %s34, 1
        %s669 = scalar_select %p668, %s34, 1
        %s670 = smul.addr %s669, 2
        %s671 = smul.addr %s670, 4
        %s672 = scalar_lea.vmem %s18, %s671
        %p673 = scmp.lt.s32.totalorder %s34, 1
        %s674 = scalar_select %p673, %s34, 1
        %s675 = smul.addr %s674, 4
        %s676 = scalar_lea.vmem %s19, %s675
        %v678 = vld [vmem:[%s1] sm:$0xff]
        %v679 = vld [vmem:[%s1 + $0x8] sm:$0xff]
        %v680 = vld [vmem:[%s663] sm:$0x77]
        %v681 = vld [vmem:[%s2] sm:$0xff]
        %v682 = vld [vmem:[%s2 + $0x8] sm:$0xff]
        %684 = vset.pattern.permute.xlu0 0
        %685 = vperm.xlu0 %684, %v681
        %v686 = vpop.permute.xlu0 %685
        %689 = vset.pattern.permute.xlu0 0
        %690 = vperm.xlu0 %689, %v682
        %v691 = vpop.permute.xlu0 %690
        %v694 = vcombine.high %v680, %v680
        %vm695 = vcmask 23552
        %v697 = vsel %vm695, %v678, 0
        %v700 = vsel %vm695, %v679, 0
        %vm702 = vcmask 1042432
        %v703 = vsel %vm702, %v680, 0
        %v705 = vsel %vm702, %v694, 0
        %707 = vmatprep.subr.mxu0 0.0
        %708 = vmatpush1.msra.mxu0 0.0
        %709 = vmatprep.subr.mxu0 0.0
        %710 = vmatpush1.msra.mxu0 0.0
        %711 = vmatprep.subr.mxu0 0.0
        %712 = vmatpush1.msra.mxu0 0.0
        %713 = vmatprep.subr.mxu0 0.0
        %714 = vmatpush1.msra.mxu0 0.0
        %715 = vmatprep.subr.mxu0 0.0
        %716 = vmatpush1.msra.mxu0 0.0
        %717 = vmatprep.subr.mxu0 0.0
        %718 = vmatpush1.msra.mxu0 0.0
        %719 = vmatprep.subr.mxu0 0.0
        %720 = vmatpush1.msra.mxu0 0.0
        %721 = vmatprep.subr.mxu0 0.0
        %722 = vmatpush1.msra.mxu0 0.0
        %723 = vmatprep.subr.mxu0 0.0
        %724 = vmatpush1.msra.mxu0 0.0
        %725 = vmatprep.subr.mxu0 0.0
        %726 = vmatpush1.msra.mxu0 0.0
        %727 = vmatprep.subr.mxu0 0.0
        %728 = vmatpush1.msra.mxu0 0.0
        %729 = vmatprep.subr.mxu0 0.0
        %730 = vmatpush1.msra.mxu0 0.0
        %731 = vmatprep.subr.mxu0 0.0
        %732 = vmatpush1.msra.mxu0 0.0
        %733 = vmatprep.subr.mxu0 0.0
        %734 = vmatpush1.msra.mxu0 0.0
        %735 = vmatprep.subr.mxu0 0.0
        %736 = vmatpush1.msra.mxu0 0.0
        %737 = vmatprep.subr.mxu0 %v705
        %738 = vmatpush1.msra.mxu0 %v703
        %739 = vmatprep.subr.mxu0 0.0
        %740 = vmatpush2.msra.mxu0 0.0
        %741 = vmatprep.subr.mxu0 0.0
        %742 = vmatpush2.msra.mxu0 0.0
        %743 = vmatprep.subr.mxu0 0.0
        %744 = vmatpush2.msra.mxu0 0.0
        %745 = vmatprep.subr.mxu0 0.0
        %746 = vmatpush2.msra.mxu0 0.0
        %747 = vmatprep.subr.mxu0 0.0
        %748 = vmatpush2.msra.mxu0 0.0
        %749 = vmatprep.subr.mxu0 0.0
        %750 = vmatpush2.msra.mxu0 0.0
        %751 = vmatprep.subr.mxu0 0.0
        %752 = vmatpush2.msra.mxu0 0.0
        %753 = vmatprep.subr.mxu0 0.0
        %754 = vmatpush2.msra.mxu0 0.0
        %755 = vmatprep.subr.mxu0 0.0
        %756 = vmatpush2.msra.mxu0 0.0
        %757 = vmatprep.subr.mxu0 0.0
        %758 = vmatpush2.msra.mxu0 0.0
        %759 = vmatprep.subr.mxu0 0.0
        %760 = vmatpush2.msra.mxu0 0.0
        %761 = vmatprep.subr.mxu0 0.0
        %762 = vmatpush2.msra.mxu0 0.0
        %763 = vmatprep.subr.mxu0 0.0
        %764 = vmatpush2.msra.mxu0 0.0
        %765 = vmatprep.subr.mxu0 0.0
        %766 = vmatpush2.msra.mxu0 0.0
        %767 = vmatprep.subr.mxu0 0.0
        %768 = vmatpush2.msra.mxu0 0.0
        %769 = vmatprep.subr.mxu0 0.0
        %770 = vmatpush2.msra.mxu0 0.0
        %771 = vmatprep.mubr.f32.mxu0 0.0
        %772 = vmatmul.mubr.f32.gmra.mxu0 %v697
        %v773 = vpop.f32.mrf.mxu0
        %v774 = vadd.f32 %v686, %v773
        %v775 = vpop.f32.mrf.mxu0
        %v776 = vadd.f32 %v686, %v775
        %777 = vmatprep.mubr.f32.mxu0 0.0
        %778 = vmatmul.mubr.f32.gmra.mxu0 %v700
        %v779 = vpop.f32.mrf.mxu0
        %v780 = vadd.f32 %v691, %v779
        %v781 = vpop.f32.mrf.mxu0
        %v782 = vadd.f32 %v691, %v781
        %783 = vdwg.mxu0
        %v784 = vmax.f32 %v774, 0.0
        %v785 = vmax.f32 %v776, 0.0
        %v786 = vmax.f32 %v780, 0.0
        %v787 = vmax.f32 %v782, 0.0
        %v788 = vadd.f32 %v784, %v785
        %789 = vadd.xlane.f32.xlu0 %v788
        %v790 = vpop.xlane.xlu0 %789
        %v791 = vadd.f32 %v786, %v787
        %792 = vadd.xlane.f32.xlu0 %v791
        %v793 = vpop.xlane.xlu0 %792
        %v794 = vmul.f32 %v790, 0.00390625
        %v795 = vmul.f32 %v793, 0.00390625
        %v796 = vld [vmem:[%s3] sm:$0xff]
        %v797 = vld [vmem:[%s3 + $0x8] sm:$0xff]
        %v798 = vld [vmem:[%s3 + $0x10] sm:$0xff]
        %v799 = vld [vmem:[%s3 + $0x18] sm:$0xff]
        %v800 = vld [vmem:[%s3 + $0x20] sm:$0xff]
        %v801 = vld [vmem:[%s3 + $0x28] sm:$0xff]
        %v802 = vld [vmem:[%s3 + $0x30] sm:$0xff]
        %v803 = vld [vmem:[%s3 + $0x38] sm:$0xff]
        %v804 = vld [vmem:[%s4] sm:$0xff]
        %v805 = vld [vmem:[%s4 + $0x8] sm:$0xff]
        %v806 = vld [vmem:[%s4 + $0x10] sm:$0xff]
        %v807 = vld [vmem:[%s4 + $0x18] sm:$0xff]
        %v808 = vld [vmem:[%s4 + $0x20] sm:$0xff]
        %v809 = vld [vmem:[%s4 + $0x28] sm:$0xff]
        %v810 = vld [vmem:[%s4 + $0x30] sm:$0xff]
        %v811 = vld [vmem:[%s4 + $0x38] sm:$0xff]
        %vm812 = vcmask 130048
        %v814 = vsel %vm812, %v796, 0
        %v817 = vsel %vm812, %v797, 0
        %v820 = vsel %vm812, %v798, 0
        %v823 = vsel %vm812, %v799, 0
        %v826 = vsel %vm812, %v800, 0
        %v829 = vsel %vm812, %v801, 0
        %v832 = vsel %vm812, %v802, 0
        %v835 = vsel %vm812, %v803, 0
        %837 = vmatprep.subr.mxu0 0.0
        %838 = vmatpush1.msra.mxu0 0.0
        %839 = vmatprep.subr.mxu0 0.0
        %840 = vmatpush1.msra.mxu0 0.0
        %841 = vmatprep.subr.mxu0 0.0
        %842 = vmatpush1.msra.mxu0 0.0
        %843 = vmatprep.subr.mxu0 0.0
        %844 = vmatpush1.msra.mxu0 0.0
        %845 = vmatprep.subr.mxu0 0.0
        %846 = vmatpush1.msra.mxu0 0.0
        %847 = vmatprep.subr.mxu0 0.0
        %848 = vmatpush1.msra.mxu0 0.0
        %849 = vmatprep.subr.mxu0 0.0
        %850 = vmatpush1.msra.mxu0 0.0
        %851 = vmatprep.subr.mxu0 0.0
        %852 = vmatpush1.msra.mxu0 0.0
        %853 = vmatprep.subr.mxu0 0.0
        %854 = vmatpush1.msra.mxu0 0.0
        %855 = vmatprep.subr.mxu0 0.0
        %856 = vmatpush1.msra.mxu0 0.0
        %857 = vmatprep.subr.mxu0 0.0
        %858 = vmatpush1.msra.mxu0 0.0
        %859 = vmatprep.subr.mxu0 0.0
        %860 = vmatpush1.msra.mxu0 0.0
        %861 = vmatprep.subr.mxu0 0.0
        %862 = vmatpush1.msra.mxu0 0.0
        %863 = vmatprep.subr.mxu0 0.0
        %864 = vmatpush1.msra.mxu0 0.0
        %865 = vmatprep.subr.mxu0 0.0
        %866 = vmatpush1.msra.mxu0 %v795
        %867 = vmatprep.subr.mxu0 0.0
        %868 = vmatpush1.msra.mxu0 %v794
        %869 = vmatprep.subr.mxu0 0.0
        %870 = vmatpush2.msra.mxu0 0.0
        %871 = vmatprep.subr.mxu0 0.0
        %872 = vmatpush2.msra.mxu0 0.0
        %873 = vmatprep.subr.mxu0 0.0
        %874 = vmatpush2.msra.mxu0 0.0
        %875 = vmatprep.subr.mxu0 0.0
        %876 = vmatpush2.msra.mxu0 0.0
        %877 = vmatprep.subr.mxu0 0.0
        %878 = vmatpush2.msra.mxu0 0.0
        %879 = vmatprep.subr.mxu0 0.0
        %880 = vmatpush2.msra.mxu0 0.0
        %881 = vmatprep.subr.mxu0 0.0
        %882 = vmatpush2.msra.mxu0 0.0
        %883 = vmatprep.subr.mxu0 0.0
        %884 = vmatpush2.msra.mxu0 0.0
        %885 = vmatprep.subr.mxu0 0.0
        %886 = vmatpush2.msra.mxu0 0.0
        %887 = vmatprep.subr.mxu0 0.0
        %888 = vmatpush2.msra.mxu0 0.0
        %889 = vmatprep.subr.mxu0 0.0
        %890 = vmatpush2.msra.mxu0 0.0
        %891 = vmatprep.subr.mxu0 0.0
        %892 = vmatpush2.msra.mxu0 0.0
        %893 = vmatprep.subr.mxu0 0.0
        %894 = vmatpush2.msra.mxu0 0.0
        %895 = vmatprep.subr.mxu0 0.0
        %896 = vmatpush2.msra.mxu0 0.0
        %897 = vmatprep.subr.mxu0 0.0
        %898 = vmatpush2.msra.mxu0 0.0
        %899 = vmatprep.subr.mxu0 0.0
        %900 = vmatpush2.msra.mxu0 0.0
        %901 = vmatprep.mubr.f32.mxu0 0.0
        %902 = vmatmul.mubr.f32.gmra.mxu0 %v814
        %v903 = vpop.f32.mrf.mxu0
        %v904 = vadd.f32 %v804, %v903
        %v905 = vpop.f32.mrf.mxu0
        %906 = vmatprep.mubr.f32.mxu0 0.0
        %907 = vmatmul.mubr.f32.gmra.mxu0 %v817
        %v908 = vpop.f32.mrf.mxu0
        %v909 = vadd.f32 %v805, %v908
        %v910 = vpop.f32.mrf.mxu0
        %911 = vmatprep.mubr.f32.mxu0 0.0
        %912 = vmatmul.mubr.f32.gmra.mxu0 %v820
        %v913 = vpop.f32.mrf.mxu0
        %v914 = vadd.f32 %v806, %v913
        %v915 = vpop.f32.mrf.mxu0
        %916 = vmatprep.mubr.f32.mxu0 0.0
        %917 = vmatmul.mubr.f32.gmra.mxu0 %v823
        %v918 = vpop.f32.mrf.mxu0
        %v919 = vadd.f32 %v807, %v918
        %v920 = vpop.f32.mrf.mxu0
        %921 = vmatprep.mubr.f32.mxu0 0.0
        %922 = vmatmul.mubr.f32.gmra.mxu0 %v826
        %v923 = vpop.f32.mrf.mxu0
        %v924 = vadd.f32 %v808, %v923
        %v925 = vpop.f32.mrf.mxu0
        %926 = vmatprep.mubr.f32.mxu0 0.0
        %927 = vmatmul.mubr.f32.gmra.mxu0 %v829
        %v928 = vpop.f32.mrf.mxu0
        %v929 = vadd.f32 %v809, %v928
        %v930 = vpop.f32.mrf.mxu0
        %931 = vmatprep.mubr.f32.mxu0 0.0
        %932 = vmatmul.mubr.f32.gmra.mxu0 %v832
        %v933 = vpop.f32.mrf.mxu0
        %v934 = vadd.f32 %v810, %v933
        %v935 = vpop.f32.mrf.mxu0
        %936 = vmatprep.mubr.f32.mxu0 0.0
        %937 = vmatmul.mubr.f32.gmra.mxu0 %v835
        %v938 = vpop.f32.mrf.mxu0
        %v939 = vadd.f32 %v811, %v938
        %v940 = vpop.f32.mrf.mxu0
        %941 = vdwg.mxu0
        %v942 = vmax.f32 %v904, 0.0
        %v943 = vmax.f32 %v909, 0.0
        %v944 = vmax.f32 %v914, 0.0
        %v945 = vmax.f32 %v919, 0.0
        %v946 = vmax.f32 %v924, 0.0
        %v947 = vmax.f32 %v929, 0.0
        %v948 = vmax.f32 %v934, 0.0
        %v949 = vmax.f32 %v939, 0.0
        %v950 = vld [vmem:[%s6] sm:$0xff]
        %v951 = vld [vmem:[%s6 + $0x8] sm:$0xff]
        %v952 = vld [vmem:[%s6 + $0x10] sm:$0xff]
        %v953 = vld [vmem:[%s6 + $0x18] sm:$0xff]
        %v954 = vld [vmem:[#allocation2] sm:$0x7]
        %v955 = vld [vmem:[%s7] sm:$0xff]
        %v956 = vld [vmem:[%s7 + $0x8] sm:$0xff]
        %v957 = vld [vmem:[%s7 + $0x10] sm:$0xff]
        %v958 = vld [vmem:[%s7 + $0x18] sm:$0xff]
        %vm959 = vcmask 523264
        %v961 = vsel %vm959, %v955, 0
        %v964 = vsel %vm959, %v956, 0
        %v967 = vsel %vm959, %v957, 0
        %v970 = vsel %vm959, %v958, 0
        %972 = vmatprep.subr.mxu0 0.0
        %973 = vmatpush1.msra.mxu0 0.0
        %974 = vmatprep.subr.mxu0 0.0
        %975 = vmatpush1.msra.mxu0 0.0
        %976 = vmatprep.subr.mxu0 0.0
        %977 = vmatpush1.msra.mxu0 0.0
        %978 = vmatprep.subr.mxu0 0.0
        %979 = vmatpush1.msra.mxu0 0.0
        %980 = vmatprep.subr.mxu0 0.0
        %981 = vmatpush1.msra.mxu0 0.0
        %982 = vmatprep.subr.mxu0 0.0
        %983 = vmatpush1.msra.mxu0 0.0
        %984 = vmatprep.subr.mxu0 0.0
        %985 = vmatpush1.msra.mxu0 0.0
        %986 = vmatprep.subr.mxu0 0.0
        %987 = vmatpush1.msra.mxu0 0.0
        %988 = vmatprep.subr.mxu0 0.0
        %989 = vmatpush1.msra.mxu0 %v949
        %990 = vmatprep.subr.mxu0 0.0
        %991 = vmatpush1.msra.mxu0 %v948
        %992 = vmatprep.subr.mxu0 0.0
        %993 = vmatpush1.msra.mxu0 %v947
        %994 = vmatprep.subr.mxu0 0.0
        %995 = vmatpush1.msra.mxu0 %v946
        %996 = vmatprep.subr.mxu0 0.0
        %997 = vmatpush1.msra.mxu0 %v945
        %998 = vmatprep.subr.mxu0 0.0
        %999 = vmatpush1.msra.mxu0 %v944
        %1000 = vmatprep.subr.mxu0 0.0
        %1001 = vmatpush1.msra.mxu0 %v943
        %1002 = vmatprep.subr.mxu0 0.0
        %1003 = vmatpush1.msra.mxu0 %v942
        %1004 = vmatprep.subr.mxu0 0.0
        %1005 = vmatpush2.msra.mxu0 0.0
        %1006 = vmatprep.subr.mxu0 0.0
        %1007 = vmatpush2.msra.mxu0 0.0
        %1008 = vmatprep.subr.mxu0 0.0
        %1009 = vmatpush2.msra.mxu0 0.0
        %1010 = vmatprep.subr.mxu0 0.0
        %1011 = vmatpush2.msra.mxu0 0.0
        %1012 = vmatprep.subr.mxu0 0.0
        %1013 = vmatpush2.msra.mxu0 0.0
        %1014 = vmatprep.subr.mxu0 0.0
        %1015 = vmatpush2.msra.mxu0 0.0
        %1016 = vmatprep.subr.mxu0 0.0
        %1017 = vmatpush2.msra.mxu0 0.0
        %1018 = vmatprep.subr.mxu0 0.0
        %1019 = vmatpush2.msra.mxu0 0.0
        %1020 = vmatprep.subr.mxu0 0.0
        %1021 = vmatpush2.msra.mxu0 0.0
        %1022 = vmatprep.subr.mxu0 0.0
        %1023 = vmatpush2.msra.mxu0 0.0
        %1024 = vmatprep.subr.mxu0 0.0
        %1025 = vmatpush2.msra.mxu0 0.0
        %1026 = vmatprep.subr.mxu0 0.0
        %1027 = vmatpush2.msra.mxu0 0.0
        %1028 = vmatprep.subr.mxu0 0.0
        %1029 = vmatpush2.msra.mxu0 0.0
        %1030 = vmatprep.subr.mxu0 0.0
        %1031 = vmatpush2.msra.mxu0 0.0
        %1032 = vmatprep.subr.mxu0 0.0
        %1033 = vmatpush2.msra.mxu0 0.0
        %1034 = vmatprep.subr.mxu0 0.0
        %1035 = vmatpush2.msra.mxu0 0.0
        %1036 = vmatprep.mubr.f32.mxu0 0.0
        %1037 = vmatmul.mubr.f32.gmra.mxu0 %v961
        %v1038 = vpop.f32.mrf.mxu0
        %v1039 = vadd.f32 0.0, %v1038
        %v1040 = vpop.f32.mrf.mxu0
        %1041 = vmatprep.mubr.f32.mxu0 0.0
        %1042 = vmatmul.mubr.f32.gmra.mxu0 %v964
        %v1043 = vpop.f32.mrf.mxu0
        %v1044 = vadd.f32 0.0, %v1043
        %v1045 = vpop.f32.mrf.mxu0
        %1046 = vmatprep.mubr.f32.mxu0 0.0
        %1047 = vmatmul.mubr.f32.gmra.mxu0 %v967
        %v1048 = vpop.f32.mrf.mxu0
        %v1049 = vadd.f32 0.0, %v1048
        %v1050 = vpop.f32.mrf.mxu0
        %1051 = vmatprep.mubr.f32.mxu0 0.0
        %1052 = vmatmul.mubr.f32.gmra.mxu0 %v970
        %v1053 = vpop.f32.mrf.mxu0
        %v1054 = vadd.f32 0.0, %v1053
        %v1055 = vpop.f32.mrf.mxu0
        %1056 = vdwg.mxu0
        %1058 = vset.pattern.permute.xlu0 0
        %1059 = vperm.xlu0 %1058, %v1039
        %v1060 = vpop.permute.xlu0 %1059
        %1063 = vset.pattern.permute.xlu0 0
        %1064 = vperm.xlu0 %1063, %v1044
        %v1065 = vpop.permute.xlu0 %1064
        %1068 = vset.pattern.permute.xlu0 0
        %1069 = vperm.xlu0 %1068, %v1049
        %v1070 = vpop.permute.xlu0 %1069
        %1073 = vset.pattern.permute.xlu0 0
        %1074 = vperm.xlu0 %1073, %v1054
        %v1075 = vpop.permute.xlu0 %1074
        %v1078 = vsel %vm695, %v950, 0
        %v1081 = vsel %vm695, %v951, 0
        %v1084 = vsel %vm695, %v952, 0
        %v1087 = vsel %vm695, %v953, 0
        %v1090 = vsel %vm702, %v954, 0
        %1092 = vmatprep.subr.mxu0 0.0
        %1093 = vmatpush1.msra.mxu0 0.0
        %1094 = vmatprep.subr.mxu0 0.0
        %1095 = vmatpush1.msra.mxu0 0.0
        %1096 = vmatprep.subr.mxu0 0.0
        %1097 = vmatpush1.msra.mxu0 0.0
        %1098 = vmatprep.subr.mxu0 0.0
        %1099 = vmatpush1.msra.mxu0 0.0
        %1100 = vmatprep.subr.mxu0 0.0
        %1101 = vmatpush1.msra.mxu0 0.0
        %1102 = vmatprep.subr.mxu0 0.0
        %1103 = vmatpush1.msra.mxu0 0.0
        %1104 = vmatprep.subr.mxu0 0.0
        %1105 = vmatpush1.msra.mxu0 0.0
        %1106 = vmatprep.subr.mxu0 0.0
        %1107 = vmatpush1.msra.mxu0 0.0
        %1108 = vmatprep.subr.mxu0 0.0
        %1109 = vmatpush1.msra.mxu0 0.0
        %1110 = vmatprep.subr.mxu0 0.0
        %1111 = vmatpush1.msra.mxu0 0.0
        %1112 = vmatprep.subr.mxu0 0.0
        %1113 = vmatpush1.msra.mxu0 0.0
        %1114 = vmatprep.subr.mxu0 0.0
        %1115 = vmatpush1.msra.mxu0 0.0
        %1116 = vmatprep.subr.mxu0 0.0
        %1117 = vmatpush1.msra.mxu0 0.0
        %1118 = vmatprep.subr.mxu0 0.0
        %1119 = vmatpush1.msra.mxu0 0.0
        %1120 = vmatprep.subr.mxu0 0.0
        %1121 = vmatpush1.msra.mxu0 0.0
        %1122 = vmatprep.subr.mxu0 0.0
        %1123 = vmatpush1.msra.mxu0 %v1090
        %1124 = vmatprep.subr.mxu0 0.0
        %1125 = vmatpush2.msra.mxu0 0.0
        %1126 = vmatprep.subr.mxu0 0.0
        %1127 = vmatpush2.msra.mxu0 0.0
        %1128 = vmatprep.subr.mxu0 0.0
        %1129 = vmatpush2.msra.mxu0 0.0
        %1130 = vmatprep.subr.mxu0 0.0
        %1131 = vmatpush2.msra.mxu0 0.0
        %1132 = vmatprep.subr.mxu0 0.0
        %1133 = vmatpush2.msra.mxu0 0.0
        %1134 = vmatprep.subr.mxu0 0.0
        %1135 = vmatpush2.msra.mxu0 0.0
        %1136 = vmatprep.subr.mxu0 0.0
        %1137 = vmatpush2.msra.mxu0 0.0
        %1138 = vmatprep.subr.mxu0 0.0
        %1139 = vmatpush2.msra.mxu0 0.0
        %1140 = vmatprep.subr.mxu0 0.0
        %1141 = vmatpush2.msra.mxu0 0.0
        %1142 = vmatprep.subr.mxu0 0.0
        %1143 = vmatpush2.msra.mxu0 0.0
        %1144 = vmatprep.subr.mxu0 0.0
        %1145 = vmatpush2.msra.mxu0 0.0
        %1146 = vmatprep.subr.mxu0 0.0
        %1147 = vmatpush2.msra.mxu0 0.0
        %1148 = vmatprep.subr.mxu0 0.0
        %1149 = vmatpush2.msra.mxu0 0.0
        %1150 = vmatprep.subr.mxu0 0.0
        %1151 = vmatpush2.msra.mxu0 0.0
        %1152 = vmatprep.subr.mxu0 0.0
        %1153 = vmatpush2.msra.mxu0 0.0
        %1154 = vmatprep.subr.mxu0 0.0
        %1155 = vmatpush2.msra.mxu0 0.0
        %1156 = vmatprep.mubr.f32.mxu0 0.0
        %1157 = vmatmul.mubr.f32.gmra.mxu0 %v1078
        %v1158 = vpop.f32.mrf.mxu0
        %v1159 = vadd.f32 %v1060, %v1158
        %v1160 = vpop.f32.mrf.mxu0
        %1161 = vmatprep.mubr.f32.mxu0 0.0
        %1162 = vmatmul.mubr.f32.gmra.mxu0 %v1081
        %v1163 = vpop.f32.mrf.mxu0
        %v1164 = vadd.f32 %v1065, %v1163
        %v1165 = vpop.f32.mrf.mxu0
        %1166 = vmatprep.mubr.f32.mxu0 0.0
        %1167 = vmatmul.mubr.f32.gmra.mxu0 %v1084
        %v1168 = vpop.f32.mrf.mxu0
        %v1169 = vadd.f32 %v1070, %v1168
        %v1170 = vpop.f32.mrf.mxu0
        %1171 = vmatprep.mubr.f32.mxu0 0.0
        %1172 = vmatmul.mubr.f32.gmra.mxu0 %v1087
        %v1173 = vpop.f32.mrf.mxu0
        %v1174 = vadd.f32 %v1075, %v1173
        %v1175 = vpop.f32.mrf.mxu0
        %1176 = vdwg.mxu0
        %v1177 = vld [vmem:[%s8] sm:$0xff]
        %v1178 = vld [vmem:[%s8 + $0x8] sm:$0xff]
        %v1179 = vld [vmem:[%s8 + $0x10] sm:$0xff]
        %v1180 = vld [vmem:[%s8 + $0x18] sm:$0xff]
        %1182 = vset.pattern.permute.xlu0 0
        %1183 = vperm.xlu0 %1182, %v1177
        %v1184 = vpop.permute.xlu0 %1183
        %1187 = vset.pattern.permute.xlu0 0
        %1188 = vperm.xlu0 %1187, %v1178
        %v1189 = vpop.permute.xlu0 %1188
        %1192 = vset.pattern.permute.xlu0 0
        %1193 = vperm.xlu0 %1192, %v1179
        %v1194 = vpop.permute.xlu0 %1193
        %1197 = vset.pattern.permute.xlu0 0
        %1198 = vperm.xlu0 %1197, %v1180
        %v1199 = vpop.permute.xlu0 %1198
        %v1201 = vadd.f32 %v1159, %v1184
        %v1202 = vadd.f32 %v1164, %v1189
        %v1203 = vadd.f32 %v1169, %v1194
        %v1204 = vadd.f32 %v1174, %v1199
        %v1205 = vmax.f32 %v1201, 0.0
        %v1206 = vmax.f32 %v1202, 0.0
        %v1207 = vmax.f32 %v1203, 0.0
        %v1208 = vmax.f32 %v1204, 0.0
        %v1209 = vld [vmem:[%s9] sm:$0xff]
        %v1210 = vld [vmem:[%s9 + $0x8] sm:$0xff]
        %v1211 = vld [vmem:[%s9 + $0x10] sm:$0xff]
        %v1212 = vld [vmem:[%s9 + $0x18] sm:$0xff]
        %v1213 = vld [vmem:[%s9 + $0x20] sm:$0xff]
        %v1214 = vld [vmem:[%s9 + $0x28] sm:$0xff]
        %v1215 = vld [vmem:[%s9 + $0x30] sm:$0xff]
        %v1216 = vld [vmem:[%s9 + $0x38] sm:$0xff]
        %v1217 = vld [vmem:[%s9 + $0x40] sm:$0xff]
        %v1218 = vld [vmem:[%s9 + $0x48] sm:$0xff]
        %v1219 = vld [vmem:[%s9 + $0x50] sm:$0xff]
        %v1220 = vld [vmem:[%s9 + $0x58] sm:$0xff]
        %v1221 = vld [vmem:[%s9 + $0x60] sm:$0xff]
        %v1222 = vld [vmem:[%s9 + $0x68] sm:$0xff]
        %v1223 = vld [vmem:[%s9 + $0x70] sm:$0xff]
        %v1224 = vld [vmem:[%s9 + $0x78] sm:$0xff]
        %v1225 = vpack.c.bf16 %v1210, %v1209
        %v1226 = vpack.c.bf16 %v1212, %v1211
        %v1227 = vpack.c.bf16 %v1214, %v1213
        %v1228 = vpack.c.bf16 %v1216, %v1215
        %v1229 = vpack.c.bf16 %v1218, %v1217
        %v1230 = vpack.c.bf16 %v1220, %v1219
        %v1231 = vpack.c.bf16 %v1222, %v1221
        %v1232 = vpack.c.bf16 %v1224, %v1223
        %v1233 = vld [vmem:[#allocation4] sm:$0xff]
        %v1234 = vld [vmem:[#allocation4 + $0x8] sm:$0xff]
        %v1235 = vld [vmem:[#allocation4 + $0x10] sm:$0xff]
        %v1236 = vld [vmem:[#allocation4 + $0x18] sm:$0xff]
        %v1237 = vpack.c.bf16 %v1234, %v1233
        %v1238 = vpack.c.bf16 %v1236, %v1235
        %v1239 = vpack.c.bf16 %v1206, %v1205
        %v1240 = vpack.c.bf16 %v1208, %v1207
        %vm1241 = vcmask 261120
        %v1243 = vsel %vm1241, %v1237, 0
        %v1246 = vsel %vm1241, %v1238, 0
        %1248 = vmatprep.subr.bf16.mxu0 0
        %1249 = vmatpush1.bf16.msra.mxu0 0
        %1250 = vmatprep.subr.bf16.mxu0 0
        %1251 = vmatpush1.bf16.msra.mxu0 0
        %1252 = vmatprep.subr.bf16.mxu0 0
        %1253 = vmatpush1.bf16.msra.mxu0 0
        %1254 = vmatprep.subr.bf16.mxu0 0
        %1255 = vmatpush1.bf16.msra.mxu0 0
        %1256 = vmatprep.subr.bf16.mxu0 0
        %1257 = vmatpush1.bf16.msra.mxu0 0
        %1258 = vmatprep.subr.bf16.mxu0 0
        %1259 = vmatpush1.bf16.msra.mxu0 0
        %1260 = vmatprep.subr.bf16.mxu0 0
        %1261 = vmatpush1.bf16.msra.mxu0 %v1240
        %1262 = vmatprep.subr.bf16.mxu0 0
        %1263 = vmatpush1.bf16.msra.mxu0 %v1239
        %1264 = vmatprep.subr.bf16.mxu0 0
        %1265 = vmatpush2.bf16.msra.mxu0 0
        %1266 = vmatprep.subr.bf16.mxu0 0
        %1267 = vmatpush2.bf16.msra.mxu0 0
        %1268 = vmatprep.subr.bf16.mxu0 0
        %1269 = vmatpush2.bf16.msra.mxu0 0
        %1270 = vmatprep.subr.bf16.mxu0 0
        %1271 = vmatpush2.bf16.msra.mxu0 0
        %1272 = vmatprep.subr.bf16.mxu0 0
        %1273 = vmatpush2.bf16.msra.mxu0 0
        %1274 = vmatprep.subr.bf16.mxu0 0
        %1275 = vmatpush2.bf16.msra.mxu0 0
        %1276 = vmatprep.subr.bf16.mxu0 0
        %1277 = vmatpush2.bf16.msra.mxu0 0
        %1278 = vmatprep.subr.bf16.mxu0 0
        %1279 = vmatpush2.bf16.msra.mxu0 0
        %1280 = vmatprep.mubr.bf16.mxu0 0
        %1281 = vmatmul.mubr.bf16.gmra.mxu0 %v1243
        %v1282 = vpop.f32.mrf.mxu0
        %v1283 = vadd.f32 0.0, %v1282
        %v1284 = vpop.f32.mrf.mxu0
        %v1285 = vpop.f32.mrf.mxu0
        %v1286 = vadd.f32 0.0, %v1285
        %v1287 = vpop.f32.mrf.mxu0
        %1288 = vmatprep.mubr.bf16.mxu0 0
        %1289 = vmatmul.mubr.bf16.gmra.mxu0 %v1246
        %v1290 = vpop.f32.mrf.mxu0
        %v1291 = vadd.f32 0.0, %v1290
        %v1292 = vpop.f32.mrf.mxu0
        %v1293 = vpop.f32.mrf.mxu0
        %v1294 = vadd.f32 0.0, %v1293
        %v1295 = vpop.f32.mrf.mxu0
        %1296 = vdwg.mxu0
        %v1297 = vpack.c.bf16 %v1286, %v1283
        %v1298 = vpack.c.bf16 %v1294, %v1291
        %v1299 = vld [vmem:[%s11] sm:$0xff]
        %v1300 = vld [vmem:[%s11 + $0x8] sm:$0xff]
        %v1301 = vld [vmem:[%s11 + $0x10] sm:$0xff]
        %v1302 = vld [vmem:[%s11 + $0x18] sm:$0xff]
        %1304 = vset.pattern.permute.xlu0 0
        %1305 = vperm.xlu0 %1304, %v1299
        %v1306 = vpop.permute.xlu0 %1305
        %1309 = vset.pattern.permute.xlu0 0
        %1310 = vperm.xlu0 %1309, %v1300
        %v1311 = vpop.permute.xlu0 %1310
        %1314 = vset.pattern.permute.xlu0 0
        %1315 = vperm.xlu0 %1314, %v1301
        %v1316 = vpop.permute.xlu0 %1315
        %1319 = vset.pattern.permute.xlu0 0
        %1320 = vperm.xlu0 %1319, %v1302
        %v1321 = vpop.permute.xlu0 %1320
        %1323 = vmatprep.subr.bf16.mxu0 0
        %1324 = vmatpush1.bf16.msra.mxu0 %v1232
        %1325 = vmatprep.subr.bf16.mxu0 0
        %1326 = vmatpush1.bf16.msra.mxu0 %v1231
        %1327 = vmatprep.subr.bf16.mxu0 0
        %1328 = vmatpush1.bf16.msra.mxu0 %v1230
        %1329 = vmatprep.subr.bf16.mxu0 0
        %1330 = vmatpush1.bf16.msra.mxu0 %v1229
        %1331 = vmatprep.subr.bf16.mxu0 0
        %1332 = vmatpush1.bf16.msra.mxu0 %v1228
        %1333 = vmatprep.subr.bf16.mxu0 0
        %1334 = vmatpush1.bf16.msra.mxu0 %v1227
        %1335 = vmatprep.subr.bf16.mxu0 0
        %1336 = vmatpush1.bf16.msra.mxu0 %v1226
        %1337 = vmatprep.subr.bf16.mxu0 0
        %1338 = vmatpush1.bf16.msra.mxu0 %v1225
        %1339 = vmatprep.subr.bf16.mxu0 0
        %1340 = vmatpush2.bf16.msra.mxu0 0
        %1341 = vmatprep.subr.bf16.mxu0 0
        %1342 = vmatpush2.bf16.msra.mxu0 0
        %1343 = vmatprep.subr.bf16.mxu0 0
        %1344 = vmatpush2.bf16.msra.mxu0 0
        %1345 = vmatprep.subr.bf16.mxu0 0
        %1346 = vmatpush2.bf16.msra.mxu0 0
        %1347 = vmatprep.subr.bf16.mxu0 0
        %1348 = vmatpush2.bf16.msra.mxu0 0
        %1349 = vmatprep.subr.bf16.mxu0 0
        %1350 = vmatpush2.bf16.msra.mxu0 0
        %1351 = vmatprep.subr.bf16.mxu0 0
        %1352 = vmatpush2.bf16.msra.mxu0 0
        %1353 = vmatprep.subr.bf16.mxu0 0
        %1354 = vmatpush2.bf16.msra.mxu0 0
        %1355 = vmatprep.mubr.bf16.mxu0 0
        %1356 = vmatmul.mubr.bf16.gmra.mxu0 %v1297
        %v1357 = vpop.f32.mrf.mxu0
        %v1358 = vadd.f32 %v1306, %v1357
        %v1359 = vpop.f32.mrf.mxu0
        %v1360 = vpop.f32.mrf.mxu0
        %v1361 = vadd.f32 %v1311, %v1360
        %v1362 = vpop.f32.mrf.mxu0
        %1363 = vmatprep.mubr.bf16.mxu0 0
        %1364 = vmatmul.mubr.bf16.gmra.mxu0 %v1298
        %v1365 = vpop.f32.mrf.mxu0
        %v1366 = vadd.f32 %v1316, %v1365
        %v1367 = vpop.f32.mrf.mxu0
        %v1368 = vpop.f32.mrf.mxu0
        %v1369 = vadd.f32 %v1321, %v1368
        %v1370 = vpop.f32.mrf.mxu0
        %1371 = vdwg.mxu0
        %v1372 = vmax.f32 %v1358, 0.0
        %v1373 = vmax.f32 %v1361, 0.0
        %v1374 = vmax.f32 %v1366, 0.0
        %v1375 = vmax.f32 %v1369, 0.0
        %s1376 = scalar_lea.vmem [#allocation4], 32
        %v1377 = vld [vmem:[%s1376] sm:$0xff]
        %v1378 = vld [vmem:[%s1376 + $0x8] sm:$0xff]
        %v1379 = vld [vmem:[%s1376 + $0x10] sm:$0xff]
        %v1380 = vld [vmem:[%s1376 + $0x18] sm:$0xff]
        %v1381 = vpack.c.bf16 %v1378, %v1377
        %v1382 = vpack.c.bf16 %v1380, %v1379
        %v1383 = vpack.c.bf16 %v1373, %v1372
        %v1384 = vpack.c.bf16 %v1375, %v1374
        %v1386 = vsel %vm1241, %v1381, 0
        %v1389 = vsel %vm1241, %v1382, 0
        %1391 = vmatprep.subr.bf16.mxu0 0
        %1392 = vmatpush1.bf16.msra.mxu0 0
        %1393 = vmatprep.subr.bf16.mxu0 0
        %1394 = vmatpush1.bf16.msra.mxu0 0
        %1395 = vmatprep.subr.bf16.mxu0 0
        %1396 = vmatpush1.bf16.msra.mxu0 0
        %1397 = vmatprep.subr.bf16.mxu0 0
        %1398 = vmatpush1.bf16.msra.mxu0 0
        %1399 = vmatprep.subr.bf16.mxu0 0
        %1400 = vmatpush1.bf16.msra.mxu0 0
        %1401 = vmatprep.subr.bf16.mxu0 0
        %1402 = vmatpush1.bf16.msra.mxu0 0
        %1403 = vmatprep.subr.bf16.mxu0 0
        %1404 = vmatpush1.bf16.msra.mxu0 %v1384
        %1405 = vmatprep.subr.bf16.mxu0 0
        %1406 = vmatpush1.bf16.msra.mxu0 %v1383
        %1407 = vmatprep.subr.bf16.mxu0 0
        %1408 = vmatpush2.bf16.msra.mxu0 0
        %1409 = vmatprep.subr.bf16.mxu0 0
        %1410 = vmatpush2.bf16.msra.mxu0 0
        %1411 = vmatprep.subr.bf16.mxu0 0
        %1412 = vmatpush2.bf16.msra.mxu0 0
        %1413 = vmatprep.subr.bf16.mxu0 0
        %1414 = vmatpush2.bf16.msra.mxu0 0
        %1415 = vmatprep.subr.bf16.mxu0 0
        %1416 = vmatpush2.bf16.msra.mxu0 0
        %1417 = vmatprep.subr.bf16.mxu0 0
        %1418 = vmatpush2.bf16.msra.mxu0 0
        %1419 = vmatprep.subr.bf16.mxu0 0
        %1420 = vmatpush2.bf16.msra.mxu0 0
        %1421 = vmatprep.subr.bf16.mxu0 0
        %1422 = vmatpush2.bf16.msra.mxu0 0
        %1423 = vmatprep.mubr.bf16.mxu0 0
        %1424 = vmatmul.mubr.bf16.gmra.mxu0 %v1386
        %v1425 = vpop.f32.mrf.mxu0
        %v1426 = vadd.f32 0.0, %v1425
        %v1427 = vpop.f32.mrf.mxu0
        %v1428 = vpop.f32.mrf.mxu0
        %v1429 = vadd.f32 0.0, %v1428
        %v1430 = vpop.f32.mrf.mxu0
        %1431 = vmatprep.mubr.bf16.mxu0 0
        %1432 = vmatmul.mubr.bf16.gmra.mxu0 %v1389
        %v1433 = vpop.f32.mrf.mxu0
        %v1434 = vadd.f32 0.0, %v1433
        %v1435 = vpop.f32.mrf.mxu0
        %v1436 = vpop.f32.mrf.mxu0
        %v1437 = vadd.f32 0.0, %v1436
        %v1438 = vpop.f32.mrf.mxu0
        %1439 = vdwg.mxu0
        %v1440 = vpack.c.bf16 %v1429, %v1426
        %v1441 = vpack.c.bf16 %v1437, %v1434
        %s1442 = scalar_lea.vmem %s11, 32
        %v1443 = vld [vmem:[%s1442] sm:$0xff]
        %v1444 = vld [vmem:[%s1442 + $0x8] sm:$0xff]
        %v1445 = vld [vmem:[%s1442 + $0x10] sm:$0xff]
        %v1446 = vld [vmem:[%s1442 + $0x18] sm:$0xff]
        %1448 = vset.pattern.permute.xlu0 0
        %1449 = vperm.xlu0 %1448, %v1443
        %v1450 = vpop.permute.xlu0 %1449
        %1453 = vset.pattern.permute.xlu0 0
        %1454 = vperm.xlu0 %1453, %v1444
        %v1455 = vpop.permute.xlu0 %1454
        %1458 = vset.pattern.permute.xlu0 0
        %1459 = vperm.xlu0 %1458, %v1445
        %v1460 = vpop.permute.xlu0 %1459
        %1463 = vset.pattern.permute.xlu0 0
        %1464 = vperm.xlu0 %1463, %v1446
        %v1465 = vpop.permute.xlu0 %1464
        %1467 = vmatprep.subr.bf16.mxu0 0
        %1468 = vmatpush1.bf16.msra.mxu0 %v1232
        %1469 = vmatprep.subr.bf16.mxu0 0
        %1470 = vmatpush1.bf16.msra.mxu0 %v1231
        %1471 = vmatprep.subr.bf16.mxu0 0
        %1472 = vmatpush1.bf16.msra.mxu0 %v1230
        %1473 = vmatprep.subr.bf16.mxu0 0
        %1474 = vmatpush1.bf16.msra.mxu0 %v1229
        %1475 = vmatprep.subr.bf16.mxu0 0
        %1476 = vmatpush1.bf16.msra.mxu0 %v1228
        %1477 = vmatprep.subr.bf16.mxu0 0
        %1478 = vmatpush1.bf16.msra.mxu0 %v1227
        %1479 = vmatprep.subr.bf16.mxu0 0
        %1480 = vmatpush1.bf16.msra.mxu0 %v1226
        %1481 = vmatprep.subr.bf16.mxu0 0
        %1482 = vmatpush1.bf16.msra.mxu0 %v1225
        %1483 = vmatprep.subr.bf16.mxu0 0
        %1484 = vmatpush2.bf16.msra.mxu0 0
        %1485 = vmatprep.subr.bf16.mxu0 0
        %1486 = vmatpush2.bf16.msra.mxu0 0
        %1487 = vmatprep.subr.bf16.mxu0 0
        %1488 = vmatpush2.bf16.msra.mxu0 0
        %1489 = vmatprep.subr.bf16.mxu0 0
        %1490 = vmatpush2.bf16.msra.mxu0 0
        %1491 = vmatprep.subr.bf16.mxu0 0
        %1492 = vmatpush2.bf16.msra.mxu0 0
        %1493 = vmatprep.subr.bf16.mxu0 0
        %1494 = vmatpush2.bf16.msra.mxu0 0
        %1495 = vmatprep.subr.bf16.mxu0 0
        %1496 = vmatpush2.bf16.msra.mxu0 0
        %1497 = vmatprep.subr.bf16.mxu0 0
        %1498 = vmatpush2.bf16.msra.mxu0 0
        %1499 = vmatprep.mubr.bf16.mxu0 0
        %1500 = vmatmul.mubr.bf16.gmra.mxu0 %v1440
        %v1501 = vpop.f32.mrf.mxu0
        %v1502 = vadd.f32 %v1450, %v1501
        %v1503 = vpop.f32.mrf.mxu0
        %v1504 = vpop.f32.mrf.mxu0
        %v1505 = vadd.f32 %v1455, %v1504
        %v1506 = vpop.f32.mrf.mxu0
        %1507 = vmatprep.mubr.bf16.mxu0 0
        %1508 = vmatmul.mubr.bf16.gmra.mxu0 %v1441
        %v1509 = vpop.f32.mrf.mxu0
        %v1510 = vadd.f32 %v1460, %v1509
        %v1511 = vpop.f32.mrf.mxu0
        %v1512 = vpop.f32.mrf.mxu0
        %v1513 = vadd.f32 %v1465, %v1512
        %v1514 = vpop.f32.mrf.mxu0
        %1515 = vdwg.mxu0
        %v1516 = vmax.f32 %v1502, 0.0
        %v1517 = vmax.f32 %v1505, 0.0
        %v1518 = vmax.f32 %v1510, 0.0
        %v1519 = vmax.f32 %v1513, 0.0
        %v1520 = vld [vmem:[#allocation6] sm:$0x7]
        %v1522 = vsel %vm1241, %v1520, 0
        %1524 = vmatprep.subr.mxu0 0.0
        %1525 = vmatpush1.msra.mxu0 0.0
        %1526 = vmatprep.subr.mxu0 0.0
        %1527 = vmatpush1.msra.mxu0 0.0
        %1528 = vmatprep.subr.mxu0 0.0
        %1529 = vmatpush1.msra.mxu0 0.0
        %1530 = vmatprep.subr.mxu0 0.0
        %1531 = vmatpush1.msra.mxu0 0.0
        %1532 = vmatprep.subr.mxu0 0.0
        %1533 = vmatpush1.msra.mxu0 0.0
        %1534 = vmatprep.subr.mxu0 0.0
        %1535 = vmatpush1.msra.mxu0 0.0
        %1536 = vmatprep.subr.mxu0 0.0
        %1537 = vmatpush1.msra.mxu0 0.0
        %1538 = vmatprep.subr.mxu0 0.0
        %1539 = vmatpush1.msra.mxu0 0.0
        %1540 = vmatprep.subr.mxu0 0.0
        %1541 = vmatpush1.msra.mxu0 0.0
        %1542 = vmatprep.subr.mxu0 0.0
        %1543 = vmatpush1.msra.mxu0 0.0
        %1544 = vmatprep.subr.mxu0 0.0
        %1545 = vmatpush1.msra.mxu0 0.0
        %1546 = vmatprep.subr.mxu0 0.0
        %1547 = vmatpush1.msra.mxu0 0.0
        %1548 = vmatprep.subr.mxu0 0.0
        %1549 = vmatpush1.msra.mxu0 %v1519
        %1550 = vmatprep.subr.mxu0 0.0
        %1551 = vmatpush1.msra.mxu0 %v1518
        %1552 = vmatprep.subr.mxu0 0.0
        %1553 = vmatpush1.msra.mxu0 %v1517
        %1554 = vmatprep.subr.mxu0 0.0
        %1555 = vmatpush1.msra.mxu0 %v1516
        %1556 = vmatprep.subr.mxu0 0.0
        %1557 = vmatpush2.msra.mxu0 0.0
        %1558 = vmatprep.subr.mxu0 0.0
        %1559 = vmatpush2.msra.mxu0 0.0
        %1560 = vmatprep.subr.mxu0 0.0
        %1561 = vmatpush2.msra.mxu0 0.0
        %1562 = vmatprep.subr.mxu0 0.0
        %1563 = vmatpush2.msra.mxu0 0.0
        %1564 = vmatprep.subr.mxu0 0.0
        %1565 = vmatpush2.msra.mxu0 0.0
        %1566 = vmatprep.subr.mxu0 0.0
        %1567 = vmatpush2.msra.mxu0 0.0
        %1568 = vmatprep.subr.mxu0 0.0
        %1569 = vmatpush2.msra.mxu0 0.0
        %1570 = vmatprep.subr.mxu0 0.0
        %1571 = vmatpush2.msra.mxu0 0.0
        %1572 = vmatprep.subr.mxu0 0.0
        %1573 = vmatpush2.msra.mxu0 0.0
        %1574 = vmatprep.subr.mxu0 0.0
        %1575 = vmatpush2.msra.mxu0 0.0
        %1576 = vmatprep.subr.mxu0 0.0
        %1577 = vmatpush2.msra.mxu0 0.0
        %1578 = vmatprep.subr.mxu0 0.0
        %1579 = vmatpush2.msra.mxu0 0.0
        %1580 = vmatprep.subr.mxu0 0.0
        %1581 = vmatpush2.msra.mxu0 0.0
        %1582 = vmatprep.subr.mxu0 0.0
        %1583 = vmatpush2.msra.mxu0 0.0
        %1584 = vmatprep.subr.mxu0 0.0
        %1585 = vmatpush2.msra.mxu0 0.0
        %1586 = vmatprep.subr.mxu0 0.0
        %1587 = vmatpush2.msra.mxu0 0.0
        %1588 = vmatprep.mubr.f32.mxu0 0.0
        %1589 = vmatmul.mubr.f32.gmra.mxu0 %v1522
        %v1590 = vpop.f32.mrf.mxu0
        %v1591 = vadd.f32 0.0, %v1590
        %v1592 = vpop.f32.mrf.mxu0
        %1593 = vdwg.mxu0
        %v1594 = vld [vmem:[%s13] sm:$0x7]
        %1596 = vset.pattern.permute.xlu0 0
        %1597 = vperm.xlu0 %1596, %v1594
        %v1598 = vpop.permute.xlu0 %1597
        %1600 = vmatprep.subr.mxu0 0.0
        %1601 = vmatpush1.msra.mxu0 %v1224
        %1602 = vmatprep.subr.mxu0 0.0
        %1603 = vmatpush1.msra.mxu0 %v1223
        %1604 = vmatprep.subr.mxu0 0.0
        %1605 = vmatpush1.msra.mxu0 %v1222
        %1606 = vmatprep.subr.mxu0 0.0
        %1607 = vmatpush1.msra.mxu0 %v1221
        %1608 = vmatprep.subr.mxu0 0.0
        %1609 = vmatpush1.msra.mxu0 %v1220
        %1610 = vmatprep.subr.mxu0 0.0
        %1611 = vmatpush1.msra.mxu0 %v1219
        %1612 = vmatprep.subr.mxu0 0.0
        %1613 = vmatpush1.msra.mxu0 %v1218
        %1614 = vmatprep.subr.mxu0 0.0
        %1615 = vmatpush1.msra.mxu0 %v1217
        %1616 = vmatprep.subr.mxu0 0.0
        %1617 = vmatpush1.msra.mxu0 %v1216
        %1618 = vmatprep.subr.mxu0 0.0
        %1619 = vmatpush1.msra.mxu0 %v1215
        %1620 = vmatprep.subr.mxu0 0.0
        %1621 = vmatpush1.msra.mxu0 %v1214
        %1622 = vmatprep.subr.mxu0 0.0
        %1623 = vmatpush1.msra.mxu0 %v1213
        %1624 = vmatprep.subr.mxu0 0.0
        %1625 = vmatpush1.msra.mxu0 %v1212
        %1626 = vmatprep.subr.mxu0 0.0
        %1627 = vmatpush1.msra.mxu0 %v1211
        %1628 = vmatprep.subr.mxu0 0.0
        %1629 = vmatpush1.msra.mxu0 %v1210
        %1630 = vmatprep.subr.mxu0 0.0
        %1631 = vmatpush1.msra.mxu0 %v1209
        %1632 = vmatprep.subr.mxu0 0.0
        %1633 = vmatpush2.msra.mxu0 0.0
        %1634 = vmatprep.subr.mxu0 0.0
        %1635 = vmatpush2.msra.mxu0 0.0
        %1636 = vmatprep.subr.mxu0 0.0
        %1637 = vmatpush2.msra.mxu0 0.0
        %1638 = vmatprep.subr.mxu0 0.0
        %1639 = vmatpush2.msra.mxu0 0.0
        %1640 = vmatprep.subr.mxu0 0.0
        %1641 = vmatpush2.msra.mxu0 0.0
        %1642 = vmatprep.subr.mxu0 0.0
        %1643 = vmatpush2.msra.mxu0 0.0
        %1644 = vmatprep.subr.mxu0 0.0
        %1645 = vmatpush2.msra.mxu0 0.0
        %1646 = vmatprep.subr.mxu0 0.0
        %1647 = vmatpush2.msra.mxu0 0.0
        %1648 = vmatprep.subr.mxu0 0.0
        %1649 = vmatpush2.msra.mxu0 0.0
        %1650 = vmatprep.subr.mxu0 0.0
        %1651 = vmatpush2.msra.mxu0 0.0
        %1652 = vmatprep.subr.mxu0 0.0
        %1653 = vmatpush2.msra.mxu0 0.0
        %1654 = vmatprep.subr.mxu0 0.0
        %1655 = vmatpush2.msra.mxu0 0.0
        %1656 = vmatprep.subr.mxu0 0.0
        %1657 = vmatpush2.msra.mxu0 0.0
        %1658 = vmatprep.subr.mxu0 0.0
        %1659 = vmatpush2.msra.mxu0 0.0
        %1660 = vmatprep.subr.mxu0 0.0
        %1661 = vmatpush2.msra.mxu0 0.0
        %1662 = vmatprep.subr.mxu0 0.0
        %1663 = vmatpush2.msra.mxu0 0.0
        %1664 = vmatprep.mubr.f32.mxu0 0.0
        %1665 = vmatmul.mubr.f32.gmra.mxu0 %v1591
        %v1666 = vpop.f32.mrf.mxu0
        %v1667 = vadd.f32 %v1598, %v1666
        %v1668 = vpop.f32.mrf.mxu0
        %1669 = vdwg.mxu0
        %1670 = vst [vmem:[%s667] sm:$0x7] %v1667
        %v1671 = vld [vmem:[%s16] sm:$0xff]
        %v1672 = vld [vmem:[%s16 + $0x8] sm:$0xff]
        %v1673 = vld [vmem:[%s16 + $0x10] sm:$0xff]
        %v1674 = vld [vmem:[%s16 + $0x18] sm:$0xff]
        %v1675 = vld [vmem:[%s16 + $0x20] sm:$0xff]
        %v1676 = vld [vmem:[%s16 + $0x28] sm:$0xff]
        %v1677 = vld [vmem:[%s16 + $0x30] sm:$0xff]
        %v1678 = vld [vmem:[%s16 + $0x38] sm:$0xff]
        %v1679 = vld [vmem:[%s16 + $0x40] sm:$0xff]
        %v1680 = vld [vmem:[%s16 + $0x48] sm:$0xff]
        %v1681 = vld [vmem:[%s16 + $0x50] sm:$0xff]
        %v1682 = vld [vmem:[%s16 + $0x58] sm:$0xff]
        %v1683 = vld [vmem:[%s16 + $0x60] sm:$0xff]
        %v1684 = vld [vmem:[%s16 + $0x68] sm:$0xff]
        %v1685 = vld [vmem:[%s16 + $0x70] sm:$0xff]
        %v1686 = vld [vmem:[%s16 + $0x78] sm:$0xff]
        %v1687 = vld [vmem:[%s16 + $0x80] sm:$0xff]
        %v1688 = vld [vmem:[%s16 + $0x88] sm:$0xff]
        %v1689 = vld [vmem:[%s16 + $0x90] sm:$0xff]
        %v1690 = vld [vmem:[%s16 + $0x98] sm:$0xff]
        %v1691 = vld [vmem:[%s16 + $0xa0] sm:$0xff]
        %v1692 = vld [vmem:[%s16 + $0xa8] sm:$0xff]
        %v1693 = vld [vmem:[%s16 + $0xb0] sm:$0xff]
        %v1694 = vld [vmem:[%s16 + $0xb8] sm:$0xff]
        %v1695 = vld [vmem:[%s16 + $0xc0] sm:$0xff]
        %v1696 = vld [vmem:[%s16 + $0xc8] sm:$0xff]
        %v1697 = vld [vmem:[%s16 + $0xd0] sm:$0xff]
        %v1698 = vld [vmem:[%s16 + $0xd8] sm:$0xff]
        %v1699 = vld [vmem:[%s16 + $0xe0] sm:$0xff]
        %v1700 = vld [vmem:[%s16 + $0xe8] sm:$0xff]
        %v1701 = vld [vmem:[%s16 + $0xf0] sm:$0xff]
        %v1702 = vld [vmem:[%s16 + $0xf8] sm:$0xff]
        %1703 = vmatprep.subr.mxu0 %v1702
        %1704 = vmatpush1.msra.mxu0 %v1701
        %1705 = vmatprep.subr.mxu0 %v1700
        %1706 = vmatpush1.msra.mxu0 %v1699
        %1707 = vmatprep.subr.mxu0 %v1698
        %1708 = vmatpush1.msra.mxu0 %v1697
        %1709 = vmatprep.subr.mxu0 %v1696
        %1710 = vmatpush1.msra.mxu0 %v1695
        %1711 = vmatprep.subr.mxu0 %v1694
        %1712 = vmatpush1.msra.mxu0 %v1693
        %1713 = vmatprep.subr.mxu0 %v1692
        %1714 = vmatpush1.msra.mxu0 %v1691
        %1715 = vmatprep.subr.mxu0 %v1690
        %1716 = vmatpush1.msra.mxu0 %v1689
        %1717 = vmatprep.subr.mxu0 %v1688
        %1718 = vmatpush1.msra.mxu0 %v1687
        %1719 = vmatprep.subr.mxu0 %v1686
        %1720 = vmatpush1.msra.mxu0 %v1685
        %1721 = vmatprep.subr.mxu0 %v1684
        %1722 = vmatpush1.msra.mxu0 %v1683
        %1723 = vmatprep.subr.mxu0 %v1682
        %1724 = vmatpush1.msra.mxu0 %v1681
        %1725 = vmatprep.subr.mxu0 %v1680
        %1726 = vmatpush1.msra.mxu0 %v1679
        %1727 = vmatprep.subr.mxu0 %v1678
        %1728 = vmatpush1.msra.mxu0 %v1677
        %1729 = vmatprep.subr.mxu0 %v1676
        %1730 = vmatpush1.msra.mxu0 %v1675
        %1731 = vmatprep.subr.mxu0 %v1674
        %1732 = vmatpush1.msra.mxu0 %v1673
        %1733 = vmatprep.subr.mxu0 %v1672
        %1734 = vmatpush1.msra.mxu0 %v1671
        %1735 = vmatprep.subr.mxu0 0.0
        %1736 = vmatpush2.msra.mxu0 0.0
        %1737 = vmatprep.subr.mxu0 0.0
        %1738 = vmatpush2.msra.mxu0 0.0
        %1739 = vmatprep.subr.mxu0 0.0
        %1740 = vmatpush2.msra.mxu0 0.0
        %1741 = vmatprep.subr.mxu0 0.0
        %1742 = vmatpush2.msra.mxu0 0.0
        %1743 = vmatprep.subr.mxu0 0.0
        %1744 = vmatpush2.msra.mxu0 0.0
        %1745 = vmatprep.subr.mxu0 0.0
        %1746 = vmatpush2.msra.mxu0 0.0
        %1747 = vmatprep.subr.mxu0 0.0
        %1748 = vmatpush2.msra.mxu0 0.0
        %1749 = vmatprep.subr.mxu0 0.0
        %1750 = vmatpush2.msra.mxu0 0.0
        %1751 = vmatprep.subr.mxu0 0.0
        %1752 = vmatpush2.msra.mxu0 0.0
        %1753 = vmatprep.subr.mxu0 0.0
        %1754 = vmatpush2.msra.mxu0 0.0
        %1755 = vmatprep.subr.mxu0 0.0
        %1756 = vmatpush2.msra.mxu0 0.0
        %1757 = vmatprep.subr.mxu0 0.0
        %1758 = vmatpush2.msra.mxu0 0.0
        %1759 = vmatprep.subr.mxu0 0.0
        %1760 = vmatpush2.msra.mxu0 0.0
        %1761 = vmatprep.subr.mxu0 0.0
        %1762 = vmatpush2.msra.mxu0 0.0
        %1763 = vmatprep.subr.mxu0 0.0
        %1764 = vmatpush2.msra.mxu0 0.0
        %1765 = vmatprep.subr.mxu0 0.0
        %1766 = vmatpush2.msra.mxu0 0.0
        %1767 = vmatprep.mubr.f32.mxu0 0.0
        %1768 = vmatmul.mubr.f32.gmra.mxu0 %v1667
        %v1769 = vpop.f32.mrf.mxu0
        %v1770 = vadd.f32 0.0, %v1769
        %v1771 = vpop.f32.mrf.mxu0
        %v1772 = vadd.f32 0.0, %v1771
        %1773 = vdwg.mxu0
        %v1776 = vcombine.low %v1770, %v1772
        %1778 = vst [vmem:[%s672] sm:$0x77] %v1776
        %1779 = vadd.xlane.f32.xlu0 %v1516
        %v1780 = vpop.xlane.xlu0 %1779
        %1781 = vadd.xlane.f32.xlu0 %v1517
        %v1782 = vpop.xlane.xlu0 %1781
        %1783 = vadd.xlane.f32.xlu0 %v1518
        %v1784 = vpop.xlane.xlu0 %1783
        %1785 = vadd.xlane.f32.xlu0 %v1519
        %v1786 = vpop.xlane.xlu0 %1785
        %v1787 = vmul.f32 %v1780, 0.0078125
        %v1788 = vmul.f32 %v1782, 0.0078125
        %v1789 = vmul.f32 %v1784, 0.0078125
        %v1790 = vmul.f32 %v1786, 0.0078125
        %v1791 = vld [vmem:[#allocation7] sm:$0x7]
        %v1792 = vld [vmem:[%s15] sm:$0x7]
        %v1794 = vsel %vm1241, %v1791, 0
        %1796 = vmatprep.subr.mxu0 0.0
        %1797 = vmatpush1.msra.mxu0 0.0
        %1798 = vmatprep.subr.mxu0 0.0
        %1799 = vmatpush1.msra.mxu0 0.0
        %1800 = vmatprep.subr.mxu0 0.0
        %1801 = vmatpush1.msra.mxu0 0.0
        %1802 = vmatprep.subr.mxu0 0.0
        %1803 = vmatpush1.msra.mxu0 0.0
        %1804 = vmatprep.subr.mxu0 0.0
        %1805 = vmatpush1.msra.mxu0 0.0
        %1806 = vmatprep.subr.mxu0 0.0
        %1807 = vmatpush1.msra.mxu0 0.0
        %1808 = vmatprep.subr.mxu0 0.0
        %1809 = vmatpush1.msra.mxu0 0.0
        %1810 = vmatprep.subr.mxu0 0.0
        %1811 = vmatpush1.msra.mxu0 0.0
        %1812 = vmatprep.subr.mxu0 0.0
        %1813 = vmatpush1.msra.mxu0 0.0
        %1814 = vmatprep.subr.mxu0 0.0
        %1815 = vmatpush1.msra.mxu0 0.0
        %1816 = vmatprep.subr.mxu0 0.0
        %1817 = vmatpush1.msra.mxu0 0.0
        %1818 = vmatprep.subr.mxu0 0.0
        %1819 = vmatpush1.msra.mxu0 0.0
        %1820 = vmatprep.subr.mxu0 0.0
        %1821 = vmatpush1.msra.mxu0 %v1790
        %1822 = vmatprep.subr.mxu0 0.0
        %1823 = vmatpush1.msra.mxu0 %v1789
        %1824 = vmatprep.subr.mxu0 0.0
        %1825 = vmatpush1.msra.mxu0 %v1788
        %1826 = vmatprep.subr.mxu0 0.0
        %1827 = vmatpush1.msra.mxu0 %v1787
        %1828 = vmatprep.subr.mxu0 0.0
        %1829 = vmatpush2.msra.mxu0 0.0
        %1830 = vmatprep.subr.mxu0 0.0
        %1831 = vmatpush2.msra.mxu0 0.0
        %1832 = vmatprep.subr.mxu0 0.0
        %1833 = vmatpush2.msra.mxu0 0.0
        %1834 = vmatprep.subr.mxu0 0.0
        %1835 = vmatpush2.msra.mxu0 0.0
        %1836 = vmatprep.subr.mxu0 0.0
        %1837 = vmatpush2.msra.mxu0 0.0
        %1838 = vmatprep.subr.mxu0 0.0
        %1839 = vmatpush2.msra.mxu0 0.0
        %1840 = vmatprep.subr.mxu0 0.0
        %1841 = vmatpush2.msra.mxu0 0.0
        %1842 = vmatprep.subr.mxu0 0.0
        %1843 = vmatpush2.msra.mxu0 0.0
        %1844 = vmatprep.subr.mxu0 0.0
        %1845 = vmatpush2.msra.mxu0 0.0
        %1846 = vmatprep.subr.mxu0 0.0
        %1847 = vmatpush2.msra.mxu0 0.0
        %1848 = vmatprep.subr.mxu0 0.0
        %1849 = vmatpush2.msra.mxu0 0.0
        %1850 = vmatprep.subr.mxu0 0.0
        %1851 = vmatpush2.msra.mxu0 0.0
        %1852 = vmatprep.subr.mxu0 0.0
        %1853 = vmatpush2.msra.mxu0 0.0
        %1854 = vmatprep.subr.mxu0 0.0
        %1855 = vmatpush2.msra.mxu0 0.0
        %1856 = vmatprep.subr.mxu0 0.0
        %1857 = vmatpush2.msra.mxu0 0.0
        %1858 = vmatprep.subr.mxu0 0.0
        %1859 = vmatpush2.msra.mxu0 0.0
        %1860 = vmatprep.mubr.f32.mxu0 0.0
        %1861 = vmatmul.mubr.f32.gmra.mxu0 %v1794
        %v1862 = vpop.f32.mrf.mxu0
        %v1863 = vadd.f32 %v1792, %v1862
        %v1864 = vpop.f32.mrf.mxu0
        %1865 = vdwg.mxu0
        %vm1866 = vcmask 2048
        %1867 = vst.msk [vmem:[%s676] sm:$0x7] %vm1866, %v1863
        %p1868 = scmp.lt.s32.totalorder %s34, 1
        %s1869 = scalar_select %p1868, %s34, 1
        %s1870 = smul.addr %s1869, 4
        %s1871 = scalar_lea.vmem %s17, %s1870
        %p1872 = scmp.lt.s32.totalorder %s34, 1
        %s1873 = scalar_select %p1872, %s34, 1
        %s1874 = smul.addr %s1873, 2
        %s1875 = smul.addr %s1874, 4
        %s1876 = scalar_lea.vmem %s18, %s1875
        %p1877 = scmp.lt.s32.totalorder %s34, 1
        %s1878 = scalar_select %p1877, %s34, 1
        %s1879 = smul.addr %s1878, 4
        %s1880 = scalar_lea.vmem %s19, %s1879
        // Predicated region
        $region105: #{cmr_forward.4} parent=87 // pred_check
          %p1881 = pneg %p414
        $region106: #{cmr_forward.4} parent=87 // pred_check_branch
          %1883 = sbr.rel (%p1881) target = $region108
        $region107: #{cmr_forward.4} parent=87 // pred_region
          _
        $region108: #{cmr_forward.4} parent=87 // pred_fallthru
          _
        // Predicated region
        $region109: #{cmr_forward.4} parent=87 // pred_check
          %p1884 = pneg %p440
        $region110: #{cmr_forward.4} parent=87 // pred_check_branch
          %1886 = sbr.rel (%p1884) target = $region112
        $region111: #{cmr_forward.4} parent=87 // pred_region
          _
        $region112: #{cmr_forward.4} parent=87 // pred_fallthru
          _
        // Predicated region
        $region113: #{cmr_forward.4} parent=87 // pred_check
          %p1887 = pneg %p466
        $region114: #{cmr_forward.4} parent=87 // pred_check_branch
          %1889 = sbr.rel (%p1887) target = $region116
        $region115: #{cmr_forward.4} parent=87 // pred_region
          _
        $region116: #{cmr_forward.4} parent=87 // pred_fallthru
          _
      $region88: #{cmr_forward.4} parent=5 // pred_fallthru
        _
      %p1890 = scmp.le.s32.totalorder 2, %s29
      // Predicated region
      $region117: #{cmr_forward.4} parent=5 // pred_check
        %p1891 = pneg %p1890
      $region118: #{cmr_forward.4} parent=5 // pred_check_branch
        %1893 = sbr.rel (%p1891) target = $region120
      $region119: #{cmr_forward.4} parent=5 // pred_region
        %s1894 = ssub.s32 %s29, 2
        // Predicated region
        $region121: #{cmr_forward.4} parent=119 // pred_check
          %p1895 = pneg %p420
        $region122: #{cmr_forward.4} parent=119 // pred_check_branch
          %1897 = sbr.rel (%p1895) target = $region124
        $region123: #{cmr_forward.4} parent=119 // pred_region
          %p1898 = scmp.lt.s32.totalorder %s35, 1
          %s1899 = scalar_select %p1898, %s35, 1
          %s1900 = smul.addr %s1899, 4
          %s1901 = scalar_lea.vmem %s17, %s1900
        $region124: #{cmr_forward.4} parent=119 // pred_fallthru
          _
        // Predicated region
        $region125: #{cmr_forward.4} parent=119 // pred_check
          %p1902 = pneg %p446
        $region126: #{cmr_forward.4} parent=119 // pred_check_branch
          %1904 = sbr.rel (%p1902) target = $region128
        $region127: #{cmr_forward.4} parent=119 // pred_region
          %p1905 = scmp.lt.s32.totalorder %s35, 1
          %s1906 = scalar_select %p1905, %s35, 1
          %s1907 = smul.addr %s1906, 2
          %s1908 = smul.addr %s1907, 4
          %s1909 = scalar_lea.vmem %s18, %s1908
        $region128: #{cmr_forward.4} parent=119 // pred_fallthru
          _
        // Predicated region
        $region129: #{cmr_forward.4} parent=119 // pred_check
          %p1910 = pneg %p472
        $region130: #{cmr_forward.4} parent=119 // pred_check_branch
          %1912 = sbr.rel (%p1910) target = $region132
        $region131: #{cmr_forward.4} parent=119 // pred_region
          %p1913 = scmp.lt.s32.totalorder %s35, 1
          %s1914 = scalar_select %p1913, %s35, 1
          %s1915 = smul.addr %s1914, 4
          %s1916 = scalar_lea.vmem %s19, %s1915
        $region132: #{cmr_forward.4} parent=119 // pred_fallthru
          _
      $region120: #{cmr_forward.4} parent=5 // pred_fallthru
        _
    $region6: #{cmr_forward.4} parent=1 // loop_footer
      %s33 = sadd.s32 1, %s29
    $region7: #{cmr_forward.4} parent=1 // loop_footer_branch
      %28 = sbr.rel target = $region3
    $region8: #{cmr_forward.4} parent=1 // loop_exit
      _
    %1917 = vsyncpa [#allocation3], 1
    %s1918 = scalar_lea.sflag [#allocation3], 1
    %1919 = vsyncpa %s1918, 1
    %1920 = vsyncpa [#allocation5], 1
    %1921 = vsyncpa [#allocation8], 1

// kernel: custom-call.59
$region0: #{custom-call.59}
  %s0 = inlined_call_operand.vmem [shape: f32[48,6,3], index: 0, kind: input, shape index: {}]
  %s1 = inlined_call_operand.vmem [shape: f32[48,6,3], index: 1, kind: output, shape index: {0}]
  %s2 = inlined_call_operand.vmem [shape: f32[48,3], index: 2, kind: output, shape index: {1}]
  %3 = xla_tuple %s1, %s2
  $region1: #{custom-call.59} parent=0
    #allocation0 [shape = 'u8[12288]{0}', space=vmem, size = 0x3000, scoped, tag = 'operand span for operand 0']
    #allocation1 [shape = 'u8[12288]{0}', space=vmem, size = 0x3000, scoped, tag = 'operand span for operand 1']
    #allocation2 [shape = 'u8[4096]{0}', space=vmem, size = 0x1000, scoped, tag = 'operand span for operand 2']
    #allocation3 [shape = 'u8[2048]{0}', space=vmem, size = 0x800, scoped, tag = 'packed  for operand 2']
    // Predicated region
    $region2: #{custom-call.59} parent=1 // pred_check
      _
    $region3: #{custom-call.59} parent=1 // pred_check_branch
      %5 = sbr.rel (0) target = $region5
    $region4: #{custom-call.59} parent=1 // pred_region
      // Predicated region
      $region6: #{custom-call.59} parent=4 // pred_check
        _
      $region7: #{custom-call.59} parent=4 // pred_check_branch
        %7 = sbr.rel (0) target = $region9
      $region8: #{custom-call.59} parent=4 // pred_region
        // Predicated region
        $region21: #{custom-call.59} parent=8 // pred_check
          _
        $region22: #{custom-call.59} parent=8 // pred_check_branch
          %27 = sbr.rel (0) target = $region24
        $region23: #{custom-call.59} parent=8 // pred_region
          loop: start=0, step=1, limit=1
          $region25: #{custom-call.59} parent=23 // loop_pre_header
            _
          $region26: #{custom-call.59} parent=23 // loop_header
            %s29 = sphi 0, %s33
            %p30 = scmp.ge.s32.totalorder %s29, 1
            %s34 = sphi %s0, %s0
            %s35 = sphi [#allocation0], [#allocation0]
          $region27: #{custom-call.59} parent=23 // loop_header_branch
            %32 = sbr.rel (%p30) target = $region31
          $region28: #{custom-call.59} parent=23 // loop_body
            %v36 = vld [vmem:[%s34] sm:$0xff]
            %37 = vst [vmem:[%s35] sm:$0xff] %v36
            %v38 = vld [vmem:[%s34 + $0x8] sm:$0xff]
            %39 = vst [vmem:[%s35 + $0x8] sm:$0xff] %v38
            %v40 = vld [vmem:[%s34 + $0x10] sm:$0xff]
            %41 = vst [vmem:[%s35 + $0x10] sm:$0xff] %v40
          $region29: #{custom-call.59} parent=23 // loop_footer
            %s33 = sadd.s32 1, %s29
          $region30: #{custom-call.59} parent=23 // loop_footer_branch
            %28 = sbr.rel target = $region26
          $region31: #{custom-call.59} parent=23 // loop_exit
            _
        $region24: #{custom-call.59} parent=8 // pred_fallthru
          _
        // Predicated region
        $region32: #{custom-call.59} parent=8 // pred_check
          _
        $region33: #{custom-call.59} parent=8 // pred_check_branch
          %43 = sbr.rel target = $region35
        $region34: #{custom-call.59} parent=8 // pred_region
          _
        $region35: #{custom-call.59} parent=8 // pred_fallthru
          _
      $region9: #{custom-call.59} parent=4 // pred_fallthru
        _
      // Predicated region
      $region10: #{custom-call.59} parent=4 // pred_check
        _
      $region11: #{custom-call.59} parent=4 // pred_check_branch
        %9 = sbr.rel target = $region13
      $region12: #{custom-call.59} parent=4 // pred_region
        %s11 = ssub.s32 256, 1
        loop: start=0, step=1, limit=1
        $region14: #{custom-call.59} parent=12 // loop_pre_header
          _
        $region15: #{custom-call.59} parent=12 // loop_header
          %s13 = sphi 0, %s17
          %p14 = scmp.ge.s32.totalorder %s13, 1
          %s18 = sphi %s0, %s0
          %s19 = sphi [#allocation0], [#allocation0]
        $region16: #{custom-call.59} parent=12 // loop_header_branch
          %16 = sbr.rel (%p14) target = $region20
        $region17: #{custom-call.59} parent=12 // loop_body
          %v20 = vld [vmem:[%s18] sm:%s11]
          %21 = vst [vmem:[%s19] sm:%s11] %v20
          %v22 = vld [vmem:[%s18 + $0x8] sm:%s11]
          %23 = vst [vmem:[%s19 + $0x8] sm:%s11] %v22
          %v24 = vld [vmem:[%s18 + $0x10] sm:%s11]
          %25 = vst [vmem:[%s19 + $0x10] sm:%s11] %v24
        $region18: #{custom-call.59} parent=12 // loop_footer
          %s17 = sadd.s32 1, %s13
        $region19: #{custom-call.59} parent=12 // loop_footer_branch
          %12 = sbr.rel target = $region15
        $region20: #{custom-call.59} parent=12 // loop_exit
          _
      $region13: #{custom-call.59} parent=4 // pred_fallthru
        _
    $region5: #{custom-call.59} parent=1 // pred_fallthru
      _
    %44 = vnop
    %v45 = vld [vmem:[#allocation0] sm:$0xff]
    %46 = vst [vmem:[#allocation1] sm:$0xff] %v45
    %s47 = scalar_lea.vmem [#allocation1], 8
    %s48 = scalar_lea.vmem [#allocation0], 8
    %v49 = vld [vmem:[%s48] sm:$0xff]
    %50 = vst [vmem:[%s47] sm:$0xff] %v49
    %s51 = scalar_lea.vmem [#allocation1], 16
    %s52 = scalar_lea.vmem [#allocation0], 16
    %v53 = vld [vmem:[%s52] sm:$0xff]
    %54 = vst [vmem:[%s51] sm:$0xff] %v53
    $region36: #{custom-call.59} parent=1
      #allocation4 [shape = 'f32[6,128]{1,0}', space=vmem, size = 0x1000, scoped, tag = 'scratch for Householder reflectors']
      %55 = vst [vmem:[#allocation2] sm:$0xff] 0.0
      loop: start=0, step=1, limit=3
      $region37: #{custom-call.59} parent=36 // loop_pre_header
        _
      $region38: #{custom-call.59} parent=36 // loop_header
        %s57 = sphi 0, %s61
        %p58 = scmp.ge.s32.totalorder %s57, 3
      $region39: #{custom-call.59} parent=36 // loop_header_branch
        %60 = sbr.rel (%p58) target = $region43
      $region40: #{custom-call.59} parent=36 // loop_body
        %s62 = smul.addr %s57, 8
        %s63 = scalar_lea.vmem [#allocation1], %s62
        %v64 = vld [vmem:[%s63] sm:$0xff]
        %v65 = vlaneseq
        %v66 = vshrl.u32 %v65, 7
        %v68 = vstv %s57
        %vm69 = vcmp.gt.s32.totalorder %v66, %v68
        %vm70 = vcmp.lt.s32.totalorder %v66, 6
        %vm71 = vmand %vm69, %vm70
        %v72 = vsel %vm71, %v64, 0.0
        %v73 = vmul.f32 %v72, %v72
        %v74 = vrot.slane %v73, 4
        %v75 = vadd.f32 %v73, %v74
        %v76 = vrot.slane %v75, 2
        %v77 = vadd.f32 %v75, %v76
        %v78 = vrot.slane %v77, 1
        %v79 = vadd.f32 %v77, %v78
        %v80 = vrsqrt.pop %v79
        %v81 = vmul.f32 %v79, %v80
        %vm82 = vcmp.eq.f32.partialorder %v79, inf
        %v83 = vsel %vm82, %v79, %v81
        %vm84 = vcmp.eq.f32.partialorder %v79, 0.0
        %v85 = vand.u32 %v79, 2147483648
        %v86 = vsel %vm84, %v85, %v83
        %vm87 = vcmp.eq.f32.partialorder %v79, 0.0
        %s88 = sshrl.u32 %s57, 3
        %s89 = sand.u32 %s57, 7
        %s90 = smul.addr %s88, 8
        %s91 = sadd.s32 %s89, %s90
        %s92 = scalar_lea.vmem %s63, %s91 [#allocation1]
        %v93 = vld [vmem:[%s92] ss:$0 sm:$0xff]
        %v94 = vand.u32 2147483647, %v93
        %v95 = vmax.f32 %v94, 0.0
        %v96 = vand.u32 2147483647, %v86
        %v97 = vmax.f32 %v95, %v96
        %v98 = vrcp.pop %v97
        %v99 = vmul.f32 %v94, %v98
        %v100 = vmul.f32 %v99, %v99
        %v101 = vrcp.pop %v97
        %v102 = vmul.f32 0.0, %v101
        %v103 = vmul.f32 %v102, %v102
        %v104 = vadd.f32 %v100, %v103
        %v105 = vrcp.pop %v97
        %v106 = vmul.f32 %v96, %v105
        %v107 = vmul.f32 %v106, %v106
        %v108 = vadd.f32 %v104, %v107
        %vm109 = vcmp.eq.f32.partialorder %v97, 0.0
        %v110 = vrsqrt.pop %v108
        %v111 = vmul.f32 %v108, %v110
        %vm112 = vcmp.eq.f32.partialorder %v108, inf
        %v113 = vsel %vm112, %v108, %v111
        %vm114 = vcmp.eq.f32.partialorder %v108, 0.0
        %v115 = vand.u32 %v108, 2147483648
        %v116 = vsel %vm114, %v115, %v113
        %v117 = vmul.f32 %v97, %v116
        %v118 = vsel %vm109, 0.0, %v117
        %vm119 = vcmp.lt.f32.partialorder %v93, 0.0
        %v120 = vxor.u32 %v118, 2147483648
        %v121 = vsel %vm119, %v118, %v120
        %v122 = vsub.f32 %v121, %v93
        %v123 = vrcp.pop %v121
        %v124 = vmul.f32 %v122, %v123
        %v125 = vsel %vm87, %v93, %v121
        %v126 = vsel %vm87, 0.0, %v124
        %v127 = vsub.f32 %v93, %v125
        %s128 = smov %s63
        %v129 = vlaneseq
        %v130 = vshrl.u32 %v129, 7
        %v131 = vmov %v130
        %v132 = vld [vmem:[%s128] sm:$0xff]
        %v134 = vstv %s57
        %vm135 = vcmp.gt.s32.totalorder %v131, %v134
        %vm136 = vcmp.lt.s32.totalorder %v131, 6
        %vm137 = vmand %vm135, %vm136
        %v138 = vsel %vm137, %v132, 0.0
        %v139 = vrcp.pop %v127
        %v140 = vmul.f32 %v138, %v139
        %v141 = vsel %vm87, 0.0, %v140
        %142 = vst [vmem:[#allocation4] sm:$0xff] %v141
        %s143 = scalar_lea.vmem [#allocation4], %s57
        %144 = vst [vmem:[%s143] sm:$0x1] 1.0
        %s145 = sshrl.u32 %s57, 3
        %s146 = sand.u32 %s57, 7
        %s147 = smul.addr %s145, 8
        %s148 = sadd.s32 %s146, %s147
        %s149 = scalar_lea.vmem [#allocation2], %s148
        %150 = vst [vmem:[%s149] sm:$0x1] %v126
        %s151 = sadd.s32 %s57, 1
        // While loop
        $region44: #{custom-call.59} parent=40 // loop_pre_header
          _
        $region45: #{custom-call.59} parent=40 // loop_header
          %s153 = sphi %s151, %s155
          %p154 = scmp.ge.s32.totalorder %s153, 3
        $region46: #{custom-call.59} parent=40 // loop_header_branch
          %157 = sbr.rel (%p154) target = $region50
        $region47: #{custom-call.59} parent=40 // loop_body
          %v158 = vlaneseq
          %v159 = vshrl.u32 %v158, 7
          %v160 = vmov %v159
          %v162 = vld [vmem:[#allocation4] sm:$0xff]
          %s163 = smul.addr %s153, 8
          %s164 = scalar_lea.vmem [#allocation1], %s163
          %v165 = vld [vmem:[%s164] sm:$0xff]
          %v166 = vmul.f32 %v162, %v165
          %vm167 = vcmp.lt.s32.totalorder %v160, 6
          %v168 = vsel %vm167, %v166, 0.0
          %v169 = vrot.slane %v168, 4
          %v170 = vadd.f32 %v168, %v169
          %v171 = vrot.slane %v170, 2
          %v172 = vadd.f32 %v170, %v171
          %v173 = vrot.slane %v172, 1
          %v174 = vadd.f32 %v172, %v173
          %v175 = vlaneseq
          %v176 = vshrl.u32 %v175, 7
          %v177 = vmov %v176
          %v178 = vmul.f32 %v174, %v126
          %v180 = vld [vmem:[#allocation4] sm:$0xff]
          %v181 = vmul.f32 %v180, %v178
          %s182 = smul.addr %s153, 8
          %s183 = scalar_lea.vmem [#allocation1], %s182
          %v184 = vld [vmem:[%s183] sm:$0xff]
          %v185 = vstv %s57
          %vm186 = vcmp.ge.s32.totalorder %v177, %v185
          %v187 = vsub.f32 %v184, %v181
          %v188 = vsel %vm186, %v187, %v184
          %189 = vst [vmem:[%s183] sm:$0xff] %v188
        $region48: #{custom-call.59} parent=40 // loop_footer
          %s155 = sadd.s32 %s153, 1
        $region49: #{custom-call.59} parent=40 // loop_footer_branch
          %152 = sbr.rel target = $region45
        $region50: #{custom-call.59} parent=40 // loop_exit
          _
        %v190 = vlaneseq
        %v191 = vshrl.u32 %v190, 7
        %v192 = vmov %v191
        %v194 = vld [vmem:[#allocation4] sm:$0xff]
        %s195 = smul.addr %s57, 8
        %s196 = scalar_lea.vmem [#allocation1], %s195
        %v197 = vld [vmem:[%s196] sm:$0xff]
        %v198 = vstv %s57
        %vm199 = vcmp.gt.s32.totalorder %v192, %v198
        %v200 = vsel %vm199, %v194, %v197
        %v201 = vstv %s57
        %vm202 = vcmp.eq.s32.totalorder %v192, %v201
        %v203 = vsel %vm202, %v125, %v200
        %204 = vst [vmem:[%s196] sm:$0xff] %v203
      $region41: #{custom-call.59} parent=36 // loop_footer
        %s61 = sadd.s32 1, %s57
      $region42: #{custom-call.59} parent=36 // loop_footer_branch
        %56 = sbr.rel target = $region38
      $region43: #{custom-call.59} parent=36 // loop_exit
        _
    %s206 = sshll.u32 1, 4
    %s207 = ssub.s32 %s206, 1
    %v209 = vld [vmem:[#allocation2] sm:%s207]
    %s210 = sshll.u32 1, 4
    %s211 = ssub.s32 %s210, 1
    %212 = vst [vmem:[#allocation3] sm:%s211] %v209
    // Predicated region
    $region51: #{custom-call.59} parent=1 // pred_check
      _
    $region52: #{custom-call.59} parent=1 // pred_check_branch
      %214 = sbr.rel (0) target = $region54
    $region53: #{custom-call.59} parent=1 // pred_region
      // Predicated region
      $region55: #{custom-call.59} parent=53 // pred_check
        _
      $region56: #{custom-call.59} parent=53 // pred_check_branch
        %216 = sbr.rel (0) target = $region58
      $region57: #{custom-call.59} parent=53 // pred_region
        // Predicated region
        $region70: #{custom-call.59} parent=57 // pred_check
          _
        $region71: #{custom-call.59} parent=57 // pred_check_branch
          %236 = sbr.rel (0) target = $region73
        $region72: #{custom-call.59} parent=57 // pred_region
          loop: start=0, step=1, limit=1
          $region74: #{custom-call.59} parent=72 // loop_pre_header
            _
          $region75: #{custom-call.59} parent=72 // loop_header
            %s238 = sphi 0, %s242
            %p239 = scmp.ge.s32.totalorder %s238, 1
            %s243 = sphi [#allocation1], [#allocation1]
            %s244 = sphi %s1, %s1
          $region76: #{custom-call.59} parent=72 // loop_header_branch
            %241 = sbr.rel (%p239) target = $region80
          $region77: #{custom-call.59} parent=72 // loop_body
            %v245 = vld [vmem:[%s243] sm:$0xff]
            %246 = vst [vmem:[%s244] sm:$0xff] %v245
            %v247 = vld [vmem:[%s243 + $0x8] sm:$0xff]
            %248 = vst [vmem:[%s244 + $0x8] sm:$0xff] %v247
            %v249 = vld [vmem:[%s243 + $0x10] sm:$0xff]
            %250 = vst [vmem:[%s244 + $0x10] sm:$0xff] %v249
          $region78: #{custom-call.59} parent=72 // loop_footer
            %s242 = sadd.s32 1, %s238
          $region79: #{custom-call.59} parent=72 // loop_footer_branch
            %237 = sbr.rel target = $region75
          $region80: #{custom-call.59} parent=72 // loop_exit
            _
        $region73: #{custom-call.59} parent=57 // pred_fallthru
          _
        // Predicated region
        $region81: #{custom-call.59} parent=57 // pred_check
          _
        $region82: #{custom-call.59} parent=57 // pred_check_branch
          %252 = sbr.rel target = $region84
        $region83: #{custom-call.59} parent=57 // pred_region
          _
        $region84: #{custom-call.59} parent=57 // pred_fallthru
          _
      $region58: #{custom-call.59} parent=53 // pred_fallthru
        _
      // Predicated region
      $region59: #{custom-call.59} parent=53 // pred_check
        _
      $region60: #{custom-call.59} parent=53 // pred_check_branch
        %218 = sbr.rel target = $region62
      $region61: #{custom-call.59} parent=53 // pred_region
        %s220 = ssub.s32 256, 1
        loop: start=0, step=1, limit=1
        $region63: #{custom-call.59} parent=61 // loop_pre_header
          _
        $region64: #{custom-call.59} parent=61 // loop_header
          %s222 = sphi 0, %s226
          %p223 = scmp.ge.s32.totalorder %s222, 1
          %s227 = sphi [#allocation1], [#allocation1]
          %s228 = sphi %s1, %s1
        $region65: #{custom-call.59} parent=61 // loop_header_branch
          %225 = sbr.rel (%p223) target = $region69
        $region66: #{custom-call.59} parent=61 // loop_body
          %v229 = vld [vmem:[%s227] sm:%s220]
          %230 = vst [vmem:[%s228] sm:%s220] %v229
          %v231 = vld [vmem:[%s227 + $0x8] sm:%s220]
          %232 = vst [vmem:[%s228 + $0x8] sm:%s220] %v231
          %v233 = vld [vmem:[%s227 + $0x10] sm:%s220]
          %234 = vst [vmem:[%s228 + $0x10] sm:%s220] %v233
        $region67: #{custom-call.59} parent=61 // loop_footer
          %s226 = sadd.s32 1, %s222
        $region68: #{custom-call.59} parent=61 // loop_footer_branch
          %221 = sbr.rel target = $region64
        $region69: #{custom-call.59} parent=61 // loop_exit
          _
      $region62: #{custom-call.59} parent=53 // pred_fallthru
        _
    $region54: #{custom-call.59} parent=1 // pred_fallthru
      _
    %253 = vnop
    // Predicated region
    $region85: #{custom-call.59} parent=1 // pred_check
      _
    $region86: #{custom-call.59} parent=1 // pred_check_branch
      %255 = sbr.rel (0) target = $region88
    $region87: #{custom-call.59} parent=1 // pred_region
      // Predicated region
      $region89: #{custom-call.59} parent=87 // pred_check
        _
      $region90: #{custom-call.59} parent=87 // pred_check_branch
        %257 = sbr.rel target = $region92
      $region91: #{custom-call.59} parent=87 // pred_region
        // Predicated region
        $region104: #{custom-call.59} parent=91 // pred_check
          _
        $region105: #{custom-call.59} parent=91 // pred_check_branch
          %273 = sbr.rel (0) target = $region107
        $region106: #{custom-call.59} parent=91 // pred_region
          %s275 = ssub.s32 16, 1
          loop: start=0, step=1, limit=1
          $region108: #{custom-call.59} parent=106 // loop_pre_header
            _
          $region109: #{custom-call.59} parent=106 // loop_header
            %s277 = sphi 0, %s281
            %p278 = scmp.ge.s32.totalorder %s277, 1
            %s282 = sphi [#allocation3], [#allocation3]
            %s283 = sphi %s2, %s2
          $region110: #{custom-call.59} parent=106 // loop_header_branch
            %280 = sbr.rel (%p278) target = $region114
          $region111: #{custom-call.59} parent=106 // loop_body
            %v284 = vld [vmem:[%s282] sm:%s275]
            %285 = vst [vmem:[%s283] sm:%s275] %v284
          $region112: #{custom-call.59} parent=106 // loop_footer
            %s281 = sadd.s32 1, %s277
          $region113: #{custom-call.59} parent=106 // loop_footer_branch
            %276 = sbr.rel target = $region109
          $region114: #{custom-call.59} parent=106 // loop_exit
            _
        $region107: #{custom-call.59} parent=91 // pred_fallthru
          _
      $region92: #{custom-call.59} parent=87 // pred_fallthru
        _
      // Predicated region
      $region93: #{custom-call.59} parent=87 // pred_check
        _
      $region94: #{custom-call.59} parent=87 // pred_check_branch
        %259 = sbr.rel (0) target = $region96
      $region95: #{custom-call.59} parent=87 // pred_region
        %s261 = ssub.s32 16, 1
        loop: start=0, step=1, limit=1
        $region97: #{custom-call.59} parent=95 // loop_pre_header
          _
        $region98: #{custom-call.59} parent=95 // loop_header
          %s263 = sphi 0, %s267
          %p264 = scmp.ge.s32.totalorder %s263, 1
          %s268 = sphi [#allocation3], [#allocation3]
          %s269 = sphi %s2, %s2
        $region99: #{custom-call.59} parent=95 // loop_header_branch
          %266 = sbr.rel (%p264) target = $region103
        $region100: #{custom-call.59} parent=95 // loop_body
          %v270 = vld [vmem:[%s268] sm:%s261]
          %271 = vst [vmem:[%s269] sm:%s261] %v270
        $region101: #{custom-call.59} parent=95 // loop_footer
          %s267 = sadd.s32 1, %s263
        $region102: #{custom-call.59} parent=95 // loop_footer_branch
          %262 = sbr.rel target = $region98
        $region103: #{custom-call.59} parent=95 // loop_exit
          _
      $region96: #{custom-call.59} parent=87 // pred_fallthru
        _
    $region88: #{custom-call.59} parent=1 // pred_fallthru
      _
    %286 = vnop

// kernel: custom-call.60
$region0: #{custom-call.60}
  %s0 = inlined_call_operand.vmem [shape: f32[48,3,3], index: 0, kind: input, shape index: {}]
  %s1 = inlined_call_operand.vmem [shape: f32[48,3,3], index: 1, kind: output, shape index: {}]
  $region1: #{custom-call.60} parent=0
    #allocation0 [shape = 'u8[4096]{0}', space=vmem, size = 0x1000, scoped, tag = 'operand span for operand 0']
    #allocation1 [shape = 'u8[4096]{0}', space=vmem, size = 0x1000, scoped, tag = 'packed  for operand 0']
    #allocation2 [shape = 'u8[4096]{0}', space=vmem, size = 0x1000, scoped, tag = 'operand span for operand 1']
    #allocation3 [shape = 'u8[4096]{0}', space=vmem, size = 0x1000, scoped, tag = 'packed  for operand 1']
    loop: start=0, step=1, limit=50
    $region2: #{custom-call.60} parent=1 // loop_pre_header
      _
    $region3: #{custom-call.60} parent=1 // loop_header
      %s3 = sphi 0, %s7
      %p4 = scmp.ge.s32.totalorder %s3, 50
    $region4: #{custom-call.60} parent=1 // loop_header_branch
      %6 = sbr.rel (%p4) target = $region8
    $region5: #{custom-call.60} parent=1 // loop_body
      %s8 = ssub.s32 %s3, 1
      %s9 = ssub.s32 %s3, 2
      %s10 = sadd.s32 %s3, 1
      %p11 = scmp.le.s32.totalorder 1, %s3
      %p12 = scmp.lt.s32.totalorder %s3, 49
      %p13 = pnand %p11, %p12
      %p14 = pneg %p13
      // Predicated region
      $region9: #{custom-call.60} parent=5 // pred_check
        _
      $region10: #{custom-call.60} parent=5 // pred_check_branch
        %16 = sbr.rel (%p13) target = $region12
      $region11: #{custom-call.60} parent=5 // pred_region
        %s17 = ssub.s32 %s3, 1
      $region12: #{custom-call.60} parent=5 // pred_fallthru
        _
      %p18 = scmp.lt.s32.totalorder %s3, 48
      // Predicated region
      $region13: #{custom-call.60} parent=5 // pred_check
        %p19 = pneg %p18
      $region14: #{custom-call.60} parent=5 // pred_check_branch
        %21 = sbr.rel (%p19) target = $region16
      $region15: #{custom-call.60} parent=5 // pred_region
        %s22 = sand.u32 %s3, 1
        %s23 = sand.u32 %s3, 1
        %s24 = smul.addr %s23, 4
        %s25 = scalar_lea.vmem [#allocation1], %s24
        %s26 = smul.addr %s3, 4
        %s27 = scalar_lea.vmem %s0, %s26
        // Predicated region
        $region17: #{custom-call.60} parent=15 // pred_check
          _
        $region18: #{custom-call.60} parent=15 // pred_check_branch
          %29 = sbr.rel (0) target = $region20
        $region19: #{custom-call.60} parent=15 // pred_region
          // Predicated region
          $region21: #{custom-call.60} parent=19 // pred_check
            _
          $region22: #{custom-call.60} parent=19 // pred_check_branch
            %31 = sbr.rel target = $region24
          $region23: #{custom-call.60} parent=19 // pred_region
            // Predicated region
            $region36: #{custom-call.60} parent=23 // pred_check
              _
            $region37: #{custom-call.60} parent=23 // pred_check_branch
              %47 = sbr.rel (0) target = $region39
            $region38: #{custom-call.60} parent=23 // pred_region
              %s49 = ssub.s32 16, 1
              loop: start=0, step=1, limit=1
              $region40: #{custom-call.60} parent=38 // loop_pre_header
                _
              $region41: #{custom-call.60} parent=38 // loop_header
                %s51 = sphi 0, %s55
                %p52 = scmp.ge.s32.totalorder %s51, 1
                %s56 = sphi %s27, %s27
                %s57 = sphi %s25, %s25
              $region42: #{custom-call.60} parent=38 // loop_header_branch
                %54 = sbr.rel (%p52) target = $region46
              $region43: #{custom-call.60} parent=38 // loop_body
                %v58 = vld [vmem:[%s56] sm:%s49]
                %59 = vst [vmem:[%s57] sm:%s49] %v58
              $region44: #{custom-call.60} parent=38 // loop_footer
                %s55 = sadd.s32 1, %s51
              $region45: #{custom-call.60} parent=38 // loop_footer_branch
                %50 = sbr.rel target = $region41
              $region46: #{custom-call.60} parent=38 // loop_exit
                _
            $region39: #{custom-call.60} parent=23 // pred_fallthru
              _
          $region24: #{custom-call.60} parent=19 // pred_fallthru
            _
          // Predicated region
          $region25: #{custom-call.60} parent=19 // pred_check
            _
          $region26: #{custom-call.60} parent=19 // pred_check_branch
            %33 = sbr.rel (0) target = $region28
          $region27: #{custom-call.60} parent=19 // pred_region
            %s35 = ssub.s32 16, 1
            loop: start=0, step=1, limit=1
            $region29: #{custom-call.60} parent=27 // loop_pre_header
              _
            $region30: #{custom-call.60} parent=27 // loop_header
              %s37 = sphi 0, %s41
              %p38 = scmp.ge.s32.totalorder %s37, 1
              %s42 = sphi %s27, %s27
              %s43 = sphi %s25, %s25
            $region31: #{custom-call.60} parent=27 // loop_header_branch
              %40 = sbr.rel (%p38) target = $region35
            $region32: #{custom-call.60} parent=27 // loop_body
              %v44 = vld [vmem:[%s42] sm:%s35]
              %45 = vst [vmem:[%s43] sm:%s35] %v44
            $region33: #{custom-call.60} parent=27 // loop_footer
              %s41 = sadd.s32 1, %s37
            $region34: #{custom-call.60} parent=27 // loop_footer_branch
              %36 = sbr.rel target = $region30
            $region35: #{custom-call.60} parent=27 // loop_exit
              _
          $region28: #{custom-call.60} parent=19 // pred_fallthru
            _
        $region20: #{custom-call.60} parent=15 // pred_fallthru
          _
        %60 = vnop
      $region16: #{custom-call.60} parent=5 // pred_fallthru
        _
      %p61 = scmp.le.s32.totalorder 1, %s3
      %p62 = scmp.lt.s32.totalorder %s3, 49
      %p63 = pnand %p61, %p62
      %p64 = pneg %p63
      // Predicated region
      $region47: #{custom-call.60} parent=5 // pred_check
        _
      $region48: #{custom-call.60} parent=5 // pred_check_branch
        %66 = sbr.rel (%p63) target = $region50
      $region49: #{custom-call.60} parent=5 // pred_region
        %s67 = ssub.s32 %s3, 1
        %s68 = sand.u32 %s8, 1
        %s69 = sand.u32 %s8, 1
        %s70 = smul.addr %s69, 4
        %s71 = scalar_lea.vmem [#allocation1], %s70
        %s72 = sand.u32 %s8, 1
        %s73 = sand.u32 %s8, 1
        %s74 = smul.addr %s73, 4
        %s75 = scalar_lea.vmem [#allocation1], %s74
        %s76 = sand.u32 %s8, 1
        %s77 = sand.u32 %s8, 1
        %s78 = smul.addr %s77, 4
        %s79 = scalar_lea.vmem [#allocation3], %s78
        %s81 = sshll.u32 1, 4
        %s82 = ssub.s32 %s81, 1
        %v83 = vld [vmem:[%s75] sm:%s82]
        %84 = vst [vmem:[#allocation0] sm:%s82] %v83
        %v85 = vlaneseq
        %v86 = vand.u32 %v85, 127
        %v87 = vlaneseq
        %v88 = vshrl.u32 %v87, 7
        %vm90 = vcmp.eq.s32.totalorder %v86, %v88
        %v91 = vld [vmem:[#allocation0] sm:$0xff]
        %v92 = vlaneseq
        %v93 = vand.u32 %v92, 127
        %vm94 = vcmp.eq.s32.totalorder %v93, 0
        %v95 = vsel %vm94, %v91, 1.0
        %v96 = vsel %vm90, %v95, 0.0
        %s97 = scalar_lea.vmem [#allocation0], 1
        %v98 = vld [vmem:[%s97] ss:$0 sm:$0xff]
        %vm99 = vcmask 23552
        %v100 = vsel %vm99, %v98, 0.0
        %v101 = vlaneseq
        %v102 = vand.u32 %v101, 127
        %vm103 = vcmp.eq.s32.totalorder %v102, 1
        %v104 = vmul.f32 %v100, %v96
        %105 = vadd.xlane.f32.xlu0 %v104
        %v106 = vpop.xlane.xlu0 %105
        %v107 = vsel %vm103, %v106, %v96
        %s108 = scalar_lea.vmem [#allocation0], 2
        %v109 = vld [vmem:[%s108] ss:$0 sm:$0xff]
        %vm110 = vcmask 23552
        %v111 = vsel %vm110, %v109, 0.0
        %v112 = vlaneseq
        %v113 = vand.u32 %v112, 127
        %vm114 = vcmp.eq.s32.totalorder %v113, 2
        %v115 = vmul.f32 %v111, %v107
        %116 = vadd.xlane.f32.xlu0 %v115
        %v117 = vpop.xlane.xlu0 %116
        %v118 = vsel %vm114, %v117, %v107
        %119 = vst [vmem:[#allocation2] sm:$0xff] %v118
        %s121 = sshll.u32 1, 4
        %s122 = ssub.s32 %s121, 1
        %v124 = vld [vmem:[#allocation2] sm:%s122]
        %s125 = sshll.u32 1, 4
        %s126 = ssub.s32 %s125, 1
        %127 = vst [vmem:[%s79] sm:%s126] %v124
        %s128 = sand.u32 %s8, 1
        %s129 = sand.u32 %s8, 1
        %s130 = smul.addr %s129, 4
        %s131 = scalar_lea.vmem [#allocation3], %s130
        %s132 = smul.addr %s8, 4
        %s133 = scalar_lea.vmem %s1, %s132
        // Predicated region
        $region51: #{custom-call.60} parent=49 // pred_check
          _
        $region52: #{custom-call.60} parent=49 // pred_check_branch
          %135 = sbr.rel (0) target = $region54
        $region53: #{custom-call.60} parent=49 // pred_region
          // Predicated region
          $region55: #{custom-call.60} parent=53 // pred_check
            _
          $region56: #{custom-call.60} parent=53 // pred_check_branch
            %137 = sbr.rel target = $region58
          $region57: #{custom-call.60} parent=53 // pred_region
            // Predicated region
            $region70: #{custom-call.60} parent=57 // pred_check
              _
            $region71: #{custom-call.60} parent=57 // pred_check_branch
              %153 = sbr.rel (0) target = $region73
            $region72: #{custom-call.60} parent=57 // pred_region
              %s155 = ssub.s32 16, 1
              loop: start=0, step=1, limit=1
              $region74: #{custom-call.60} parent=72 // loop_pre_header
                _
              $region75: #{custom-call.60} parent=72 // loop_header
                %s157 = sphi 0, %s161
                %p158 = scmp.ge.s32.totalorder %s157, 1
                %s162 = sphi %s131, %s131
                %s163 = sphi %s133, %s133
              $region76: #{custom-call.60} parent=72 // loop_header_branch
                %160 = sbr.rel (%p158) target = $region80
              $region77: #{custom-call.60} parent=72 // loop_body
                %v164 = vld [vmem:[%s162] sm:%s155]
                %165 = vst [vmem:[%s163] sm:%s155] %v164
              $region78: #{custom-call.60} parent=72 // loop_footer
                %s161 = sadd.s32 1, %s157
              $region79: #{custom-call.60} parent=72 // loop_footer_branch
                %156 = sbr.rel target = $region75
              $region80: #{custom-call.60} parent=72 // loop_exit
                _
            $region73: #{custom-call.60} parent=57 // pred_fallthru
              _
          $region58: #{custom-call.60} parent=53 // pred_fallthru
            _
          // Predicated region
          $region59: #{custom-call.60} parent=53 // pred_check
            _
          $region60: #{custom-call.60} parent=53 // pred_check_branch
            %139 = sbr.rel (0) target = $region62
          $region61: #{custom-call.60} parent=53 // pred_region
            %s141 = ssub.s32 16, 1
            loop: start=0, step=1, limit=1
            $region63: #{custom-call.60} parent=61 // loop_pre_header
              _
            $region64: #{custom-call.60} parent=61 // loop_header
              %s143 = sphi 0, %s147
              %p144 = scmp.ge.s32.totalorder %s143, 1
              %s148 = sphi %s131, %s131
              %s149 = sphi %s133, %s133
            $region65: #{custom-call.60} parent=61 // loop_header_branch
              %146 = sbr.rel (%p144) target = $region69
            $region66: #{custom-call.60} parent=61 // loop_body
              %v150 = vld [vmem:[%s148] sm:%s141]
              %151 = vst [vmem:[%s149] sm:%s141] %v150
            $region67: #{custom-call.60} parent=61 // loop_footer
              %s147 = sadd.s32 1, %s143
            $region68: #{custom-call.60} parent=61 // loop_footer_branch
              %142 = sbr.rel target = $region64
            $region69: #{custom-call.60} parent=61 // loop_exit
              _
          $region62: #{custom-call.60} parent=53 // pred_fallthru
            _
        $region54: #{custom-call.60} parent=49 // pred_fallthru
          _
        %166 = vnop
      $region50: #{custom-call.60} parent=5 // pred_fallthru
        _
      %p167 = scmp.le.s32.totalorder 2, %s3
      // Predicated region
      $region81: #{custom-call.60} parent=5 // pred_check
        %p168 = pneg %p167
      $region82: #{custom-call.60} parent=5 // pred_check_branch
        %170 = sbr.rel (%p168) target = $region84
      $region83: #{custom-call.60} parent=5 // pred_region
        %s171 = ssub.s32 %s3, 2
        %s172 = sand.u32 %s9, 1
        %s173 = sand.u32 %s9, 1
        %s174 = smul.addr %s173, 4
        %s175 = scalar_lea.vmem [#allocation3], %s174
      $region84: #{custom-call.60} parent=5 // pred_fallthru
        _
    $region6: #{custom-call.60} parent=1 // loop_footer
      %s7 = sadd.s32 1, %s3
    $region7: #{custom-call.60} parent=1 // loop_footer_branch
      %2 = sbr.rel target = $region3
    $region8: #{custom-call.60} parent=1 // loop_exit
      _

// kernel: custom-call.57
$region0: #{custom-call.57}
  %s0 = inlined_call_operand.vmem [shape: f32[48,3,3], index: 0, kind: input, shape index: {}]
  %s1 = inlined_call_operand.vmem [shape: f32[48,3,3], index: 1, kind: output, shape index: {}]
  $region1: #{custom-call.57} parent=0
    #allocation0 [shape = 'u8[4096]{0}', space=vmem, size = 0x1000, scoped, tag = 'operand span for operand 0']
    #allocation1 [shape = 'u8[4096]{0}', space=vmem, size = 0x1000, scoped, tag = 'packed  for operand 0']
    #allocation2 [shape = 'u8[4096]{0}', space=vmem, size = 0x1000, scoped, tag = 'operand span for operand 1']
    #allocation3 [shape = 'u8[4096]{0}', space=vmem, size = 0x1000, scoped, tag = 'packed  for operand 1']
    loop: start=0, step=1, limit=50
    $region2: #{custom-call.57} parent=1 // loop_pre_header
      _
    $region3: #{custom-call.57} parent=1 // loop_header
      %s3 = sphi 0, %s7
      %p4 = scmp.ge.s32.totalorder %s3, 50
      %s10 = sphi 0, %s29
      %s11 = sphi 0, %s25
      %s12 = sphi 0, %s21
      %s13 = sphi 0, %s10
      %s14 = sphi 0, %s11
      %s15 = sphi 0, %s12
      %s16 = sphi 0, %s13
      %s17 = sphi 0, %s14
      %s18 = sphi 0, %s15
    $region4: #{custom-call.57} parent=1 // loop_header_branch
      %6 = sbr.rel (%p4) target = $region8
    $region5: #{custom-call.57} parent=1 // loop_body
      %s8 = ssub.s32 %s3, 1
      %s9 = ssub.s32 %s3, 2
      %s19 = sadd.s32 1, %s12
      %p20 = scmp.ge.s32.totalorder %s19, 1
      %s21 = scalar_select %p20, 0, %s19
      %s22 = sadd.s32 1, %s11
      %s23 = scalar_select %p20, %s22, %s11
      %p24 = scmp.ge.s32.totalorder %s23, 1
      %s25 = scalar_select %p24, 0, %s23
      %s26 = sadd.s32 1, %s10
      %s27 = scalar_select %p24, %s26, %s10
      %p28 = scmp.ge.s32.totalorder %s27, 48
      %s29 = scalar_select %p28, 0, %s27
      %p30 = scmp.le.s32.totalorder 1, %s3
      %p31 = scmp.lt.s32.totalorder %s3, 49
      %p32 = pnand %p30, %p31
      %p33 = pneg %p32
      // Predicated region
      $region9: #{custom-call.57} parent=5 // pred_check
        _
      $region10: #{custom-call.57} parent=5 // pred_check_branch
        %35 = sbr.rel (%p32) target = $region12
      $region11: #{custom-call.57} parent=5 // pred_region
        %s36 = ssub.s32 %s3, 1
      $region12: #{custom-call.57} parent=5 // pred_fallthru
        _
      %p37 = scmp.lt.s32.totalorder %s3, 48
      // Predicated region
      $region13: #{custom-call.57} parent=5 // pred_check
        %p38 = pneg %p37
      $region14: #{custom-call.57} parent=5 // pred_check_branch
        %40 = sbr.rel (%p38) target = $region16
      $region15: #{custom-call.57} parent=5 // pred_region
        %s41 = sand.u32 %s3, 1
        %s42 = sand.u32 %s3, 1
        %s43 = smul.addr %s42, 4
        %s44 = scalar_lea.vmem [#allocation1], %s43
        %s45 = sadd.s32 %s12, %s11
        %s46 = sadd.s32 %s45, %s10
        %s47 = smul.addr %s46, 4
        %s48 = scalar_lea.vmem %s0, %s47
        // Predicated region
        $region17: #{custom-call.57} parent=15 // pred_check
          _
        $region18: #{custom-call.57} parent=15 // pred_check_branch
          %50 = sbr.rel (0) target = $region20
        $region19: #{custom-call.57} parent=15 // pred_region
          // Predicated region
          $region21: #{custom-call.57} parent=19 // pred_check
            _
          $region22: #{custom-call.57} parent=19 // pred_check_branch
            %52 = sbr.rel target = $region24
          $region23: #{custom-call.57} parent=19 // pred_region
            // Predicated region
            $region36: #{custom-call.57} parent=23 // pred_check
              _
            $region37: #{custom-call.57} parent=23 // pred_check_branch
              %68 = sbr.rel (0) target = $region39
            $region38: #{custom-call.57} parent=23 // pred_region
              %s70 = ssub.s32 16, 1
              loop: start=0, step=1, limit=1
              $region40: #{custom-call.57} parent=38 // loop_pre_header
                _
              $region41: #{custom-call.57} parent=38 // loop_header
                %s72 = sphi 0, %s76
                %p73 = scmp.ge.s32.totalorder %s72, 1
                %s77 = sphi %s48, %s48
                %s78 = sphi %s44, %s44
              $region42: #{custom-call.57} parent=38 // loop_header_branch
                %75 = sbr.rel (%p73) target = $region46
              $region43: #{custom-call.57} parent=38 // loop_body
                %v79 = vld [vmem:[%s77] sm:%s70]
                %80 = vst [vmem:[%s78] sm:%s70] %v79
              $region44: #{custom-call.57} parent=38 // loop_footer
                %s76 = sadd.s32 1, %s72
              $region45: #{custom-call.57} parent=38 // loop_footer_branch
                %71 = sbr.rel target = $region41
              $region46: #{custom-call.57} parent=38 // loop_exit
                _
            $region39: #{custom-call.57} parent=23 // pred_fallthru
              _
          $region24: #{custom-call.57} parent=19 // pred_fallthru
            _
          // Predicated region
          $region25: #{custom-call.57} parent=19 // pred_check
            _
          $region26: #{custom-call.57} parent=19 // pred_check_branch
            %54 = sbr.rel (0) target = $region28
          $region27: #{custom-call.57} parent=19 // pred_region
            %s56 = ssub.s32 16, 1
            loop: start=0, step=1, limit=1
            $region29: #{custom-call.57} parent=27 // loop_pre_header
              _
            $region30: #{custom-call.57} parent=27 // loop_header
              %s58 = sphi 0, %s62
              %p59 = scmp.ge.s32.totalorder %s58, 1
              %s63 = sphi %s48, %s48
              %s64 = sphi %s44, %s44
            $region31: #{custom-call.57} parent=27 // loop_header_branch
              %61 = sbr.rel (%p59) target = $region35
            $region32: #{custom-call.57} parent=27 // loop_body
              %v65 = vld [vmem:[%s63] sm:%s56]
              %66 = vst [vmem:[%s64] sm:%s56] %v65
            $region33: #{custom-call.57} parent=27 // loop_footer
              %s62 = sadd.s32 1, %s58
            $region34: #{custom-call.57} parent=27 // loop_footer_branch
              %57 = sbr.rel target = $region30
            $region35: #{custom-call.57} parent=27 // loop_exit
              _
          $region28: #{custom-call.57} parent=19 // pred_fallthru
            _
        $region20: #{custom-call.57} parent=15 // pred_fallthru
          _
        %81 = vnop
      $region16: #{custom-call.57} parent=5 // pred_fallthru
        _
      %p82 = scmp.le.s32.totalorder 1, %s3
      %p83 = scmp.lt.s32.totalorder %s3, 49
      %p84 = pnand %p82, %p83
      %p85 = pneg %p84
      // Predicated region
      $region47: #{custom-call.57} parent=5 // pred_check
        _
      $region48: #{custom-call.57} parent=5 // pred_check_branch
        %87 = sbr.rel (%p84) target = $region50
      $region49: #{custom-call.57} parent=5 // pred_region
        %s88 = ssub.s32 %s3, 1
        %s89 = sand.u32 %s8, 1
        %s90 = sand.u32 %s8, 1
        %s91 = smul.addr %s90, 4
        %s92 = scalar_lea.vmem [#allocation1], %s91
        %s93 = sand.u32 %s8, 1
        %s94 = sand.u32 %s8, 1
        %s95 = smul.addr %s94, 4
        %s96 = scalar_lea.vmem [#allocation1], %s95
        %s97 = sand.u32 %s8, 1
        %s98 = sand.u32 %s8, 1
        %s99 = smul.addr %s98, 4
        %s100 = scalar_lea.vmem [#allocation3], %s99
        %s102 = sshll.u32 1, 4
        %s103 = ssub.s32 %s102, 1
        %v104 = vld [vmem:[%s96] sm:%s103]
        %105 = vst [vmem:[#allocation0] sm:%s103] %v104
        %106 = vst [vmem:[#allocation2] sm:$0xff] 0.0
        %vm107 = vcmask 7168
        %v108 = vld [vmem:[#allocation2] ss:$0 sm:$0xff]
        %v109 = vld [vmem:[#allocation0] ss:$0 sm:$0xff]
        %v110 = vmul.f32 %v108, %v108
        %111 = vadd.xlane.f32.xlu0 %v110
        %v112 = vpop.xlane.xlu0 %111
        %v113 = vsub.f32 %v109, %v112
        %v114 = vrsqrt.pop %v113
        %v115 = vld [vmem:[#allocation0] sm:$0xff]
        %v116 = vld [vmem:[#allocation2] sm:$0xff]
        %v117 = vmul.f32 %v116, %v108
        %118 = vadd.xlane.f32.xlu0 %v117
        %v119 = vpop.xlane.xlu0 %118
        %v120 = vsub.f32 %v115, %v119
        %v121 = vmul.f32 %v120, %v114
        %v122 = vsel %vm107, %v121, 0.0
        %v123 = vadd.f32 %v116, %v122
        %124 = vst [vmem:[#allocation2] sm:$0xff] %v123
        %vm125 = vcmask 15368
        %s126 = scalar_lea.vmem [#allocation2], 1
        %v127 = vld [vmem:[%s126] ss:$0 sm:$0xff]
        %s128 = scalar_lea.vmem [#allocation0], 1
        %v129 = vld [vmem:[%s128] ss:$0 sm:$0xff]
        %v130 = vmul.f32 %v127, %v127
        %131 = vadd.xlane.f32.xlu0 %v130
        %v132 = vpop.xlane.xlu0 %131
        %v133 = vsub.f32 %v129, %v132
        %v134 = vrsqrt.pop %v133
        %v135 = vld [vmem:[#allocation0] sm:$0xff]
        %v136 = vld [vmem:[#allocation2] sm:$0xff]
        %v137 = vmul.f32 %v136, %v127
        %138 = vadd.xlane.f32.xlu0 %v137
        %v139 = vpop.xlane.xlu0 %138
        %v140 = vsub.f32 %v135, %v139
        %v141 = vmul.f32 %v140, %v134
        %vm142 = vcmask 1047553
        %vm143 = vmand %vm125, %vm142
        %v144 = vsel %vm143, %v141, 0.0
        %v145 = vadd.f32 %v136, %v144
        %146 = vst [vmem:[#allocation2] sm:$0xff] %v145
        %vm147 = vcmask 23568
        %s148 = scalar_lea.vmem [#allocation2], 2
        %v149 = vld [vmem:[%s148] ss:$0 sm:$0xff]
        %s150 = scalar_lea.vmem [#allocation0], 2
        %v151 = vld [vmem:[%s150] ss:$0 sm:$0xff]
        %v152 = vmul.f32 %v149, %v149
        %153 = vadd.xlane.f32.xlu0 %v152
        %v154 = vpop.xlane.xlu0 %153
        %v155 = vsub.f32 %v151, %v154
        %v156 = vrsqrt.pop %v155
        %v157 = vld [vmem:[#allocation0] sm:$0xff]
        %v158 = vld [vmem:[#allocation2] sm:$0xff]
        %v159 = vmul.f32 %v158, %v149
        %160 = vadd.xlane.f32.xlu0 %v159
        %v161 = vpop.xlane.xlu0 %160
        %v162 = vsub.f32 %v157, %v161
        %v163 = vmul.f32 %v162, %v156
        %vm164 = vcmask 1047554
        %vm165 = vmand %vm147, %vm164
        %v166 = vsel %vm165, %v163, 0.0
        %v167 = vadd.f32 %v158, %v166
        %168 = vst [vmem:[#allocation2] sm:$0xff] %v167
        %s170 = sshll.u32 1, 4
        %s171 = ssub.s32 %s170, 1
        %v173 = vld [vmem:[#allocation2] sm:%s171]
        %s174 = sshll.u32 1, 4
        %s175 = ssub.s32 %s174, 1
        %176 = vst [vmem:[%s100] sm:%s175] %v173
        %s177 = sand.u32 %s8, 1
        %s178 = sand.u32 %s8, 1
        %s179 = smul.addr %s178, 4
        %s180 = scalar_lea.vmem [#allocation3], %s179
        %s181 = sadd.s32 %s15, %s14
        %s182 = sadd.s32 %s181, %s13
        %s183 = smul.addr %s182, 4
        %s184 = scalar_lea.vmem %s1, %s183
        // Predicated region
        $region51: #{custom-call.57} parent=49 // pred_check
          _
        $region52: #{custom-call.57} parent=49 // pred_check_branch
          %186 = sbr.rel (0) target = $region54
        $region53: #{custom-call.57} parent=49 // pred_region
          // Predicated region
          $region55: #{custom-call.57} parent=53 // pred_check
            _
          $region56: #{custom-call.57} parent=53 // pred_check_branch
            %188 = sbr.rel target = $region58
          $region57: #{custom-call.57} parent=53 // pred_region
            // Predicated region
            $region70: #{custom-call.57} parent=57 // pred_check
              _
            $region71: #{custom-call.57} parent=57 // pred_check_branch
              %204 = sbr.rel (0) target = $region73
            $region72: #{custom-call.57} parent=57 // pred_region
              %s206 = ssub.s32 16, 1
              loop: start=0, step=1, limit=1
              $region74: #{custom-call.57} parent=72 // loop_pre_header
                _
              $region75: #{custom-call.57} parent=72 // loop_header
                %s208 = sphi 0, %s212
                %p209 = scmp.ge.s32.totalorder %s208, 1
                %s213 = sphi %s180, %s180
                %s214 = sphi %s184, %s184
              $region76: #{custom-call.57} parent=72 // loop_header_branch
                %211 = sbr.rel (%p209) target = $region80
              $region77: #{custom-call.57} parent=72 // loop_body
                %v215 = vld [vmem:[%s213] sm:%s206]
                %216 = vst [vmem:[%s214] sm:%s206] %v215
              $region78: #{custom-call.57} parent=72 // loop_footer
                %s212 = sadd.s32 1, %s208
              $region79: #{custom-call.57} parent=72 // loop_footer_branch
                %207 = sbr.rel target = $region75
              $region80: #{custom-call.57} parent=72 // loop_exit
                _
            $region73: #{custom-call.57} parent=57 // pred_fallthru
              _
          $region58: #{custom-call.57} parent=53 // pred_fallthru
            _
          // Predicated region
          $region59: #{custom-call.57} parent=53 // pred_check
            _
          $region60: #{custom-call.57} parent=53 // pred_check_branch
            %190 = sbr.rel (0) target = $region62
          $region61: #{custom-call.57} parent=53 // pred_region
            %s192 = ssub.s32 16, 1
            loop: start=0, step=1, limit=1
            $region63: #{custom-call.57} parent=61 // loop_pre_header
              _
            $region64: #{custom-call.57} parent=61 // loop_header
              %s194 = sphi 0, %s198
              %p195 = scmp.ge.s32.totalorder %s194, 1
              %s199 = sphi %s180, %s180
              %s200 = sphi %s184, %s184
            $region65: #{custom-call.57} parent=61 // loop_header_branch
              %197 = sbr.rel (%p195) target = $region69
            $region66: #{custom-call.57} parent=61 // loop_body
              %v201 = vld [vmem:[%s199] sm:%s192]
              %202 = vst [vmem:[%s200] sm:%s192] %v201
            $region67: #{custom-call.57} parent=61 // loop_footer
              %s198 = sadd.s32 1, %s194
            $region68: #{custom-call.57} parent=61 // loop_footer_branch
              %193 = sbr.rel target = $region64
            $region69: #{custom-call.57} parent=61 // loop_exit
              _
          $region62: #{custom-call.57} parent=53 // pred_fallthru
            _
        $region54: #{custom-call.57} parent=49 // pred_fallthru
          _
        %217 = vnop
      $region50: #{custom-call.57} parent=5 // pred_fallthru
        _
      %p218 = scmp.le.s32.totalorder 2, %s3
      // Predicated region
      $region81: #{custom-call.57} parent=5 // pred_check
        %p219 = pneg %p218
      $region82: #{custom-call.57} parent=5 // pred_check_branch
        %221 = sbr.rel (%p219) target = $region84
      $region83: #{custom-call.57} parent=5 // pred_region
        %s222 = ssub.s32 %s3, 2
        %s223 = sand.u32 %s9, 1
        %s224 = sand.u32 %s9, 1
        %s225 = smul.addr %s224, 4
        %s226 = scalar_lea.vmem [#allocation3], %s225
      $region84: #{custom-call.57} parent=5 // pred_fallthru
        _
    $region6: #{custom-call.57} parent=1 // loop_footer
      %s7 = sadd.s32 1, %s3
    $region7: #{custom-call.57} parent=1 // loop_footer_branch
      %2 = sbr.rel target = $region3
    $region8: #{custom-call.57} parent=1 // loop_exit
      _

// kernel: custom-call.58
$region0: #{custom-call.58}
  %s0 = inlined_call_operand.vmem [shape: f32[48,1,3,3], index: 0, kind: input, shape index: {}]
  %s1 = inlined_call_operand.vmem [shape: f32[48,1,3,3], index: 1, kind: output, shape index: {}]
  $region1: #{custom-call.58} parent=0
    #allocation0 [shape = 'u8[12288]{0}', space=vmem, size = 0x3000, scoped, tag = 'operand span for operand 0']
    #allocation1 [shape = 'u8[6144]{0}', space=vmem, size = 0x1800, scoped, tag = 'packed  for operand 0']
    #allocation2 [shape = 'u8[12288]{0}', space=vmem, size = 0x3000, scoped, tag = 'operand span for operand 1']
    #allocation3 [shape = 'u8[6144]{0}', space=vmem, size = 0x1800, scoped, tag = 'packed  for operand 1']
    #allocation4 [shape = 'f32[3,8,128]{2,1,0}', space=vmem, size = 0x3000, scoped, tag = 'rescaled input a']
    #allocation5 [shape = 'f32[8,128]{1,0}', space=vmem, size = 0x1000, scoped, tag = 'row diag scales']
    // Predicated region
    $region2: #{custom-call.58} parent=1 // pred_check
      _
    $region3: #{custom-call.58} parent=1 // pred_check_branch
      %3 = sbr.rel (0) target = $region5
    $region4: #{custom-call.58} parent=1 // pred_region
      // Predicated region
      $region6: #{custom-call.58} parent=4 // pred_check
        _
      $region7: #{custom-call.58} parent=4 // pred_check_branch
        %5 = sbr.rel target = $region9
      $region8: #{custom-call.58} parent=4 // pred_region
        // Predicated region
        $region21: #{custom-call.58} parent=8 // pred_check
          _
        $region22: #{custom-call.58} parent=8 // pred_check_branch
          %25 = sbr.rel (0) target = $region24
        $region23: #{custom-call.58} parent=8 // pred_region
          loop: start=0, step=1, limit=1
          $region25: #{custom-call.58} parent=23 // loop_pre_header
            _
          $region26: #{custom-call.58} parent=23 // loop_header
            %s27 = sphi 0, %s31
            %p28 = scmp.ge.s32.totalorder %s27, 1
            %s32 = sphi %s0, %s0
            %s33 = sphi [#allocation1], [#allocation1]
          $region27: #{custom-call.58} parent=23 // loop_header_branch
            %30 = sbr.rel (%p28) target = $region31
          $region28: #{custom-call.58} parent=23 // loop_body
            _
          $region29: #{custom-call.58} parent=23 // loop_footer
            %s31 = sadd.s32 1, %s27
          $region30: #{custom-call.58} parent=23 // loop_footer_branch
            %26 = sbr.rel target = $region26
          $region31: #{custom-call.58} parent=23 // loop_exit
            _
          %s35 = ssub.s32 16, 1
          loop: start=0, step=1, limit=1
          $region32: #{custom-call.58} parent=23 // loop_pre_header
            _
          $region33: #{custom-call.58} parent=23 // loop_header
            %s37 = sphi 0, %s41
            %p38 = scmp.ge.s32.totalorder %s37, 1
            %s42 = sphi %s0, %s0
            %s43 = sphi [#allocation1], [#allocation1]
          $region34: #{custom-call.58} parent=23 // loop_header_branch
            %40 = sbr.rel (%p38) target = $region38
          $region35: #{custom-call.58} parent=23 // loop_body
            %v44 = vld [vmem:[%s42] sm:%s35]
            %45 = vst [vmem:[%s43] sm:%s35] %v44
            %v46 = vld [vmem:[%s42 + $0x4] sm:%s35]
            %47 = vst [vmem:[%s43 + $0x4] sm:%s35] %v46
            %v48 = vld [vmem:[%s42 + $0x8] sm:%s35]
            %49 = vst [vmem:[%s43 + $0x8] sm:%s35] %v48
          $region36: #{custom-call.58} parent=23 // loop_footer
            %s41 = sadd.s32 1, %s37
          $region37: #{custom-call.58} parent=23 // loop_footer_branch
            %36 = sbr.rel target = $region33
          $region38: #{custom-call.58} parent=23 // loop_exit
            _
        $region24: #{custom-call.58} parent=8 // pred_fallthru
          _
      $region9: #{custom-call.58} parent=4 // pred_fallthru
        _
      // Predicated region
      $region10: #{custom-call.58} parent=4 // pred_check
        _
      $region11: #{custom-call.58} parent=4 // pred_check_branch
        %7 = sbr.rel (0) target = $region13
      $region12: #{custom-call.58} parent=4 // pred_region
        %s9 = ssub.s32 16, 1
        loop: start=0, step=1, limit=1
        $region14: #{custom-call.58} parent=12 // loop_pre_header
          _
        $region15: #{custom-call.58} parent=12 // loop_header
          %s11 = sphi 0, %s15
          %p12 = scmp.ge.s32.totalorder %s11, 1
          %s16 = sphi %s0, %s0
          %s17 = sphi [#allocation1], [#allocation1]
        $region16: #{custom-call.58} parent=12 // loop_header_branch
          %14 = sbr.rel (%p12) target = $region20
        $region17: #{custom-call.58} parent=12 // loop_body
          %v18 = vld [vmem:[%s16] sm:%s9]
          %19 = vst [vmem:[%s17] sm:%s9] %v18
          %v20 = vld [vmem:[%s16 + $0x4] sm:%s9]
          %21 = vst [vmem:[%s17 + $0x4] sm:%s9] %v20
          %v22 = vld [vmem:[%s16 + $0x8] sm:%s9]
          %23 = vst [vmem:[%s17 + $0x8] sm:%s9] %v22
        $region18: #{custom-call.58} parent=12 // loop_footer
          %s15 = sadd.s32 1, %s11
        $region19: #{custom-call.58} parent=12 // loop_footer_branch
          %10 = sbr.rel target = $region15
        $region20: #{custom-call.58} parent=12 // loop_exit
          _
      $region13: #{custom-call.58} parent=4 // pred_fallthru
        _
    $region5: #{custom-call.58} parent=1 // pred_fallthru
      _
    %50 = vnop
    %s52 = sshll.u32 1, 4
    %s53 = ssub.s32 %s52, 1
    %s54 = smul.addr 4, 2
    %s55 = scalar_lea.vmem [#allocation1], %s54
    %v56 = vld [vmem:[%s55] sm:%s53]
    %s57 = scalar_lea.vmem [#allocation0], 16
    %58 = vst [vmem:[%s57] sm:%s53] %v56
    %s59 = scalar_lea.vmem [#allocation1], 4
    %v60 = vld [vmem:[%s59] sm:%s53]
    %s61 = scalar_lea.vmem [#allocation0], 8
    %62 = vst [vmem:[%s61] sm:%s53] %v60
    %v63 = vld [vmem:[#allocation1] sm:%s53]
    %64 = vst [vmem:[#allocation0] sm:%s53] %v63
    loop: start=0, step=1, limit=3
    $region39: #{custom-call.58} parent=1 // loop_pre_header
      _
    $region40: #{custom-call.58} parent=1 // loop_header
      %s66 = sphi 0, %s70
      %p67 = scmp.ge.s32.totalorder %s66, 3
    $region41: #{custom-call.58} parent=1 // loop_header_branch
      %69 = sbr.rel (%p67) target = $region45
    $region42: #{custom-call.58} parent=1 // loop_body
      %s71 = smul.addr %s66, 8
      %s72 = sadd.s32 %s66, %s71
      %s73 = scalar_lea.vmem [#allocation0], %s72
      %v74 = vld [vmem:[%s73] ss:$0 sm:$0xff]
      %s75 = scalar_lea.vmem [#allocation5], %s66
      %76 = vst [vmem:[%s75] sm:$0x1] %v74
      %s77 = smul.addr %s66, 8
      %s78 = scalar_lea.vmem [#allocation0], %s77
      %s79 = scalar_lea.vmem [#allocation4], %s77
      %v80 = vld [vmem:[%s78] sm:$0xff]
      %v81 = vlaneseq
      %v82 = vshrl.u32 %v81, 7
      %v84 = vstv %s66
      %vm85 = vcmp.ge.s32.totalorder %v84, %v82
      %vm86 = vcmp.lt.s32.totalorder %v82, 3
      %vm87 = vmand %vm85, %vm86
      %v88 = vsel %vm87, %v80, 0.0
      %v89 = vrcp.pop %v74
      %v90 = vmul.f32 %v88, %v89
      %v91 = vxor.u32 %v90, 2147483648
      %92 = vst [vmem:[%s79] sm:$0xff] %v91
    $region43: #{custom-call.58} parent=1 // loop_footer
      %s70 = sadd.s32 1, %s66
    $region44: #{custom-call.58} parent=1 // loop_footer_branch
      %65 = sbr.rel target = $region40
    $region45: #{custom-call.58} parent=1 // loop_exit
      _
    loop: start=0, step=1, limit=3
    $region46: #{custom-call.58} parent=1 // loop_pre_header
      _
    $region47: #{custom-call.58} parent=1 // loop_header
      %s94 = sphi 0, %s98
      %p95 = scmp.ge.s32.totalorder %s94, 3
    $region48: #{custom-call.58} parent=1 // loop_header_branch
      %97 = sbr.rel (%p95) target = $region52
    $region49: #{custom-call.58} parent=1 // loop_body
      %v99 = vstv %s94
      %v100 = vlaneseq
      %v101 = vshrl.u32 %v100, 7
      %vm103 = vcmp.eq.s32.totalorder %v99, %v101
      %s104 = smul.addr %s94, 8
      %s105 = scalar_lea.vmem [#allocation2], %s104
      %v106 = vsel %vm103, -1.0, 0.0
      %107 = vst [vmem:[%s105] sm:$0xff] %v106
    $region50: #{custom-call.58} parent=1 // loop_footer
      %s98 = sadd.s32 1, %s94
    $region51: #{custom-call.58} parent=1 // loop_footer_branch
      %93 = sbr.rel target = $region47
    $region52: #{custom-call.58} parent=1 // loop_exit
      _
    %108 = vst [vmem:[#allocation2] sm:$0x1] 1.0
    loop: start=1, step=1, limit=3
    $region53: #{custom-call.58} parent=1 // loop_pre_header
      _
    $region54: #{custom-call.58} parent=1 // loop_header
      %s110 = sphi 1, %s114
      %p111 = scmp.ge.s32.totalorder %s110, 3
    $region55: #{custom-call.58} parent=1 // loop_header_branch
      %113 = sbr.rel (%p111) target = $region59
    $region56: #{custom-call.58} parent=1 // loop_body
      %s115 = smul.addr %s110, 8
      %s116 = scalar_lea.vmem [#allocation4], %s115
      %v117 = vld [vmem:[%s116] sm:$0xff]
      %v118 = vld [vmem:[#allocation2] sm:$0xff]
      %v119 = vmul.f32 %v117, %v118
      %s120 = scalar_lea.vmem [#allocation2], %s110
      %v121 = vrot.slane %v119, 4
      %v122 = vadd.f32 %v119, %v121
      %v123 = vrot.slane %v122, 2
      %v124 = vadd.f32 %v122, %v123
      %v125 = vrot.slane %v124, 1
      %v126 = vadd.f32 %v124, %v125
      %127 = vst [vmem:[%s120] sm:$0x1] %v126
      %s128 = smul.addr %s110, 8
      %s129 = scalar_lea.vmem [#allocation4], %s128
      %v130 = vld [vmem:[%s129] sm:$0xff]
      %s131 = scalar_lea.vmem [#allocation2], 8
      %v132 = vld [vmem:[%s131] sm:$0xff]
      %v133 = vmul.f32 %v130, %v132
      %s134 = sadd.s32 %s110, 8
      %s135 = scalar_lea.vmem [#allocation2], %s134
      %v136 = vrot.slane %v133, 4
      %v137 = vadd.f32 %v133, %v136
      %v138 = vrot.slane %v137, 2
      %v139 = vadd.f32 %v137, %v138
      %v140 = vrot.slane %v139, 1
      %v141 = vadd.f32 %v139, %v140
      %142 = vst [vmem:[%s135] sm:$0x1] %v141
      %s143 = smul.addr %s110, 8
      %s144 = scalar_lea.vmem [#allocation4], %s143
      %v145 = vld [vmem:[%s144] sm:$0xff]
      %s146 = scalar_lea.vmem [#allocation2], 16
      %v147 = vld [vmem:[%s146] sm:$0xff]
      %v148 = vmul.f32 %v145, %v147
      %s149 = sadd.s32 %s110, 16
      %s150 = scalar_lea.vmem [#allocation2], %s149
      %v151 = vrot.slane %v148, 4
      %v152 = vadd.f32 %v148, %v151
      %v153 = vrot.slane %v152, 2
      %v154 = vadd.f32 %v152, %v153
      %v155 = vrot.slane %v154, 1
      %v156 = vadd.f32 %v154, %v155
      %157 = vst [vmem:[%s150] sm:$0x1] %v156
    $region57: #{custom-call.58} parent=1 // loop_footer
      %s114 = sadd.s32 1, %s110
    $region58: #{custom-call.58} parent=1 // loop_footer_branch
      %109 = sbr.rel target = $region54
    $region59: #{custom-call.58} parent=1 // loop_exit
      _
    loop: start=0, step=1, limit=3
    $region60: #{custom-call.58} parent=1 // loop_pre_header
      _
    $region61: #{custom-call.58} parent=1 // loop_header
      %s159 = sphi 0, %s163
      %p160 = scmp.ge.s32.totalorder %s159, 3
    $region62: #{custom-call.58} parent=1 // loop_header_branch
      %162 = sbr.rel (%p160) target = $region66
    $region63: #{custom-call.58} parent=1 // loop_body
      %s164 = scalar_lea.vmem [#allocation5], %s159
      %v165 = vld [vmem:[%s164] ss:$0 sm:$0xff]
      %s166 = smul.addr %s159, 8
      %s167 = scalar_lea.vmem [#allocation2], %s166
      %v168 = vld [vmem:[%s167] sm:$0xff]
      %v169 = vrcp.pop %v165
      %v170 = vmul.f32 %v168, %v169
      %vm171 = vweird.f32 %v165
      %v172 = vsel %vm171, %v168, %v170
      %173 = vst [vmem:[%s167] sm:$0xff] %v172
    $region64: #{custom-call.58} parent=1 // loop_footer
      %s163 = sadd.s32 1, %s159
    $region65: #{custom-call.58} parent=1 // loop_footer_branch
      %158 = sbr.rel target = $region61
    $region66: #{custom-call.58} parent=1 // loop_exit
      _
    %s175 = sshll.u32 1, 4
    %s176 = ssub.s32 %s175, 1
    %v178 = vld [vmem:[#allocation2] sm:%s176]
    %s179 = sshll.u32 1, 4
    %s180 = ssub.s32 %s179, 1
    %181 = vst [vmem:[#allocation3] sm:%s180] %v178
    %s182 = scalar_lea.vmem [#allocation2], 8
    %v183 = vld [vmem:[%s182] sm:%s176]
    %s184 = sshll.u32 1, 4
    %s185 = ssub.s32 %s184, 1
    %s186 = scalar_lea.vmem [#allocation3], 4
    %187 = vst [vmem:[%s186] sm:%s185] %v183
    %s188 = scalar_lea.vmem [#allocation2], 16
    %v189 = vld [vmem:[%s188] sm:%s176]
    %s190 = sshll.u32 1, 4
    %s191 = ssub.s32 %s190, 1
    %s192 = smul.addr 4, 2
    %s193 = scalar_lea.vmem [#allocation3], %s192
    %194 = vst [vmem:[%s193] sm:%s191] %v189
    // Predicated region
    $region67: #{custom-call.58} parent=1 // pred_check
      _
    $region68: #{custom-call.58} parent=1 // pred_check_branch
      %196 = sbr.rel (0) target = $region70
    $region69: #{custom-call.58} parent=1 // pred_region
      // Predicated region
      $region71: #{custom-call.58} parent=69 // pred_check
        _
      $region72: #{custom-call.58} parent=69 // pred_check_branch
        %198 = sbr.rel target = $region74
      $region73: #{custom-call.58} parent=69 // pred_region
        // Predicated region
        $region86: #{custom-call.58} parent=73 // pred_check
          _
        $region87: #{custom-call.58} parent=73 // pred_check_branch
          %218 = sbr.rel (0) target = $region89
        $region88: #{custom-call.58} parent=73 // pred_region
          loop: start=0, step=1, limit=1
          $region90: #{custom-call.58} parent=88 // loop_pre_header
            _
          $region91: #{custom-call.58} parent=88 // loop_header
            %s220 = sphi 0, %s224
            %p221 = scmp.ge.s32.totalorder %s220, 1
            %s225 = sphi [#allocation3], [#allocation3]
            %s226 = sphi %s1, %s1
          $region92: #{custom-call.58} parent=88 // loop_header_branch
            %223 = sbr.rel (%p221) target = $region96
          $region93: #{custom-call.58} parent=88 // loop_body
            _
          $region94: #{custom-call.58} parent=88 // loop_footer
            %s224 = sadd.s32 1, %s220
          $region95: #{custom-call.58} parent=88 // loop_footer_branch
            %219 = sbr.rel target = $region91
          $region96: #{custom-call.58} parent=88 // loop_exit
            _
          %s228 = ssub.s32 16, 1
          loop: start=0, step=1, limit=1
          $region97: #{custom-call.58} parent=88 // loop_pre_header
            _
          $region98: #{custom-call.58} parent=88 // loop_header
            %s230 = sphi 0, %s234
            %p231 = scmp.ge.s32.totalorder %s230, 1
            %s235 = sphi [#allocation3], [#allocation3]
            %s236 = sphi %s1, %s1
          $region99: #{custom-call.58} parent=88 // loop_header_branch
            %233 = sbr.rel (%p231) target = $region103
          $region100: #{custom-call.58} parent=88 // loop_body
            %v237 = vld [vmem:[%s235] sm:%s228]
            %238 = vst [vmem:[%s236] sm:%s228] %v237
            %v239 = vld [vmem:[%s235 + $0x4] sm:%s228]
            %240 = vst [vmem:[%s236 + $0x4] sm:%s228] %v239
            %v241 = vld [vmem:[%s235 + $0x8] sm:%s228]
            %242 = vst [vmem:[%s236 + $0x8] sm:%s228] %v241
          $region101: #{custom-call.58} parent=88 // loop_footer
            %s234 = sadd.s32 1, %s230
          $region102: #{custom-call.58} parent=88 // loop_footer_branch
            %229 = sbr.rel target = $region98
          $region103: #{custom-call.58} parent=88 // loop_exit
            _
        $region89: #{custom-call.58} parent=73 // pred_fallthru
          _
      $region74: #{custom-call.58} parent=69 // pred_fallthru
        _
      // Predicated region
      $region75: #{custom-call.58} parent=69 // pred_check
        _
      $region76: #{custom-call.58} parent=69 // pred_check_branch
        %200 = sbr.rel (0) target = $region78
      $region77: #{custom-call.58} parent=69 // pred_region
        %s202 = ssub.s32 16, 1
        loop: start=0, step=1, limit=1
        $region79: #{custom-call.58} parent=77 // loop_pre_header
          _
        $region80: #{custom-call.58} parent=77 // loop_header
          %s204 = sphi 0, %s208
          %p205 = scmp.ge.s32.totalorder %s204, 1
          %s209 = sphi [#allocation3], [#allocation3]
          %s210 = sphi %s1, %s1
        $region81: #{custom-call.58} parent=77 // loop_header_branch
          %207 = sbr.rel (%p205) target = $region85
        $region82: #{custom-call.58} parent=77 // loop_body
          %v211 = vld [vmem:[%s209] sm:%s202]
          %212 = vst [vmem:[%s210] sm:%s202] %v211
          %v213 = vld [vmem:[%s209 + $0x4] sm:%s202]
          %214 = vst [vmem:[%s210 + $0x4] sm:%s202] %v213
          %v215 = vld [vmem:[%s209 + $0x8] sm:%s202]
          %216 = vst [vmem:[%s210 + $0x8] sm:%s202] %v215
        $region83: #{custom-call.58} parent=77 // loop_footer
          %s208 = sadd.s32 1, %s204
        $region84: #{custom-call.58} parent=77 // loop_footer_branch
          %203 = sbr.rel target = $region80
        $region85: #{custom-call.58} parent=77 // loop_exit
          _
      $region78: #{custom-call.58} parent=69 // pred_fallthru
        _
    $region70: #{custom-call.58} parent=1 // pred_fallthru
      _
    %243 = vnop

// kernel: custom-call.22
$region0: #{custom-call.22}
  %s0 = inlined_call_operand.vmem [shape: f32[48,2,2], index: 0, kind: input, shape index: {}]
  %s1 = inlined_call_operand.vmem [shape: f32[48,2,2], index: 1, kind: input, shape index: {}]
  %s2 = inlined_call_operand.vmem [shape: f32[48,2,2], index: 2, kind: input, shape index: {}]
  %s3 = inlined_call_operand.vmem [shape: f32[48,2,2], index: 3, kind: input, shape index: {}]
  %s4 = inlined_call_operand.vmem [shape: f32[48,2], index: 4, kind: output, shape index: {0}]
  %s5 = inlined_call_operand.vmem [shape: f32[48,2], index: 5, kind: output, shape index: {1}]
  %s6 = inlined_call_operand.vmem [shape: f32[48,2,2], index: 6, kind: output, shape index: {2}]
  %s7 = inlined_call_operand.vmem [shape: f32[48,2,2], index: 7, kind: output, shape index: {3}]
  %s8 = inlined_call_operand.vmem [shape: f32[48,2,2], index: 8, kind: output, shape index: {4}]
  %s9 = inlined_call_operand.vmem [shape: f32[48,2,2], index: 9, kind: output, shape index: {5}]
  %10 = xla_tuple %s4, %s5, %s6, %s7, %s8, %s9
  $region1: #{custom-call.22} parent=0
    #allocation0 [shape = 'u8[4096]{0}', space=vmem, size = 0x1000, scoped, tag = 'operand span for operand 0']
    #allocation1 [shape = 'u8[2048]{0}', space=vmem, size = 0x800, scoped, tag = 'packed  for operand 0']
    #allocation2 [shape = 'u8[4096]{0}', space=vmem, size = 0x1000, scoped, tag = 'operand span for operand 1']
    #allocation3 [shape = 'u8[2048]{0}', space=vmem, size = 0x800, scoped, tag = 'packed  for operand 1']
    #allocation4 [shape = 'u8[4096]{0}', space=vmem, size = 0x1000, scoped, tag = 'operand span for operand 2']
    #allocation5 [shape = 'u8[2048]{0}', space=vmem, size = 0x800, scoped, tag = 'packed  for operand 2']
    #allocation6 [shape = 'u8[4096]{0}', space=vmem, size = 0x1000, scoped, tag = 'operand span for operand 3']
    #allocation7 [shape = 'u8[2048]{0}', space=vmem, size = 0x800, scoped, tag = 'packed  for operand 3']
    #allocation8 [shape = 'u8[8192]{0}', space=vmem, size = 0x2000, scoped, tag = 'operand span for operand 4']
    #allocation9 [shape = 'u8[8192]{0}', space=vmem, size = 0x2000, scoped, tag = 'operand span for operand 5']
    #allocation10 [shape = 'u8[4096]{0}', space=vmem, size = 0x1000, scoped, tag = 'operand span for operand 6']
    #allocation11 [shape = 'u8[2048]{0}', space=vmem, size = 0x800, scoped, tag = 'packed  for operand 6']
    #allocation12 [shape = 'u8[4096]{0}', space=vmem, size = 0x1000, scoped, tag = 'operand span for operand 7']
    #allocation13 [shape = 'u8[2048]{0}', space=vmem, size = 0x800, scoped, tag = 'packed  for operand 7']
    #allocation14 [shape = 'u8[4096]{0}', space=vmem, size = 0x1000, scoped, tag = 'operand span for operand 8']
    #allocation15 [shape = 'u8[2048]{0}', space=vmem, size = 0x800, scoped, tag = 'packed  for operand 8']
    #allocation16 [shape = 'u8[4096]{0}', space=vmem, size = 0x1000, scoped, tag = 'operand span for operand 9']
    #allocation17 [shape = 'u8[2048]{0}', space=vmem, size = 0x800, scoped, tag = 'packed  for operand 9']
    loop: start=0, step=1, limit=50
    $region2: #{custom-call.22} parent=1 // loop_pre_header
      _
    $region3: #{custom-call.22} parent=1 // loop_header
      %s12 = sphi 0, %s16
      %p13 = scmp.ge.s32.totalorder %s12, 50
      %s24 = sphi 0, %s26
      %s27 = sphi 0, %s24
      %s28 = sphi 0, %s27
      %s44 = sphi 0, %s28
      %s52 = sphi 0, %s54
      %s55 = sphi 0, %s52
      %s56 = sphi 0, %s55
      %s72 = sphi 0, %s56
    $region4: #{custom-call.22} parent=1 // loop_header_branch
      %15 = sbr.rel (%p13) target = $region8
    $region5: #{custom-call.22} parent=1 // loop_body
      %s17 = ssub.s32 %s12, 1
      %s18 = ssub.s32 %s12, 2
      %s19 = sadd.s32 %s12, 1
      %s20 = sshrl.u32 %s12, 3
      %s21 = sshrl.u32 %s19, 3
      %s22 = ssub.s32 %s20, %s21
      %p23 = scmp.eq.s32.totalorder %s22, 0
      %s25 = sadd.s32 %s24, 1
      %s26 = scalar_select %p23, %s24, %s25
      %p29 = pneg %p23
      %p30 = scmp.eq.s32.totalorder %s12, 47
      %p31 = por %p29, %p30
      %p32 = scmp.ne.s32.totalorder %s24, %s27
      %p33 = scmp.eq.s32.totalorder %s12, 0
      %p34 = por %p32, %p33
      %p35 = scmp.ne.s32.totalorder %s24, %s27
      %p36 = scmp.eq.s32.totalorder %s17, 47
      %p37 = por %p35, %p36
      %p38 = scmp.ne.s32.totalorder %s27, %s28
      %p39 = scmp.eq.s32.totalorder %s17, 0
      %p40 = por %p38, %p39
      %p41 = scmp.ne.s32.totalorder %s27, %s28
      %p42 = scmp.eq.s32.totalorder %s18, 47
      %p43 = por %p41, %p42
      %p45 = scmp.ne.s32.totalorder %s28, %s44
      %p46 = scmp.eq.s32.totalorder %s18, 0
      %p47 = por %p45, %p46
      %s48 = sshrl.u32 %s12, 3
      %s49 = sshrl.u32 %s19, 3
      %s50 = ssub.s32 %s48, %s49
      %p51 = scmp.eq.s32.totalorder %s50, 0
      %s53 = sadd.s32 %s52, 1
      %s54 = scalar_select %p51, %s52, %s53
      %p57 = pneg %p51
      %p58 = scmp.eq.s32.totalorder %s12, 47
      %p59 = por %p57, %p58
      %p60 = scmp.ne.s32.totalorder %s52, %s55
      %p61 = scmp.eq.s32.totalorder %s12, 0
      %p62 = por %p60, %p61
      %p63 = scmp.ne.s32.totalorder %s52, %s55
      %p64 = scmp.eq.s32.totalorder %s17, 47
      %p65 = por %p63, %p64
      %p66 = scmp.ne.s32.totalorder %s55, %s56
      %p67 = scmp.eq.s32.totalorder %s17, 0
      %p68 = por %p66, %p67
      %p69 = scmp.ne.s32.totalorder %s55, %s56
      %p70 = scmp.eq.s32.totalorder %s18, 47
      %p71 = por %p69, %p70
      %p73 = scmp.ne.s32.totalorder %s56, %s72
      %p74 = scmp.eq.s32.totalorder %s18, 0
      %p75 = por %p73, %p74
      %p76 = scmp.le.s32.totalorder 1, %s12
      %p77 = scmp.lt.s32.totalorder %s12, 49
      %p78 = pnand %p76, %p77
      %p79 = pneg %p78
      // Predicated region
      $region9: #{custom-call.22} parent=5 // pred_check
        _
      $region10: #{custom-call.22} parent=5 // pred_check_branch
        %81 = sbr.rel (%p78) target = $region12
      $region11: #{custom-call.22} parent=5 // pred_region
        %s82 = ssub.s32 %s12, 1
      $region12: #{custom-call.22} parent=5 // pred_fallthru
        _
      %p83 = scmp.lt.s32.totalorder %s12, 48
      // Predicated region
      $region13: #{custom-call.22} parent=5 // pred_check
        %p84 = pneg %p83
      $region14: #{custom-call.22} parent=5 // pred_check_branch
        %86 = sbr.rel (%p84) target = $region16
      $region15: #{custom-call.22} parent=5 // pred_region
        %s87 = sand.u32 %s12, 1
        %s88 = sand.u32 %s12, 1
        %s89 = smul.addr %s88, 2
        %s90 = scalar_lea.vmem [#allocation1], %s89
        %s91 = smul.addr %s12, 2
        %s92 = scalar_lea.vmem %s0, %s91
        // Predicated region
        $region17: #{custom-call.22} parent=15 // pred_check
          _
        $region18: #{custom-call.22} parent=15 // pred_check_branch
          %94 = sbr.rel (0) target = $region20
        $region19: #{custom-call.22} parent=15 // pred_region
          // Predicated region
          $region21: #{custom-call.22} parent=19 // pred_check
            _
          $region22: #{custom-call.22} parent=19 // pred_check_branch
            %96 = sbr.rel target = $region24
          $region23: #{custom-call.22} parent=19 // pred_region
            // Predicated region
            $region36: #{custom-call.22} parent=23 // pred_check
              _
            $region37: #{custom-call.22} parent=23 // pred_check_branch
              %112 = sbr.rel (0) target = $region39
            $region38: #{custom-call.22} parent=23 // pred_region
              %s114 = ssub.s32 4, 1
              loop: start=0, step=1, limit=1
              $region40: #{custom-call.22} parent=38 // loop_pre_header
                _
              $region41: #{custom-call.22} parent=38 // loop_header
                %s116 = sphi 0, %s120
                %p117 = scmp.ge.s32.totalorder %s116, 1
                %s121 = sphi %s92, %s92
                %s122 = sphi %s90, %s90
              $region42: #{custom-call.22} parent=38 // loop_header_branch
                %119 = sbr.rel (%p117) target = $region46
              $region43: #{custom-call.22} parent=38 // loop_body
                %v123 = vld [vmem:[%s121] sm:%s114]
                %124 = vst [vmem:[%s122] sm:%s114] %v123
              $region44: #{custom-call.22} parent=38 // loop_footer
                %s120 = sadd.s32 1, %s116
              $region45: #{custom-call.22} parent=38 // loop_footer_branch
                %115 = sbr.rel target = $region41
              $region46: #{custom-call.22} parent=38 // loop_exit
                _
            $region39: #{custom-call.22} parent=23 // pred_fallthru
              _
          $region24: #{custom-call.22} parent=19 // pred_fallthru
            _
          // Predicated region
          $region25: #{custom-call.22} parent=19 // pred_check
            _
          $region26: #{custom-call.22} parent=19 // pred_check_branch
            %98 = sbr.rel (0) target = $region28
          $region27: #{custom-call.22} parent=19 // pred_region
            %s100 = ssub.s32 4, 1
            loop: start=0, step=1, limit=1
            $region29: #{custom-call.22} parent=27 // loop_pre_header
              _
            $region30: #{custom-call.22} parent=27 // loop_header
              %s102 = sphi 0, %s106
              %p103 = scmp.ge.s32.totalorder %s102, 1
              %s107 = sphi %s92, %s92
              %s108 = sphi %s90, %s90
            $region31: #{custom-call.22} parent=27 // loop_header_branch
              %105 = sbr.rel (%p103) target = $region35
            $region32: #{custom-call.22} parent=27 // loop_body
              %v109 = vld [vmem:[%s107] sm:%s100]
              %110 = vst [vmem:[%s108] sm:%s100] %v109
            $region33: #{custom-call.22} parent=27 // loop_footer
              %s106 = sadd.s32 1, %s102
            $region34: #{custom-call.22} parent=27 // loop_footer_branch
              %101 = sbr.rel target = $region30
            $region35: #{custom-call.22} parent=27 // loop_exit
              _
          $region28: #{custom-call.22} parent=19 // pred_fallthru
            _
        $region20: #{custom-call.22} parent=15 // pred_fallthru
          _
        %125 = vnop
        %s126 = sand.u32 %s12, 1
        %s127 = sand.u32 %s12, 1
        %s128 = smul.addr %s127, 2
        %s129 = scalar_lea.vmem [#allocation3], %s128
        %s130 = smul.addr %s12, 2
        %s131 = scalar_lea.vmem %s1, %s130
        // Predicated region
        $region47: #{custom-call.22} parent=15 // pred_check
          _
        $region48: #{custom-call.22} parent=15 // pred_check_branch
          %133 = sbr.rel (0) target = $region50
        $region49: #{custom-call.22} parent=15 // pred_region
          // Predicated region
          $region51: #{custom-call.22} parent=49 // pred_check
            _
          $region52: #{custom-call.22} parent=49 // pred_check_branch
            %135 = sbr.rel target = $region54
          $region53: #{custom-call.22} parent=49 // pred_region
            // Predicated region
            $region66: #{custom-call.22} parent=53 // pred_check
              _
            $region67: #{custom-call.22} parent=53 // pred_check_branch
              %151 = sbr.rel (0) target = $region69
            $region68: #{custom-call.22} parent=53 // pred_region
              %s153 = ssub.s32 4, 1
              loop: start=0, step=1, limit=1
              $region70: #{custom-call.22} parent=68 // loop_pre_header
                _
              $region71: #{custom-call.22} parent=68 // loop_header
                %s155 = sphi 0, %s159
                %p156 = scmp.ge.s32.totalorder %s155, 1
                %s160 = sphi %s131, %s131
                %s161 = sphi %s129, %s129
              $region72: #{custom-call.22} parent=68 // loop_header_branch
                %158 = sbr.rel (%p156) target = $region76
              $region73: #{custom-call.22} parent=68 // loop_body
                %v162 = vld [vmem:[%s160] sm:%s153]
                %163 = vst [vmem:[%s161] sm:%s153] %v162
              $region74: #{custom-call.22} parent=68 // loop_footer
                %s159 = sadd.s32 1, %s155
              $region75: #{custom-call.22} parent=68 // loop_footer_branch
                %154 = sbr.rel target = $region71
              $region76: #{custom-call.22} parent=68 // loop_exit
                _
            $region69: #{custom-call.22} parent=53 // pred_fallthru
              _
          $region54: #{custom-call.22} parent=49 // pred_fallthru
            _
          // Predicated region
          $region55: #{custom-call.22} parent=49 // pred_check
            _
          $region56: #{custom-call.22} parent=49 // pred_check_branch
            %137 = sbr.rel (0) target = $region58
          $region57: #{custom-call.22} parent=49 // pred_region
            %s139 = ssub.s32 4, 1
            loop: start=0, step=1, limit=1
            $region59: #{custom-call.22} parent=57 // loop_pre_header
              _
            $region60: #{custom-call.22} parent=57 // loop_header
              %s141 = sphi 0, %s145
              %p142 = scmp.ge.s32.totalorder %s141, 1
              %s146 = sphi %s131, %s131
              %s147 = sphi %s129, %s129
            $region61: #{custom-call.22} parent=57 // loop_header_branch
              %144 = sbr.rel (%p142) target = $region65
            $region62: #{custom-call.22} parent=57 // loop_body
              %v148 = vld [vmem:[%s146] sm:%s139]
              %149 = vst [vmem:[%s147] sm:%s139] %v148
            $region63: #{custom-call.22} parent=57 // loop_footer
              %s145 = sadd.s32 1, %s141
            $region64: #{custom-call.22} parent=57 // loop_footer_branch
              %140 = sbr.rel target = $region60
            $region65: #{custom-call.22} parent=57 // loop_exit
              _
          $region58: #{custom-call.22} parent=49 // pred_fallthru
            _
        $region50: #{custom-call.22} parent=15 // pred_fallthru
          _
        %164 = vnop
        %s165 = sand.u32 %s12, 1
        %s166 = sand.u32 %s12, 1
        %s167 = smul.addr %s166, 2
        %s168 = scalar_lea.vmem [#allocation5], %s167
        %s169 = smul.addr %s12, 2
        %s170 = scalar_lea.vmem %s2, %s169
        // Predicated region
        $region77: #{custom-call.22} parent=15 // pred_check
          _
        $region78: #{custom-call.22} parent=15 // pred_check_branch
          %172 = sbr.rel (0) target = $region80
        $region79: #{custom-call.22} parent=15 // pred_region
          // Predicated region
          $region81: #{custom-call.22} parent=79 // pred_check
            _
          $region82: #{custom-call.22} parent=79 // pred_check_branch
            %174 = sbr.rel target = $region84
          $region83: #{custom-call.22} parent=79 // pred_region
            // Predicated region
            $region96: #{custom-call.22} parent=83 // pred_check
              _
            $region97: #{custom-call.22} parent=83 // pred_check_branch
              %190 = sbr.rel (0) target = $region99
            $region98: #{custom-call.22} parent=83 // pred_region
              %s192 = ssub.s32 4, 1
              loop: start=0, step=1, limit=1
              $region100: #{custom-call.22} parent=98 // loop_pre_header
                _
              $region101: #{custom-call.22} parent=98 // loop_header
                %s194 = sphi 0, %s198
                %p195 = scmp.ge.s32.totalorder %s194, 1
                %s199 = sphi %s170, %s170
                %s200 = sphi %s168, %s168
              $region102: #{custom-call.22} parent=98 // loop_header_branch
                %197 = sbr.rel (%p195) target = $region106
              $region103: #{custom-call.22} parent=98 // loop_body
                %v201 = vld [vmem:[%s199] sm:%s192]
                %202 = vst [vmem:[%s200] sm:%s192] %v201
              $region104: #{custom-call.22} parent=98 // loop_footer
                %s198 = sadd.s32 1, %s194
              $region105: #{custom-call.22} parent=98 // loop_footer_branch
                %193 = sbr.rel target = $region101
              $region106: #{custom-call.22} parent=98 // loop_exit
                _
            $region99: #{custom-call.22} parent=83 // pred_fallthru
              _
          $region84: #{custom-call.22} parent=79 // pred_fallthru
            _
          // Predicated region
          $region85: #{custom-call.22} parent=79 // pred_check
            _
          $region86: #{custom-call.22} parent=79 // pred_check_branch
            %176 = sbr.rel (0) target = $region88
          $region87: #{custom-call.22} parent=79 // pred_region
            %s178 = ssub.s32 4, 1
            loop: start=0, step=1, limit=1
            $region89: #{custom-call.22} parent=87 // loop_pre_header
              _
            $region90: #{custom-call.22} parent=87 // loop_header
              %s180 = sphi 0, %s184
              %p181 = scmp.ge.s32.totalorder %s180, 1
              %s185 = sphi %s170, %s170
              %s186 = sphi %s168, %s168
            $region91: #{custom-call.22} parent=87 // loop_header_branch
              %183 = sbr.rel (%p181) target = $region95
            $region92: #{custom-call.22} parent=87 // loop_body
              %v187 = vld [vmem:[%s185] sm:%s178]
              %188 = vst [vmem:[%s186] sm:%s178] %v187
            $region93: #{custom-call.22} parent=87 // loop_footer
              %s184 = sadd.s32 1, %s180
            $region94: #{custom-call.22} parent=87 // loop_footer_branch
              %179 = sbr.rel target = $region90
            $region95: #{custom-call.22} parent=87 // loop_exit
              _
          $region88: #{custom-call.22} parent=79 // pred_fallthru
            _
        $region80: #{custom-call.22} parent=15 // pred_fallthru
          _
        %203 = vnop
        %s204 = sand.u32 %s12, 1
        %s205 = sand.u32 %s12, 1
        %s206 = smul.addr %s205, 2
        %s207 = scalar_lea.vmem [#allocation7], %s206
        %s208 = smul.addr %s12, 2
        %s209 = scalar_lea.vmem %s3, %s208
        // Predicated region
        $region107: #{custom-call.22} parent=15 // pred_check
          _
        $region108: #{custom-call.22} parent=15 // pred_check_branch
          %211 = sbr.rel (0) target = $region110
        $region109: #{custom-call.22} parent=15 // pred_region
          // Predicated region
          $region111: #{custom-call.22} parent=109 // pred_check
            _
          $region112: #{custom-call.22} parent=109 // pred_check_branch
            %213 = sbr.rel target = $region114
          $region113: #{custom-call.22} parent=109 // pred_region
            // Predicated region
            $region126: #{custom-call.22} parent=113 // pred_check
              _
            $region127: #{custom-call.22} parent=113 // pred_check_branch
              %229 = sbr.rel (0) target = $region129
            $region128: #{custom-call.22} parent=113 // pred_region
              %s231 = ssub.s32 4, 1
              loop: start=0, step=1, limit=1
              $region130: #{custom-call.22} parent=128 // loop_pre_header
                _
              $region131: #{custom-call.22} parent=128 // loop_header
                %s233 = sphi 0, %s237
                %p234 = scmp.ge.s32.totalorder %s233, 1
                %s238 = sphi %s209, %s209
                %s239 = sphi %s207, %s207
              $region132: #{custom-call.22} parent=128 // loop_header_branch
                %236 = sbr.rel (%p234) target = $region136
              $region133: #{custom-call.22} parent=128 // loop_body
                %v240 = vld [vmem:[%s238] sm:%s231]
                %241 = vst [vmem:[%s239] sm:%s231] %v240
              $region134: #{custom-call.22} parent=128 // loop_footer
                %s237 = sadd.s32 1, %s233
              $region135: #{custom-call.22} parent=128 // loop_footer_branch
                %232 = sbr.rel target = $region131
              $region136: #{custom-call.22} parent=128 // loop_exit
                _
            $region129: #{custom-call.22} parent=113 // pred_fallthru
              _
          $region114: #{custom-call.22} parent=109 // pred_fallthru
            _
          // Predicated region
          $region115: #{custom-call.22} parent=109 // pred_check
            _
          $region116: #{custom-call.22} parent=109 // pred_check_branch
            %215 = sbr.rel (0) target = $region118
          $region117: #{custom-call.22} parent=109 // pred_region
            %s217 = ssub.s32 4, 1
            loop: start=0, step=1, limit=1
            $region119: #{custom-call.22} parent=117 // loop_pre_header
              _
            $region120: #{custom-call.22} parent=117 // loop_header
              %s219 = sphi 0, %s223
              %p220 = scmp.ge.s32.totalorder %s219, 1
              %s224 = sphi %s209, %s209
              %s225 = sphi %s207, %s207
            $region121: #{custom-call.22} parent=117 // loop_header_branch
              %222 = sbr.rel (%p220) target = $region125
            $region122: #{custom-call.22} parent=117 // loop_body
              %v226 = vld [vmem:[%s224] sm:%s217]
              %227 = vst [vmem:[%s225] sm:%s217] %v226
            $region123: #{custom-call.22} parent=117 // loop_footer
              %s223 = sadd.s32 1, %s219
            $region124: #{custom-call.22} parent=117 // loop_footer_branch
              %218 = sbr.rel target = $region120
            $region125: #{custom-call.22} parent=117 // loop_exit
              _
          $region118: #{custom-call.22} parent=109 // pred_fallthru
            _
        $region110: #{custom-call.22} parent=15 // pred_fallthru
          _
        %242 = vnop
      $region16: #{custom-call.22} parent=5 // pred_fallthru
        _
      %p243 = scmp.le.s32.totalorder 1, %s12
      %p244 = scmp.lt.s32.totalorder %s12, 49
      %p245 = pnand %p243, %p244
      %p246 = pneg %p245
      // Predicated region
      $region137: #{custom-call.22} parent=5 // pred_check
        _
      $region138: #{custom-call.22} parent=5 // pred_check_branch
        %248 = sbr.rel (%p245) target = $region140
      $region139: #{custom-call.22} parent=5 // pred_region
        #allocation18 [shape = 'f32[2,2]{1,0}', space=vmem, size = 0x1000, scoped, tag = 'a top-left matrix']
        #allocation19 [shape = 'f32[2,2]{1,0}', space=vmem, size = 0x1000, scoped, tag = 'a top-right matrix']
        #allocation20 [shape = 'f32[2,2]{1,0}', space=vmem, size = 0x1000, scoped, tag = 'a bottom-left matrix']
        #allocation21 [shape = 'f32[2,2]{1,0}', space=vmem, size = 0x1000, scoped, tag = 'a bottom-right matrix']
        %s249 = ssub.s32 %s12, 1
        %s250 = sand.u32 %s17, 1
        %s251 = sand.u32 %s17, 1
        %s252 = smul.addr %s251, 2
        %s253 = scalar_lea.vmem [#allocation1], %s252
        %s254 = sand.u32 %s17, 1
        %s255 = sand.u32 %s17, 1
        %s256 = smul.addr %s255, 2
        %s257 = scalar_lea.vmem [#allocation3], %s256
        %s258 = sand.u32 %s17, 1
        %s259 = sand.u32 %s17, 1
        %s260 = smul.addr %s259, 2
        %s261 = scalar_lea.vmem [#allocation5], %s260
        %s262 = sand.u32 %s17, 1
        %s263 = sand.u32 %s17, 1
        %s264 = smul.addr %s263, 2
        %s265 = scalar_lea.vmem [#allocation7], %s264
        %s266 = sand.u32 %s17, 1
        %s267 = sand.u32 %s17, 1
        %s268 = smul.addr %s267, 2
        %s269 = scalar_lea.vmem [#allocation1], %s268
        %s270 = sand.u32 %s17, 1
        %s271 = sand.u32 %s17, 1
        %s272 = smul.addr %s271, 2
        %s273 = scalar_lea.vmem [#allocation3], %s272
        %s274 = sand.u32 %s17, 1
        %s275 = sand.u32 %s17, 1
        %s276 = smul.addr %s275, 2
        %s277 = scalar_lea.vmem [#allocation5], %s276
        %s278 = sand.u32 %s17, 1
        %s279 = sand.u32 %s17, 1
        %s280 = smul.addr %s279, 2
        %s281 = scalar_lea.vmem [#allocation7], %s280
        %p282 = pneg %p40
        %p283 = pneg %p37
        %s284 = sand.u32 %s27, 1
        %s285 = sand.u32 %s27, 1
        %s286 = smul.addr %s285, 8
        %s287 = scalar_lea.vmem [#allocation8], %s286
        %p288 = pneg %p68
        %p289 = pneg %p65
        %s290 = sand.u32 %s55, 1
        %s291 = sand.u32 %s55, 1
        %s292 = smul.addr %s291, 8
        %s293 = scalar_lea.vmem [#allocation9], %s292
        %s294 = sand.u32 %s17, 1
        %s295 = sand.u32 %s17, 1
        %s296 = smul.addr %s295, 2
        %s297 = scalar_lea.vmem [#allocation11], %s296
        %s298 = sand.u32 %s17, 1
        %s299 = sand.u32 %s17, 1
        %s300 = smul.addr %s299, 2
        %s301 = scalar_lea.vmem [#allocation13], %s300
        %s302 = sand.u32 %s17, 1
        %s303 = sand.u32 %s17, 1
        %s304 = smul.addr %s303, 2
        %s305 = scalar_lea.vmem [#allocation15], %s304
        %s306 = sand.u32 %s17, 1
        %s307 = sand.u32 %s17, 1
        %s308 = smul.addr %s307, 2
        %s309 = scalar_lea.vmem [#allocation17], %s308
        %s311 = sshll.u32 1, 2
        %s312 = ssub.s32 %s311, 1
        %v313 = vld [vmem:[%s269] sm:%s312]
        %314 = vst [vmem:[#allocation0] sm:%s312] %v313
        %s316 = sshll.u32 1, 2
        %s317 = ssub.s32 %s316, 1
        %v318 = vld [vmem:[%s273] sm:%s317]
        %319 = vst [vmem:[#allocation2] sm:%s317] %v318
        %s321 = sshll.u32 1, 2
        %s322 = ssub.s32 %s321, 1
        %v323 = vld [vmem:[%s277] sm:%s322]
        %324 = vst [vmem:[#allocation4] sm:%s322] %v323
        %s326 = sshll.u32 1, 2
        %s327 = ssub.s32 %s326, 1
        %v328 = vld [vmem:[%s281] sm:%s327]
        %329 = vst [vmem:[#allocation6] sm:%s327] %v328
        %s330 = sshrl.u32 %s17, 3
        %s331 = sshrl.u32 %s17, 3
        %s332 = smov [#allocation18]
        %v333 = vld [vmem:[#allocation0] sm:$0xff]
        %334 = vst [vmem:[%s332] sm:$0xff] %v333
        %s335 = smov [#allocation19]
        %v336 = vld [vmem:[#allocation2] sm:$0xff]
        %337 = vst [vmem:[%s335] sm:$0xff] %v336
        %s338 = smov [#allocation20]
        %v339 = vld [vmem:[#allocation4] sm:$0xff]
        %340 = vst [vmem:[%s338] sm:$0xff] %v339
        %s341 = smov [#allocation21]
        %v342 = vld [vmem:[#allocation6] sm:$0xff]
        %343 = vst [vmem:[%s341] sm:$0xff] %v342
        %344 = vst [vmem:[#allocation10] sm:$0xff] 0.0
        %345 = vst [vmem:[#allocation12] sm:$0xff] 0.0
        %346 = vst [vmem:[#allocation14] sm:$0xff] 0.0
        %347 = vst [vmem:[#allocation16] sm:$0xff] 0.0
        %s348 = smov [#allocation10]
        %v349 = vlaneseq
        %v350 = vand.u32 %v349, 127
        %v351 = vmov %v350
        %v352 = vlaneseq
        %v353 = vshrl.u32 %v352, 7
        %v354 = vmov %v353
        %v355 = vld [vmem:[%s348] sm:$0x3]
        %vm358 = vcmp.eq.s32.totalorder %v354, %v351
        %v359 = vsel %vm358, 1.0, %v355
        %360 = vst [vmem:[%s348] sm:$0x3] %v359
        %s361 = smov [#allocation16]
        %v362 = vlaneseq
        %v363 = vand.u32 %v362, 127
        %v364 = vmov %v363
        %v365 = vlaneseq
        %v366 = vshrl.u32 %v365, 7
        %v367 = vmov %v366
        %v368 = vld [vmem:[%s361] sm:$0x3]
        %vm371 = vcmp.eq.s32.totalorder %v367, %v364
        %v372 = vsel %vm371, 1.0, %v368
        %373 = vst [vmem:[%s361] sm:$0x3] %v372
        // While loop
        $region141: #{custom-call.22} parent=139 // loop_pre_header
          _
        $region142: #{custom-call.22} parent=139 // loop_header
          %s375 = sphi 0, %s917
          %v376 = vlaneseq
          %v377 = vand.u32 %v376, 127
          %v378 = vmov %v377
          %v379 = vlaneseq
          %v380 = vshrl.u32 %v379, 7
          %v381 = vmov %v380
          %s382 = smov [#allocation18]
          %v383 = vlaneseq
          %v384 = vand.u32 %v383, 127
          %vm385 = vcmp.ge.s32.totalorder %v384, 0
          %vm386 = vcmp.lt.s32.totalorder %v384, 2
          %vm387 = vmand %vm385, %vm386
          %v388 = vld [vmem:[%s382] sm:$0x3]
          %v389 = vsel %vm387, %v388, 0.0
          %v390 = vmul.f32 %v389, %v389
          %vm393 = vcmp.eq.s32.totalorder %v381, %v378
          %v394 = vsel %vm393, 0.0, %v390
          %v395 = vlaneseq
          %v396 = vand.u32 %v395, 127
          %v397 = vmov %v396
          %v398 = vlaneseq
          %v399 = vshrl.u32 %v398, 7
          %v400 = vmov %v399
          %s401 = smov [#allocation19]
          %v402 = vlaneseq
          %v403 = vand.u32 %v402, 127
          %vm404 = vcmp.ge.s32.totalorder %v403, 0
          %vm405 = vcmp.lt.s32.totalorder %v403, 2
          %vm406 = vmand %vm404, %vm405
          %v407 = vld [vmem:[%s401] sm:$0x3]
          %v408 = vsel %vm406, %v407, 0.0
          %v409 = vmul.f32 %v408, %v408
          %v410 = vadd.f32 %v394, %v409
          %v411 = vadd.f32 %v390, %v409
          %v412 = vlaneseq
          %v413 = vand.u32 %v412, 127
          %v414 = vmov %v413
          %v415 = vlaneseq
          %v416 = vshrl.u32 %v415, 7
          %v417 = vmov %v416
          %s418 = smov [#allocation20]
          %v419 = vlaneseq
          %v420 = vand.u32 %v419, 127
          %vm421 = vcmp.ge.s32.totalorder %v420, 0
          %vm422 = vcmp.lt.s32.totalorder %v420, 2
          %vm423 = vmand %vm421, %vm422
          %v424 = vld [vmem:[%s418] sm:$0x3]
          %v425 = vsel %vm423, %v424, 0.0
          %v426 = vmul.f32 %v425, %v425
          %v427 = vadd.f32 %v410, %v426
          %v428 = vadd.f32 %v411, %v426
          %v429 = vlaneseq
          %v430 = vand.u32 %v429, 127
          %v431 = vmov %v430
          %v432 = vlaneseq
          %v433 = vshrl.u32 %v432, 7
          %v434 = vmov %v433
          %s435 = smov [#allocation21]
          %v436 = vlaneseq
          %v437 = vand.u32 %v436, 127
          %vm438 = vcmp.ge.s32.totalorder %v437, 0
          %vm439 = vcmp.lt.s32.totalorder %v437, 2
          %vm440 = vmand %vm438, %vm439
          %v441 = vld [vmem:[%s435] sm:$0x3]
          %v442 = vsel %vm440, %v441, 0.0
          %v443 = vmul.f32 %v442, %v442
          %vm446 = vcmp.eq.s32.totalorder %v434, %v431
          %v447 = vsel %vm446, 0.0, %v443
          %v448 = vadd.f32 %v427, %v447
          %v449 = vadd.f32 %v428, %v443
          %450 = vadd.xlane.f32.xlu0 %v449
          %v451 = vpop.xlane.xlu0 %450
          %v452 = vrot.slane %v451, 4
          %v453 = vadd.f32 %v451, %v452
          %v454 = vrot.slane %v453, 2
          %v455 = vadd.f32 %v453, %v454
          %v456 = vrot.slane %v455, 1
          %v457 = vadd.f32 %v455, %v456
          %458 = vadd.xlane.f32.xlu0 %v448
          %v459 = vpop.xlane.xlu0 %458
          %v460 = vrot.slane %v459, 4
          %v461 = vadd.f32 %v459, %v460
          %v462 = vrot.slane %v461, 2
          %v463 = vadd.f32 %v461, %v462
          %v464 = vrot.slane %v463, 1
          %v465 = vadd.f32 %v463, %v464
          %s466 = vtos %v465
          %s467 = vtos %v457
          %s468 = smul.f32 1e-10, %s467
          %p469 = scmp.le.f32.partialorder %s466, %s468
          %p470 = scmp.ge.s32.totalorder %s375, 15
          %p471 = por %p469, %p470
        $region143: #{custom-call.22} parent=139 // loop_header_branch
          %919 = sbr.rel (%p471) target = $region147
        $region144: #{custom-call.22} parent=139 // loop_body
          loop: start=0, step=1, limit=3
          $region148: #{custom-call.22} parent=144 // loop_pre_header
            _
          $region149: #{custom-call.22} parent=144 // loop_header
            %s473 = sphi 0, %s477
            %p474 = scmp.ge.s32.totalorder %s473, 3
          $region150: #{custom-call.22} parent=144 // loop_header_branch
            %476 = sbr.rel (%p474) target = $region154
          $region151: #{custom-call.22} parent=144 // loop_body
            #allocation22 [shape = 'f32[1024]{0}', space=vmem, size = 0x1000, scoped, tag = 'a_tl_diag vmem']
            #allocation23 [shape = 'f32[1024]{0}', space=vmem, size = 0x1000, scoped, tag = 'a_tr_diag vmem']
            #allocation24 [shape = 'f32[1024]{0}', space=vmem, size = 0x1000, scoped, tag = 'a_br_diag vmem']
            #allocation25 [shape = 'f32[1024]{0}', space=vmem, size = 0x1000, scoped, tag = 'rt1 vmem']
            #allocation26 [shape = 'f32[1024]{0}', space=vmem, size = 0x1000, scoped, tag = 'rt2 vmem']
            #allocation27 [shape = 'f32[1024]{0}', space=vmem, size = 0x1000, scoped, tag = 'c vmem']
            #allocation28 [shape = 'f32[1024]{0}', space=vmem, size = 0x1000, scoped, tag = 's vmem']
            #allocation29 [shape = 'f32[4096]{0}', space=vmem, size = 0x4000, scoped, tag = 'c broadcast']
            #allocation30 [shape = 'f32[4096]{0}', space=vmem, size = 0x4000, scoped, tag = 's broadcast']
            %s478 = smov [#allocation18]
            %s479 = smov [#allocation22]
            %v480 = vlaneseq
            %v481 = vand.u32 %v480, 127
            %v482 = vmov %v481
            %v483 = vlaneseq
            %v484 = vshrl.u32 %v483, 7
            %v485 = vmov %v484
            %v486 = vld [vmem:[%s478] sm:$0x3]
            %vm489 = vcmp.eq.s32.totalorder %v485, %v482
            %v490 = vsel %vm489, %v486, 0.0
            %v491 = vrot.slane %v490, 4
            %v492 = vadd.f32 %v490, %v491
            %v493 = vrot.slane %v492, 2
            %v494 = vadd.f32 %v492, %v493
            %v495 = vrot.slane %v494, 1
            %v496 = vadd.f32 %v494, %v495
            %497 = vst [vmem:[%s479] sm:$0x1] %v496
            %s498 = smov [#allocation19]
            %s499 = smov [#allocation23]
            %v500 = vlaneseq
            %v501 = vand.u32 %v500, 127
            %v502 = vmov %v501
            %v503 = vlaneseq
            %v504 = vshrl.u32 %v503, 7
            %v505 = vmov %v504
            %v506 = vld [vmem:[%s498] sm:$0x3]
            %vm509 = vcmp.eq.s32.totalorder %v505, %v502
            %v510 = vsel %vm509, %v506, 0.0
            %v511 = vrot.slane %v510, 4
            %v512 = vadd.f32 %v510, %v511
            %v513 = vrot.slane %v512, 2
            %v514 = vadd.f32 %v512, %v513
            %v515 = vrot.slane %v514, 1
            %v516 = vadd.f32 %v514, %v515
            %517 = vst [vmem:[%s499] sm:$0x1] %v516
            %s518 = smov [#allocation21]
            %s519 = smov [#allocation24]
            %v520 = vlaneseq
            %v521 = vand.u32 %v520, 127
            %v522 = vmov %v521
            %v523 = vlaneseq
            %v524 = vshrl.u32 %v523, 7
            %v525 = vmov %v524
            %v526 = vld [vmem:[%s518] sm:$0x3]
            %vm529 = vcmp.eq.s32.totalorder %v525, %v522
            %v530 = vsel %vm529, %v526, 0.0
            %v531 = vrot.slane %v530, 4
            %v532 = vadd.f32 %v530, %v531
            %v533 = vrot.slane %v532, 2
            %v534 = vadd.f32 %v532, %v533
            %v535 = vrot.slane %v534, 1
            %v536 = vadd.f32 %v534, %v535
            %537 = vst [vmem:[%s519] sm:$0x1] %v536
            %s538 = smov [#allocation27]
            %s539 = smov [#allocation28]
            %s540 = smov [#allocation22]
            %v541 = vld [vmem:[%s540] sm:$0xff]
            %s542 = smov [#allocation23]
            %v543 = vld [vmem:[%s542] sm:$0xff]
            %s544 = smov [#allocation24]
            %v545 = vld [vmem:[%s544] sm:$0xff]
            %v546 = vsub.f32 %v545, %v541
            %v547 = vmul.f32 2.0, %v543
            %v548 = vrcp.pop %v547
            %v549 = vmul.f32 %v546, %v548
            %vm550 = vcmp.ge.f32.partialorder %v549, 0.0
            %v551 = vmul.f32 %v549, %v549
            %v552 = vadd.f32 1.0, %v551
            %v553 = vrsqrt.pop %v552
            %v554 = vmul.f32 %v552, %v553
            %vm555 = vcmp.eq.f32.partialorder %v552, inf
            %v556 = vsel %vm555, %v552, %v554
            %vm557 = vcmp.eq.f32.partialorder %v552, 0.0
            %v558 = vand.u32 %v552, 2147483648
            %v559 = vsel %vm557, %v558, %v556
            %v560 = vxor.u32 %v559, 2147483648
            %v561 = vsel %vm550, %v559, %v560
            %v562 = vadd.f32 %v549, %v561
            %v563 = vrcp.pop %v562
            %v564 = vand.u32 2147483647, %v541
            %v565 = vand.u32 2147483647, %v543
            %v566 = vand.u32 2147483647, %v545
            %v567 = vmin.f32 %v564, %v566
            %v568 = vmul.f32 1.1920929e-08, %v567
            %vm569 = vcmp.le.f32.partialorder %v565, %v568
            %v570 = vsel %vm569, 0.0, %v563
            %v571 = vmul.f32 %v570, %v570
            %v572 = vadd.f32 1.0, %v571
            %v573 = vrsqrt.pop %v572
            %v574 = vmul.f32 %v570, %v573
            %v575 = vmul.f32 %v570, %v543
            %v576 = vsub.f32 %v541, %v575
            %v577 = vmul.f32 %v570, %v543
            %v578 = vadd.f32 %v545, %v577
            %s579 = smov [#allocation25]
            %580 = vst [vmem:[%s579] sm:$0xff] %v576
            %s581 = smov [#allocation26]
            %582 = vst [vmem:[%s581] sm:$0xff] %v578
            %s583 = smov %s538
            %584 = vst [vmem:[%s583] sm:$0xff] %v573
            %s585 = smov %s539
            %586 = vst [vmem:[%s585] sm:$0xff] %v574
            %s587 = smov [#allocation27]
            %v588 = vld [vmem:[%s587] ss:$0 sm:$0xff]
            %v589 = vlaneseq
            %v590 = vand.u32 %v589, 127
            %v591 = vmov %v590
            %v592 = vlaneseq
            %v593 = vshrl.u32 %v592, 7
            %v594 = vmov %v593
            %vm596 = vcmp.eq.s32.totalorder %v594, %v591
            %v597 = vsel %vm596, %v588, 0.0
            %598 = vadd.xlane.f32.xlu0 %v597
            %v599 = vpop.xlane.xlu0 %598
            %s600 = smov [#allocation29]
            %601 = vst [vmem:[%s600] sm:$0xff] %v599
            %s602 = smov [#allocation28]
            %v603 = vld [vmem:[%s602] ss:$0 sm:$0xff]
            %v604 = vlaneseq
            %v605 = vand.u32 %v604, 127
            %v606 = vmov %v605
            %v607 = vlaneseq
            %v608 = vshrl.u32 %v607, 7
            %v609 = vmov %v608
            %vm611 = vcmp.eq.s32.totalorder %v609, %v606
            %v612 = vsel %vm611, %v603, 0.0
            %613 = vadd.xlane.f32.xlu0 %v612
            %v614 = vpop.xlane.xlu0 %613
            %s615 = smov [#allocation30]
            %616 = vst [vmem:[%s615] sm:$0xff] %v614
            %s617 = smov [#allocation29]
            %v618 = vld [vmem:[%s617] sm:$0xff]
            %s619 = smov [#allocation30]
            %v620 = vld [vmem:[%s619] sm:$0xff]
            %s621 = smov [#allocation18]
            %s622 = smov [#allocation19]
            %s623 = smov [#allocation20]
            %s624 = smov [#allocation21]
            %v625 = vld [vmem:[%s621] sm:$0x3]
            %v626 = vld [vmem:[%s622] sm:$0x3]
            %v627 = vld [vmem:[%s623] sm:$0x3]
            %v628 = vld [vmem:[%s624] sm:$0x3]
            %v629 = vmul.f32 %v618, %v625
            %v630 = vmul.f32 %v620, %v627
            %v631 = vsub.f32 %v629, %v630
            %v632 = vmul.f32 %v618, %v626
            %v633 = vmul.f32 %v620, %v628
            %v634 = vsub.f32 %v632, %v633
            %v635 = vmul.f32 %v620, %v625
            %v636 = vmul.f32 %v618, %v627
            %v637 = vadd.f32 %v635, %v636
            %v638 = vmul.f32 %v620, %v626
            %v639 = vmul.f32 %v618, %v628
            %v640 = vadd.f32 %v638, %v639
            %641 = vst [vmem:[%s621] sm:$0x3] %v631
            %642 = vst [vmem:[%s622] sm:$0x3] %v634
            %643 = vst [vmem:[%s623] sm:$0x3] %v637
            %644 = vst [vmem:[%s624] sm:$0x3] %v640
            %s645 = smov [#allocation27]
            %v646 = vld [vmem:[%s645] ss:$0 sm:$0xff]
            %s647 = smov [#allocation28]
            %v648 = vld [vmem:[%s647] ss:$0 sm:$0xff]
            %s649 = smov [#allocation18]
            %s650 = smov [#allocation19]
            %s651 = smov [#allocation20]
            %s652 = smov [#allocation21]
            %v653 = vld [vmem:[%s649] sm:$0x3]
            %v654 = vld [vmem:[%s650] sm:$0x3]
            %v655 = vld [vmem:[%s651] sm:$0x3]
            %v656 = vld [vmem:[%s652] sm:$0x3]
            %v657 = vmul.f32 %v646, %v653
            %v658 = vmul.f32 %v648, %v654
            %v659 = vsub.f32 %v657, %v658
            %v660 = vmul.f32 %v648, %v653
            %v661 = vmul.f32 %v646, %v654
            %v662 = vadd.f32 %v660, %v661
            %v663 = vmul.f32 %v646, %v655
            %v664 = vmul.f32 %v648, %v656
            %v665 = vsub.f32 %v663, %v664
            %v666 = vmul.f32 %v648, %v655
            %v667 = vmul.f32 %v646, %v656
            %v668 = vadd.f32 %v666, %v667
            %669 = vst [vmem:[%s649] sm:$0x3] %v659
            %670 = vst [vmem:[%s650] sm:$0x3] %v662
            %671 = vst [vmem:[%s651] sm:$0x3] %v665
            %672 = vst [vmem:[%s652] sm:$0x3] %v668
            %s673 = smov [#allocation18]
            %s674 = smov [#allocation25]
            %v675 = vlaneseq
            %v676 = vand.u32 %v675, 127
            %v677 = vmov %v676
            %v678 = vlaneseq
            %v679 = vshrl.u32 %v678, 7
            %v680 = vmov %v679
            %v681 = vld [vmem:[%s674] ss:$0 sm:$0xff]
            %v682 = vld [vmem:[%s673] sm:$0x3]
            %vm685 = vcmp.eq.s32.totalorder %v680, %v677
            %v686 = vsel %vm685, %v681, %v682
            %687 = vst [vmem:[%s673] sm:$0x3] %v686
            %s688 = smov [#allocation19]
            %v689 = vlaneseq
            %v690 = vand.u32 %v689, 127
            %v691 = vmov %v690
            %v692 = vlaneseq
            %v693 = vshrl.u32 %v692, 7
            %v694 = vmov %v693
            %v695 = vld [vmem:[%s688] sm:$0x3]
            %vm698 = vcmp.eq.s32.totalorder %v694, %v691
            %v699 = vsel %vm698, 0.0, %v695
            %700 = vst [vmem:[%s688] sm:$0x3] %v699
            %s701 = smov [#allocation20]
            %v702 = vlaneseq
            %v703 = vand.u32 %v702, 127
            %v704 = vmov %v703
            %v705 = vlaneseq
            %v706 = vshrl.u32 %v705, 7
            %v707 = vmov %v706
            %v708 = vld [vmem:[%s701] sm:$0x3]
            %vm711 = vcmp.eq.s32.totalorder %v707, %v704
            %v712 = vsel %vm711, 0.0, %v708
            %713 = vst [vmem:[%s701] sm:$0x3] %v712
            %s714 = smov [#allocation21]
            %s715 = smov [#allocation26]
            %v716 = vlaneseq
            %v717 = vand.u32 %v716, 127
            %v718 = vmov %v717
            %v719 = vlaneseq
            %v720 = vshrl.u32 %v719, 7
            %v721 = vmov %v720
            %v722 = vld [vmem:[%s715] ss:$0 sm:$0xff]
            %v723 = vld [vmem:[%s714] sm:$0x3]
            %vm726 = vcmp.eq.s32.totalorder %v721, %v718
            %v727 = vsel %vm726, %v722, %v723
            %728 = vst [vmem:[%s714] sm:$0x3] %v727
            %s729 = smov [#allocation18]
            %s730 = smov [#allocation19]
            %v731 = vld [vmem:[%s730] sm:$0x3]
            %732 = vrot.lane.b32.xlu0 %v731, 1
            %v733 = vpop.permute.xlu0 %732
            %v734 = vld [vmem:[%s729] sm:$0x3]
            %v735 = vld [vmem:[%s729] sm:$0x3]
            %736 = vrot.lane.b32.xlu0 %v735, 1
            %v737 = vpop.permute.xlu0 %736
            %v738 = vlaneseq
            %v739 = vand.u32 %v738, 127
            %vm740 = vcmp.eq.s32.totalorder %v739, 0
            %v741 = vsel %vm740, %v735, %v737
            %v742 = vlaneseq
            %v743 = vand.u32 %v742, 127
            %vm744 = vcmp.eq.s32.totalorder %v743, 1
            %v745 = vsel %vm744, %v733, %v741
            %v746 = vlaneseq
            %v747 = vand.u32 %v746, 127
            %vm748 = vcmp.ge.s32.totalorder %v747, 0
            %vm749 = vcmp.lt.s32.totalorder %v747, 2
            %vm750 = vmand %vm748, %vm749
            %v751 = vsel %vm750, %v745, 0.0
            %v752 = vld [vmem:[%s730] sm:$0x3]
            %753 = vrot.lane.b32.xlu0 %v752, 127
            %v754 = vpop.permute.xlu0 %753
            %v755 = vlaneseq
            %v756 = vand.u32 %v755, 127
            %vm757 = vcmp.eq.s32.totalorder %v756, 1
            %v758 = vsel %vm757, %v734, %v754
            %759 = vst [vmem:[%s729] sm:$0x3] %v751
            %760 = vst [vmem:[%s730] sm:$0x3] %v758
            %s761 = smov [#allocation20]
            %s762 = smov [#allocation21]
            %v763 = vld [vmem:[%s762] sm:$0x3]
            %764 = vrot.lane.b32.xlu0 %v763, 1
            %v765 = vpop.permute.xlu0 %764
            %v766 = vld [vmem:[%s761] sm:$0x3]
            %v767 = vld [vmem:[%s761] sm:$0x3]
            %768 = vrot.lane.b32.xlu0 %v767, 1
            %v769 = vpop.permute.xlu0 %768
            %v770 = vlaneseq
            %v771 = vand.u32 %v770, 127
            %vm772 = vcmp.eq.s32.totalorder %v771, 0
            %v773 = vsel %vm772, %v767, %v769
            %v774 = vlaneseq
            %v775 = vand.u32 %v774, 127
            %vm776 = vcmp.eq.s32.totalorder %v775, 1
            %v777 = vsel %vm776, %v765, %v773
            %v778 = vlaneseq
            %v779 = vand.u32 %v778, 127
            %vm780 = vcmp.ge.s32.totalorder %v779, 0
            %vm781 = vcmp.lt.s32.totalorder %v779, 2
            %vm782 = vmand %vm780, %vm781
            %v783 = vsel %vm782, %v777, 0.0
            %v784 = vld [vmem:[%s762] sm:$0x3]
            %785 = vrot.lane.b32.xlu0 %v784, 127
            %v786 = vpop.permute.xlu0 %785
            %v787 = vlaneseq
            %v788 = vand.u32 %v787, 127
            %vm789 = vcmp.eq.s32.totalorder %v788, 1
            %v790 = vsel %vm789, %v766, %v786
            %791 = vst [vmem:[%s761] sm:$0x3] %v783
            %792 = vst [vmem:[%s762] sm:$0x3] %v790
            %s793 = smov [#allocation18]
            %s794 = smov [#allocation20]
            %v795 = vld [vmem:[%s793] ss:$0 sm:$0xff]
            %s797 = scalar_lea.vmem %s793, 4294967295
            %v798 = vld [vmem:[%s797] sm:$0x2]
            %v799 = vlaneseq
            %v800 = vshrl.u32 %v799, 7
            %vm801 = vcmp.eq.s32.totalorder %v800, 0
            %v802 = vsel %vm801, %v795, %v798
            %s803 = scalar_lea.vmem %s793, 1
            %v804 = vld [vmem:[%s803] ss:$0 sm:$0xff]
            %805 = vst [vmem:[%s793] sm:$0x3] %v802
            %v806 = vld [vmem:[%s794] ss:$0 sm:$0xff]
            %s807 = scalar_lea.vmem %s793, 1
            %808 = vst [vmem:[%s807] sm:$0x1] %v806
            %s809 = scalar_lea.vmem %s794, 1
            %v810 = vld [vmem:[%s809] sm:$0x1]
            %v811 = vlaneseq
            %v812 = vshrl.u32 %v811, 7
            %vm813 = vcmp.eq.s32.totalorder %v812, 1
            %v814 = vsel %vm813, %v804, %v810
            %v815 = vld [vmem:[%s794] ss:$0 sm:$0xff]
            %816 = vst [vmem:[%s794] sm:$0x3] %v814
            %s817 = smov [#allocation19]
            %s818 = smov [#allocation21]
            %v819 = vld [vmem:[%s817] ss:$0 sm:$0xff]
            %s821 = scalar_lea.vmem %s817, 4294967295
            %v822 = vld [vmem:[%s821] sm:$0x2]
            %v823 = vlaneseq
            %v824 = vshrl.u32 %v823, 7
            %vm825 = vcmp.eq.s32.totalorder %v824, 0
            %v826 = vsel %vm825, %v819, %v822
            %s827 = scalar_lea.vmem %s817, 1
            %v828 = vld [vmem:[%s827] ss:$0 sm:$0xff]
            %829 = vst [vmem:[%s817] sm:$0x3] %v826
            %v830 = vld [vmem:[%s818] ss:$0 sm:$0xff]
            %s831 = scalar_lea.vmem %s817, 1
            %832 = vst [vmem:[%s831] sm:$0x1] %v830
            %s833 = scalar_lea.vmem %s818, 1
            %v834 = vld [vmem:[%s833] sm:$0x1]
            %v835 = vlaneseq
            %v836 = vshrl.u32 %v835, 7
            %vm837 = vcmp.eq.s32.totalorder %v836, 1
            %v838 = vsel %vm837, %v828, %v834
            %v839 = vld [vmem:[%s818] ss:$0 sm:$0xff]
            %840 = vst [vmem:[%s818] sm:$0x3] %v838
            %s841 = smov [#allocation29]
            %v842 = vld [vmem:[%s841] sm:$0xff]
            %s843 = smov [#allocation30]
            %v844 = vld [vmem:[%s843] sm:$0xff]
            %s845 = smov [#allocation10]
            %s846 = smov [#allocation12]
            %s847 = smov [#allocation14]
            %s848 = smov [#allocation16]
            %v849 = vld [vmem:[%s845] sm:$0x3]
            %v850 = vld [vmem:[%s846] sm:$0x3]
            %v851 = vld [vmem:[%s847] sm:$0x3]
            %v852 = vld [vmem:[%s848] sm:$0x3]
            %v853 = vmul.f32 %v842, %v849
            %v854 = vmul.f32 %v844, %v851
            %v855 = vsub.f32 %v853, %v854
            %v856 = vmul.f32 %v842, %v850
            %v857 = vmul.f32 %v844, %v852
            %v858 = vsub.f32 %v856, %v857
            %v859 = vmul.f32 %v844, %v849
            %v860 = vmul.f32 %v842, %v851
            %v861 = vadd.f32 %v859, %v860
            %v862 = vmul.f32 %v844, %v850
            %v863 = vmul.f32 %v842, %v852
            %v864 = vadd.f32 %v862, %v863
            %865 = vst [vmem:[%s845] sm:$0x3] %v855
            %866 = vst [vmem:[%s846] sm:$0x3] %v858
            %867 = vst [vmem:[%s847] sm:$0x3] %v861
            %868 = vst [vmem:[%s848] sm:$0x3] %v864
            %s869 = smov [#allocation10]
            %s870 = smov [#allocation14]
            %v871 = vld [vmem:[%s869] ss:$0 sm:$0xff]
            %s873 = scalar_lea.vmem %s869, 4294967295
            %v874 = vld [vmem:[%s873] sm:$0x2]
            %v875 = vlaneseq
            %v876 = vshrl.u32 %v875, 7
            %vm877 = vcmp.eq.s32.totalorder %v876, 0
            %v878 = vsel %vm877, %v871, %v874
            %s879 = scalar_lea.vmem %s869, 1
            %v880 = vld [vmem:[%s879] ss:$0 sm:$0xff]
            %881 = vst [vmem:[%s869] sm:$0x3] %v878
            %v882 = vld [vmem:[%s870] ss:$0 sm:$0xff]
            %s883 = scalar_lea.vmem %s869, 1
            %884 = vst [vmem:[%s883] sm:$0x1] %v882
            %s885 = scalar_lea.vmem %s870, 1
            %v886 = vld [vmem:[%s885] sm:$0x1]
            %v887 = vlaneseq
            %v888 = vshrl.u32 %v887, 7
            %vm889 = vcmp.eq.s32.totalorder %v888, 1
            %v890 = vsel %vm889, %v880, %v886
            %v891 = vld [vmem:[%s870] ss:$0 sm:$0xff]
            %892 = vst [vmem:[%s870] sm:$0x3] %v890
            %s893 = smov [#allocation12]
            %s894 = smov [#allocation16]
            %v895 = vld [vmem:[%s893] ss:$0 sm:$0xff]
            %s897 = scalar_lea.vmem %s893, 4294967295
            %v898 = vld [vmem:[%s897] sm:$0x2]
            %v899 = vlaneseq
            %v900 = vshrl.u32 %v899, 7
            %vm901 = vcmp.eq.s32.totalorder %v900, 0
            %v902 = vsel %vm901, %v895, %v898
            %s903 = scalar_lea.vmem %s893, 1
            %v904 = vld [vmem:[%s903] ss:$0 sm:$0xff]
            %905 = vst [vmem:[%s893] sm:$0x3] %v902
            %v906 = vld [vmem:[%s894] ss:$0 sm:$0xff]
            %s907 = scalar_lea.vmem %s893, 1
            %908 = vst [vmem:[%s907] sm:$0x1] %v906
            %s909 = scalar_lea.vmem %s894, 1
            %v910 = vld [vmem:[%s909] sm:$0x1]
            %v911 = vlaneseq
            %v912 = vshrl.u32 %v911, 7
            %vm913 = vcmp.eq.s32.totalorder %v912, 1
            %v914 = vsel %vm913, %v904, %v910
            %v915 = vld [vmem:[%s894] ss:$0 sm:$0xff]
            %916 = vst [vmem:[%s894] sm:$0x3] %v914
          $region152: #{custom-call.22} parent=144 // loop_footer
            %s477 = sadd.s32 1, %s473
          $region153: #{custom-call.22} parent=144 // loop_footer_branch
            %472 = sbr.rel target = $region149
          $region154: #{custom-call.22} parent=144 // loop_exit
            _
          %s917 = sadd.s32 %s375, 1
        $region145: #{custom-call.22} parent=139 // loop_footer
          _
        $region146: #{custom-call.22} parent=139 // loop_footer_branch
          %374 = sbr.rel target = $region142
        $region147: #{custom-call.22} parent=139 // loop_exit
          _
        %s920 = sand.u32 %s17, 7
        %s921 = scalar_lea.vmem %s287, %s920 [#allocation8]
        %s922 = sand.u32 %s17, 7
        %s923 = scalar_lea.vmem %s293, %s922 [#allocation9]
        %s924 = smov [#allocation18]
        %s925 = smov %s921
        %v926 = vlaneseq
        %v927 = vand.u32 %v926, 127
        %v928 = vmov %v927
        %v929 = vlaneseq
        %v930 = vshrl.u32 %v929, 7
        %v931 = vmov %v930
        %v932 = vld [vmem:[%s924] sm:$0x3]
        %vm935 = vcmp.eq.s32.totalorder %v931, %v928
        %v936 = vsel %vm935, %v932, 0.0
        %v937 = vrot.slane %v936, 4
        %v938 = vadd.f32 %v936, %v937
        %v939 = vrot.slane %v938, 2
        %v940 = vadd.f32 %v938, %v939
        %v941 = vrot.slane %v940, 1
        %v942 = vadd.f32 %v940, %v941
        %943 = vst [vmem:[%s925] sm:$0x1] %v942
        %s944 = smov [#allocation21]
        %s945 = smov %s923
        %v946 = vlaneseq
        %v947 = vand.u32 %v946, 127
        %v948 = vmov %v947
        %v949 = vlaneseq
        %v950 = vshrl.u32 %v949, 7
        %v951 = vmov %v950
        %v952 = vld [vmem:[%s944] sm:$0x3]
        %vm955 = vcmp.eq.s32.totalorder %v951, %v948
        %v956 = vsel %vm955, %v952, 0.0
        %v957 = vrot.slane %v956, 4
        %v958 = vadd.f32 %v956, %v957
        %v959 = vrot.slane %v958, 2
        %v960 = vadd.f32 %v958, %v959
        %v961 = vrot.slane %v960, 1
        %v962 = vadd.f32 %v960, %v961
        %963 = vst [vmem:[%s945] sm:$0x1] %v962
        %s965 = sshll.u32 1, 2
        %s966 = ssub.s32 %s965, 1
        %v968 = vld [vmem:[#allocation10] sm:%s966]
        %s969 = sshll.u32 1, 2
        %s970 = ssub.s32 %s969, 1
        %971 = vst [vmem:[%s297] sm:%s970] %v968
        %s973 = sshll.u32 1, 2
        %s974 = ssub.s32 %s973, 1
        %v976 = vld [vmem:[#allocation12] sm:%s974]
        %s977 = sshll.u32 1, 2
        %s978 = ssub.s32 %s977, 1
        %979 = vst [vmem:[%s301] sm:%s978] %v976
        %s981 = sshll.u32 1, 2
        %s982 = ssub.s32 %s981, 1
        %v984 = vld [vmem:[#allocation14] sm:%s982]
        %s985 = sshll.u32 1, 2
        %s986 = ssub.s32 %s985, 1
        %987 = vst [vmem:[%s305] sm:%s986] %v984
        %s989 = sshll.u32 1, 2
        %s990 = ssub.s32 %s989, 1
        %v992 = vld [vmem:[#allocation16] sm:%s990]
        %s993 = sshll.u32 1, 2
        %s994 = ssub.s32 %s993, 1
        %995 = vst [vmem:[%s309] sm:%s994] %v992
        %s996 = sand.u32 %s27, 1
        %s997 = sand.u32 %s27, 1
        %s998 = smul.addr %s997, 8
        %s999 = scalar_lea.vmem [#allocation8], %s998
        %s1000 = sand.u32 %s55, 1
        %s1001 = sand.u32 %s55, 1
        %s1002 = smul.addr %s1001, 8
        %s1003 = scalar_lea.vmem [#allocation9], %s1002
        %s1004 = sand.u32 %s17, 1
        %s1005 = sand.u32 %s17, 1
        %s1006 = smul.addr %s1005, 2
        %s1007 = scalar_lea.vmem [#allocation11], %s1006
        %s1008 = sand.u32 %s17, 1
        %s1009 = sand.u32 %s17, 1
        %s1010 = smul.addr %s1009, 2
        %s1011 = scalar_lea.vmem [#allocation13], %s1010
        %s1012 = sand.u32 %s17, 1
        %s1013 = sand.u32 %s17, 1
        %s1014 = smul.addr %s1013, 2
        %s1015 = scalar_lea.vmem [#allocation15], %s1014
        %s1016 = sand.u32 %s17, 1
        %s1017 = sand.u32 %s17, 1
        %s1018 = smul.addr %s1017, 2
        %s1019 = scalar_lea.vmem [#allocation17], %s1018
        // Predicated region
        $region155: #{custom-call.22} parent=139 // pred_check
          %p1020 = pneg %p37
        $region156: #{custom-call.22} parent=139 // pred_check_branch
          %1022 = sbr.rel (%p1020) target = $region158
        $region157: #{custom-call.22} parent=139 // pred_region
          %s1023 = sshrl.u32 %s17, 3
          %s1024 = smul.addr %s1023, 8
          %s1025 = scalar_lea.vmem %s4, %s1024
          // Predicated region
          $region159: #{custom-call.22} parent=157 // pred_check
            _
          $region160: #{custom-call.22} parent=157 // pred_check_branch
            %1027 = sbr.rel (0) target = $region162
          $region161: #{custom-call.22} parent=157 // pred_region
            // Predicated region
            $region163: #{custom-call.22} parent=161 // pred_check
              _
            $region164: #{custom-call.22} parent=161 // pred_check_branch
              %1029 = sbr.rel (0) target = $region166
            $region165: #{custom-call.22} parent=161 // pred_region
              // Predicated region
              $region178: #{custom-call.22} parent=165 // pred_check
                _
              $region179: #{custom-call.22} parent=165 // pred_check_branch
                %1045 = sbr.rel (0) target = $region181
              $region180: #{custom-call.22} parent=165 // pred_region
                loop: start=0, step=1, limit=1
                $region182: #{custom-call.22} parent=180 // loop_pre_header
                  _
                $region183: #{custom-call.22} parent=180 // loop_header
                  %s1047 = sphi 0, %s1051
                  %p1048 = scmp.ge.s32.totalorder %s1047, 1
                  %s1052 = sphi %s999, %s999
                  %s1053 = sphi %s1025, %s1025
                $region184: #{custom-call.22} parent=180 // loop_header_branch
                  %1050 = sbr.rel (%p1048) target = $region188
                $region185: #{custom-call.22} parent=180 // loop_body
                  %v1054 = vld [vmem:[%s1052] sm:$0xff]
                  %1055 = vst [vmem:[%s1053] sm:$0xff] %v1054
                $region186: #{custom-call.22} parent=180 // loop_footer
                  %s1051 = sadd.s32 1, %s1047
                $region187: #{custom-call.22} parent=180 // loop_footer_branch
                  %1046 = sbr.rel target = $region183
                $region188: #{custom-call.22} parent=180 // loop_exit
                  _
              $region181: #{custom-call.22} parent=165 // pred_fallthru
                _
              // Predicated region
              $region189: #{custom-call.22} parent=165 // pred_check
                _
              $region190: #{custom-call.22} parent=165 // pred_check_branch
                %1057 = sbr.rel target = $region192
              $region191: #{custom-call.22} parent=165 // pred_region
                _
              $region192: #{custom-call.22} parent=165 // pred_fallthru
                _
            $region166: #{custom-call.22} parent=161 // pred_fallthru
              _
            // Predicated region
            $region167: #{custom-call.22} parent=161 // pred_check
              _
            $region168: #{custom-call.22} parent=161 // pred_check_branch
              %1031 = sbr.rel target = $region170
            $region169: #{custom-call.22} parent=161 // pred_region
              %s1033 = ssub.s32 256, 1
              loop: start=0, step=1, limit=1
              $region171: #{custom-call.22} parent=169 // loop_pre_header
                _
              $region172: #{custom-call.22} parent=169 // loop_header
                %s1035 = sphi 0, %s1039
                %p1036 = scmp.ge.s32.totalorder %s1035, 1
                %s1040 = sphi %s999, %s999
                %s1041 = sphi %s1025, %s1025
              $region173: #{custom-call.22} parent=169 // loop_header_branch
                %1038 = sbr.rel (%p1036) target = $region177
              $region174: #{custom-call.22} parent=169 // loop_body
                %v1042 = vld [vmem:[%s1040] sm:%s1033]
                %1043 = vst [vmem:[%s1041] sm:%s1033] %v1042
              $region175: #{custom-call.22} parent=169 // loop_footer
                %s1039 = sadd.s32 1, %s1035
              $region176: #{custom-call.22} parent=169 // loop_footer_branch
                %1034 = sbr.rel target = $region172
              $region177: #{custom-call.22} parent=169 // loop_exit
                _
            $region170: #{custom-call.22} parent=161 // pred_fallthru
              _
          $region162: #{custom-call.22} parent=157 // pred_fallthru
            _
          %1058 = vnop
        $region158: #{custom-call.22} parent=139 // pred_fallthru
          _
        // Predicated region
        $region193: #{custom-call.22} parent=139 // pred_check
          %p1059 = pneg %p65
        $region194: #{custom-call.22} parent=139 // pred_check_branch
          %1061 = sbr.rel (%p1059) target = $region196
        $region195: #{custom-call.22} parent=139 // pred_region
          %s1062 = sshrl.u32 %s17, 3
          %s1063 = smul.addr %s1062, 8
          %s1064 = scalar_lea.vmem %s5, %s1063
          // Predicated region
          $region197: #{custom-call.22} parent=195 // pred_check
            _
          $region198: #{custom-call.22} parent=195 // pred_check_branch
            %1066 = sbr.rel (0) target = $region200
          $region199: #{custom-call.22} parent=195 // pred_region
            // Predicated region
            $region201: #{custom-call.22} parent=199 // pred_check
              _
            $region202: #{custom-call.22} parent=199 // pred_check_branch
              %1068 = sbr.rel (0) target = $region204
            $region203: #{custom-call.22} parent=199 // pred_region
              // Predicated region
              $region216: #{custom-call.22} parent=203 // pred_check
                _
              $region217: #{custom-call.22} parent=203 // pred_check_branch
                %1084 = sbr.rel (0) target = $region219
              $region218: #{custom-call.22} parent=203 // pred_region
                loop: start=0, step=1, limit=1
                $region220: #{custom-call.22} parent=218 // loop_pre_header
                  _
                $region221: #{custom-call.22} parent=218 // loop_header
                  %s1086 = sphi 0, %s1090
                  %p1087 = scmp.ge.s32.totalorder %s1086, 1
                  %s1091 = sphi %s1003, %s1003
                  %s1092 = sphi %s1064, %s1064
                $region222: #{custom-call.22} parent=218 // loop_header_branch
                  %1089 = sbr.rel (%p1087) target = $region226
                $region223: #{custom-call.22} parent=218 // loop_body
                  %v1093 = vld [vmem:[%s1091] sm:$0xff]
                  %1094 = vst [vmem:[%s1092] sm:$0xff] %v1093
                $region224: #{custom-call.22} parent=218 // loop_footer
                  %s1090 = sadd.s32 1, %s1086
                $region225: #{custom-call.22} parent=218 // loop_footer_branch
                  %1085 = sbr.rel target = $region221
                $region226: #{custom-call.22} parent=218 // loop_exit
                  _
              $region219: #{custom-call.22} parent=203 // pred_fallthru
                _
              // Predicated region
              $region227: #{custom-call.22} parent=203 // pred_check
                _
              $region228: #{custom-call.22} parent=203 // pred_check_branch
                %1096 = sbr.rel target = $region230
              $region229: #{custom-call.22} parent=203 // pred_region
                _
              $region230: #{custom-call.22} parent=203 // pred_fallthru
                _
            $region204: #{custom-call.22} parent=199 // pred_fallthru
              _
            // Predicated region
            $region205: #{custom-call.22} parent=199 // pred_check
              _
            $region206: #{custom-call.22} parent=199 // pred_check_branch
              %1070 = sbr.rel target = $region208
            $region207: #{custom-call.22} parent=199 // pred_region
              %s1072 = ssub.s32 256, 1
              loop: start=0, step=1, limit=1
              $region209: #{custom-call.22} parent=207 // loop_pre_header
                _
              $region210: #{custom-call.22} parent=207 // loop_header
                %s1074 = sphi 0, %s1078
                %p1075 = scmp.ge.s32.totalorder %s1074, 1
                %s1079 = sphi %s1003, %s1003
                %s1080 = sphi %s1064, %s1064
              $region211: #{custom-call.22} parent=207 // loop_header_branch
                %1077 = sbr.rel (%p1075) target = $region215
              $region212: #{custom-call.22} parent=207 // loop_body
                %v1081 = vld [vmem:[%s1079] sm:%s1072]
                %1082 = vst [vmem:[%s1080] sm:%s1072] %v1081
              $region213: #{custom-call.22} parent=207 // loop_footer
                %s1078 = sadd.s32 1, %s1074
              $region214: #{custom-call.22} parent=207 // loop_footer_branch
                %1073 = sbr.rel target = $region210
              $region215: #{custom-call.22} parent=207 // loop_exit
                _
            $region208: #{custom-call.22} parent=199 // pred_fallthru
              _
          $region200: #{custom-call.22} parent=195 // pred_fallthru
            _
          %1097 = vnop
        $region196: #{custom-call.22} parent=139 // pred_fallthru
          _
        %s1098 = smul.addr %s17, 2
        %s1099 = scalar_lea.vmem %s6, %s1098
        // Predicated region
        $region231: #{custom-call.22} parent=139 // pred_check
          _
        $region232: #{custom-call.22} parent=139 // pred_check_branch
          %1101 = sbr.rel (0) target = $region234
        $region233: #{custom-call.22} parent=139 // pred_region
          // Predicated region
          $region235: #{custom-call.22} parent=233 // pred_check
            _
          $region236: #{custom-call.22} parent=233 // pred_check_branch
            %1103 = sbr.rel target = $region238
          $region237: #{custom-call.22} parent=233 // pred_region
            // Predicated region
            $region250: #{custom-call.22} parent=237 // pred_check
              _
            $region251: #{custom-call.22} parent=237 // pred_check_branch
              %1119 = sbr.rel (0) target = $region253
            $region252: #{custom-call.22} parent=237 // pred_region
              %s1121 = ssub.s32 4, 1
              loop: start=0, step=1, limit=1
              $region254: #{custom-call.22} parent=252 // loop_pre_header
                _
              $region255: #{custom-call.22} parent=252 // loop_header
                %s1123 = sphi 0, %s1127
                %p1124 = scmp.ge.s32.totalorder %s1123, 1
                %s1128 = sphi %s1007, %s1007
                %s1129 = sphi %s1099, %s1099
              $region256: #{custom-call.22} parent=252 // loop_header_branch
                %1126 = sbr.rel (%p1124) target = $region260
              $region257: #{custom-call.22} parent=252 // loop_body
                %v1130 = vld [vmem:[%s1128] sm:%s1121]
                %1131 = vst [vmem:[%s1129] sm:%s1121] %v1130
              $region258: #{custom-call.22} parent=252 // loop_footer
                %s1127 = sadd.s32 1, %s1123
              $region259: #{custom-call.22} parent=252 // loop_footer_branch
                %1122 = sbr.rel target = $region255
              $region260: #{custom-call.22} parent=252 // loop_exit
                _
            $region253: #{custom-call.22} parent=237 // pred_fallthru
              _
          $region238: #{custom-call.22} parent=233 // pred_fallthru
            _
          // Predicated region
          $region239: #{custom-call.22} parent=233 // pred_check
            _
          $region240: #{custom-call.22} parent=233 // pred_check_branch
            %1105 = sbr.rel (0) target = $region242
          $region241: #{custom-call.22} parent=233 // pred_region
            %s1107 = ssub.s32 4, 1
            loop: start=0, step=1, limit=1
            $region243: #{custom-call.22} parent=241 // loop_pre_header
              _
            $region244: #{custom-call.22} parent=241 // loop_header
              %s1109 = sphi 0, %s1113
              %p1110 = scmp.ge.s32.totalorder %s1109, 1
              %s1114 = sphi %s1007, %s1007
              %s1115 = sphi %s1099, %s1099
            $region245: #{custom-call.22} parent=241 // loop_header_branch
              %1112 = sbr.rel (%p1110) target = $region249
            $region246: #{custom-call.22} parent=241 // loop_body
              %v1116 = vld [vmem:[%s1114] sm:%s1107]
              %1117 = vst [vmem:[%s1115] sm:%s1107] %v1116
            $region247: #{custom-call.22} parent=241 // loop_footer
              %s1113 = sadd.s32 1, %s1109
            $region248: #{custom-call.22} parent=241 // loop_footer_branch
              %1108 = sbr.rel target = $region244
            $region249: #{custom-call.22} parent=241 // loop_exit
              _
          $region242: #{custom-call.22} parent=233 // pred_fallthru
            _
        $region234: #{custom-call.22} parent=139 // pred_fallthru
          _
        %1132 = vnop
        %s1133 = smul.addr %s17, 2
        %s1134 = scalar_lea.vmem %s7, %s1133
        // Predicated region
        $region261: #{custom-call.22} parent=139 // pred_check
          _
        $region262: #{custom-call.22} parent=139 // pred_check_branch
          %1136 = sbr.rel (0) target = $region264
        $region263: #{custom-call.22} parent=139 // pred_region
          // Predicated region
          $region265: #{custom-call.22} parent=263 // pred_check
            _
          $region266: #{custom-call.22} parent=263 // pred_check_branch
            %1138 = sbr.rel target = $region268
          $region267: #{custom-call.22} parent=263 // pred_region
            // Predicated region
            $region280: #{custom-call.22} parent=267 // pred_check
              _
            $region281: #{custom-call.22} parent=267 // pred_check_branch
              %1154 = sbr.rel (0) target = $region283
            $region282: #{custom-call.22} parent=267 // pred_region
              %s1156 = ssub.s32 4, 1
              loop: start=0, step=1, limit=1
              $region284: #{custom-call.22} parent=282 // loop_pre_header
                _
              $region285: #{custom-call.22} parent=282 // loop_header
                %s1158 = sphi 0, %s1162
                %p1159 = scmp.ge.s32.totalorder %s1158, 1
                %s1163 = sphi %s1011, %s1011
                %s1164 = sphi %s1134, %s1134
              $region286: #{custom-call.22} parent=282 // loop_header_branch
                %1161 = sbr.rel (%p1159) target = $region290
              $region287: #{custom-call.22} parent=282 // loop_body
                %v1165 = vld [vmem:[%s1163] sm:%s1156]
                %1166 = vst [vmem:[%s1164] sm:%s1156] %v1165
              $region288: #{custom-call.22} parent=282 // loop_footer
                %s1162 = sadd.s32 1, %s1158
              $region289: #{custom-call.22} parent=282 // loop_footer_branch
                %1157 = sbr.rel target = $region285
              $region290: #{custom-call.22} parent=282 // loop_exit
                _
            $region283: #{custom-call.22} parent=267 // pred_fallthru
              _
          $region268: #{custom-call.22} parent=263 // pred_fallthru
            _
          // Predicated region
          $region269: #{custom-call.22} parent=263 // pred_check
            _
          $region270: #{custom-call.22} parent=263 // pred_check_branch
            %1140 = sbr.rel (0) target = $region272
          $region271: #{custom-call.22} parent=263 // pred_region
            %s1142 = ssub.s32 4, 1
            loop: start=0, step=1, limit=1
            $region273: #{custom-call.22} parent=271 // loop_pre_header
              _
            $region274: #{custom-call.22} parent=271 // loop_header
              %s1144 = sphi 0, %s1148
              %p1145 = scmp.ge.s32.totalorder %s1144, 1
              %s1149 = sphi %s1011, %s1011
              %s1150 = sphi %s1134, %s1134
            $region275: #{custom-call.22} parent=271 // loop_header_branch
              %1147 = sbr.rel (%p1145) target = $region279
            $region276: #{custom-call.22} parent=271 // loop_body
              %v1151 = vld [vmem:[%s1149] sm:%s1142]
              %1152 = vst [vmem:[%s1150] sm:%s1142] %v1151
            $region277: #{custom-call.22} parent=271 // loop_footer
              %s1148 = sadd.s32 1, %s1144
            $region278: #{custom-call.22} parent=271 // loop_footer_branch
              %1143 = sbr.rel target = $region274
            $region279: #{custom-call.22} parent=271 // loop_exit
              _
          $region272: #{custom-call.22} parent=263 // pred_fallthru
            _
        $region264: #{custom-call.22} parent=139 // pred_fallthru
          _
        %1167 = vnop
        %s1168 = smul.addr %s17, 2
        %s1169 = scalar_lea.vmem %s8, %s1168
        // Predicated region
        $region291: #{custom-call.22} parent=139 // pred_check
          _
        $region292: #{custom-call.22} parent=139 // pred_check_branch
          %1171 = sbr.rel (0) target = $region294
        $region293: #{custom-call.22} parent=139 // pred_region
          // Predicated region
          $region295: #{custom-call.22} parent=293 // pred_check
            _
          $region296: #{custom-call.22} parent=293 // pred_check_branch
            %1173 = sbr.rel target = $region298
          $region297: #{custom-call.22} parent=293 // pred_region
            // Predicated region
            $region310: #{custom-call.22} parent=297 // pred_check
              _
            $region311: #{custom-call.22} parent=297 // pred_check_branch
              %1189 = sbr.rel (0) target = $region313
            $region312: #{custom-call.22} parent=297 // pred_region
              %s1191 = ssub.s32 4, 1
              loop: start=0, step=1, limit=1
              $region314: #{custom-call.22} parent=312 // loop_pre_header
                _
              $region315: #{custom-call.22} parent=312 // loop_header
                %s1193 = sphi 0, %s1197
                %p1194 = scmp.ge.s32.totalorder %s1193, 1
                %s1198 = sphi %s1015, %s1015
                %s1199 = sphi %s1169, %s1169
              $region316: #{custom-call.22} parent=312 // loop_header_branch
                %1196 = sbr.rel (%p1194) target = $region320
              $region317: #{custom-call.22} parent=312 // loop_body
                %v1200 = vld [vmem:[%s1198] sm:%s1191]
                %1201 = vst [vmem:[%s1199] sm:%s1191] %v1200
              $region318: #{custom-call.22} parent=312 // loop_footer
                %s1197 = sadd.s32 1, %s1193
              $region319: #{custom-call.22} parent=312 // loop_footer_branch
                %1192 = sbr.rel target = $region315
              $region320: #{custom-call.22} parent=312 // loop_exit
                _
            $region313: #{custom-call.22} parent=297 // pred_fallthru
              _
          $region298: #{custom-call.22} parent=293 // pred_fallthru
            _
          // Predicated region
          $region299: #{custom-call.22} parent=293 // pred_check
            _
          $region300: #{custom-call.22} parent=293 // pred_check_branch
            %1175 = sbr.rel (0) target = $region302
          $region301: #{custom-call.22} parent=293 // pred_region
            %s1177 = ssub.s32 4, 1
            loop: start=0, step=1, limit=1
            $region303: #{custom-call.22} parent=301 // loop_pre_header
              _
            $region304: #{custom-call.22} parent=301 // loop_header
              %s1179 = sphi 0, %s1183
              %p1180 = scmp.ge.s32.totalorder %s1179, 1
              %s1184 = sphi %s1015, %s1015
              %s1185 = sphi %s1169, %s1169
            $region305: #{custom-call.22} parent=301 // loop_header_branch
              %1182 = sbr.rel (%p1180) target = $region309
            $region306: #{custom-call.22} parent=301 // loop_body
              %v1186 = vld [vmem:[%s1184] sm:%s1177]
              %1187 = vst [vmem:[%s1185] sm:%s1177] %v1186
            $region307: #{custom-call.22} parent=301 // loop_footer
              %s1183 = sadd.s32 1, %s1179
            $region308: #{custom-call.22} parent=301 // loop_footer_branch
              %1178 = sbr.rel target = $region304
            $region309: #{custom-call.22} parent=301 // loop_exit
              _
          $region302: #{custom-call.22} parent=293 // pred_fallthru
            _
        $region294: #{custom-call.22} parent=139 // pred_fallthru
          _
        %1202 = vnop
        %s1203 = smul.addr %s17, 2
        %s1204 = scalar_lea.vmem %s9, %s1203
        // Predicated region
        $region321: #{custom-call.22} parent=139 // pred_check
          _
        $region322: #{custom-call.22} parent=139 // pred_check_branch
          %1206 = sbr.rel (0) target = $region324
        $region323: #{custom-call.22} parent=139 // pred_region
          // Predicated region
          $region325: #{custom-call.22} parent=323 // pred_check
            _
          $region326: #{custom-call.22} parent=323 // pred_check_branch
            %1208 = sbr.rel target = $region328
          $region327: #{custom-call.22} parent=323 // pred_region
            // Predicated region
            $region340: #{custom-call.22} parent=327 // pred_check
              _
            $region341: #{custom-call.22} parent=327 // pred_check_branch
              %1224 = sbr.rel (0) target = $region343
            $region342: #{custom-call.22} parent=327 // pred_region
              %s1226 = ssub.s32 4, 1
              loop: start=0, step=1, limit=1
              $region344: #{custom-call.22} parent=342 // loop_pre_header
                _
              $region345: #{custom-call.22} parent=342 // loop_header
                %s1228 = sphi 0, %s1232
                %p1229 = scmp.ge.s32.totalorder %s1228, 1
                %s1233 = sphi %s1019, %s1019
                %s1234 = sphi %s1204, %s1204
              $region346: #{custom-call.22} parent=342 // loop_header_branch
                %1231 = sbr.rel (%p1229) target = $region350
              $region347: #{custom-call.22} parent=342 // loop_body
                %v1235 = vld [vmem:[%s1233] sm:%s1226]
                %1236 = vst [vmem:[%s1234] sm:%s1226] %v1235
              $region348: #{custom-call.22} parent=342 // loop_footer
                %s1232 = sadd.s32 1, %s1228
              $region349: #{custom-call.22} parent=342 // loop_footer_branch
                %1227 = sbr.rel target = $region345
              $region350: #{custom-call.22} parent=342 // loop_exit
                _
            $region343: #{custom-call.22} parent=327 // pred_fallthru
              _
          $region328: #{custom-call.22} parent=323 // pred_fallthru
            _
          // Predicated region
          $region329: #{custom-call.22} parent=323 // pred_check
            _
          $region330: #{custom-call.22} parent=323 // pred_check_branch
            %1210 = sbr.rel (0) target = $region332
          $region331: #{custom-call.22} parent=323 // pred_region
            %s1212 = ssub.s32 4, 1
            loop: start=0, step=1, limit=1
            $region333: #{custom-call.22} parent=331 // loop_pre_header
              _
            $region334: #{custom-call.22} parent=331 // loop_header
              %s1214 = sphi 0, %s1218
              %p1215 = scmp.ge.s32.totalorder %s1214, 1
              %s1219 = sphi %s1019, %s1019
              %s1220 = sphi %s1204, %s1204
            $region335: #{custom-call.22} parent=331 // loop_header_branch
              %1217 = sbr.rel (%p1215) target = $region339
            $region336: #{custom-call.22} parent=331 // loop_body
              %v1221 = vld [vmem:[%s1219] sm:%s1212]
              %1222 = vst [vmem:[%s1220] sm:%s1212] %v1221
            $region337: #{custom-call.22} parent=331 // loop_footer
              %s1218 = sadd.s32 1, %s1214
            $region338: #{custom-call.22} parent=331 // loop_footer_branch
              %1213 = sbr.rel target = $region334
            $region339: #{custom-call.22} parent=331 // loop_exit
              _
          $region332: #{custom-call.22} parent=323 // pred_fallthru
            _
        $region324: #{custom-call.22} parent=139 // pred_fallthru
          _
        %1237 = vnop
      $region140: #{custom-call.22} parent=5 // pred_fallthru
        _
      %p1238 = scmp.le.s32.totalorder 2, %s12
      // Predicated region
      $region351: #{custom-call.22} parent=5 // pred_check
        %p1239 = pneg %p1238
      $region352: #{custom-call.22} parent=5 // pred_check_branch
        %1241 = sbr.rel (%p1239) target = $region354
      $region353: #{custom-call.22} parent=5 // pred_region
        %s1242 = ssub.s32 %s12, 2
        // Predicated region
        $region355: #{custom-call.22} parent=353 // pred_check
          %p1243 = pneg %p43
        $region356: #{custom-call.22} parent=353 // pred_check_branch
          %1245 = sbr.rel (%p1243) target = $region358
        $region357: #{custom-call.22} parent=353 // pred_region
          %s1246 = sand.u32 %s28, 1
          %s1247 = sand.u32 %s28, 1
          %s1248 = smul.addr %s1247, 8
          %s1249 = scalar_lea.vmem [#allocation8], %s1248
        $region358: #{custom-call.22} parent=353 // pred_fallthru
          _
        // Predicated region
        $region359: #{custom-call.22} parent=353 // pred_check
          %p1250 = pneg %p71
        $region360: #{custom-call.22} parent=353 // pred_check_branch
          %1252 = sbr.rel (%p1250) target = $region362
        $region361: #{custom-call.22} parent=353 // pred_region
          %s1253 = sand.u32 %s56, 1
          %s1254 = sand.u32 %s56, 1
          %s1255 = smul.addr %s1254, 8
          %s1256 = scalar_lea.vmem [#allocation9], %s1255
        $region362: #{custom-call.22} parent=353 // pred_fallthru
          _
        %s1257 = sand.u32 %s18, 1
        %s1258 = sand.u32 %s18, 1
        %s1259 = smul.addr %s1258, 2
        %s1260 = scalar_lea.vmem [#allocation11], %s1259
        %s1261 = sand.u32 %s18, 1
        %s1262 = sand.u32 %s18, 1
        %s1263 = smul.addr %s1262, 2
        %s1264 = scalar_lea.vmem [#allocation13], %s1263
        %s1265 = sand.u32 %s18, 1
        %s1266 = sand.u32 %s18, 1
        %s1267 = smul.addr %s1266, 2
        %s1268 = scalar_lea.vmem [#allocation15], %s1267
        %s1269 = sand.u32 %s18, 1
        %s1270 = sand.u32 %s18, 1
        %s1271 = smul.addr %s1270, 2
        %s1272 = scalar_lea.vmem [#allocation17], %s1271
      $region354: #{custom-call.22} parent=5 // pred_fallthru
        _
    $region6: #{custom-call.22} parent=1 // loop_footer
      %s16 = sadd.s32 1, %s12
    $region7: #{custom-call.22} parent=1 // loop_footer_branch
      %11 = sbr.rel target = $region3
    $region8: #{custom-call.22} parent=1 // loop_exit
      _

// kernel: reverse
$region0: #{reverse}
  %s0 = inlined_call_operand.vmem [shape: f32[48,3], index: 0, kind: input, shape index: {}]
  %s1 = inlined_call_operand.vmem [shape: f32[48,3], index: 1, kind: output, shape index: {}]
  %v2 = vlaneseq
  %v3 = vsub.s32 2, %v2
  %4 = vset.pattern.permute.xlu0 %v3
  $region1: #{reverse} parent=0
    #allocation0 [shape = 'u8[24576]{0}', space=vmem, size = 0x6000, scoped, tag = 'operand span for operand 0']
    #allocation1 [shape = 'u8[24576]{0}', space=vmem, size = 0x6000, scoped, tag = 'operand span for operand 1']
    // Predicated region
    $region2: #{reverse} parent=1 // pred_check
      _
    $region3: #{reverse} parent=1 // pred_check_branch
      %6 = sbr.rel (0) target = $region5
    $region4: #{reverse} parent=1 // pred_region
      // Predicated region
      $region6: #{reverse} parent=4 // pred_check
        _
      $region7: #{reverse} parent=4 // pred_check_branch
        %8 = sbr.rel (0) target = $region9
      $region8: #{reverse} parent=4 // pred_region
        // Predicated region
        $region21: #{reverse} parent=8 // pred_check
          _
        $region22: #{reverse} parent=8 // pred_check_branch
          %34 = sbr.rel (0) target = $region24
        $region23: #{reverse} parent=8 // pred_region
          loop: start=0, step=1, limit=1
          $region25: #{reverse} parent=23 // loop_pre_header
            _
          $region26: #{reverse} parent=23 // loop_header
            %s36 = sphi 0, %s40
            %p37 = scmp.ge.s32.totalorder %s36, 1
            %s41 = sphi %s0, %s0
            %s42 = sphi [#allocation0], [#allocation0]
          $region27: #{reverse} parent=23 // loop_header_branch
            %39 = sbr.rel (%p37) target = $region31
          $region28: #{reverse} parent=23 // loop_body
            %v43 = vld [vmem:[%s41] sm:$0xff]
            %44 = vst [vmem:[%s42] sm:$0xff] %v43
            %v45 = vld [vmem:[%s41 + $0x8] sm:$0xff]
            %46 = vst [vmem:[%s42 + $0x8] sm:$0xff] %v45
            %v47 = vld [vmem:[%s41 + $0x10] sm:$0xff]
            %48 = vst [vmem:[%s42 + $0x10] sm:$0xff] %v47
            %v49 = vld [vmem:[%s41 + $0x18] sm:$0xff]
            %50 = vst [vmem:[%s42 + $0x18] sm:$0xff] %v49
            %v51 = vld [vmem:[%s41 + $0x20] sm:$0xff]
            %52 = vst [vmem:[%s42 + $0x20] sm:$0xff] %v51
            %v53 = vld [vmem:[%s41 + $0x28] sm:$0xff]
            %54 = vst [vmem:[%s42 + $0x28] sm:$0xff] %v53
          $region29: #{reverse} parent=23 // loop_footer
            %s40 = sadd.s32 1, %s36
          $region30: #{reverse} parent=23 // loop_footer_branch
            %35 = sbr.rel target = $region26
          $region31: #{reverse} parent=23 // loop_exit
            _
        $region24: #{reverse} parent=8 // pred_fallthru
          _
        // Predicated region
        $region32: #{reverse} parent=8 // pred_check
          _
        $region33: #{reverse} parent=8 // pred_check_branch
          %56 = sbr.rel target = $region35
        $region34: #{reverse} parent=8 // pred_region
          _
        $region35: #{reverse} parent=8 // pred_fallthru
          _
      $region9: #{reverse} parent=4 // pred_fallthru
        _
      // Predicated region
      $region10: #{reverse} parent=4 // pred_check
        _
      $region11: #{reverse} parent=4 // pred_check_branch
        %10 = sbr.rel target = $region13
      $region12: #{reverse} parent=4 // pred_region
        %s12 = ssub.s32 256, 1
        loop: start=0, step=1, limit=1
        $region14: #{reverse} parent=12 // loop_pre_header
          _
        $region15: #{reverse} parent=12 // loop_header
          %s14 = sphi 0, %s18
          %p15 = scmp.ge.s32.totalorder %s14, 1
          %s19 = sphi %s0, %s0
          %s20 = sphi [#allocation0], [#allocation0]
        $region16: #{reverse} parent=12 // loop_header_branch
          %17 = sbr.rel (%p15) target = $region20
        $region17: #{reverse} parent=12 // loop_body
          %v21 = vld [vmem:[%s19] sm:%s12]
          %22 = vst [vmem:[%s20] sm:%s12] %v21
          %v23 = vld [vmem:[%s19 + $0x8] sm:%s12]
          %24 = vst [vmem:[%s20 + $0x8] sm:%s12] %v23
          %v25 = vld [vmem:[%s19 + $0x10] sm:%s12]
          %26 = vst [vmem:[%s20 + $0x10] sm:%s12] %v25
          %v27 = vld [vmem:[%s19 + $0x18] sm:%s12]
          %28 = vst [vmem:[%s20 + $0x18] sm:%s12] %v27
          %v29 = vld [vmem:[%s19 + $0x20] sm:%s12]
          %30 = vst [vmem:[%s20 + $0x20] sm:%s12] %v29
          %v31 = vld [vmem:[%s19 + $0x28] sm:%s12]
          %32 = vst [vmem:[%s20 + $0x28] sm:%s12] %v31
        $region18: #{reverse} parent=12 // loop_footer
          %s18 = sadd.s32 1, %s14
        $region19: #{reverse} parent=12 // loop_footer_branch
          %13 = sbr.rel target = $region15
        $region20: #{reverse} parent=12 // loop_exit
          _
      $region13: #{reverse} parent=4 // pred_fallthru
        _
    $region5: #{reverse} parent=1 // pred_fallthru
      _
    %57 = vnop
    %v58 = vld [vmem:[#allocation0] sm:$0xff]
    %59 = vperm.xlu0 %4, %v58
    %v60 = vpop.permute.xlu0 %59
    %61 = vst [vmem:[#allocation1] sm:$0xff] %v60
    %s62 = scalar_lea.vmem [#allocation1], 8
    %s63 = scalar_lea.vmem [#allocation0], 8
    %v64 = vld [vmem:[%s63] sm:$0xff]
    %65 = vperm.xlu0 %4, %v64
    %v66 = vpop.permute.xlu0 %65
    %67 = vst [vmem:[%s62] sm:$0xff] %v66
    %s68 = scalar_lea.vmem [#allocation1], 16
    %s69 = scalar_lea.vmem [#allocation0], 16
    %v70 = vld [vmem:[%s69] sm:$0xff]
    %71 = vperm.xlu0 %4, %v70
    %v72 = vpop.permute.xlu0 %71
    %73 = vst [vmem:[%s68] sm:$0xff] %v72
    %s74 = scalar_lea.vmem [#allocation1], 24
    %s75 = scalar_lea.vmem [#allocation0], 24
    %v76 = vld [vmem:[%s75] sm:$0xff]
    %77 = vperm.xlu0 %4, %v76
    %v78 = vpop.permute.xlu0 %77
    %79 = vst [vmem:[%s74] sm:$0xff] %v78
    %s80 = scalar_lea.vmem [#allocation1], 32
    %s81 = scalar_lea.vmem [#allocation0], 32
    %v82 = vld [vmem:[%s81] sm:$0xff]
    %83 = vperm.xlu0 %4, %v82
    %v84 = vpop.permute.xlu0 %83
    %85 = vst [vmem:[%s80] sm:$0xff] %v84
    %s86 = scalar_lea.vmem [#allocation1], 40
    %s87 = scalar_lea.vmem [#allocation0], 40
    %v88 = vld [vmem:[%s87] sm:$0xff]
    %89 = vperm.xlu0 %4, %v88
    %v90 = vpop.permute.xlu0 %89
    %91 = vst [vmem:[%s86] sm:$0xff] %v90
    // Predicated region
    $region36: #{reverse} parent=1 // pred_check
      _
    $region37: #{reverse} parent=1 // pred_check_branch
      %93 = sbr.rel (0) target = $region39
    $region38: #{reverse} parent=1 // pred_region
      // Predicated region
      $region40: #{reverse} parent=38 // pred_check
        _
      $region41: #{reverse} parent=38 // pred_check_branch
        %95 = sbr.rel (0) target = $region43
      $region42: #{reverse} parent=38 // pred_region
        // Predicated region
        $region55: #{reverse} parent=42 // pred_check
          _
        $region56: #{reverse} parent=42 // pred_check_branch
          %121 = sbr.rel (0) target = $region58
        $region57: #{reverse} parent=42 // pred_region
          loop: start=0, step=1, limit=1
          $region59: #{reverse} parent=57 // loop_pre_header
            _
          $region60: #{reverse} parent=57 // loop_header
            %s123 = sphi 0, %s127
            %p124 = scmp.ge.s32.totalorder %s123, 1
            %s128 = sphi [#allocation1], [#allocation1]
            %s129 = sphi %s1, %s1
          $region61: #{reverse} parent=57 // loop_header_branch
            %126 = sbr.rel (%p124) target = $region65
          $region62: #{reverse} parent=57 // loop_body
            %v130 = vld [vmem:[%s128] sm:$0xff]
            %131 = vst [vmem:[%s129] sm:$0xff] %v130
            %v132 = vld [vmem:[%s128 + $0x8] sm:$0xff]
            %133 = vst [vmem:[%s129 + $0x8] sm:$0xff] %v132
            %v134 = vld [vmem:[%s128 + $0x10] sm:$0xff]
            %135 = vst [vmem:[%s129 + $0x10] sm:$0xff] %v134
            %v136 = vld [vmem:[%s128 + $0x18] sm:$0xff]
            %137 = vst [vmem:[%s129 + $0x18] sm:$0xff] %v136
            %v138 = vld [vmem:[%s128 + $0x20] sm:$0xff]
            %139 = vst [vmem:[%s129 + $0x20] sm:$0xff] %v138
            %v140 = vld [vmem:[%s128 + $0x28] sm:$0xff]
            %141 = vst [vmem:[%s129 + $0x28] sm:$0xff] %v140
          $region63: #{reverse} parent=57 // loop_footer
            %s127 = sadd.s32 1, %s123
          $region64: #{reverse} parent=57 // loop_footer_branch
            %122 = sbr.rel target = $region60
          $region65: #{reverse} parent=57 // loop_exit
            _
        $region58: #{reverse} parent=42 // pred_fallthru
          _
        // Predicated region
        $region66: #{reverse} parent=42 // pred_check
          _
        $region67: #{reverse} parent=42 // pred_check_branch
          %143 = sbr.rel target = $region69
        $region68: #{reverse} parent=42 // pred_region
          _
        $region69: #{reverse} parent=42 // pred_fallthru
          _
      $region43: #{reverse} parent=38 // pred_fallthru
        _
      // Predicated region
      $region44: #{reverse} parent=38 // pred_check
        _
      $region45: #{reverse} parent=38 // pred_check_branch
        %97 = sbr.rel target = $region47
      $region46: #{reverse} parent=38 // pred_region
        %s99 = ssub.s32 256, 1
        loop: start=0, step=1, limit=1
        $region48: #{reverse} parent=46 // loop_pre_header
          _
        $region49: #{reverse} parent=46 // loop_header
          %s101 = sphi 0, %s105
          %p102 = scmp.ge.s32.totalorder %s101, 1
          %s106 = sphi [#allocation1], [#allocation1]
          %s107 = sphi %s1, %s1
        $region50: #{reverse} parent=46 // loop_header_branch
          %104 = sbr.rel (%p102) target = $region54
        $region51: #{reverse} parent=46 // loop_body
          %v108 = vld [vmem:[%s106] sm:%s99]
          %109 = vst [vmem:[%s107] sm:%s99] %v108
          %v110 = vld [vmem:[%s106 + $0x8] sm:%s99]
          %111 = vst [vmem:[%s107 + $0x8] sm:%s99] %v110
          %v112 = vld [vmem:[%s106 + $0x10] sm:%s99]
          %113 = vst [vmem:[%s107 + $0x10] sm:%s99] %v112
          %v114 = vld [vmem:[%s106 + $0x18] sm:%s99]
          %115 = vst [vmem:[%s107 + $0x18] sm:%s99] %v114
          %v116 = vld [vmem:[%s106 + $0x20] sm:%s99]
          %117 = vst [vmem:[%s107 + $0x20] sm:%s99] %v116
          %v118 = vld [vmem:[%s106 + $0x28] sm:%s99]
          %119 = vst [vmem:[%s107 + $0x28] sm:%s99] %v118
        $region52: #{reverse} parent=46 // loop_footer
          %s105 = sadd.s32 1, %s101
        $region53: #{reverse} parent=46 // loop_footer_branch
          %100 = sbr.rel target = $region49
        $region54: #{reverse} parent=46 // loop_exit
          _
      $region47: #{reverse} parent=38 // pred_fallthru
        _
    $region39: #{reverse} parent=1 // pred_fallthru
      _
    %144 = vnop

// kernel: custom-call.16
$region0: #{custom-call.16}
  %s0 = inlined_call_operand.vmem [shape: f32[48,3,3], index: 0, kind: input, shape index: {}]
  %s1 = inlined_call_operand.vmem [shape: f32[48,3,3], index: 1, kind: output, shape index: {0}]
  %s2 = inlined_call_operand.vmem [shape: f32[48,3], index: 2, kind: output, shape index: {1}]
  %3 = xla_tuple %s1, %s2
  $region1: #{custom-call.16} parent=0
    #allocation0 [shape = 'u8[12288]{0}', space=vmem, size = 0x3000, scoped, tag = 'operand span for operand 0']
    #allocation1 [shape = 'u8[6144]{0}', space=vmem, size = 0x1800, scoped, tag = 'packed  for operand 0']
    #allocation2 [shape = 'u8[12288]{0}', space=vmem, size = 0x3000, scoped, tag = 'operand span for operand 1']
    #allocation3 [shape = 'u8[6144]{0}', space=vmem, size = 0x1800, scoped, tag = 'packed  for operand 1']
    #allocation4 [shape = 'u8[4096]{0}', space=vmem, size = 0x1000, scoped, tag = 'operand span for operand 2']
    #allocation5 [shape = 'u8[2048]{0}', space=vmem, size = 0x800, scoped, tag = 'packed  for operand 2']
    // Predicated region
    $region2: #{custom-call.16} parent=1 // pred_check
      _
    $region3: #{custom-call.16} parent=1 // pred_check_branch
      %5 = sbr.rel (0) target = $region5
    $region4: #{custom-call.16} parent=1 // pred_region
      // Predicated region
      $region6: #{custom-call.16} parent=4 // pred_check
        _
      $region7: #{custom-call.16} parent=4 // pred_check_branch
        %7 = sbr.rel target = $region9
      $region8: #{custom-call.16} parent=4 // pred_region
        // Predicated region
        $region21: #{custom-call.16} parent=8 // pred_check
          _
        $region22: #{custom-call.16} parent=8 // pred_check_branch
          %27 = sbr.rel (0) target = $region24
        $region23: #{custom-call.16} parent=8 // pred_region
          loop: start=0, step=1, limit=1
          $region25: #{custom-call.16} parent=23 // loop_pre_header
            _
          $region26: #{custom-call.16} parent=23 // loop_header
            %s29 = sphi 0, %s33
            %p30 = scmp.ge.s32.totalorder %s29, 1
            %s34 = sphi %s0, %s0
            %s35 = sphi [#allocation1], [#allocation1]
          $region27: #{custom-call.16} parent=23 // loop_header_branch
            %32 = sbr.rel (%p30) target = $region31
          $region28: #{custom-call.16} parent=23 // loop_body
            _
          $region29: #{custom-call.16} parent=23 // loop_footer
            %s33 = sadd.s32 1, %s29
          $region30: #{custom-call.16} parent=23 // loop_footer_branch
            %28 = sbr.rel target = $region26
          $region31: #{custom-call.16} parent=23 // loop_exit
            _
          %s37 = ssub.s32 16, 1
          loop: start=0, step=1, limit=1
          $region32: #{custom-call.16} parent=23 // loop_pre_header
            _
          $region33: #{custom-call.16} parent=23 // loop_header
            %s39 = sphi 0, %s43
            %p40 = scmp.ge.s32.totalorder %s39, 1
            %s44 = sphi %s0, %s0
            %s45 = sphi [#allocation1], [#allocation1]
          $region34: #{custom-call.16} parent=23 // loop_header_branch
            %42 = sbr.rel (%p40) target = $region38
          $region35: #{custom-call.16} parent=23 // loop_body
            %v46 = vld [vmem:[%s44] sm:%s37]
            %47 = vst [vmem:[%s45] sm:%s37] %v46
            %v48 = vld [vmem:[%s44 + $0x4] sm:%s37]
            %49 = vst [vmem:[%s45 + $0x4] sm:%s37] %v48
            %v50 = vld [vmem:[%s44 + $0x8] sm:%s37]
            %51 = vst [vmem:[%s45 + $0x8] sm:%s37] %v50
          $region36: #{custom-call.16} parent=23 // loop_footer
            %s43 = sadd.s32 1, %s39
          $region37: #{custom-call.16} parent=23 // loop_footer_branch
            %38 = sbr.rel target = $region33
          $region38: #{custom-call.16} parent=23 // loop_exit
            _
        $region24: #{custom-call.16} parent=8 // pred_fallthru
          _
      $region9: #{custom-call.16} parent=4 // pred_fallthru
        _
      // Predicated region
      $region10: #{custom-call.16} parent=4 // pred_check
        _
      $region11: #{custom-call.16} parent=4 // pred_check_branch
        %9 = sbr.rel (0) target = $region13
      $region12: #{custom-call.16} parent=4 // pred_region
        %s11 = ssub.s32 16, 1
        loop: start=0, step=1, limit=1
        $region14: #{custom-call.16} parent=12 // loop_pre_header
          _
        $region15: #{custom-call.16} parent=12 // loop_header
          %s13 = sphi 0, %s17
          %p14 = scmp.ge.s32.totalorder %s13, 1
          %s18 = sphi %s0, %s0
          %s19 = sphi [#allocation1], [#allocation1]
        $region16: #{custom-call.16} parent=12 // loop_header_branch
          %16 = sbr.rel (%p14) target = $region20
        $region17: #{custom-call.16} parent=12 // loop_body
          %v20 = vld [vmem:[%s18] sm:%s11]
          %21 = vst [vmem:[%s19] sm:%s11] %v20
          %v22 = vld [vmem:[%s18 + $0x4] sm:%s11]
          %23 = vst [vmem:[%s19 + $0x4] sm:%s11] %v22
          %v24 = vld [vmem:[%s18 + $0x8] sm:%s11]
          %25 = vst [vmem:[%s19 + $0x8] sm:%s11] %v24
        $region18: #{custom-call.16} parent=12 // loop_footer
          %s17 = sadd.s32 1, %s13
        $region19: #{custom-call.16} parent=12 // loop_footer_branch
          %12 = sbr.rel target = $region15
        $region20: #{custom-call.16} parent=12 // loop_exit
          _
      $region13: #{custom-call.16} parent=4 // pred_fallthru
        _
    $region5: #{custom-call.16} parent=1 // pred_fallthru
      _
    %52 = vnop
    %s54 = sshll.u32 1, 4
    %s55 = ssub.s32 %s54, 1
    %s56 = smul.addr 4, 2
    %s57 = scalar_lea.vmem [#allocation1], %s56
    %v58 = vld [vmem:[%s57] sm:%s55]
    %s59 = scalar_lea.vmem [#allocation0], 16
    %60 = vst [vmem:[%s59] sm:%s55] %v58
    %s61 = scalar_lea.vmem [#allocation1], 4
    %v62 = vld [vmem:[%s61] sm:%s55]
    %s63 = scalar_lea.vmem [#allocation0], 8
    %64 = vst [vmem:[%s63] sm:%s55] %v62
    %v65 = vld [vmem:[#allocation1] sm:%s55]
    %66 = vst [vmem:[#allocation0] sm:%s55] %v65
    %v67 = vld [vmem:[#allocation0] sm:$0xff]
    %68 = vst [vmem:[#allocation2] sm:$0xff] %v67
    %s69 = scalar_lea.vmem [#allocation2], 8
    %s70 = scalar_lea.vmem [#allocation0], 8
    %v71 = vld [vmem:[%s70] sm:$0xff]
    %72 = vst [vmem:[%s69] sm:$0xff] %v71
    %s73 = scalar_lea.vmem [#allocation2], 16
    %s74 = scalar_lea.vmem [#allocation0], 16
    %v75 = vld [vmem:[%s74] sm:$0xff]
    %76 = vst [vmem:[%s73] sm:$0xff] %v75
    $region39: #{custom-call.16} parent=1
      #allocation6 [shape = 'f32[3,128]{1,0}', space=vmem, size = 0x1000, scoped, tag = 'scratch for Householder reflectors']
      %77 = vst [vmem:[#allocation4] sm:$0xff] 0.0
      loop: start=0, step=1, limit=3
      $region40: #{custom-call.16} parent=39 // loop_pre_header
        _
      $region41: #{custom-call.16} parent=39 // loop_header
        %s79 = sphi 0, %s83
        %p80 = scmp.ge.s32.totalorder %s79, 3
      $region42: #{custom-call.16} parent=39 // loop_header_branch
        %82 = sbr.rel (%p80) target = $region46
      $region43: #{custom-call.16} parent=39 // loop_body
        %s84 = smul.addr %s79, 8
        %s85 = scalar_lea.vmem [#allocation2], %s84
        %v86 = vld [vmem:[%s85] sm:$0xff]
        %v87 = vlaneseq
        %v88 = vshrl.u32 %v87, 7
        %v90 = vstv %s79
        %vm91 = vcmp.gt.s32.totalorder %v88, %v90
        %vm92 = vcmp.lt.s32.totalorder %v88, 3
        %vm93 = vmand %vm91, %vm92
        %v94 = vsel %vm93, %v86, 0.0
        %v95 = vmul.f32 %v94, %v94
        %v96 = vrot.slane %v95, 4
        %v97 = vadd.f32 %v95, %v96
        %v98 = vrot.slane %v97, 2
        %v99 = vadd.f32 %v97, %v98
        %v100 = vrot.slane %v99, 1
        %v101 = vadd.f32 %v99, %v100
        %v102 = vrsqrt.pop %v101
        %v103 = vmul.f32 %v101, %v102
        %vm104 = vcmp.eq.f32.partialorder %v101, inf
        %v105 = vsel %vm104, %v101, %v103
        %vm106 = vcmp.eq.f32.partialorder %v101, 0.0
        %v107 = vand.u32 %v101, 2147483648
        %v108 = vsel %vm106, %v107, %v105
        %vm109 = vcmp.eq.f32.partialorder %v101, 0.0
        %s110 = sshrl.u32 %s79, 3
        %s111 = sand.u32 %s79, 7
        %s112 = smul.addr %s110, 8
        %s113 = sadd.s32 %s111, %s112
        %s114 = scalar_lea.vmem %s85, %s113 [#allocation2]
        %v115 = vld [vmem:[%s114] ss:$0 sm:$0xff]
        %v116 = vand.u32 2147483647, %v115
        %v117 = vmax.f32 %v116, 0.0
        %v118 = vand.u32 2147483647, %v108
        %v119 = vmax.f32 %v117, %v118
        %v120 = vrcp.pop %v119
        %v121 = vmul.f32 %v116, %v120
        %v122 = vmul.f32 %v121, %v121
        %v123 = vrcp.pop %v119
        %v124 = vmul.f32 0.0, %v123
        %v125 = vmul.f32 %v124, %v124
        %v126 = vadd.f32 %v122, %v125
        %v127 = vrcp.pop %v119
        %v128 = vmul.f32 %v118, %v127
        %v129 = vmul.f32 %v128, %v128
        %v130 = vadd.f32 %v126, %v129
        %vm131 = vcmp.eq.f32.partialorder %v119, 0.0
        %v132 = vrsqrt.pop %v130
        %v133 = vmul.f32 %v130, %v132
        %vm134 = vcmp.eq.f32.partialorder %v130, inf
        %v135 = vsel %vm134, %v130, %v133
        %vm136 = vcmp.eq.f32.partialorder %v130, 0.0
        %v137 = vand.u32 %v130, 2147483648
        %v138 = vsel %vm136, %v137, %v135
        %v139 = vmul.f32 %v119, %v138
        %v140 = vsel %vm131, 0.0, %v139
        %vm141 = vcmp.lt.f32.partialorder %v115, 0.0
        %v142 = vxor.u32 %v140, 2147483648
        %v143 = vsel %vm141, %v140, %v142
        %v144 = vsub.f32 %v143, %v115
        %v145 = vrcp.pop %v143
        %v146 = vmul.f32 %v144, %v145
        %v147 = vsel %vm109, %v115, %v143
        %v148 = vsel %vm109, 0.0, %v146
        %v149 = vsub.f32 %v115, %v147
        %s150 = smov %s85
        %v151 = vlaneseq
        %v152 = vshrl.u32 %v151, 7
        %v153 = vmov %v152
        %v154 = vld [vmem:[%s150] sm:$0xff]
        %v156 = vstv %s79
        %vm157 = vcmp.gt.s32.totalorder %v153, %v156
        %vm158 = vcmp.lt.s32.totalorder %v153, 3
        %vm159 = vmand %vm157, %vm158
        %v160 = vsel %vm159, %v154, 0.0
        %v161 = vrcp.pop %v149
        %v162 = vmul.f32 %v160, %v161
        %v163 = vsel %vm109, 0.0, %v162
        %164 = vst [vmem:[#allocation6] sm:$0xff] %v163
        %s165 = scalar_lea.vmem [#allocation6], %s79
        %166 = vst [vmem:[%s165] sm:$0x1] 1.0
        %s167 = sshrl.u32 %s79, 3
        %s168 = sand.u32 %s79, 7
        %s169 = smul.addr %s167, 8
        %s170 = sadd.s32 %s168, %s169
        %s171 = scalar_lea.vmem [#allocation4], %s170
        %172 = vst [vmem:[%s171] sm:$0x1] %v148
        %s173 = sadd.s32 %s79, 1
        // While loop
        $region47: #{custom-call.16} parent=43 // loop_pre_header
          _
        $region48: #{custom-call.16} parent=43 // loop_header
          %s175 = sphi %s173, %s177
          %p176 = scmp.ge.s32.totalorder %s175, 3
        $region49: #{custom-call.16} parent=43 // loop_header_branch
          %179 = sbr.rel (%p176) target = $region53
        $region50: #{custom-call.16} parent=43 // loop_body
          %v180 = vlaneseq
          %v181 = vshrl.u32 %v180, 7
          %v182 = vmov %v181
          %v184 = vld [vmem:[#allocation6] sm:$0xff]
          %s185 = smul.addr %s175, 8
          %s186 = scalar_lea.vmem [#allocation2], %s185
          %v187 = vld [vmem:[%s186] sm:$0xff]
          %v188 = vmul.f32 %v184, %v187
          %vm189 = vcmp.lt.s32.totalorder %v182, 3
          %v190 = vsel %vm189, %v188, 0.0
          %v191 = vrot.slane %v190, 4
          %v192 = vadd.f32 %v190, %v191
          %v193 = vrot.slane %v192, 2
          %v194 = vadd.f32 %v192, %v193
          %v195 = vrot.slane %v194, 1
          %v196 = vadd.f32 %v194, %v195
          %v197 = vlaneseq
          %v198 = vshrl.u32 %v197, 7
          %v199 = vmov %v198
          %v200 = vmul.f32 %v196, %v148
          %v202 = vld [vmem:[#allocation6] sm:$0xff]
          %v203 = vmul.f32 %v202, %v200
          %s204 = smul.addr %s175, 8
          %s205 = scalar_lea.vmem [#allocation2], %s204
          %v206 = vld [vmem:[%s205] sm:$0xff]
          %v207 = vstv %s79
          %vm208 = vcmp.ge.s32.totalorder %v199, %v207
          %v209 = vsub.f32 %v206, %v203
          %v210 = vsel %vm208, %v209, %v206
          %211 = vst [vmem:[%s205] sm:$0xff] %v210
        $region51: #{custom-call.16} parent=43 // loop_footer
          %s177 = sadd.s32 %s175, 1
        $region52: #{custom-call.16} parent=43 // loop_footer_branch
          %174 = sbr.rel target = $region48
        $region53: #{custom-call.16} parent=43 // loop_exit
          _
        %v212 = vlaneseq
        %v213 = vshrl.u32 %v212, 7
        %v214 = vmov %v213
        %v216 = vld [vmem:[#allocation6] sm:$0xff]
        %s217 = smul.addr %s79, 8
        %s218 = scalar_lea.vmem [#allocation2], %s217
        %v219 = vld [vmem:[%s218] sm:$0xff]
        %v220 = vstv %s79
        %vm221 = vcmp.gt.s32.totalorder %v214, %v220
        %v222 = vsel %vm221, %v216, %v219
        %v223 = vstv %s79
        %vm224 = vcmp.eq.s32.totalorder %v214, %v223
        %v225 = vsel %vm224, %v147, %v222
        %226 = vst [vmem:[%s218] sm:$0xff] %v225
      $region44: #{custom-call.16} parent=39 // loop_footer
        %s83 = sadd.s32 1, %s79
      $region45: #{custom-call.16} parent=39 // loop_footer_branch
        %78 = sbr.rel target = $region41
      $region46: #{custom-call.16} parent=39 // loop_exit
        _
    %s228 = sshll.u32 1, 4
    %s229 = ssub.s32 %s228, 1
    %v231 = vld [vmem:[#allocation2] sm:%s229]
    %s232 = sshll.u32 1, 4
    %s233 = ssub.s32 %s232, 1
    %234 = vst [vmem:[#allocation3] sm:%s233] %v231
    %s235 = scalar_lea.vmem [#allocation2], 8
    %v236 = vld [vmem:[%s235] sm:%s229]
    %s237 = sshll.u32 1, 4
    %s238 = ssub.s32 %s237, 1
    %s239 = scalar_lea.vmem [#allocation3], 4
    %240 = vst [vmem:[%s239] sm:%s238] %v236
    %s241 = scalar_lea.vmem [#allocation2], 16
    %v242 = vld [vmem:[%s241] sm:%s229]
    %s243 = sshll.u32 1, 4
    %s244 = ssub.s32 %s243, 1
    %s245 = smul.addr 4, 2
    %s246 = scalar_lea.vmem [#allocation3], %s245
    %247 = vst [vmem:[%s246] sm:%s244] %v242
    %s249 = sshll.u32 1, 4
    %s250 = ssub.s32 %s249, 1
    %v252 = vld [vmem:[#allocation4] sm:%s250]
    %s253 = sshll.u32 1, 4
    %s254 = ssub.s32 %s253, 1
    %255 = vst [vmem:[#allocation5] sm:%s254] %v252
    // Predicated region
    $region54: #{custom-call.16} parent=1 // pred_check
      _
    $region55: #{custom-call.16} parent=1 // pred_check_branch
      %257 = sbr.rel (0) target = $region57
    $region56: #{custom-call.16} parent=1 // pred_region
      // Predicated region
      $region58: #{custom-call.16} parent=56 // pred_check
        _
      $region59: #{custom-call.16} parent=56 // pred_check_branch
        %259 = sbr.rel target = $region61
      $region60: #{custom-call.16} parent=56 // pred_region
        // Predicated region
        $region73: #{custom-call.16} parent=60 // pred_check
          _
        $region74: #{custom-call.16} parent=60 // pred_check_branch
          %279 = sbr.rel (0) target = $region76
        $region75: #{custom-call.16} parent=60 // pred_region
          loop: start=0, step=1, limit=1
          $region77: #{custom-call.16} parent=75 // loop_pre_header
            _
          $region78: #{custom-call.16} parent=75 // loop_header
            %s281 = sphi 0, %s285
            %p282 = scmp.ge.s32.totalorder %s281, 1
            %s286 = sphi [#allocation3], [#allocation3]
            %s287 = sphi %s1, %s1
          $region79: #{custom-call.16} parent=75 // loop_header_branch
            %284 = sbr.rel (%p282) target = $region83
          $region80: #{custom-call.16} parent=75 // loop_body
            _
          $region81: #{custom-call.16} parent=75 // loop_footer
            %s285 = sadd.s32 1, %s281
          $region82: #{custom-call.16} parent=75 // loop_footer_branch
            %280 = sbr.rel target = $region78
          $region83: #{custom-call.16} parent=75 // loop_exit
            _
          %s289 = ssub.s32 16, 1
          loop: start=0, step=1, limit=1
          $region84: #{custom-call.16} parent=75 // loop_pre_header
            _
          $region85: #{custom-call.16} parent=75 // loop_header
            %s291 = sphi 0, %s295
            %p292 = scmp.ge.s32.totalorder %s291, 1
            %s296 = sphi [#allocation3], [#allocation3]
            %s297 = sphi %s1, %s1
          $region86: #{custom-call.16} parent=75 // loop_header_branch
            %294 = sbr.rel (%p292) target = $region90
          $region87: #{custom-call.16} parent=75 // loop_body
            %v298 = vld [vmem:[%s296] sm:%s289]
            %299 = vst [vmem:[%s297] sm:%s289] %v298
            %v300 = vld [vmem:[%s296 + $0x4] sm:%s289]
            %301 = vst [vmem:[%s297 + $0x4] sm:%s289] %v300
            %v302 = vld [vmem:[%s296 + $0x8] sm:%s289]
            %303 = vst [vmem:[%s297 + $0x8] sm:%s289] %v302
          $region88: #{custom-call.16} parent=75 // loop_footer
            %s295 = sadd.s32 1, %s291
          $region89: #{custom-call.16} parent=75 // loop_footer_branch
            %290 = sbr.rel target = $region85
          $region90: #{custom-call.16} parent=75 // loop_exit
            _
        $region76: #{custom-call.16} parent=60 // pred_fallthru
          _
      $region61: #{custom-call.16} parent=56 // pred_fallthru
        _
      // Predicated region
      $region62: #{custom-call.16} parent=56 // pred_check
        _
      $region63: #{custom-call.16} parent=56 // pred_check_branch
        %261 = sbr.rel (0) target = $region65
      $region64: #{custom-call.16} parent=56 // pred_region
        %s263 = ssub.s32 16, 1
        loop: start=0, step=1, limit=1
        $region66: #{custom-call.16} parent=64 // loop_pre_header
          _
        $region67: #{custom-call.16} parent=64 // loop_header
          %s265 = sphi 0, %s269
          %p266 = scmp.ge.s32.totalorder %s265, 1
          %s270 = sphi [#allocation3], [#allocation3]
          %s271 = sphi %s1, %s1
        $region68: #{custom-call.16} parent=64 // loop_header_branch
          %268 = sbr.rel (%p266) target = $region72
        $region69: #{custom-call.16} parent=64 // loop_body
          %v272 = vld [vmem:[%s270] sm:%s263]
          %273 = vst [vmem:[%s271] sm:%s263] %v272
          %v274 = vld [vmem:[%s270 + $0x4] sm:%s263]
          %275 = vst [vmem:[%s271 + $0x4] sm:%s263] %v274
          %v276 = vld [vmem:[%s270 + $0x8] sm:%s263]
          %277 = vst [vmem:[%s271 + $0x8] sm:%s263] %v276
        $region70: #{custom-call.16} parent=64 // loop_footer
          %s269 = sadd.s32 1, %s265
        $region71: #{custom-call.16} parent=64 // loop_footer_branch
          %264 = sbr.rel target = $region67
        $region72: #{custom-call.16} parent=64 // loop_exit
          _
      $region65: #{custom-call.16} parent=56 // pred_fallthru
        _
    $region57: #{custom-call.16} parent=1 // pred_fallthru
      _
    %304 = vnop
    // Predicated region
    $region91: #{custom-call.16} parent=1 // pred_check
      _
    $region92: #{custom-call.16} parent=1 // pred_check_branch
      %306 = sbr.rel (0) target = $region94
    $region93: #{custom-call.16} parent=1 // pred_region
      // Predicated region
      $region95: #{custom-call.16} parent=93 // pred_check
        _
      $region96: #{custom-call.16} parent=93 // pred_check_branch
        %308 = sbr.rel target = $region98
      $region97: #{custom-call.16} parent=93 // pred_region
        // Predicated region
        $region110: #{custom-call.16} parent=97 // pred_check
          _
        $region111: #{custom-call.16} parent=97 // pred_check_branch
          %324 = sbr.rel (0) target = $region113
        $region112: #{custom-call.16} parent=97 // pred_region
          %s326 = ssub.s32 16, 1
          loop: start=0, step=1, limit=1
          $region114: #{custom-call.16} parent=112 // loop_pre_header
            _
          $region115: #{custom-call.16} parent=112 // loop_header
            %s328 = sphi 0, %s332
            %p329 = scmp.ge.s32.totalorder %s328, 1
            %s333 = sphi [#allocation5], [#allocation5]
            %s334 = sphi %s2, %s2
          $region116: #{custom-call.16} parent=112 // loop_header_branch
            %331 = sbr.rel (%p329) target = $region120
          $region117: #{custom-call.16} parent=112 // loop_body
            %v335 = vld [vmem:[%s333] sm:%s326]
            %336 = vst [vmem:[%s334] sm:%s326] %v335
          $region118: #{custom-call.16} parent=112 // loop_footer
            %s332 = sadd.s32 1, %s328
          $region119: #{custom-call.16} parent=112 // loop_footer_branch
            %327 = sbr.rel target = $region115
          $region120: #{custom-call.16} parent=112 // loop_exit
            _
        $region113: #{custom-call.16} parent=97 // pred_fallthru
          _
      $region98: #{custom-call.16} parent=93 // pred_fallthru
        _
      // Predicated region
      $region99: #{custom-call.16} parent=93 // pred_check
        _
      $region100: #{custom-call.16} parent=93 // pred_check_branch
        %310 = sbr.rel (0) target = $region102
      $region101: #{custom-call.16} parent=93 // pred_region
        %s312 = ssub.s32 16, 1
        loop: start=0, step=1, limit=1
        $region103: #{custom-call.16} parent=101 // loop_pre_header
          _
        $region104: #{custom-call.16} parent=101 // loop_header
          %s314 = sphi 0, %s318
          %p315 = scmp.ge.s32.totalorder %s314, 1
          %s319 = sphi [#allocation5], [#allocation5]
          %s320 = sphi %s2, %s2
        $region105: #{custom-call.16} parent=101 // loop_header_branch
          %317 = sbr.rel (%p315) target = $region109
        $region106: #{custom-call.16} parent=101 // loop_body
          %v321 = vld [vmem:[%s319] sm:%s312]
          %322 = vst [vmem:[%s320] sm:%s312] %v321
        $region107: #{custom-call.16} parent=101 // loop_footer
          %s318 = sadd.s32 1, %s314
        $region108: #{custom-call.16} parent=101 // loop_footer_branch
          %313 = sbr.rel target = $region104
        $region109: #{custom-call.16} parent=101 // loop_exit
          _
      $region102: #{custom-call.16} parent=93 // pred_fallthru
        _
    $region94: #{custom-call.16} parent=1 // pred_fallthru
      _
    %337 = vnop

// kernel: sub.212
$region0: #{sub.212}
  #allocation0 [shape = 's32[1]{0}', space=sflag, size = 0x4, scoped, tag = 'scoped memory for sub.212']
  %s0 = inlined_call_operand.vmem [shape: f32[2,3,1], index: 0, kind: input, shape index: {}]
  %s1 = inlined_call_operand.vmem [shape: f32[2,3,1], index: 1, kind: input, shape index: {}]
  %s2 = inlined_call_operand.vmem [shape: f32[2,3,1], index: 2, kind: output, shape index: {}]
  %v3 = vld [vmem:[%s0] sm:$0x3]
  %v4 = vld [vmem:[%s1] sm:$0x3]
  %5 = xla_tuple %v3, %v4
  %6 = xla_tuple %5
  %v7 = vsub.f32 %v3, %v4
  %8 = xla_tuple %v7
  %9 = vst [vmem:[%s2] sm:$0x3] %v7

// kernel: cmr_forward.6
$region0: #{cmr_forward.6}
  #allocation0 [shape = 'u32[]', space=smem, size = 0x4, offset = 0x4, fixed_abs, tag = 'smem constant byte address 0x4 - core index']
  #allocation1 [shape = 'u32[144,128]{1,0:T(1,128)}', space=vmem, size = 0x12000, scoped, tag = 'internal scratch']
  %s0 = inlined_call_operand.vmem [shape: f32[2,10], index: 0, kind: input, shape index: {}]
  %s1 = inlined_call_operand.vmem [shape: f32[2,207], index: 1, kind: input, shape index: {}]
  %s2 = inlined_call_operand.vmem [shape: f32[10,768], index: 2, kind: input, shape index: {}]
  %s3 = inlined_call_operand.vmem [shape: f32[207,768], index: 3, kind: input, shape index: {}]
  %s4 = inlined_call_operand.vmem [shape: f32[1,768], index: 4, kind: input, shape index: {}]
  %s5 = inlined_call_operand.vmem [shape: f32[1,72], index: 5, kind: input, shape index: {}]
  %s6 = inlined_call_operand.vmem [shape: f32[10,72], index: 6, kind: input, shape index: {}]
  %s7 = inlined_call_operand.vmem [shape: f32[2,768], index: 7, kind: output, shape index: {0}]
  %s8 = inlined_call_operand.vmem [shape: f32[2,72], index: 8, kind: output, shape index: {1}]
  %9 = xla_tuple %s7, %s8
  %s10 = sld [smem:[#allocation0]]
  $region46: #{cmr_forward.6} parent=0
    _
  %s12 = ssub.s32 1, %s10
  %s13 = scalar_select 0, %s12, %s10
  // Predicated region
  $region2: #{cmr_forward.6} parent=0 // pred_check
    _
  $region3: #{cmr_forward.6} parent=0 // pred_check_branch
    %15 = sbr.rel (0) target = $region5
  $region4: #{cmr_forward.6} parent=0 // pred_region
    _
  $region5: #{cmr_forward.6} parent=0 // pred_fallthru
    _
  // Predicated region
  $region6: #{cmr_forward.6} parent=0 // pred_check
    _
  $region7: #{cmr_forward.6} parent=0 // pred_check_branch
    %17 = sbr.rel (0) target = $region9
  $region8: #{cmr_forward.6} parent=0 // pred_region
    _
  $region9: #{cmr_forward.6} parent=0 // pred_fallthru
    _
  // Predicated region
  $region10: #{cmr_forward.6} parent=0 // pred_check
    _
  $region11: #{cmr_forward.6} parent=0 // pred_check_branch
    %19 = sbr.rel (0) target = $region13
  $region12: #{cmr_forward.6} parent=0 // pred_region
    _
  $region13: #{cmr_forward.6} parent=0 // pred_fallthru
    _
  // Predicated region
  $region14: #{cmr_forward.6} parent=0 // pred_check
    _
  $region15: #{cmr_forward.6} parent=0 // pred_check_branch
    %21 = sbr.rel (0) target = $region17
  $region16: #{cmr_forward.6} parent=0 // pred_region
    _
  $region17: #{cmr_forward.6} parent=0 // pred_fallthru
    _
  // Predicated region
  $region18: #{cmr_forward.6} parent=0 // pred_check
    _
  $region19: #{cmr_forward.6} parent=0 // pred_check_branch
    %23 = sbr.rel (0) target = $region21
  $region20: #{cmr_forward.6} parent=0 // pred_region
    _
  $region21: #{cmr_forward.6} parent=0 // pred_fallthru
    _
  // Predicated region
  $region22: #{cmr_forward.6} parent=0 // pred_check
    _
  $region23: #{cmr_forward.6} parent=0 // pred_check_branch
    %25 = sbr.rel (0) target = $region25
  $region24: #{cmr_forward.6} parent=0 // pred_region
    _
  $region25: #{cmr_forward.6} parent=0 // pred_fallthru
    _
  // Predicated region
  $region26: #{cmr_forward.6} parent=0 // pred_check
    _
  $region27: #{cmr_forward.6} parent=0 // pred_check_branch
    %27 = sbr.rel (0) target = $region29
  $region28: #{cmr_forward.6} parent=0 // pred_region
    _
  $region29: #{cmr_forward.6} parent=0 // pred_fallthru
    _
  %v28 = vld [vmem:[%s0] sm:$0x3]
  %v29 = vld [vmem:[%s4] sm:$0x3f]
  %v30 = vld [vmem:[%s2] sm:$0xff]
  %v31 = vld [vmem:[%s2 + $0x8] sm:$0xff]
  %v32 = vld [vmem:[%s2 + $0x10] sm:$0xff]
  %v33 = vld [vmem:[%s2 + $0x18] sm:$0xff]
  %v34 = vld [vmem:[%s2 + $0x20] sm:$0xff]
  %v35 = vld [vmem:[%s2 + $0x28] sm:$0xff]
  %v36 = vld [vmem:[%s2 + $0x30] sm:$0x3]
  %v37 = vld [vmem:[%s2 + $0x38] sm:$0x3]
  %v38 = vld [vmem:[%s2 + $0x40] sm:$0x3]
  %v39 = vld [vmem:[%s2 + $0x48] sm:$0x3]
  %v40 = vld [vmem:[%s2 + $0x50] sm:$0x3]
  %v41 = vld [vmem:[%s2 + $0x58] sm:$0x3]
  %vm42 = vcmask 80896
  %v44 = vsel %vm42, %v28, 0
  %vm46 = vcmask 1041408
  %v48 = vsel %vm46, %v36, 0
  %v51 = vsel %vm46, %v37, 0
  %v54 = vsel %vm46, %v38, 0
  %v57 = vsel %vm46, %v39, 0
  %v60 = vsel %vm46, %v40, 0
  %v63 = vsel %vm46, %v41, 0
  %65 = vmatprep.subr.mxu0 0.0
  %66 = vmatpush1.msra.mxu0 0.0
  %67 = vmatprep.subr.mxu0 0.0
  %68 = vmatpush1.msra.mxu0 0.0
  %69 = vmatprep.subr.mxu0 0.0
  %70 = vmatpush1.msra.mxu0 0.0
  %71 = vmatprep.subr.mxu0 0.0
  %72 = vmatpush1.msra.mxu0 0.0
  %73 = vmatprep.subr.mxu0 0.0
  %74 = vmatpush1.msra.mxu0 0.0
  %75 = vmatprep.subr.mxu0 0.0
  %76 = vmatpush1.msra.mxu0 0.0
  %77 = vmatprep.subr.mxu0 0.0
  %78 = vmatpush1.msra.mxu0 0.0
  %79 = vmatprep.subr.mxu0 0.0
  %80 = vmatpush1.msra.mxu0 0.0
  %81 = vmatprep.subr.mxu0 0.0
  %82 = vmatpush1.msra.mxu0 0.0
  %83 = vmatprep.subr.mxu0 0.0
  %84 = vmatpush1.msra.mxu0 0.0
  %85 = vmatprep.subr.mxu0 0.0
  %86 = vmatpush1.msra.mxu0 0.0
  %87 = vmatprep.subr.mxu0 0.0
  %88 = vmatpush1.msra.mxu0 0.0
  %89 = vmatprep.subr.mxu0 0.0
  %90 = vmatpush1.msra.mxu0 0.0
  %91 = vmatprep.subr.mxu0 0.0
  %92 = vmatpush1.msra.mxu0 0.0
  %93 = vmatprep.subr.mxu0 %v51
  %94 = vmatpush1.msra.mxu0 %v48
  %95 = vmatprep.subr.mxu0 %v31
  %96 = vmatpush1.msra.mxu0 %v30
  %97 = vmatprep.subr.mxu0 0.0
  %98 = vmatpush2.msra.mxu0 0.0
  %99 = vmatprep.subr.mxu0 0.0
  %100 = vmatpush2.msra.mxu0 0.0
  %101 = vmatprep.subr.mxu0 0.0
  %102 = vmatpush2.msra.mxu0 0.0
  %103 = vmatprep.subr.mxu0 0.0
  %104 = vmatpush2.msra.mxu0 0.0
  %105 = vmatprep.subr.mxu0 0.0
  %106 = vmatpush2.msra.mxu0 0.0
  %107 = vmatprep.subr.mxu0 0.0
  %108 = vmatpush2.msra.mxu0 0.0
  %109 = vmatprep.subr.mxu0 0.0
  %110 = vmatpush2.msra.mxu0 0.0
  %111 = vmatprep.subr.mxu0 0.0
  %112 = vmatpush2.msra.mxu0 0.0
  %113 = vmatprep.subr.mxu0 0.0
  %114 = vmatpush2.msra.mxu0 0.0
  %115 = vmatprep.subr.mxu0 0.0
  %116 = vmatpush2.msra.mxu0 0.0
  %117 = vmatprep.subr.mxu0 0.0
  %118 = vmatpush2.msra.mxu0 0.0
  %119 = vmatprep.subr.mxu0 0.0
  %120 = vmatpush2.msra.mxu0 0.0
  %121 = vmatprep.subr.mxu0 0.0
  %122 = vmatpush2.msra.mxu0 0.0
  %123 = vmatprep.subr.mxu0 0.0
  %124 = vmatpush2.msra.mxu0 0.0
  %125 = vmatprep.subr.mxu0 0.0
  %126 = vmatpush2.msra.mxu0 0.0
  %127 = vmatprep.subr.mxu0 0.0
  %128 = vmatpush2.msra.mxu0 0.0
  %129 = vmatprep.mubr.f32.mxu0 0.0
  %130 = vmatmul.mubr.f32.gmra.mxu0 %v44
  %v131 = vpop.f32.mrf.mxu0
  %v132 = vadd.f32 0.0, %v131
  %v133 = vpop.f32.mrf.mxu0
  %v134 = vadd.f32 0.0, %v133
  %135 = vdwg.mxu0
  %136 = vmatprep.subr.mxu0 0.0
  %137 = vmatpush1.msra.mxu0 0.0
  %138 = vmatprep.subr.mxu0 0.0
  %139 = vmatpush1.msra.mxu0 0.0
  %140 = vmatprep.subr.mxu0 0.0
  %141 = vmatpush1.msra.mxu0 0.0
  %142 = vmatprep.subr.mxu0 0.0
  %143 = vmatpush1.msra.mxu0 0.0
  %144 = vmatprep.subr.mxu0 0.0
  %145 = vmatpush1.msra.mxu0 0.0
  %146 = vmatprep.subr.mxu0 0.0
  %147 = vmatpush1.msra.mxu0 0.0
  %148 = vmatprep.subr.mxu0 0.0
  %149 = vmatpush1.msra.mxu0 0.0
  %150 = vmatprep.subr.mxu0 0.0
  %151 = vmatpush1.msra.mxu0 0.0
  %152 = vmatprep.subr.mxu0 0.0
  %153 = vmatpush1.msra.mxu0 0.0
  %154 = vmatprep.subr.mxu0 0.0
  %155 = vmatpush1.msra.mxu0 0.0
  %156 = vmatprep.subr.mxu0 0.0
  %157 = vmatpush1.msra.mxu0 0.0
  %158 = vmatprep.subr.mxu0 0.0
  %159 = vmatpush1.msra.mxu0 0.0
  %160 = vmatprep.subr.mxu0 0.0
  %161 = vmatpush1.msra.mxu0 0.0
  %162 = vmatprep.subr.mxu0 0.0
  %163 = vmatpush1.msra.mxu0 0.0
  %164 = vmatprep.subr.mxu0 %v57
  %165 = vmatpush1.msra.mxu0 %v54
  %166 = vmatprep.subr.mxu0 %v33
  %167 = vmatpush1.msra.mxu0 %v32
  %168 = vmatprep.subr.mxu0 0.0
  %169 = vmatpush2.msra.mxu0 0.0
  %170 = vmatprep.subr.mxu0 0.0
  %171 = vmatpush2.msra.mxu0 0.0
  %172 = vmatprep.subr.mxu0 0.0
  %173 = vmatpush2.msra.mxu0 0.0
  %174 = vmatprep.subr.mxu0 0.0
  %175 = vmatpush2.msra.mxu0 0.0
  %176 = vmatprep.subr.mxu0 0.0
  %177 = vmatpush2.msra.mxu0 0.0
  %178 = vmatprep.subr.mxu0 0.0
  %179 = vmatpush2.msra.mxu0 0.0
  %180 = vmatprep.subr.mxu0 0.0
  %181 = vmatpush2.msra.mxu0 0.0
  %182 = vmatprep.subr.mxu0 0.0
  %183 = vmatpush2.msra.mxu0 0.0
  %184 = vmatprep.subr.mxu0 0.0
  %185 = vmatpush2.msra.mxu0 0.0
  %186 = vmatprep.subr.mxu0 0.0
  %187 = vmatpush2.msra.mxu0 0.0
  %188 = vmatprep.subr.mxu0 0.0
  %189 = vmatpush2.msra.mxu0 0.0
  %190 = vmatprep.subr.mxu0 0.0
  %191 = vmatpush2.msra.mxu0 0.0
  %192 = vmatprep.subr.mxu0 0.0
  %193 = vmatpush2.msra.mxu0 0.0
  %194 = vmatprep.subr.mxu0 0.0
  %195 = vmatpush2.msra.mxu0 0.0
  %196 = vmatprep.subr.mxu0 0.0
  %197 = vmatpush2.msra.mxu0 0.0
  %198 = vmatprep.subr.mxu0 0.0
  %199 = vmatpush2.msra.mxu0 0.0
  %200 = vmatprep.mubr.f32.mxu0 0.0
  %201 = vmatmul.mubr.f32.gmra.mxu0 %v44
  %v202 = vpop.f32.mrf.mxu0
  %v203 = vadd.f32 0.0, %v202
  %v204 = vpop.f32.mrf.mxu0
  %v205 = vadd.f32 0.0, %v204
  %206 = vdwg.mxu0
  %207 = vmatprep.subr.mxu0 0.0
  %208 = vmatpush1.msra.mxu0 0.0
  %209 = vmatprep.subr.mxu0 0.0
  %210 = vmatpush1.msra.mxu0 0.0
  %211 = vmatprep.subr.mxu0 0.0
  %212 = vmatpush1.msra.mxu0 0.0
  %213 = vmatprep.subr.mxu0 0.0
  %214 = vmatpush1.msra.mxu0 0.0
  %215 = vmatprep.subr.mxu0 0.0
  %216 = vmatpush1.msra.mxu0 0.0
  %217 = vmatprep.subr.mxu0 0.0
  %218 = vmatpush1.msra.mxu0 0.0
  %219 = vmatprep.subr.mxu0 0.0
  %220 = vmatpush1.msra.mxu0 0.0
  %221 = vmatprep.subr.mxu0 0.0
  %222 = vmatpush1.msra.mxu0 0.0
  %223 = vmatprep.subr.mxu0 0.0
  %224 = vmatpush1.msra.mxu0 0.0
  %225 = vmatprep.subr.mxu0 0.0
  %226 = vmatpush1.msra.mxu0 0.0
  %227 = vmatprep.subr.mxu0 0.0
  %228 = vmatpush1.msra.mxu0 0.0
  %229 = vmatprep.subr.mxu0 0.0
  %230 = vmatpush1.msra.mxu0 0.0
  %231 = vmatprep.subr.mxu0 0.0
  %232 = vmatpush1.msra.mxu0 0.0
  %233 = vmatprep.subr.mxu0 0.0
  %234 = vmatpush1.msra.mxu0 0.0
  %235 = vmatprep.subr.mxu0 %v63
  %236 = vmatpush1.msra.mxu0 %v60
  %237 = vmatprep.subr.mxu0 %v35
  %238 = vmatpush1.msra.mxu0 %v34
  %239 = vmatprep.subr.mxu0 0.0
  %240 = vmatpush2.msra.mxu0 0.0
  %241 = vmatprep.subr.mxu0 0.0
  %242 = vmatpush2.msra.mxu0 0.0
  %243 = vmatprep.subr.mxu0 0.0
  %244 = vmatpush2.msra.mxu0 0.0
  %245 = vmatprep.subr.mxu0 0.0
  %246 = vmatpush2.msra.mxu0 0.0
  %247 = vmatprep.subr.mxu0 0.0
  %248 = vmatpush2.msra.mxu0 0.0
  %249 = vmatprep.subr.mxu0 0.0
  %250 = vmatpush2.msra.mxu0 0.0
  %251 = vmatprep.subr.mxu0 0.0
  %252 = vmatpush2.msra.mxu0 0.0
  %253 = vmatprep.subr.mxu0 0.0
  %254 = vmatpush2.msra.mxu0 0.0
  %255 = vmatprep.subr.mxu0 0.0
  %256 = vmatpush2.msra.mxu0 0.0
  %257 = vmatprep.subr.mxu0 0.0
  %258 = vmatpush2.msra.mxu0 0.0
  %259 = vmatprep.subr.mxu0 0.0
  %260 = vmatpush2.msra.mxu0 0.0
  %261 = vmatprep.subr.mxu0 0.0
  %262 = vmatpush2.msra.mxu0 0.0
  %263 = vmatprep.subr.mxu0 0.0
  %264 = vmatpush2.msra.mxu0 0.0
  %265 = vmatprep.subr.mxu0 0.0
  %266 = vmatpush2.msra.mxu0 0.0
  %267 = vmatprep.subr.mxu0 0.0
  %268 = vmatpush2.msra.mxu0 0.0
  %269 = vmatprep.subr.mxu0 0.0
  %270 = vmatpush2.msra.mxu0 0.0
  %271 = vmatprep.mubr.f32.mxu0 0.0
  %272 = vmatmul.mubr.f32.gmra.mxu0 %v44
  %v273 = vpop.f32.mrf.mxu0
  %v274 = vadd.f32 0.0, %v273
  %v275 = vpop.f32.mrf.mxu0
  %v276 = vadd.f32 0.0, %v275
  %277 = vdwg.mxu0
  %v279 = vlaneseq
  %v280 = vshrl.u32 %v279, 7
  %v281 = vsub.s32 0, %v280
  %v282 = vrot.slane %v29, %v281
  %v283 = vlaneseq
  %v284 = vshrl.u32 %v283, 7
  %v285 = vsub.s32 1, %v284
  %v286 = vrot.slane %v29, %v285
  %v287 = vlaneseq
  %v288 = vshrl.u32 %v287, 7
  %v289 = vsub.s32 2, %v288
  %v290 = vrot.slane %v29, %v289
  %v291 = vlaneseq
  %v292 = vshrl.u32 %v291, 7
  %v293 = vsub.s32 3, %v292
  %v294 = vrot.slane %v29, %v293
  %v295 = vlaneseq
  %v296 = vshrl.u32 %v295, 7
  %v297 = vsub.s32 4, %v296
  %v298 = vrot.slane %v29, %v297
  %v299 = vlaneseq
  %v300 = vshrl.u32 %v299, 7
  %v301 = vsub.s32 5, %v300
  %v302 = vrot.slane %v29, %v301
  %v309 = vadd.f32 %v282, %v132
  %v310 = vadd.f32 %v286, %v134
  %v311 = vadd.f32 %v290, %v203
  %v312 = vadd.f32 %v294, %v205
  %v313 = vadd.f32 %v298, %v274
  %v314 = vadd.f32 %v302, %v276
  %v315 = vld [vmem:[%s1] sm:$0xf]
  %v316 = vld [vmem:[%s3] sm:$0xff]
  %v317 = vld [vmem:[%s3 + $0x8] sm:$0xff]
  %v318 = vld [vmem:[%s3 + $0x10] sm:$0xff]
  %v319 = vld [vmem:[%s3 + $0x18] sm:$0xff]
  %v320 = vld [vmem:[%s3 + $0x20] sm:$0xff]
  %v321 = vld [vmem:[%s3 + $0x28] sm:$0xff]
  %v322 = vld [vmem:[%s3 + $0x30] sm:$0xff]
  %v323 = vld [vmem:[%s3 + $0x38] sm:$0xff]
  %v324 = vld [vmem:[%s3 + $0x40] sm:$0xff]
  %v325 = vld [vmem:[%s3 + $0x48] sm:$0xff]
  %v326 = vld [vmem:[%s3 + $0x50] sm:$0xff]
  %v327 = vld [vmem:[%s3 + $0x58] sm:$0xff]
  %v328 = vld [vmem:[%s3 + $0x60] sm:$0xff]
  %v329 = vld [vmem:[%s3 + $0x68] sm:$0xff]
  %v330 = vld [vmem:[%s3 + $0x70] sm:$0xff]
  %v331 = vld [vmem:[%s3 + $0x78] sm:$0xff]
  %v332 = vld [vmem:[%s3 + $0x80] sm:$0xff]
  %v333 = vld [vmem:[%s3 + $0x88] sm:$0xff]
  %v334 = vld [vmem:[%s3 + $0x90] sm:$0xff]
  %v335 = vld [vmem:[%s3 + $0x98] sm:$0xff]
  %v336 = vld [vmem:[%s3 + $0xa0] sm:$0xff]
  %v337 = vld [vmem:[%s3 + $0xa8] sm:$0xff]
  %v338 = vld [vmem:[%s3 + $0xb0] sm:$0xff]
  %v339 = vld [vmem:[%s3 + $0xb8] sm:$0xff]
  %v340 = vld [vmem:[%s3 + $0xc0] sm:$0xff]
  %v341 = vld [vmem:[%s3 + $0xc8] sm:$0xff]
  %v342 = vld [vmem:[%s3 + $0xd0] sm:$0xff]
  %v343 = vld [vmem:[%s3 + $0xd8] sm:$0xff]
  %v344 = vld [vmem:[%s3 + $0xe0] sm:$0xff]
  %v345 = vld [vmem:[%s3 + $0xe8] sm:$0xff]
  %v346 = vld [vmem:[%s3 + $0xf0] sm:$0xff]
  %v347 = vld [vmem:[%s3 + $0xf8] sm:$0xff]
  %v348 = vld [vmem:[%s3 + $0x100] sm:$0xff]
  %v349 = vld [vmem:[%s3 + $0x108] sm:$0xff]
  %v350 = vld [vmem:[%s3 + $0x110] sm:$0xff]
  %v351 = vld [vmem:[%s3 + $0x118] sm:$0xff]
  %v352 = vld [vmem:[%s3 + $0x120] sm:$0xff]
  %v353 = vld [vmem:[%s3 + $0x128] sm:$0xff]
  %v354 = vld [vmem:[%s3 + $0x130] sm:$0xff]
  %v355 = vld [vmem:[%s3 + $0x138] sm:$0xff]
  %v356 = vld [vmem:[%s3 + $0x140] sm:$0xff]
  %v357 = vld [vmem:[%s3 + $0x148] sm:$0xff]
  %v358 = vld [vmem:[%s3 + $0x150] sm:$0xff]
  %v359 = vld [vmem:[%s3 + $0x158] sm:$0xff]
  %v360 = vld [vmem:[%s3 + $0x160] sm:$0xff]
  %v361 = vld [vmem:[%s3 + $0x168] sm:$0xff]
  %v362 = vld [vmem:[%s3 + $0x170] sm:$0xff]
  %v363 = vld [vmem:[%s3 + $0x178] sm:$0xff]
  %v364 = vld [vmem:[%s3 + $0x180] sm:$0xff]
  %v365 = vld [vmem:[%s3 + $0x188] sm:$0xff]
  %v366 = vld [vmem:[%s3 + $0x190] sm:$0xff]
  %v367 = vld [vmem:[%s3 + $0x198] sm:$0xff]
  %v368 = vld [vmem:[%s3 + $0x1a0] sm:$0xff]
  %v369 = vld [vmem:[%s3 + $0x1a8] sm:$0xff]
  %v370 = vld [vmem:[%s3 + $0x1b0] sm:$0xff]
  %v371 = vld [vmem:[%s3 + $0x1b8] sm:$0xff]
  %v372 = vld [vmem:[%s3 + $0x1c0] sm:$0xff]
  %v373 = vld [vmem:[%s3 + $0x1c8] sm:$0xff]
  %v374 = vld [vmem:[%s3 + $0x1d0] sm:$0xff]
  %v375 = vld [vmem:[%s3 + $0x1d8] sm:$0xff]
  %v376 = vld [vmem:[%s3 + $0x1e0] sm:$0xff]
  %v377 = vld [vmem:[%s3 + $0x1e8] sm:$0xff]
  %v378 = vld [vmem:[%s3 + $0x1f0] sm:$0xff]
  %v379 = vld [vmem:[%s3 + $0x1f8] sm:$0xff]
  %v380 = vld [vmem:[%s3 + $0x200] sm:$0xff]
  %v381 = vld [vmem:[%s3 + $0x208] sm:$0xff]
  %v382 = vld [vmem:[%s3 + $0x210] sm:$0xff]
  %v383 = vld [vmem:[%s3 + $0x218] sm:$0xff]
  %v384 = vld [vmem:[%s3 + $0x220] sm:$0xff]
  %v385 = vld [vmem:[%s3 + $0x228] sm:$0xff]
  %v386 = vld [vmem:[%s3 + $0x230] sm:$0xff]
  %v387 = vld [vmem:[%s3 + $0x238] sm:$0xff]
  %v388 = vld [vmem:[%s3 + $0x240] sm:$0xff]
  %v389 = vld [vmem:[%s3 + $0x248] sm:$0xff]
  %v390 = vld [vmem:[%s3 + $0x250] sm:$0xff]
  %v391 = vld [vmem:[%s3 + $0x258] sm:$0xff]
  %v392 = vld [vmem:[%s3 + $0x260] sm:$0xff]
  %v393 = vld [vmem:[%s3 + $0x268] sm:$0xff]
  %v394 = vld [vmem:[%s3 + $0x270] sm:$0xff]
  %v395 = vld [vmem:[%s3 + $0x278] sm:$0xff]
  %v396 = vld [vmem:[%s3 + $0x280] sm:$0xff]
  %v397 = vld [vmem:[%s3 + $0x288] sm:$0xff]
  %v398 = vld [vmem:[%s3 + $0x290] sm:$0xff]
  %v399 = vld [vmem:[%s3 + $0x298] sm:$0xff]
  %v400 = vld [vmem:[%s3 + $0x2a0] sm:$0xff]
  %v401 = vld [vmem:[%s3 + $0x2a8] sm:$0xff]
  %v402 = vld [vmem:[%s3 + $0x2b0] sm:$0xff]
  %v403 = vld [vmem:[%s3 + $0x2b8] sm:$0xff]
  %v404 = vld [vmem:[%s3 + $0x2c0] sm:$0xff]
  %v405 = vld [vmem:[%s3 + $0x2c8] sm:$0xff]
  %v406 = vld [vmem:[%s3 + $0x2d0] sm:$0xff]
  %v407 = vld [vmem:[%s3 + $0x2d8] sm:$0xff]
  %v408 = vld [vmem:[%s3 + $0x2e0] sm:$0xff]
  %v409 = vld [vmem:[%s3 + $0x2e8] sm:$0xff]
  %v410 = vld [vmem:[%s3 + $0x2f0] sm:$0xff]
  %v411 = vld [vmem:[%s3 + $0x2f8] sm:$0xff]
  %v412 = vld [vmem:[%s3 + $0x300] sm:$0xff]
  %v413 = vld [vmem:[%s3 + $0x308] sm:$0xff]
  %v414 = vld [vmem:[%s3 + $0x310] sm:$0xff]
  %v415 = vld [vmem:[%s3 + $0x318] sm:$0xff]
  %v416 = vld [vmem:[%s3 + $0x320] sm:$0xff]
  %v417 = vld [vmem:[%s3 + $0x328] sm:$0xff]
  %v418 = vld [vmem:[%s3 + $0x330] sm:$0xff]
  %v419 = vld [vmem:[%s3 + $0x338] sm:$0xff]
  %v420 = vld [vmem:[%s3 + $0x340] sm:$0xff]
  %v421 = vld [vmem:[%s3 + $0x348] sm:$0xff]
  %v422 = vld [vmem:[%s3 + $0x350] sm:$0xff]
  %v423 = vld [vmem:[%s3 + $0x358] sm:$0xff]
  %v424 = vld [vmem:[%s3 + $0x360] sm:$0xff]
  %v425 = vld [vmem:[%s3 + $0x368] sm:$0xff]
  %v426 = vld [vmem:[%s3 + $0x370] sm:$0xff]
  %v427 = vld [vmem:[%s3 + $0x378] sm:$0xff]
  %v428 = vld [vmem:[%s3 + $0x380] sm:$0xff]
  %v429 = vld [vmem:[%s3 + $0x388] sm:$0xff]
  %v430 = vld [vmem:[%s3 + $0x390] sm:$0xff]
  %v431 = vld [vmem:[%s3 + $0x398] sm:$0xff]
  %v432 = vld [vmem:[%s3 + $0x3a0] sm:$0xff]
  %v433 = vld [vmem:[%s3 + $0x3a8] sm:$0xff]
  %v434 = vld [vmem:[%s3 + $0x3b0] sm:$0xff]
  %v435 = vld [vmem:[%s3 + $0x3b8] sm:$0xff]
  %v436 = vld [vmem:[%s3 + $0x3c0] sm:$0xff]
  %v437 = vld [vmem:[%s3 + $0x3c8] sm:$0xff]
  %v438 = vld [vmem:[%s3 + $0x3d0] sm:$0xff]
  %v439 = vld [vmem:[%s3 + $0x3d8] sm:$0xff]
  %v440 = vld [vmem:[%s3 + $0x3e0] sm:$0xff]
  %v441 = vld [vmem:[%s3 + $0x3e8] sm:$0xff]
  %v442 = vld [vmem:[%s3 + $0x3f0] sm:$0xff]
  %v443 = vld [vmem:[%s3 + $0x3f8] sm:$0xff]
  %v444 = vld [vmem:[%s3 + $0x400] sm:$0xff]
  %v445 = vld [vmem:[%s3 + $0x408] sm:$0xff]
  %v446 = vld [vmem:[%s3 + $0x410] sm:$0xff]
  %v447 = vld [vmem:[%s3 + $0x418] sm:$0xff]
  %v448 = vld [vmem:[%s3 + $0x420] sm:$0xff]
  %v449 = vld [vmem:[%s3 + $0x428] sm:$0xff]
  %v450 = vld [vmem:[%s3 + $0x430] sm:$0xff]
  %v451 = vld [vmem:[%s3 + $0x438] sm:$0xff]
  %v452 = vld [vmem:[%s3 + $0x440] sm:$0xff]
  %v453 = vld [vmem:[%s3 + $0x448] sm:$0xff]
  %v454 = vld [vmem:[%s3 + $0x450] sm:$0xff]
  %v455 = vld [vmem:[%s3 + $0x458] sm:$0xff]
  %v456 = vld [vmem:[%s3 + $0x460] sm:$0xff]
  %v457 = vld [vmem:[%s3 + $0x468] sm:$0xff]
  %v458 = vld [vmem:[%s3 + $0x470] sm:$0xff]
  %v459 = vld [vmem:[%s3 + $0x478] sm:$0xff]
  %v460 = vld [vmem:[%s3 + $0x480] sm:$0xff]
  %v461 = vld [vmem:[%s3 + $0x488] sm:$0xff]
  %v462 = vld [vmem:[%s3 + $0x490] sm:$0xff]
  %v463 = vld [vmem:[%s3 + $0x498] sm:$0xff]
  %v464 = vld [vmem:[%s3 + $0x4a0] sm:$0xff]
  %v465 = vld [vmem:[%s3 + $0x4a8] sm:$0xff]
  %v466 = vld [vmem:[%s3 + $0x4b0] sm:$0x7f]
  %v467 = vld [vmem:[%s3 + $0x4b8] sm:$0x7f]
  %v468 = vld [vmem:[%s3 + $0x4c0] sm:$0x7f]
  %v469 = vld [vmem:[%s3 + $0x4c8] sm:$0x7f]
  %v470 = vld [vmem:[%s3 + $0x4d0] sm:$0x7f]
  %v471 = vld [vmem:[%s3 + $0x4d8] sm:$0x7f]
  %v474 = vunpack.c.l.s4 1983009808
  %v475 = vunpack.c.0.s8 %v474
  %v476 = vlaneseq
  %v477 = vshrl.u32 %v476, 7
  %v478 = vsub.s32 %v475, %v477
  %v479 = vrot.slane %v315, %v478
  %v480 = vcombine.high %v479, %v479
  %vm482 = vcmask 646144
  %v483 = vsel %vm482, %v480, 0
  %vm485 = vcmask 1046528
  %v487 = vsel %vm485, %v466, 0
  %v490 = vsel %vm485, %v467, 0
  %v493 = vsel %vm485, %v468, 0
  %v496 = vsel %vm485, %v469, 0
  %v499 = vsel %vm485, %v470, 0
  %v502 = vsel %vm485, %v471, 0
  %504 = vmatprep.subr.mxu0 %v407
  %505 = vmatpush1.msra.mxu0 %v406
  %506 = vmatprep.subr.mxu0 %v401
  %507 = vmatpush1.msra.mxu0 %v400
  %508 = vmatprep.subr.mxu0 %v395
  %509 = vmatpush1.msra.mxu0 %v394
  %510 = vmatprep.subr.mxu0 %v389
  %511 = vmatpush1.msra.mxu0 %v388
  %512 = vmatprep.subr.mxu0 %v383
  %513 = vmatpush1.msra.mxu0 %v382
  %514 = vmatprep.subr.mxu0 %v377
  %515 = vmatpush1.msra.mxu0 %v376
  %516 = vmatprep.subr.mxu0 %v371
  %517 = vmatpush1.msra.mxu0 %v370
  %518 = vmatprep.subr.mxu0 %v365
  %519 = vmatpush1.msra.mxu0 %v364
  %520 = vmatprep.subr.mxu0 %v359
  %521 = vmatpush1.msra.mxu0 %v358
  %522 = vmatprep.subr.mxu0 %v353
  %523 = vmatpush1.msra.mxu0 %v352
  %524 = vmatprep.subr.mxu0 %v347
  %525 = vmatpush1.msra.mxu0 %v346
  %526 = vmatprep.subr.mxu0 %v341
  %527 = vmatpush1.msra.mxu0 %v340
  %528 = vmatprep.subr.mxu0 %v335
  %529 = vmatpush1.msra.mxu0 %v334
  %530 = vmatprep.subr.mxu0 %v329
  %531 = vmatpush1.msra.mxu0 %v328
  %532 = vmatprep.subr.mxu0 %v323
  %533 = vmatpush1.msra.mxu0 %v322
  %534 = vmatprep.subr.mxu0 %v317
  %535 = vmatpush1.msra.mxu0 %v316
  %536 = vmatprep.subr.mxu0 0.0
  %537 = vmatpush2.msra.mxu0 0.0
  %538 = vmatprep.subr.mxu0 0.0
  %539 = vmatpush2.msra.mxu0 0.0
  %540 = vmatprep.subr.mxu0 0.0
  %541 = vmatpush2.msra.mxu0 0.0
  %542 = vmatprep.subr.mxu0 0.0
  %543 = vmatpush2.msra.mxu0 0.0
  %544 = vmatprep.subr.mxu0 0.0
  %545 = vmatpush2.msra.mxu0 0.0
  %546 = vmatprep.subr.mxu0 0.0
  %547 = vmatpush2.msra.mxu0 0.0
  %548 = vmatprep.subr.mxu0 %v490
  %549 = vmatpush2.msra.mxu0 %v487
  %550 = vmatprep.subr.mxu0 %v461
  %551 = vmatpush2.msra.mxu0 %v460
  %552 = vmatprep.subr.mxu0 %v455
  %553 = vmatpush2.msra.mxu0 %v454
  %554 = vmatprep.subr.mxu0 %v449
  %555 = vmatpush2.msra.mxu0 %v448
  %556 = vmatprep.subr.mxu0 %v443
  %557 = vmatpush2.msra.mxu0 %v442
  %558 = vmatprep.subr.mxu0 %v437
  %559 = vmatpush2.msra.mxu0 %v436
  %560 = vmatprep.subr.mxu0 %v431
  %561 = vmatpush2.msra.mxu0 %v430
  %562 = vmatprep.subr.mxu0 %v425
  %563 = vmatpush2.msra.mxu0 %v424
  %564 = vmatprep.subr.mxu0 %v419
  %565 = vmatpush2.msra.mxu0 %v418
  %566 = vmatprep.subr.mxu0 %v413
  %567 = vmatpush2.msra.mxu0 %v412
  %568 = vmatprep.mubr.f32.mxu0 %v483
  %569 = vmatmul.mubr.f32.gmra.mxu0 %v479
  %v570 = vpop.f32.mrf.mxu0
  %v571 = vadd.f32 0.0, %v570
  %v572 = vpop.f32.mrf.mxu0
  %v573 = vadd.f32 0.0, %v572
  %574 = vdwg.mxu0
  %575 = vmatprep.subr.mxu0 %v409
  %576 = vmatpush1.msra.mxu0 %v408
  %577 = vmatprep.subr.mxu0 %v403
  %578 = vmatpush1.msra.mxu0 %v402
  %579 = vmatprep.subr.mxu0 %v397
  %580 = vmatpush1.msra.mxu0 %v396
  %581 = vmatprep.subr.mxu0 %v391
  %582 = vmatpush1.msra.mxu0 %v390
  %583 = vmatprep.subr.mxu0 %v385
  %584 = vmatpush1.msra.mxu0 %v384
  %585 = vmatprep.subr.mxu0 %v379
  %586 = vmatpush1.msra.mxu0 %v378
  %587 = vmatprep.subr.mxu0 %v373
  %588 = vmatpush1.msra.mxu0 %v372
  %589 = vmatprep.subr.mxu0 %v367
  %590 = vmatpush1.msra.mxu0 %v366
  %591 = vmatprep.subr.mxu0 %v361
  %592 = vmatpush1.msra.mxu0 %v360
  %593 = vmatprep.subr.mxu0 %v355
  %594 = vmatpush1.msra.mxu0 %v354
  %595 = vmatprep.subr.mxu0 %v349
  %596 = vmatpush1.msra.mxu0 %v348
  %597 = vmatprep.subr.mxu0 %v343
  %598 = vmatpush1.msra.mxu0 %v342
  %599 = vmatprep.subr.mxu0 %v337
  %600 = vmatpush1.msra.mxu0 %v336
  %601 = vmatprep.subr.mxu0 %v331
  %602 = vmatpush1.msra.mxu0 %v330
  %603 = vmatprep.subr.mxu0 %v325
  %604 = vmatpush1.msra.mxu0 %v324
  %605 = vmatprep.subr.mxu0 %v319
  %606 = vmatpush1.msra.mxu0 %v318
  %607 = vmatprep.subr.mxu0 0.0
  %608 = vmatpush2.msra.mxu0 0.0
  %609 = vmatprep.subr.mxu0 0.0
  %610 = vmatpush2.msra.mxu0 0.0
  %611 = vmatprep.subr.mxu0 0.0
  %612 = vmatpush2.msra.mxu0 0.0
  %613 = vmatprep.subr.mxu0 0.0
  %614 = vmatpush2.msra.mxu0 0.0
  %615 = vmatprep.subr.mxu0 0.0
  %616 = vmatpush2.msra.mxu0 0.0
  %617 = vmatprep.subr.mxu0 0.0
  %618 = vmatpush2.msra.mxu0 0.0
  %619 = vmatprep.subr.mxu0 %v496
  %620 = vmatpush2.msra.mxu0 %v493
  %621 = vmatprep.subr.mxu0 %v463
  %622 = vmatpush2.msra.mxu0 %v462
  %623 = vmatprep.subr.mxu0 %v457
  %624 = vmatpush2.msra.mxu0 %v456
  %625 = vmatprep.subr.mxu0 %v451
  %626 = vmatpush2.msra.mxu0 %v450
  %627 = vmatprep.subr.mxu0 %v445
  %628 = vmatpush2.msra.mxu0 %v444
  %629 = vmatprep.subr.mxu0 %v439
  %630 = vmatpush2.msra.mxu0 %v438
  %631 = vmatprep.subr.mxu0 %v433
  %632 = vmatpush2.msra.mxu0 %v432
  %633 = vmatprep.subr.mxu0 %v427
  %634 = vmatpush2.msra.mxu0 %v426
  %635 = vmatprep.subr.mxu0 %v421
  %636 = vmatpush2.msra.mxu0 %v420
  %637 = vmatprep.subr.mxu0 %v415
  %638 = vmatpush2.msra.mxu0 %v414
  %639 = vmatprep.mubr.f32.mxu0 %v483
  %640 = vmatmul.mubr.f32.gmra.mxu0 %v479
  %v641 = vpop.f32.mrf.mxu0
  %v642 = vadd.f32 0.0, %v641
  %v643 = vpop.f32.mrf.mxu0
  %v644 = vadd.f32 0.0, %v643
  %645 = vdwg.mxu0
  %646 = vmatprep.subr.mxu0 %v411
  %647 = vmatpush1.msra.mxu0 %v410
  %648 = vmatprep.subr.mxu0 %v405
  %649 = vmatpush1.msra.mxu0 %v404
  %650 = vmatprep.subr.mxu0 %v399
  %651 = vmatpush1.msra.mxu0 %v398
  %652 = vmatprep.subr.mxu0 %v393
  %653 = vmatpush1.msra.mxu0 %v392
  %654 = vmatprep.subr.mxu0 %v387
  %655 = vmatpush1.msra.mxu0 %v386
  %656 = vmatprep.subr.mxu0 %v381
  %657 = vmatpush1.msra.mxu0 %v380
  %658 = vmatprep.subr.mxu0 %v375
  %659 = vmatpush1.msra.mxu0 %v374
  %660 = vmatprep.subr.mxu0 %v369
  %661 = vmatpush1.msra.mxu0 %v368
  %662 = vmatprep.subr.mxu0 %v363
  %663 = vmatpush1.msra.mxu0 %v362
  %664 = vmatprep.subr.mxu0 %v357
  %665 = vmatpush1.msra.mxu0 %v356
  %666 = vmatprep.subr.mxu0 %v351
  %667 = vmatpush1.msra.mxu0 %v350
  %668 = vmatprep.subr.mxu0 %v345
  %669 = vmatpush1.msra.mxu0 %v344
  %670 = vmatprep.subr.mxu0 %v339
  %671 = vmatpush1.msra.mxu0 %v338
  %672 = vmatprep.subr.mxu0 %v333
  %673 = vmatpush1.msra.mxu0 %v332
  %674 = vmatprep.subr.mxu0 %v327
  %675 = vmatpush1.msra.mxu0 %v326
  %676 = vmatprep.subr.mxu0 %v321
  %677 = vmatpush1.msra.mxu0 %v320
  %678 = vmatprep.subr.mxu0 0.0
  %679 = vmatpush2.msra.mxu0 0.0
  %680 = vmatprep.subr.mxu0 0.0
  %681 = vmatpush2.msra.mxu0 0.0
  %682 = vmatprep.subr.mxu0 0.0
  %683 = vmatpush2.msra.mxu0 0.0
  %684 = vmatprep.subr.mxu0 0.0
  %685 = vmatpush2.msra.mxu0 0.0
  %686 = vmatprep.subr.mxu0 0.0
  %687 = vmatpush2.msra.mxu0 0.0
  %688 = vmatprep.subr.mxu0 0.0
  %689 = vmatpush2.msra.mxu0 0.0
  %690 = vmatprep.subr.mxu0 %v502
  %691 = vmatpush2.msra.mxu0 %v499
  %692 = vmatprep.subr.mxu0 %v465
  %693 = vmatpush2.msra.mxu0 %v464
  %694 = vmatprep.subr.mxu0 %v459
  %695 = vmatpush2.msra.mxu0 %v458
  %696 = vmatprep.subr.mxu0 %v453
  %697 = vmatpush2.msra.mxu0 %v452
  %698 = vmatprep.subr.mxu0 %v447
  %699 = vmatpush2.msra.mxu0 %v446
  %700 = vmatprep.subr.mxu0 %v441
  %701 = vmatpush2.msra.mxu0 %v440
  %702 = vmatprep.subr.mxu0 %v435
  %703 = vmatpush2.msra.mxu0 %v434
  %704 = vmatprep.subr.mxu0 %v429
  %705 = vmatpush2.msra.mxu0 %v428
  %706 = vmatprep.subr.mxu0 %v423
  %707 = vmatpush2.msra.mxu0 %v422
  %708 = vmatprep.subr.mxu0 %v417
  %709 = vmatpush2.msra.mxu0 %v416
  %710 = vmatprep.mubr.f32.mxu0 %v483
  %711 = vmatmul.mubr.f32.gmra.mxu0 %v479
  %v712 = vpop.f32.mrf.mxu0
  %v713 = vadd.f32 0.0, %v712
  %v714 = vpop.f32.mrf.mxu0
  %v715 = vadd.f32 0.0, %v714
  %716 = vdwg.mxu0
  %v717 = vadd.f32 %v309, %v571
  %v718 = vadd.f32 %v310, %v573
  %v719 = vadd.f32 %v311, %v642
  %v720 = vadd.f32 %v312, %v644
  %v721 = vadd.f32 %v313, %v713
  %v722 = vadd.f32 %v314, %v715
  %v729 = vcombine.low %v717, %v718
  %v730 = vcombine.low %v719, %v720
  %v732 = vunpack.c.l.s4 1983009808
  %v733 = vunpack.c.0.s8 %v732
  %v734 = vlaneseq
  %v735 = vshrl.u32 %v734, 7
  %v736 = vsub.s32 %v733, %v735
  %v737 = vrot.slane %v729, %v736
  %v739 = vunpack.c.l.s4 1983009808
  %v740 = vunpack.c.0.s8 %v739
  %v741 = vlaneseq
  %v742 = vshrl.u32 %v741, 7
  %v743 = vsub.s32 %v740, %v742
  %v744 = vrot.slane %v730, %v743
  %v745 = vcombine.low %v737, %v744
  %v746 = vcombine.low %v721, %v722
  %v748 = vunpack.c.l.s4 1983009808
  %v749 = vunpack.c.0.s8 %v748
  %v750 = vlaneseq
  %v751 = vshrl.u32 %v750, 7
  %v752 = vsub.s32 %v749, %v751
  %v753 = vrot.slane %v746, %v752
  %756 = vst [vmem:[%s7] sm:$0xff] %v745
  %757 = vst [vmem:[%s7 + $0x8] sm:$0xf] %v753
  %v758 = vld [vmem:[%s5] sm:$0x1]
  %v759 = vld [vmem:[%s6] sm:$0xff]
  %v760 = vld [vmem:[%s6 + $0x8] sm:$0x3]
  %v762 = vsel %vm46, %v760, 0
  %764 = vmatprep.subr.mxu0 0.0
  %765 = vmatpush1.msra.mxu0 0.0
  %766 = vmatprep.subr.mxu0 0.0
  %767 = vmatpush1.msra.mxu0 0.0
  %768 = vmatprep.subr.mxu0 0.0
  %769 = vmatpush1.msra.mxu0 0.0
  %770 = vmatprep.subr.mxu0 0.0
  %771 = vmatpush1.msra.mxu0 0.0
  %772 = vmatprep.subr.mxu0 0.0
  %773 = vmatpush1.msra.mxu0 0.0
  %774 = vmatprep.subr.mxu0 0.0
  %775 = vmatpush1.msra.mxu0 0.0
  %776 = vmatprep.subr.mxu0 0.0
  %777 = vmatpush1.msra.mxu0 0.0
  %778 = vmatprep.subr.mxu0 0.0
  %779 = vmatpush1.msra.mxu0 0.0
  %780 = vmatprep.subr.mxu0 0.0
  %781 = vmatpush1.msra.mxu0 0.0
  %782 = vmatprep.subr.mxu0 0.0
  %783 = vmatpush1.msra.mxu0 0.0
  %784 = vmatprep.subr.mxu0 0.0
  %785 = vmatpush1.msra.mxu0 0.0
  %786 = vmatprep.subr.mxu0 0.0
  %787 = vmatpush1.msra.mxu0 0.0
  %788 = vmatprep.subr.mxu0 0.0
  %789 = vmatpush1.msra.mxu0 0.0
  %790 = vmatprep.subr.mxu0 0.0
  %791 = vmatpush1.msra.mxu0 0.0
  %792 = vmatprep.subr.mxu0 0.0
  %793 = vmatpush1.msra.mxu0 %v762
  %794 = vmatprep.subr.mxu0 0.0
  %795 = vmatpush1.msra.mxu0 %v759
  %796 = vmatprep.subr.mxu0 0.0
  %797 = vmatpush2.msra.mxu0 0.0
  %798 = vmatprep.subr.mxu0 0.0
  %799 = vmatpush2.msra.mxu0 0.0
  %800 = vmatprep.subr.mxu0 0.0
  %801 = vmatpush2.msra.mxu0 0.0
  %802 = vmatprep.subr.mxu0 0.0
  %803 = vmatpush2.msra.mxu0 0.0
  %804 = vmatprep.subr.mxu0 0.0
  %805 = vmatpush2.msra.mxu0 0.0
  %806 = vmatprep.subr.mxu0 0.0
  %807 = vmatpush2.msra.mxu0 0.0
  %808 = vmatprep.subr.mxu0 0.0
  %809 = vmatpush2.msra.mxu0 0.0
  %810 = vmatprep.subr.mxu0 0.0
  %811 = vmatpush2.msra.mxu0 0.0
  %812 = vmatprep.subr.mxu0 0.0
  %813 = vmatpush2.msra.mxu0 0.0
  %814 = vmatprep.subr.mxu0 0.0
  %815 = vmatpush2.msra.mxu0 0.0
  %816 = vmatprep.subr.mxu0 0.0
  %817 = vmatpush2.msra.mxu0 0.0
  %818 = vmatprep.subr.mxu0 0.0
  %819 = vmatpush2.msra.mxu0 0.0
  %820 = vmatprep.subr.mxu0 0.0
  %821 = vmatpush2.msra.mxu0 0.0
  %822 = vmatprep.subr.mxu0 0.0
  %823 = vmatpush2.msra.mxu0 0.0
  %824 = vmatprep.subr.mxu0 0.0
  %825 = vmatpush2.msra.mxu0 0.0
  %826 = vmatprep.subr.mxu0 0.0
  %827 = vmatpush2.msra.mxu0 0.0
  %828 = vmatprep.mubr.f32.mxu0 0.0
  %829 = vmatmul.mubr.f32.gmra.mxu0 %v44
  %v830 = vpop.f32.mrf.mxu0
  %v831 = vadd.f32 0.0, %v830
  %v832 = vpop.f32.mrf.mxu0
  %833 = vdwg.mxu0
  %v835 = vlaneseq
  %v836 = vshrl.u32 %v835, 7
  %v837 = vsub.s32 0, %v836
  %v838 = vrot.slane %v758, %v837
  %v840 = vadd.f32 %v838, %v831
  %vm841 = vcmask 582656
  %842 = vst.msk [vmem:[%s8] sm:$0x3] %vm841, %v840
  // Predicated region
  $region30: #{cmr_forward.6} parent=0 // pred_check
    _
  $region31: #{cmr_forward.6} parent=0 // pred_check_branch
    %844 = sbr.rel (0) target = $region33
  $region32: #{cmr_forward.6} parent=0 // pred_region
    _
  $region33: #{cmr_forward.6} parent=0 // pred_fallthru
    _
  // Predicated region
  $region34: #{cmr_forward.6} parent=0 // pred_check
    _
  $region35: #{cmr_forward.6} parent=0 // pred_check_branch
    %846 = sbr.rel (0) target = $region37
  $region36: #{cmr_forward.6} parent=0 // pred_region
    _
  $region37: #{cmr_forward.6} parent=0 // pred_fallthru
    _
  // Predicated region
  $region38: #{cmr_forward.6} parent=0 // pred_check
    _
  $region39: #{cmr_forward.6} parent=0 // pred_check_branch
    %848 = sbr.rel (0) target = $region41
  $region40: #{cmr_forward.6} parent=0 // pred_region
    _
  $region41: #{cmr_forward.6} parent=0 // pred_fallthru
    _
  // Predicated region
  $region42: #{cmr_forward.6} parent=0 // pred_check
    _
  $region43: #{cmr_forward.6} parent=0 // pred_check_branch
    %850 = sbr.rel (0) target = $region45
  $region44: #{cmr_forward.6} parent=0 // pred_region
    _
  $region45: #{cmr_forward.6} parent=0 // pred_fallthru
    _

// kernel: cmr_forward.7
$region0: #{cmr_forward.7}
  #allocation0 [shape = 'u32[]', space=smem, size = 0x4, offset = 0x4, fixed_abs, tag = 'smem constant byte address 0x4 - core index']
  #allocation1 [shape = 'u32[144,128]{1,0:T(1,128)}', space=vmem, size = 0x12000, scoped, tag = 'internal scratch']
  %s0 = inlined_call_operand.vmem [shape: f32[2,16,24], index: 0, kind: input, shape index: {}]
  %s1 = inlined_call_operand.vmem [shape: f32[2,3,256], index: 1, kind: input, shape index: {}]
  %s2 = inlined_call_operand.vmem [shape: f32[24,256], index: 2, kind: input, shape index: {}]
  %s3 = inlined_call_operand.vmem [shape: f32[2,3,256], index: 3, kind: output, shape index: {}]
  %s4 = sld [smem:[#allocation0]]
  $region45: #{cmr_forward.7} parent=0
    _
  %s6 = ssub.s32 1, %s4
  %s7 = scalar_select 0, %s6, %s4
  loop: start=0, step=1, limit=4
  $region2: #{cmr_forward.7} parent=0 // loop_pre_header
    _
  $region3: #{cmr_forward.7} parent=0 // loop_header
    %s9 = sphi 0, %s13
    %p10 = scmp.ge.s32.totalorder %s9, 4
    %s19 = sphi 0, %s21
    %s22 = sphi 0, %s19
    %s23 = sphi 0, %s22
    %s39 = sphi 0, %s23
    %s45 = sphi 0, %s47
    %s48 = sphi 0, %s45
    %s49 = sphi 0, %s48
    %s65 = sphi 0, %s49
    %s69 = sphi 0, %s69
    %s71 = sphi 0, %s69
    %s72 = sphi 0, %s71
    %s86 = sphi 0, %s72
    %s92 = sphi 0, %s94
    %s95 = sphi 0, %s92
    %s96 = sphi 0, %s95
    %s112 = sphi 0, %s96
  $region4: #{cmr_forward.7} parent=0 // loop_header_branch
    %12 = sbr.rel (%p10) target = $region8
  $region5: #{cmr_forward.7} parent=0 // loop_body
    %s14 = ssub.s32 %s9, 1
    %s15 = ssub.s32 %s9, 2
    %s16 = sadd.s32 %s9, 1
    %s17 = ssub.s32 %s9, %s16
    %p18 = scmp.eq.s32.totalorder %s17, 0
    %s20 = sadd.s32 %s19, 1
    %s21 = scalar_select %p18, %s19, %s20
    %p24 = pneg %p18
    %p25 = scmp.eq.s32.totalorder %s9, 1
    %p26 = por %p24, %p25
    %p27 = scmp.ne.s32.totalorder %s19, %s22
    %p28 = scmp.eq.s32.totalorder %s9, 0
    %p29 = por %p27, %p28
    %p30 = scmp.ne.s32.totalorder %s19, %s22
    %p31 = scmp.eq.s32.totalorder %s14, 1
    %p32 = por %p30, %p31
    %p33 = scmp.ne.s32.totalorder %s22, %s23
    %p34 = scmp.eq.s32.totalorder %s14, 0
    %p35 = por %p33, %p34
    %p36 = scmp.ne.s32.totalorder %s22, %s23
    %p37 = scmp.eq.s32.totalorder %s15, 1
    %p38 = por %p36, %p37
    %p40 = scmp.ne.s32.totalorder %s23, %s39
    %p41 = scmp.eq.s32.totalorder %s15, 0
    %p42 = por %p40, %p41
    %s43 = ssub.s32 %s9, %s16
    %p44 = scmp.eq.s32.totalorder %s43, 0
    %s46 = sadd.s32 %s45, 1
    %s47 = scalar_select %p44, %s45, %s46
    %p50 = pneg %p44
    %p51 = scmp.eq.s32.totalorder %s9, 1
    %p52 = por %p50, %p51
    %p53 = scmp.ne.s32.totalorder %s45, %s48
    %p54 = scmp.eq.s32.totalorder %s9, 0
    %p55 = por %p53, %p54
    %p56 = scmp.ne.s32.totalorder %s45, %s48
    %p57 = scmp.eq.s32.totalorder %s14, 1
    %p58 = por %p56, %p57
    %p59 = scmp.ne.s32.totalorder %s48, %s49
    %p60 = scmp.eq.s32.totalorder %s14, 0
    %p61 = por %p59, %p60
    %p62 = scmp.ne.s32.totalorder %s48, %s49
    %p63 = scmp.eq.s32.totalorder %s15, 1
    %p64 = por %p62, %p63
    %p66 = scmp.ne.s32.totalorder %s49, %s65
    %p67 = scmp.eq.s32.totalorder %s15, 0
    %p68 = por %p66, %p67
    %s70 = sadd.s32 %s69, 1
    %p73 = scmp.eq.s32.totalorder %s9, 1
    %p74 = scmp.ne.s32.totalorder %s69, %s71
    %p75 = scmp.eq.s32.totalorder %s9, 0
    %p76 = por %p74, %p75
    %p77 = scmp.ne.s32.totalorder %s69, %s71
    %p78 = scmp.eq.s32.totalorder %s14, 1
    %p79 = por %p77, %p78
    %p80 = scmp.ne.s32.totalorder %s71, %s72
    %p81 = scmp.eq.s32.totalorder %s14, 0
    %p82 = por %p80, %p81
    %p83 = scmp.ne.s32.totalorder %s71, %s72
    %p84 = scmp.eq.s32.totalorder %s15, 1
    %p85 = por %p83, %p84
    %p87 = scmp.ne.s32.totalorder %s72, %s86
    %p88 = scmp.eq.s32.totalorder %s15, 0
    %p89 = por %p87, %p88
    %s90 = ssub.s32 %s9, %s16
    %p91 = scmp.eq.s32.totalorder %s90, 0
    %s93 = sadd.s32 %s92, 1
    %s94 = scalar_select %p91, %s92, %s93
    %p97 = pneg %p91
    %p98 = scmp.eq.s32.totalorder %s9, 1
    %p99 = por %p97, %p98
    %p100 = scmp.ne.s32.totalorder %s92, %s95
    %p101 = scmp.eq.s32.totalorder %s9, 0
    %p102 = por %p100, %p101
    %p103 = scmp.ne.s32.totalorder %s92, %s95
    %p104 = scmp.eq.s32.totalorder %s14, 1
    %p105 = por %p103, %p104
    %p106 = scmp.ne.s32.totalorder %s95, %s96
    %p107 = scmp.eq.s32.totalorder %s14, 0
    %p108 = por %p106, %p107
    %p109 = scmp.ne.s32.totalorder %s95, %s96
    %p110 = scmp.eq.s32.totalorder %s15, 1
    %p111 = por %p109, %p110
    %p113 = scmp.ne.s32.totalorder %s96, %s112
    %p114 = scmp.eq.s32.totalorder %s15, 0
    %p115 = por %p113, %p114
    %p116 = scmp.le.s32.totalorder 1, %s9
    %p117 = scmp.lt.s32.totalorder %s9, 3
    %p118 = pnand %p116, %p117
    %p119 = pneg %p118
    // Predicated region
    $region9: #{cmr_forward.7} parent=5 // pred_check
      _
    $region10: #{cmr_forward.7} parent=5 // pred_check_branch
      %121 = sbr.rel (%p118) target = $region12
    $region11: #{cmr_forward.7} parent=5 // pred_region
      %s122 = ssub.s32 %s9, 1
      // Predicated region
      $region13: #{cmr_forward.7} parent=11 // pred_check
        %p123 = pneg %p82
      $region14: #{cmr_forward.7} parent=11 // pred_check_branch
        %125 = sbr.rel (%p123) target = $region16
      $region15: #{cmr_forward.7} parent=11 // pred_region
        _
      $region16: #{cmr_forward.7} parent=11 // pred_fallthru
        _
    $region12: #{cmr_forward.7} parent=5 // pred_fallthru
      _
    %p126 = scmp.lt.s32.totalorder %s9, 2
    // Predicated region
    $region17: #{cmr_forward.7} parent=5 // pred_check
      %p127 = pneg %p126
    $region18: #{cmr_forward.7} parent=5 // pred_check_branch
      %129 = sbr.rel (%p127) target = $region20
    $region19: #{cmr_forward.7} parent=5 // pred_region
      // Predicated region
      $region21: #{cmr_forward.7} parent=19 // pred_check
        %p130 = pneg %p29
      $region22: #{cmr_forward.7} parent=19 // pred_check_branch
        %132 = sbr.rel (%p130) target = $region24
      $region23: #{cmr_forward.7} parent=19 // pred_region
        %p133 = scmp.lt.s32.totalorder %s9, 1
        %s134 = scalar_select %p133, %s9, 1
        %s135 = smul.addr %s134, 2
        %s136 = smul.addr %s135, 8
        %s137 = scalar_lea.vmem %s0, %s136
      $region24: #{cmr_forward.7} parent=19 // pred_fallthru
        _
      // Predicated region
      $region25: #{cmr_forward.7} parent=19 // pred_check
        %p138 = pneg %p55
      $region26: #{cmr_forward.7} parent=19 // pred_check_branch
        %140 = sbr.rel (%p138) target = $region28
      $region27: #{cmr_forward.7} parent=19 // pred_region
        %p141 = scmp.lt.s32.totalorder %s9, 1
        %s142 = scalar_select %p141, %s9, 1
        %s143 = smul.addr %s142, 2
        %s144 = smul.addr %s143, 4
        %s145 = scalar_lea.vmem %s1, %s144
      $region28: #{cmr_forward.7} parent=19 // pred_fallthru
        _
    $region20: #{cmr_forward.7} parent=5 // pred_fallthru
      _
    %p146 = scmp.le.s32.totalorder 1, %s9
    %p147 = scmp.lt.s32.totalorder %s9, 3
    %p148 = pnand %p146, %p147
    %p149 = pneg %p148
    // Predicated region
    $region29: #{cmr_forward.7} parent=5 // pred_check
      _
    $region30: #{cmr_forward.7} parent=5 // pred_check_branch
      %151 = sbr.rel (%p148) target = $region32
    $region31: #{cmr_forward.7} parent=5 // pred_region
      %s152 = ssub.s32 %s9, 1
      %p153 = scmp.lt.s32.totalorder %s14, 1
      %s154 = scalar_select %p153, %s14, 1
      %s155 = smul.addr %s154, 2
      %s156 = smul.addr %s155, 8
      %s157 = scalar_lea.vmem %s0, %s156
      %p158 = pneg %p35
      %p159 = pneg %p32
      %p160 = scmp.lt.s32.totalorder %s14, 1
      %s161 = scalar_select %p160, %s14, 1
      %s162 = smul.addr %s161, 2
      %s163 = smul.addr %s162, 4
      %s164 = scalar_lea.vmem %s1, %s163
      %p165 = pneg %p61
      %p166 = pneg %p58
      %p167 = pneg %p82
      %p168 = pneg %p79
      %p169 = pneg %p108
      %p170 = pneg %p105
      %p171 = scmp.lt.s32.totalorder %s14, 1
      %s172 = scalar_select %p171, %s14, 1
      %s173 = smul.addr %s172, 2
      %s174 = smul.addr %s173, 4
      %s175 = scalar_lea.vmem %s3, %s174
      %p176 = scmp.lt.s32.totalorder %s14, 1
      %s177 = scalar_select %p176, %s14, 1
      %s178 = smul.addr %s177, 2
      %s179 = smul.addr %s178, 8
      %s180 = scalar_lea.vmem %s0, %s179
      %p181 = scmp.lt.s32.totalorder %s14, 1
      %s182 = scalar_select %p181, %s14, 1
      %s183 = smul.addr %s182, 2
      %s184 = smul.addr %s183, 4
      %s185 = scalar_lea.vmem %s1, %s184
      %p186 = scmp.lt.s32.totalorder %s14, 1
      %s187 = scalar_select %p186, %s14, 1
      %s188 = smul.addr %s187, 2
      %s189 = smul.addr %s188, 4
      %s190 = scalar_lea.vmem %s3, %s189
      %v191 = vld [vmem:[%s180] sm:$0xff]
      %v192 = vld [vmem:[%s180 + $0x8] sm:$0xff]
      %v193 = vld [vmem:[%s2] sm:$0xff]
      %v194 = vld [vmem:[%s2 + $0x8] sm:$0xff]
      %v195 = vld [vmem:[%s2 + $0x10] sm:$0xff]
      %v196 = vld [vmem:[%s2 + $0x18] sm:$0xff]
      %v197 = vld [vmem:[%s2 + $0x20] sm:$0xff]
      %v198 = vld [vmem:[%s2 + $0x28] sm:$0xff]
      %vm199 = vcmask 195584
      %v201 = vsel %vm199, %v191, 0
      %v204 = vsel %vm199, %v192, 0
      %206 = vmatprep.subr.mxu0 0.0
      %207 = vmatpush1.msra.mxu0 0.0
      %208 = vmatprep.subr.mxu0 0.0
      %209 = vmatpush1.msra.mxu0 0.0
      %210 = vmatprep.subr.mxu0 0.0
      %211 = vmatpush1.msra.mxu0 0.0
      %212 = vmatprep.subr.mxu0 0.0
      %213 = vmatpush1.msra.mxu0 0.0
      %214 = vmatprep.subr.mxu0 0.0
      %215 = vmatpush1.msra.mxu0 0.0
      %216 = vmatprep.subr.mxu0 0.0
      %217 = vmatpush1.msra.mxu0 0.0
      %218 = vmatprep.subr.mxu0 0.0
      %219 = vmatpush1.msra.mxu0 0.0
      %220 = vmatprep.subr.mxu0 0.0
      %221 = vmatpush1.msra.mxu0 0.0
      %222 = vmatprep.subr.mxu0 0.0
      %223 = vmatpush1.msra.mxu0 0.0
      %224 = vmatprep.subr.mxu0 0.0
      %225 = vmatpush1.msra.mxu0 0.0
      %226 = vmatprep.subr.mxu0 0.0
      %227 = vmatpush1.msra.mxu0 0.0
      %228 = vmatprep.subr.mxu0 0.0
      %229 = vmatpush1.msra.mxu0 0.0
      %230 = vmatprep.subr.mxu0 0.0
      %231 = vmatpush1.msra.mxu0 0.0
      %232 = vmatprep.subr.mxu0 %v198
      %233 = vmatpush1.msra.mxu0 %v197
      %234 = vmatprep.subr.mxu0 %v196
      %235 = vmatpush1.msra.mxu0 %v195
      %236 = vmatprep.subr.mxu0 %v194
      %237 = vmatpush1.msra.mxu0 %v193
      %238 = vmatprep.subr.mxu0 0.0
      %239 = vmatpush2.msra.mxu0 0.0
      %240 = vmatprep.subr.mxu0 0.0
      %241 = vmatpush2.msra.mxu0 0.0
      %242 = vmatprep.subr.mxu0 0.0
      %243 = vmatpush2.msra.mxu0 0.0
      %244 = vmatprep.subr.mxu0 0.0
      %245 = vmatpush2.msra.mxu0 0.0
      %246 = vmatprep.subr.mxu0 0.0
      %247 = vmatpush2.msra.mxu0 0.0
      %248 = vmatprep.subr.mxu0 0.0
      %249 = vmatpush2.msra.mxu0 0.0
      %250 = vmatprep.subr.mxu0 0.0
      %251 = vmatpush2.msra.mxu0 0.0
      %252 = vmatprep.subr.mxu0 0.0
      %253 = vmatpush2.msra.mxu0 0.0
      %254 = vmatprep.subr.mxu0 0.0
      %255 = vmatpush2.msra.mxu0 0.0
      %256 = vmatprep.subr.mxu0 0.0
      %257 = vmatpush2.msra.mxu0 0.0
      %258 = vmatprep.subr.mxu0 0.0
      %259 = vmatpush2.msra.mxu0 0.0
      %260 = vmatprep.subr.mxu0 0.0
      %261 = vmatpush2.msra.mxu0 0.0
      %262 = vmatprep.subr.mxu0 0.0
      %263 = vmatpush2.msra.mxu0 0.0
      %264 = vmatprep.subr.mxu0 0.0
      %265 = vmatpush2.msra.mxu0 0.0
      %266 = vmatprep.subr.mxu0 0.0
      %267 = vmatpush2.msra.mxu0 0.0
      %268 = vmatprep.subr.mxu0 0.0
      %269 = vmatpush2.msra.mxu0 0.0
      %270 = vmatprep.mubr.f32.mxu0 0.0
      %271 = vmatmul.mubr.f32.gmra.mxu0 %v201
      %v272 = vpop.f32.mrf.mxu0
      %v273 = vadd.f32 0.0, %v272
      %v274 = vpop.f32.mrf.mxu0
      %v275 = vadd.f32 0.0, %v274
      %276 = vmatprep.mubr.f32.mxu0 0.0
      %277 = vmatmul.mubr.f32.gmra.mxu0 %v204
      %v278 = vpop.f32.mrf.mxu0
      %v279 = vadd.f32 0.0, %v278
      %v280 = vpop.f32.mrf.mxu0
      %v281 = vadd.f32 0.0, %v280
      %282 = vdwg.mxu0
      %v283 = vld [vmem:[%s185] sm:$0x77]
      %v285 = vlaneseq
      %v286 = vshrl.u32 %v285, 7
      %v287 = vsub.s32 0, %v286
      %v288 = vrot.slane %v283, %v287
      %v289 = vlaneseq
      %v290 = vshrl.u32 %v289, 7
      %v291 = vsub.s32 4, %v290
      %v292 = vrot.slane %v283, %v291
      %v295 = vmul.f32 %v273, %v288
      %v296 = vmul.f32 %v275, %v292
      %v297 = vlaneseq
      %v298 = vshrl.u32 %v297, 7
      %v299 = vsub.s32 1, %v298
      %v300 = vrot.slane %v283, %v299
      %v301 = vlaneseq
      %v302 = vshrl.u32 %v301, 7
      %v303 = vsub.s32 5, %v302
      %v304 = vrot.slane %v283, %v303
      %v307 = vmul.f32 %v273, %v300
      %v308 = vmul.f32 %v275, %v304
      %v311 = vrot.slane %v307, 1
      %v312 = vrot.slane %v308, 1
      %v315 = vadd.f32 %v295, %v311
      %v316 = vadd.f32 %v296, %v312
      %v317 = vlaneseq
      %v318 = vshrl.u32 %v317, 7
      %v319 = vsub.s32 2, %v318
      %v320 = vrot.slane %v283, %v319
      %v321 = vlaneseq
      %v322 = vshrl.u32 %v321, 7
      %v323 = vsub.s32 6, %v322
      %v324 = vrot.slane %v283, %v323
      %v327 = vmul.f32 %v273, %v320
      %v328 = vmul.f32 %v275, %v324
      %v331 = vrot.slane %v327, 2
      %v332 = vrot.slane %v328, 2
      %v335 = vadd.f32 %v315, %v331
      %v336 = vadd.f32 %v316, %v332
      %v339 = vrot.slane %v273, 3
      %v340 = vrot.slane %v275, 3
      %v343 = vadd.f32 %v335, %v339
      %v344 = vadd.f32 %v336, %v340
      %v345 = vmul.f32 %v279, %v288
      %v346 = vmul.f32 %v281, %v292
      %v347 = vmul.f32 %v279, %v300
      %v348 = vmul.f32 %v281, %v304
      %v351 = vrot.slane %v347, 1
      %v352 = vrot.slane %v348, 1
      %v355 = vadd.f32 %v345, %v351
      %v356 = vadd.f32 %v346, %v352
      %v357 = vmul.f32 %v279, %v320
      %v358 = vmul.f32 %v281, %v324
      %v361 = vrot.slane %v357, 2
      %v362 = vrot.slane %v358, 2
      %v365 = vadd.f32 %v355, %v361
      %v366 = vadd.f32 %v356, %v362
      %v369 = vrot.slane %v279, 3
      %v370 = vrot.slane %v281, 3
      %v373 = vadd.f32 %v365, %v369
      %v374 = vadd.f32 %v366, %v370
      %v377 = vrot.slane %v343, 3
      %v378 = vrot.slane %v344, 3
      %v383 = vrot.slane %v373, 6
      %v384 = vrot.slane %v374, 6
      %vm387 = vcmask 1040384
      %v388 = vsel %vm387, %v343, %v377
      %v389 = vsel %vm387, %v344, %v378
      %vm390 = vcmask 1041408
      %v391 = vsel %vm390, %v388, %v383
      %v392 = vsel %vm390, %v389, %v384
      %v395 = vcombine.low %v391, %v392
      %397 = vst [vmem:[%s190] sm:$0x77] %v395
      %p398 = scmp.lt.s32.totalorder %s14, 1
      %s399 = scalar_select %p398, %s14, 1
      %s400 = smul.addr %s399, 2
      %s401 = smul.addr %s400, 4
      %s402 = scalar_lea.vmem %s3, %s401
      // Predicated region
      $region33: #{cmr_forward.7} parent=31 // pred_check
        %p403 = pneg %p105
      $region34: #{cmr_forward.7} parent=31 // pred_check_branch
        %405 = sbr.rel (%p403) target = $region36
      $region35: #{cmr_forward.7} parent=31 // pred_region
        _
      $region36: #{cmr_forward.7} parent=31 // pred_fallthru
        _
    $region32: #{cmr_forward.7} parent=5 // pred_fallthru
      _
    %p406 = scmp.le.s32.totalorder 2, %s9
    // Predicated region
    $region37: #{cmr_forward.7} parent=5 // pred_check
      %p407 = pneg %p406
    $region38: #{cmr_forward.7} parent=5 // pred_check_branch
      %409 = sbr.rel (%p407) target = $region40
    $region39: #{cmr_forward.7} parent=5 // pred_region
      %s410 = ssub.s32 %s9, 2
      // Predicated region
      $region41: #{cmr_forward.7} parent=39 // pred_check
        %p411 = pneg %p111
      $region42: #{cmr_forward.7} parent=39 // pred_check_branch
        %413 = sbr.rel (%p411) target = $region44
      $region43: #{cmr_forward.7} parent=39 // pred_region
        %p414 = scmp.lt.s32.totalorder %s15, 1
        %s415 = scalar_select %p414, %s15, 1
        %s416 = smul.addr %s415, 2
        %s417 = smul.addr %s416, 4
        %s418 = scalar_lea.vmem %s3, %s417
      $region44: #{cmr_forward.7} parent=39 // pred_fallthru
        _
    $region40: #{cmr_forward.7} parent=5 // pred_fallthru
      _
  $region6: #{cmr_forward.7} parent=0 // loop_footer
    %s13 = sadd.s32 1, %s9
  $region7: #{cmr_forward.7} parent=0 // loop_footer_branch
    %8 = sbr.rel target = $region3
  $region8: #{cmr_forward.7} parent=0 // loop_exit
    _

</llo_original>
